<compile_context>
chip_gen: v6e
topology: v6e:2x2x1
jax: 0.10.0
libtpu: 0.0.40
codegen_flags: <defaults>
</compile_context>

<pallas_src>
import functools

import jax
import jax.numpy as jnp
from jax import lax
from jax.experimental import pallas as pl
from jax.experimental.pallas import tpu as pltpu

LANE = 128


def _round_up(x, m):
    return (x + m - 1) // m * m


# ------------------------------ fused kernel --------------------------------

def _rdb_kernel(xpad_ref, mask_ref, *rest, nC, gr, nD, Wp, Mp, base):
    """Whole RDB forward for one image.

    xpad_ref : (1, Mp, CP) f32   spatially zero-padded input, flattened rows,
                                 channels zero-padded to CP (=128) lanes.
    mask_ref : (Mp, 1)    f32    1.0 on interior (real output) rows, else 0.
    rest     : nD dense-conv weights (9, c_i, gr) bf16,
               w1x1 (Ctot, CP) bf16 (zero-padded columns),
               out_ref (1, Mp, CP) f32,
               slab_ref (Mguard, CP) f32 VMEM scratch (feature slab + guards).
    """
    w_dense = rest[:nD]
    w1x1_ref = rest[nD]
    out_ref = rest[nD + 1]
    slab_ref = rest[nD + 2]

    x2 = xpad_ref[0]            # (Mp, CP) f32
    mask = mask_ref[...]        # (Mp, 1)  f32

    # (Re)initialize the feature slab: guards/halos zero, interior <- x.
    slab_ref[...] = jnp.zeros_like(slab_ref)
    slab_ref[pl.ds(base, Mp), :] = x2

    taps = [(di, dj) for di in (-1, 0, 1) for dj in (-1, 0, 1)]

    # Dense layers: out_i = relu(conv3x3(feat[:, :c_i])), "concat" = write the
    # gr new channels at lane offset c_i of the slab.
    for layer in range(nD):
        c_in = nC + layer * gr
        acc = jnp.zeros((Mp, gr), jnp.float32)
        for t, (di, dj) in enumerate(taps):
            off = di * Wp + dj                      # flat row shift of the tap
            lhs = slab_ref[pl.ds(base + off, Mp), pl.ds(0, c_in)]
            acc = acc + jnp.dot(lhs.astype(jnp.bfloat16), w_dense[layer][t],
                                preferred_element_type=jnp.float32)
        # Mask halo rows back to zero so they act as conv zero-padding for the
        # next layer (halo-row accumulations are garbage but finite).
        new = jnp.maximum(acc, 0.0) * mask
        slab_ref[pl.ds(base, Mp), pl.ds(c_in, gr)] = new

    # Final 1x1 conv (lane-dense, N padded to 128) + fused residual add.
    c_tot = nC + nD * gr
    feat = slab_ref[pl.ds(base, Mp), pl.ds(0, c_tot)]
    y = jnp.dot(feat.astype(jnp.bfloat16), w1x1_ref[...],
                preferred_element_type=jnp.float32)
    out_ref[0] = y + x2


# --------------------------------- wrapper -----------------------------------

def rdb_forward(x_nchw, dense_ws, w1x1, *, growth_rate):
    """RDB forward.  x_nchw: (B, nC, H, W) f32.
    dense_ws[i]: (9, nC + i*gr, gr) f32 (taps kh*3+kw, Cin, Cout).
    w1x1: (nC + nD*gr, nC) f32."""
    B, nC, H, W = x_nchw.shape
    nD = len(dense_ws)
    gr = growth_rate
    c_tot = nC + nD * gr

    Hp, Wp = H + 2, W + 2
    M_img = Hp * Wp
    Mp = _round_up(M_img, 8)               # padded row count per image
    CP = _round_up(c_tot, LANE)            # lane-dense channel padding
    base = _round_up(Wp + 1, 8)            # leading guard rows (>= Wp+1)
    Mguard = _round_up(base + Mp + Wp + 2, 8)

    # NCHW -> NHWC, zero-pad spatially by 1, flatten per image, pad rows/lanes.
    x_nhwc = jnp.transpose(x_nchw, (0, 2, 3, 1)).astype(jnp.float32)
    xpad = jnp.pad(x_nhwc, ((0, 0), (1, 1), (1, 1), (0, 0)))
    xpad = xpad.reshape(B, M_img, nC)
    xpad = jnp.pad(xpad, ((0, 0), (0, Mp - M_img), (0, CP - nC)))

    # Interior-row mask (rows that correspond to real output pixels).
    r = jnp.arange(Mp)
    ii, jj = r // Wp, r % Wp
    mask = ((r < M_img) & (ii >= 1) & (ii <= H) & (jj >= 1) & (jj <= W))
    mask = mask.astype(jnp.float32).reshape(Mp, 1)

    # bf16 weights; 1x1 weight zero-padded to a lane-dense (c_tot, 128) matrix.
    w_dense_bf16 = [w.astype(jnp.bfloat16) for w in dense_ws]
    w1x1_p = jnp.pad(w1x1, ((0, 0), (0, CP - w1x1.shape[1]))).astype(jnp.bfloat16)

    kernel = functools.partial(_rdb_kernel, nC=nC, gr=gr, nD=nD,
                               Wp=Wp, Mp=Mp, base=base)

    in_specs = [
        pl.BlockSpec((1, Mp, CP), lambda b: (b, 0, 0)),   # x (one image / step)
        pl.BlockSpec((Mp, 1), lambda b: (0, 0)),          # interior mask
    ]
    for w in w_dense_bf16:
        in_specs.append(pl.BlockSpec(w.shape, lambda b: (0, 0, 0)))
    in_specs.append(pl.BlockSpec(w1x1_p.shape, lambda b: (0, 0)))

    out = pl.pallas_call(
        kernel,
        out_shape=jax.ShapeDtypeStruct((B, Mp, CP), jnp.float32),
        grid=(B,),
        in_specs=in_specs,
        out_specs=pl.BlockSpec((1, Mp, CP), lambda b: (b, 0, 0)),
        scratch_shapes=[pltpu.VMEM((Mguard, CP), jnp.float32)],
        compiler_params=pltpu.CompilerParams(
            dimension_semantics=("parallel",),          # one image per TC (v7x)
            vmem_limit_bytes=32 * 1024 * 1024),
    )(xpad, mask, *w_dense_bf16, w1x1_p)

    # Strip padding: (B, Mp, CP) -> (B, nC, H, W).
    y = out[:, :M_img, :nC].reshape(B, Hp, Wp, nC)
    y = y[:, 1:H + 1, 1:W + 1, :]
    return jnp.transpose(y, (0, 3, 1, 2))


# -------------------------- params & XLA reference ---------------------------

def build_rdb_params(key, nC, nD, gr):
    ws = []
    c = nC
    for _ in range(nD):
        key, k = jax.random.split(key)
        w = 0.1 * jax.random.normal(k, (3, 3, c, gr), jnp.float32)
        ws.append(w.reshape(9, c, gr))
        c += gr
    key, k = jax.random.split(key)
    w1x1 = 0.1 * jax.random.normal(k, (c, nC), jnp.float32)
    return ws, w1x1


def rdb_reference(x_nchw, dense_ws, w1x1):
    """Pure-XLA reference mimicking the kernel's bf16-operand / f32-acc numerics."""
    feat = x_nchw.astype(jnp.bfloat16)
    for w in dense_ws:
        khkw = w.reshape(3, 3, w.shape[1], w.shape[2])
        w_oihw = jnp.transpose(khkw, (3, 2, 0, 1)).astype(jnp.bfloat16)
        out = lax.conv_general_dilated(
            feat, w_oihw, window_strides=(1, 1), padding=[(1, 1), (1, 1)],
            dimension_numbers=("NCHW", "OIHW", "NCHW"),
            preferred_element_type=jnp.float32)
        out = jnp.maximum(out, 0.0).astype(jnp.bfloat16)
        feat = jnp.concatenate([feat, out], axis=1)
    w_oihw = jnp.transpose(w1x1, (1, 0))[:, :, None, None].astype(jnp.bfloat16)
    y = lax.conv_general_dilated(
        feat, w_oihw, window_strides=(1, 1), padding=[(0, 0), (0, 0)],
        dimension_numbers=("NCHW", "OIHW", "NCHW"),
        preferred_element_type=jnp.float32)
    return y + x_nchw


# ----------------------------------- main ------------------------------------

if __name__ == "__main__":
    B, nC, H, W = 2, 16, 16, 16        # RDB(nChannels=16, nDenselayer=3, growthRate=8)
    nD, gr = 3, 8

    key = jax.random.PRNGKey(0)
    kx, kw = jax.random.split(key)
    x = jax.random.normal(kx, (B, nC, H, W), jnp.float32)
    dense_ws, w1x1 = build_rdb_params(kw, nC, nD, gr)

    fwd = jax.jit(functools.partial(rdb_forward, growth_rate=gr))
    out = fwd(x, dense_ws, w1x1)
    out = jax.block_until_ready(out)
    assert out.shape == (B, nC, H, W)

    ref = jax.block_until_ready(rdb_reference(x, dense_ws, w1x1))
    max_err = float(jnp.max(jnp.abs(out - ref)))
    assert max_err < 1e-2, f"mismatch vs XLA reference: max abs err {max_err}"

    print("KERNEL_OK")
</pallas_src>

<mosaic_0001>
module attributes {stable_mosaic.version = 11 : i64} {
  func.func @_rdb_kernel(%arg0: i32, %arg1: memref<1x328x128xf32, #tpu.memory_space<vmem>>, %arg2: memref<328x1xf32, #tpu.memory_space<vmem>>, %arg3: memref<9x16x8xbf16, #tpu.memory_space<vmem>>, %arg4: memref<9x24x8xbf16, #tpu.memory_space<vmem>>, %arg5: memref<9x32x8xbf16, #tpu.memory_space<vmem>>, %arg6: memref<40x128xbf16, #tpu.memory_space<vmem>>, %arg7: memref<1x328x128xf32, #tpu.memory_space<vmem>>, %arg8: memref<376x128xf32, #tpu.memory_space<vmem>>) attributes {dimension_semantics = [#tpu.dimension_semantics<parallel>], iteration_bounds = array<i64: 2>, scalar_prefetch = 0 : i64, scratch_operands = 1 : i64, tpu.core_type = #tpu.core_type<tc>, window_params = [{transform_indices = @transform_0, window_bounds = array<i64: 1, 328, 128>}, {pipeline_mode = #tpu.pipeline_mode<synchronous>, transform_indices = @transform_1, window_bounds = array<i64: 328, 1>}, {pipeline_mode = #tpu.pipeline_mode<synchronous>, transform_indices = @transform_2, window_bounds = array<i64: 9, 16, 8>}, {pipeline_mode = #tpu.pipeline_mode<synchronous>, transform_indices = @transform_3, window_bounds = array<i64: 9, 24, 8>}, {pipeline_mode = #tpu.pipeline_mode<synchronous>, transform_indices = @transform_4, window_bounds = array<i64: 9, 32, 8>}, {pipeline_mode = #tpu.pipeline_mode<synchronous>, transform_indices = @transform_5, window_bounds = array<i64: 40, 128>}, {transform_indices = @transform_6, window_bounds = array<i64: 1, 328, 128>}]} {
    %c0 = arith.constant 0 : index
    %c0_0 = arith.constant 0 : index
    %c0_1 = arith.constant 0 : index
    %0 = vector.load %arg1[%c0, %c0_0, %c0_1] : memref<1x328x128xf32, #tpu.memory_space<vmem>>, vector<1x328x128xf32>
    %1 = vector.shape_cast %0 : vector<1x328x128xf32> to vector<328x128xf32>
    %c0_2 = arith.constant 0 : index
    %c0_3 = arith.constant 0 : index
    %2 = vector.load %arg2[%c0_2, %c0_3] : memref<328x1xf32, #tpu.memory_space<vmem>>, vector<328x1xf32>
    %cst = arith.constant 0.000000e+00 : f32
    %3 = vector.broadcast %cst : f32 to vector<376x128xf32>
    %c0_4 = arith.constant 0 : index
    %c0_5 = arith.constant 0 : index
    %4 = vector.load %arg8[%c0_4, %c0_5] : memref<376x128xf32, #tpu.memory_space<vmem>>, vector<376x128xf32>
    tpu.vector_store %arg8[%c0_4, %c0_5], %3 {strides = array<i32>} : memref<376x128xf32, #tpu.memory_space<vmem>>, vector<376x128xf32>,
    %c24 = arith.constant 24 : index
    %c0_6 = arith.constant 0 : index
    %5 = vector.load %arg8[%c24, %c0_6] : memref<376x128xf32, #tpu.memory_space<vmem>>, vector<328x128xf32>
    tpu.vector_store %arg8[%c24, %c0_6], %1 {strides = array<i32>} : memref<376x128xf32, #tpu.memory_space<vmem>>, vector<328x128xf32>,
    %cst_7 = arith.constant 0.000000e+00 : f32
    %6 = vector.broadcast %cst_7 : f32 to vector<328x8xf32>
    %c5 = arith.constant 5 : index
    %c0_8 = arith.constant 0 : index
    %7 = vector.load %arg8[%c5, %c0_8] : memref<376x128xf32, #tpu.memory_space<vmem>>, vector<328x16xf32>
    %8 = arith.truncf %7 : vector<328x16xf32> to vector<328x16xbf16>
    %c0_9 = arith.constant 0 : index
    %c0_10 = arith.constant 0 : index
    %c0_11 = arith.constant 0 : index
    %9 = vector.load %arg3[%c0_9, %c0_10, %c0_11] : memref<9x16x8xbf16, #tpu.memory_space<vmem>>, vector<1x16x8xbf16>
    %10 = vector.shape_cast %9 : vector<1x16x8xbf16> to vector<16x8xbf16>
    %cst_12 = arith.constant dense<0.000000e+00> : vector<328x8xf32>
    %11 = tpu.matmul %8, %10, %cst_12 {dimension_numbers = #tpu.dot_dimension_numbers<[1], [0], [0], [1], [0, 0, 1, 1], [], []>} : vector<328x16xbf16>, vector<16x8xbf16>, vector<328x8xf32> -> vector<328x8xf32>
    %12 = arith.addf %6, %11 : vector<328x8xf32>
    %c6 = arith.constant 6 : index
    %c0_13 = arith.constant 0 : index
    %13 = vector.load %arg8[%c6, %c0_13] : memref<376x128xf32, #tpu.memory_space<vmem>>, vector<328x16xf32>
    %14 = arith.truncf %13 : vector<328x16xf32> to vector<328x16xbf16>
    %c1 = arith.constant 1 : index
    %c0_14 = arith.constant 0 : index
    %c0_15 = arith.constant 0 : index
    %15 = vector.load %arg3[%c1, %c0_14, %c0_15] : memref<9x16x8xbf16, #tpu.memory_space<vmem>>, vector<1x16x8xbf16>
    %16 = vector.shape_cast %15 : vector<1x16x8xbf16> to vector<16x8xbf16>
    %cst_16 = arith.constant dense<0.000000e+00> : vector<328x8xf32>
    %17 = tpu.matmul %14, %16, %cst_16 {dimension_numbers = #tpu.dot_dimension_numbers<[1], [0], [0], [1], [0, 0, 1, 1], [], []>} : vector<328x16xbf16>, vector<16x8xbf16>, vector<328x8xf32> -> vector<328x8xf32>
    %18 = arith.addf %12, %17 : vector<328x8xf32>
    %c7 = arith.constant 7 : index
    %c0_17 = arith.constant 0 : index
    %19 = vector.load %arg8[%c7, %c0_17] : memref<376x128xf32, #tpu.memory_space<vmem>>, vector<328x16xf32>
    %20 = arith.truncf %19 : vector<328x16xf32> to vector<328x16xbf16>
    %c2 = arith.constant 2 : index
    %c0_18 = arith.constant 0 : index
    %c0_19 = arith.constant 0 : index
    %21 = vector.load %arg3[%c2, %c0_18, %c0_19] : memref<9x16x8xbf16, #tpu.memory_space<vmem>>, vector<1x16x8xbf16>
    %22 = vector.shape_cast %21 : vector<1x16x8xbf16> to vector<16x8xbf16>
    %cst_20 = arith.constant dense<0.000000e+00> : vector<328x8xf32>
    %23 = tpu.matmul %20, %22, %cst_20 {dimension_numbers = #tpu.dot_dimension_numbers<[1], [0], [0], [1], [0, 0, 1, 1], [], []>} : vector<328x16xbf16>, vector<16x8xbf16>, vector<328x8xf32> -> vector<328x8xf32>
    %24 = arith.addf %18, %23 : vector<328x8xf32>
    %c23 = arith.constant 23 : index
    %c0_21 = arith.constant 0 : index
    %25 = vector.load %arg8[%c23, %c0_21] : memref<376x128xf32, #tpu.memory_space<vmem>>, vector<328x16xf32>
    %26 = arith.truncf %25 : vector<328x16xf32> to vector<328x16xbf16>
    %c3 = arith.constant 3 : index
    %c0_22 = arith.constant 0 : index
    %c0_23 = arith.constant 0 : index
    %27 = vector.load %arg3[%c3, %c0_22, %c0_23] : memref<9x16x8xbf16, #tpu.memory_space<vmem>>, vector<1x16x8xbf16>
    %28 = vector.shape_cast %27 : vector<1x16x8xbf16> to vector<16x8xbf16>
    %cst_24 = arith.constant dense<0.000000e+00> : vector<328x8xf32>
    %29 = tpu.matmul %26, %28, %cst_24 {dimension_numbers = #tpu.dot_dimension_numbers<[1], [0], [0], [1], [0, 0, 1, 1], [], []>} : vector<328x16xbf16>, vector<16x8xbf16>, vector<328x8xf32> -> vector<328x8xf32>
    %30 = arith.addf %24, %29 : vector<328x8xf32>
    %c24_25 = arith.constant 24 : index
    %c0_26 = arith.constant 0 : index
    %31 = vector.load %arg8[%c24_25, %c0_26] : memref<376x128xf32, #tpu.memory_space<vmem>>, vector<328x16xf32>
    %32 = arith.truncf %31 : vector<328x16xf32> to vector<328x16xbf16>
    %c4 = arith.constant 4 : index
    %c0_27 = arith.constant 0 : index
    %c0_28 = arith.constant 0 : index
    %33 = vector.load %arg3[%c4, %c0_27, %c0_28] : memref<9x16x8xbf16, #tpu.memory_space<vmem>>, vector<1x16x8xbf16>
    %34 = vector.shape_cast %33 : vector<1x16x8xbf16> to vector<16x8xbf16>
    %cst_29 = arith.constant dense<0.000000e+00> : vector<328x8xf32>
    %35 = tpu.matmul %32, %34, %cst_29 {dimension_numbers = #tpu.dot_dimension_numbers<[1], [0], [0], [1], [0, 0, 1, 1], [], []>} : vector<328x16xbf16>, vector<16x8xbf16>, vector<328x8xf32> -> vector<328x8xf32>
    %36 = arith.addf %30, %35 : vector<328x8xf32>
    %c25 = arith.constant 25 : index
    %c0_30 = arith.constant 0 : index
    %37 = vector.load %arg8[%c25, %c0_30] : memref<376x128xf32, #tpu.memory_space<vmem>>, vector<328x16xf32>
    %38 = arith.truncf %37 : vector<328x16xf32> to vector<328x16xbf16>
    %c5_31 = arith.constant 5 : index
    %c0_32 = arith.constant 0 : index
    %c0_33 = arith.constant 0 : index
    %39 = vector.load %arg3[%c5_31, %c0_32, %c0_33] : memref<9x16x8xbf16, #tpu.memory_space<vmem>>, vector<1x16x8xbf16>
    %40 = vector.shape_cast %39 : vector<1x16x8xbf16> to vector<16x8xbf16>
    %cst_34 = arith.constant dense<0.000000e+00> : vector<328x8xf32>
    %41 = tpu.matmul %38, %40, %cst_34 {dimension_numbers = #tpu.dot_dimension_numbers<[1], [0], [0], [1], [0, 0, 1, 1], [], []>} : vector<328x16xbf16>, vector<16x8xbf16>, vector<328x8xf32> -> vector<328x8xf32>
    %42 = arith.addf %36, %41 : vector<328x8xf32>
    %c41 = arith.constant 41 : index
    %c0_35 = arith.constant 0 : index
    %43 = vector.load %arg8[%c41, %c0_35] : memref<376x128xf32, #tpu.memory_space<vmem>>, vector<328x16xf32>
    %44 = arith.truncf %43 : vector<328x16xf32> to vector<328x16xbf16>
    %c6_36 = arith.constant 6 : index
    %c0_37 = arith.constant 0 : index
    %c0_38 = arith.constant 0 : index
    %45 = vector.load %arg3[%c6_36, %c0_37, %c0_38] : memref<9x16x8xbf16, #tpu.memory_space<vmem>>, vector<1x16x8xbf16>
    %46 = vector.shape_cast %45 : vector<1x16x8xbf16> to vector<16x8xbf16>
    %cst_39 = arith.constant dense<0.000000e+00> : vector<328x8xf32>
    %47 = tpu.matmul %44, %46, %cst_39 {dimension_numbers = #tpu.dot_dimension_numbers<[1], [0], [0], [1], [0, 0, 1, 1], [], []>} : vector<328x16xbf16>, vector<16x8xbf16>, vector<328x8xf32> -> vector<328x8xf32>
    %48 = arith.addf %42, %47 : vector<328x8xf32>
    %c42 = arith.constant 42 : index
    %c0_40 = arith.constant 0 : index
    %49 = vector.load %arg8[%c42, %c0_40] : memref<376x128xf32, #tpu.memory_space<vmem>>, vector<328x16xf32>
    %50 = arith.truncf %49 : vector<328x16xf32> to vector<328x16xbf16>
    %c7_41 = arith.constant 7 : index
    %c0_42 = arith.constant 0 : index
    %c0_43 = arith.constant 0 : index
    %51 = vector.load %arg3[%c7_41, %c0_42, %c0_43] : memref<9x16x8xbf16, #tpu.memory_space<vmem>>, vector<1x16x8xbf16>
    %52 = vector.shape_cast %51 : vector<1x16x8xbf16> to vector<16x8xbf16>
    %cst_44 = arith.constant dense<0.000000e+00> : vector<328x8xf32>
    %53 = tpu.matmul %50, %52, %cst_44 {dimension_numbers = #tpu.dot_dimension_numbers<[1], [0], [0], [1], [0, 0, 1, 1], [], []>} : vector<328x16xbf16>, vector<16x8xbf16>, vector<328x8xf32> -> vector<328x8xf32>
    %54 = arith.addf %48, %53 : vector<328x8xf32>
    %c43 = arith.constant 43 : index
    %c0_45 = arith.constant 0 : index
    %55 = vector.load %arg8[%c43, %c0_45] : memref<376x128xf32, #tpu.memory_space<vmem>>, vector<328x16xf32>
    %56 = arith.truncf %55 : vector<328x16xf32> to vector<328x16xbf16>
    %c8 = arith.constant 8 : index
    %c0_46 = arith.constant 0 : index
    %c0_47 = arith.constant 0 : index
    %57 = vector.load %arg3[%c8, %c0_46, %c0_47] : memref<9x16x8xbf16, #tpu.memory_space<vmem>>, vector<1x16x8xbf16>
    %58 = vector.shape_cast %57 : vector<1x16x8xbf16> to vector<16x8xbf16>
    %cst_48 = arith.constant dense<0.000000e+00> : vector<328x8xf32>
    %59 = tpu.matmul %56, %58, %cst_48 {dimension_numbers = #tpu.dot_dimension_numbers<[1], [0], [0], [1], [0, 0, 1, 1], [], []>} : vector<328x16xbf16>, vector<16x8xbf16>, vector<328x8xf32> -> vector<328x8xf32>
    %60 = arith.addf %54, %59 : vector<328x8xf32>
    %cst_49 = arith.constant 0.000000e+00 : f32
    %61 = vector.broadcast %cst_49 : f32 to vector<328x8xf32>
    %62 = arith.maximumf %60, %61 : vector<328x8xf32>
    %63 = vector.broadcast %2 : vector<328x1xf32> to vector<328x8xf32>
    %64 = arith.mulf %62, %63 : vector<328x8xf32>
    %c24_50 = arith.constant 24 : index
    %c16 = arith.constant 16 : index
    %65 = vector.load %arg8[%c24_50, %c16] : memref<376x128xf32, #tpu.memory_space<vmem>>, vector<328x8xf32>
    tpu.vector_store %arg8[%c24_50, %c16], %64 {strides = array<i32>} : memref<376x128xf32, #tpu.memory_space<vmem>>, vector<328x8xf32>,
    %cst_51 = arith.constant 0.000000e+00 : f32
    %66 = vector.broadcast %cst_51 : f32 to vector<328x8xf32>
    %c5_52 = arith.constant 5 : index
    %c0_53 = arith.constant 0 : index
    %67 = vector.load %arg8[%c5_52, %c0_53] : memref<376x128xf32, #tpu.memory_space<vmem>>, vector<328x24xf32>
    %68 = arith.truncf %67 : vector<328x24xf32> to vector<328x24xbf16>
    %c0_54 = arith.constant 0 : index
    %c0_55 = arith.constant 0 : index
    %c0_56 = arith.constant 0 : index
    %69 = vector.load %arg4[%c0_54, %c0_55, %c0_56] : memref<9x24x8xbf16, #tpu.memory_space<vmem>>, vector<1x24x8xbf16>
    %70 = vector.shape_cast %69 : vector<1x24x8xbf16> to vector<24x8xbf16>
    %cst_57 = arith.constant dense<0.000000e+00> : vector<328x8xf32>
    %71 = tpu.matmul %68, %70, %cst_57 {dimension_numbers = #tpu.dot_dimension_numbers<[1], [0], [0], [1], [0, 0, 1, 1], [], []>} : vector<328x24xbf16>, vector<24x8xbf16>, vector<328x8xf32> -> vector<328x8xf32>
    %72 = arith.addf %66, %71 : vector<328x8xf32>
    %c6_58 = arith.constant 6 : index
    %c0_59 = arith.constant 0 : index
    %73 = vector.load %arg8[%c6_58, %c0_59] : memref<376x128xf32, #tpu.memory_space<vmem>>, vector<328x24xf32>
    %74 = arith.truncf %73 : vector<328x24xf32> to vector<328x24xbf16>
    %c1_60 = arith.constant 1 : index
    %c0_61 = arith.constant 0 : index
    %c0_62 = arith.constant 0 : index
    %75 = vector.load %arg4[%c1_60, %c0_61, %c0_62] : memref<9x24x8xbf16, #tpu.memory_space<vmem>>, vector<1x24x8xbf16>
    %76 = vector.shape_cast %75 : vector<1x24x8xbf16> to vector<24x8xbf16>
    %cst_63 = arith.constant dense<0.000000e+00> : vector<328x8xf32>
    %77 = tpu.matmul %74, %76, %cst_63 {dimension_numbers = #tpu.dot_dimension_numbers<[1], [0], [0], [1], [0, 0, 1, 1], [], []>} : vector<328x24xbf16>, vector<24x8xbf16>, vector<328x8xf32> -> vector<328x8xf32>
    %78 = arith.addf %72, %77 : vector<328x8xf32>
    %c7_64 = arith.constant 7 : index
    %c0_65 = arith.constant 0 : index
    %79 = vector.load %arg8[%c7_64, %c0_65] : memref<376x128xf32, #tpu.memory_space<vmem>>, vector<328x24xf32>
    %80 = arith.truncf %79 : vector<328x24xf32> to vector<328x24xbf16>
    %c2_66 = arith.constant 2 : index
    %c0_67 = arith.constant 0 : index
    %c0_68 = arith.constant 0 : index
    %81 = vector.load %arg4[%c2_66, %c0_67, %c0_68] : memref<9x24x8xbf16, #tpu.memory_space<vmem>>, vector<1x24x8xbf16>
    %82 = vector.shape_cast %81 : vector<1x24x8xbf16> to vector<24x8xbf16>
    %cst_69 = arith.constant dense<0.000000e+00> : vector<328x8xf32>
    %83 = tpu.matmul %80, %82, %cst_69 {dimension_numbers = #tpu.dot_dimension_numbers<[1], [0], [0], [1], [0, 0, 1, 1], [], []>} : vector<328x24xbf16>, vector<24x8xbf16>, vector<328x8xf32> -> vector<328x8xf32>
    %84 = arith.addf %78, %83 : vector<328x8xf32>
    %c23_70 = arith.constant 23 : index
    %c0_71 = arith.constant 0 : index
    %85 = vector.load %arg8[%c23_70, %c0_71] : memref<376x128xf32, #tpu.memory_space<vmem>>, vector<328x24xf32>
    %86 = arith.truncf %85 : vector<328x24xf32> to vector<328x24xbf16>
    %c3_72 = arith.constant 3 : index
    %c0_73 = arith.constant 0 : index
    %c0_74 = arith.constant 0 : index
    %87 = vector.load %arg4[%c3_72, %c0_73, %c0_74] : memref<9x24x8xbf16, #tpu.memory_space<vmem>>, vector<1x24x8xbf16>
    %88 = vector.shape_cast %87 : vector<1x24x8xbf16> to vector<24x8xbf16>
    %cst_75 = arith.constant dense<0.000000e+00> : vector<328x8xf32>
    %89 = tpu.matmul %86, %88, %cst_75 {dimension_numbers = #tpu.dot_dimension_numbers<[1], [0], [0], [1], [0, 0, 1, 1], [], []>} : vector<328x24xbf16>, vector<24x8xbf16>, vector<328x8xf32> -> vector<328x8xf32>
    %90 = arith.addf %84, %89 : vector<328x8xf32>
    %c24_76 = arith.constant 24 : index
    %c0_77 = arith.constant 0 : index
    %91 = vector.load %arg8[%c24_76, %c0_77] : memref<376x128xf32, #tpu.memory_space<vmem>>, vector<328x24xf32>
    %92 = arith.truncf %91 : vector<328x24xf32> to vector<328x24xbf16>
    %c4_78 = arith.constant 4 : index
    %c0_79 = arith.constant 0 : index
    %c0_80 = arith.constant 0 : index
    %93 = vector.load %arg4[%c4_78, %c0_79, %c0_80] : memref<9x24x8xbf16, #tpu.memory_space<vmem>>, vector<1x24x8xbf16>
    %94 = vector.shape_cast %93 : vector<1x24x8xbf16> to vector<24x8xbf16>
    %cst_81 = arith.constant dense<0.000000e+00> : vector<328x8xf32>
    %95 = tpu.matmul %92, %94, %cst_81 {dimension_numbers = #tpu.dot_dimension_numbers<[1], [0], [0], [1], [0, 0, 1, 1], [], []>} : vector<328x24xbf16>, vector<24x8xbf16>, vector<328x8xf32> -> vector<328x8xf32>
    %96 = arith.addf %90, %95 : vector<328x8xf32>
    %c25_82 = arith.constant 25 : index
    %c0_83 = arith.constant 0 : index
    %97 = vector.load %arg8[%c25_82, %c0_83] : memref<376x128xf32, #tpu.memory_space<vmem>>, vector<328x24xf32>
    %98 = arith.truncf %97 : vector<328x24xf32> to vector<328x24xbf16>
    %c5_84 = arith.constant 5 : index
    %c0_85 = arith.constant 0 : index
    %c0_86 = arith.constant 0 : index
    %99 = vector.load %arg4[%c5_84, %c0_85, %c0_86] : memref<9x24x8xbf16, #tpu.memory_space<vmem>>, vector<1x24x8xbf16>
    %100 = vector.shape_cast %99 : vector<1x24x8xbf16> to vector<24x8xbf16>
    %cst_87 = arith.constant dense<0.000000e+00> : vector<328x8xf32>
    %101 = tpu.matmul %98, %100, %cst_87 {dimension_numbers = #tpu.dot_dimension_numbers<[1], [0], [0], [1], [0, 0, 1, 1], [], []>} : vector<328x24xbf16>, vector<24x8xbf16>, vector<328x8xf32> -> vector<328x8xf32>
    %102 = arith.addf %96, %101 : vector<328x8xf32>
    %c41_88 = arith.constant 41 : index
    %c0_89 = arith.constant 0 : index
    %103 = vector.load %arg8[%c41_88, %c0_89] : memref<376x128xf32, #tpu.memory_space<vmem>>, vector<328x24xf32>
    %104 = arith.truncf %103 : vector<328x24xf32> to vector<328x24xbf16>
    %c6_90 = arith.constant 6 : index
    %c0_91 = arith.constant 0 : index
    %c0_92 = arith.constant 0 : index
    %105 = vector.load %arg4[%c6_90, %c0_91, %c0_92] : memref<9x24x8xbf16, #tpu.memory_space<vmem>>, vector<1x24x8xbf16>
    %106 = vector.shape_cast %105 : vector<1x24x8xbf16> to vector<24x8xbf16>
    %cst_93 = arith.constant dense<0.000000e+00> : vector<328x8xf32>
    %107 = tpu.matmul %104, %106, %cst_93 {dimension_numbers = #tpu.dot_dimension_numbers<[1], [0], [0], [1], [0, 0, 1, 1], [], []>} : vector<328x24xbf16>, vector<24x8xbf16>, vector<328x8xf32> -> vector<328x8xf32>
    %108 = arith.addf %102, %107 : vector<328x8xf32>
    %c42_94 = arith.constant 42 : index
    %c0_95 = arith.constant 0 : index
    %109 = vector.load %arg8[%c42_94, %c0_95] : memref<376x128xf32, #tpu.memory_space<vmem>>, vector<328x24xf32>
    %110 = arith.truncf %109 : vector<328x24xf32> to vector<328x24xbf16>
    %c7_96 = arith.constant 7 : index
    %c0_97 = arith.constant 0 : index
    %c0_98 = arith.constant 0 : index
    %111 = vector.load %arg4[%c7_96, %c0_97, %c0_98] : memref<9x24x8xbf16, #tpu.memory_space<vmem>>, vector<1x24x8xbf16>
    %112 = vector.shape_cast %111 : vector<1x24x8xbf16> to vector<24x8xbf16>
    %cst_99 = arith.constant dense<0.000000e+00> : vector<328x8xf32>
    %113 = tpu.matmul %110, %112, %cst_99 {dimension_numbers = #tpu.dot_dimension_numbers<[1], [0], [0], [1], [0, 0, 1, 1], [], []>} : vector<328x24xbf16>, vector<24x8xbf16>, vector<328x8xf32> -> vector<328x8xf32>
    %114 = arith.addf %108, %113 : vector<328x8xf32>
    %c43_100 = arith.constant 43 : index
    %c0_101 = arith.constant 0 : index
    %115 = vector.load %arg8[%c43_100, %c0_101] : memref<376x128xf32, #tpu.memory_space<vmem>>, vector<328x24xf32>
    %116 = arith.truncf %115 : vector<328x24xf32> to vector<328x24xbf16>
    %c8_102 = arith.constant 8 : index
    %c0_103 = arith.constant 0 : index
    %c0_104 = arith.constant 0 : index
    %117 = vector.load %arg4[%c8_102, %c0_103, %c0_104] : memref<9x24x8xbf16, #tpu.memory_space<vmem>>, vector<1x24x8xbf16>
    %118 = vector.shape_cast %117 : vector<1x24x8xbf16> to vector<24x8xbf16>
    %cst_105 = arith.constant dense<0.000000e+00> : vector<328x8xf32>
    %119 = tpu.matmul %116, %118, %cst_105 {dimension_numbers = #tpu.dot_dimension_numbers<[1], [0], [0], [1], [0, 0, 1, 1], [], []>} : vector<328x24xbf16>, vector<24x8xbf16>, vector<328x8xf32> -> vector<328x8xf32>
    %120 = arith.addf %114, %119 : vector<328x8xf32>
    %cst_106 = arith.constant 0.000000e+00 : f32
    %121 = vector.broadcast %cst_106 : f32 to vector<328x8xf32>
    %122 = arith.maximumf %120, %121 : vector<328x8xf32>
    %123 = vector.broadcast %2 : vector<328x1xf32> to vector<328x8xf32>
    %124 = arith.mulf %122, %123 : vector<328x8xf32>
    %c24_107 = arith.constant 24 : index
    %c24_108 = arith.constant 24 : index
    %125 = vector.load %arg8[%c24_107, %c24_108] : memref<376x128xf32, #tpu.memory_space<vmem>>, vector<328x8xf32>
    tpu.vector_store %arg8[%c24_107, %c24_108], %124 {strides = array<i32>} : memref<376x128xf32, #tpu.memory_space<vmem>>, vector<328x8xf32>,
    %cst_109 = arith.constant 0.000000e+00 : f32
    %126 = vector.broadcast %cst_109 : f32 to vector<328x8xf32>
    %c5_110 = arith.constant 5 : index
    %c0_111 = arith.constant 0 : index
    %127 = vector.load %arg8[%c5_110, %c0_111] : memref<376x128xf32, #tpu.memory_space<vmem>>, vector<328x32xf32>
    %128 = arith.truncf %127 : vector<328x32xf32> to vector<328x32xbf16>
    %c0_112 = arith.constant 0 : index
    %c0_113 = arith.constant 0 : index
    %c0_114 = arith.constant 0 : index
    %129 = vector.load %arg5[%c0_112, %c0_113, %c0_114] : memref<9x32x8xbf16, #tpu.memory_space<vmem>>, vector<1x32x8xbf16>
    %130 = vector.shape_cast %129 : vector<1x32x8xbf16> to vector<32x8xbf16>
    %cst_115 = arith.constant dense<0.000000e+00> : vector<328x8xf32>
    %131 = tpu.matmul %128, %130, %cst_115 {dimension_numbers = #tpu.dot_dimension_numbers<[1], [0], [0], [1], [0, 0, 1, 1], [], []>} : vector<328x32xbf16>, vector<32x8xbf16>, vector<328x8xf32> -> vector<328x8xf32>
    %132 = arith.addf %126, %131 : vector<328x8xf32>
    %c6_116 = arith.constant 6 : index
    %c0_117 = arith.constant 0 : index
    %133 = vector.load %arg8[%c6_116, %c0_117] : memref<376x128xf32, #tpu.memory_space<vmem>>, vector<328x32xf32>
    %134 = arith.truncf %133 : vector<328x32xf32> to vector<328x32xbf16>
    %c1_118 = arith.constant 1 : index
    %c0_119 = arith.constant 0 : index
    %c0_120 = arith.constant 0 : index
    %135 = vector.load %arg5[%c1_118, %c0_119, %c0_120] : memref<9x32x8xbf16, #tpu.memory_space<vmem>>, vector<1x32x8xbf16>
    %136 = vector.shape_cast %135 : vector<1x32x8xbf16> to vector<32x8xbf16>
    %cst_121 = arith.constant dense<0.000000e+00> : vector<328x8xf32>
    %137 = tpu.matmul %134, %136, %cst_121 {dimension_numbers = #tpu.dot_dimension_numbers<[1], [0], [0], [1], [0, 0, 1, 1], [], []>} : vector<328x32xbf16>, vector<32x8xbf16>, vector<328x8xf32> -> vector<328x8xf32>
    %138 = arith.addf %132, %137 : vector<328x8xf32>
    %c7_122 = arith.constant 7 : index
    %c0_123 = arith.constant 0 : index
    %139 = vector.load %arg8[%c7_122, %c0_123] : memref<376x128xf32, #tpu.memory_space<vmem>>, vector<328x32xf32>
    %140 = arith.truncf %139 : vector<328x32xf32> to vector<328x32xbf16>
    %c2_124 = arith.constant 2 : index
    %c0_125 = arith.constant 0 : index
    %c0_126 = arith.constant 0 : index
    %141 = vector.load %arg5[%c2_124, %c0_125, %c0_126] : memref<9x32x8xbf16, #tpu.memory_space<vmem>>, vector<1x32x8xbf16>
    %142 = vector.shape_cast %141 : vector<1x32x8xbf16> to vector<32x8xbf16>
    %cst_127 = arith.constant dense<0.000000e+00> : vector<328x8xf32>
    %143 = tpu.matmul %140, %142, %cst_127 {dimension_numbers = #tpu.dot_dimension_numbers<[1], [0], [0], [1], [0, 0, 1, 1], [], []>} : vector<328x32xbf16>, vector<32x8xbf16>, vector<328x8xf32> -> vector<328x8xf32>
    %144 = arith.addf %138, %143 : vector<328x8xf32>
    %c23_128 = arith.constant 23 : index
    %c0_129 = arith.constant 0 : index
    %145 = vector.load %arg8[%c23_128, %c0_129] : memref<376x128xf32, #tpu.memory_space<vmem>>, vector<328x32xf32>
    %146 = arith.truncf %145 : vector<328x32xf32> to vector<328x32xbf16>
    %c3_130 = arith.constant 3 : index
    %c0_131 = arith.constant 0 : index
    %c0_132 = arith.constant 0 : index
    %147 = vector.load %arg5[%c3_130, %c0_131, %c0_132] : memref<9x32x8xbf16, #tpu.memory_space<vmem>>, vector<1x32x8xbf16>
    %148 = vector.shape_cast %147 : vector<1x32x8xbf16> to vector<32x8xbf16>
    %cst_133 = arith.constant dense<0.000000e+00> : vector<328x8xf32>
    %149 = tpu.matmul %146, %148, %cst_133 {dimension_numbers = #tpu.dot_dimension_numbers<[1], [0], [0], [1], [0, 0, 1, 1], [], []>} : vector<328x32xbf16>, vector<32x8xbf16>, vector<328x8xf32> -> vector<328x8xf32>
    %150 = arith.addf %144, %149 : vector<328x8xf32>
    %c24_134 = arith.constant 24 : index
    %c0_135 = arith.constant 0 : index
    %151 = vector.load %arg8[%c24_134, %c0_135] : memref<376x128xf32, #tpu.memory_space<vmem>>, vector<328x32xf32>
    %152 = arith.truncf %151 : vector<328x32xf32> to vector<328x32xbf16>
    %c4_136 = arith.constant 4 : index
    %c0_137 = arith.constant 0 : index
    %c0_138 = arith.constant 0 : index
    %153 = vector.load %arg5[%c4_136, %c0_137, %c0_138] : memref<9x32x8xbf16, #tpu.memory_space<vmem>>, vector<1x32x8xbf16>
    %154 = vector.shape_cast %153 : vector<1x32x8xbf16> to vector<32x8xbf16>
    %cst_139 = arith.constant dense<0.000000e+00> : vector<328x8xf32>
    %155 = tpu.matmul %152, %154, %cst_139 {dimension_numbers = #tpu.dot_dimension_numbers<[1], [0], [0], [1], [0, 0, 1, 1], [], []>} : vector<328x32xbf16>, vector<32x8xbf16>, vector<328x8xf32> -> vector<328x8xf32>
    %156 = arith.addf %150, %155 : vector<328x8xf32>
    %c25_140 = arith.constant 25 : index
    %c0_141 = arith.constant 0 : index
    %157 = vector.load %arg8[%c25_140, %c0_141] : memref<376x128xf32, #tpu.memory_space<vmem>>, vector<328x32xf32>
    %158 = arith.truncf %157 : vector<328x32xf32> to vector<328x32xbf16>
    %c5_142 = arith.constant 5 : index
    %c0_143 = arith.constant 0 : index
    %c0_144 = arith.constant 0 : index
    %159 = vector.load %arg5[%c5_142, %c0_143, %c0_144] : memref<9x32x8xbf16, #tpu.memory_space<vmem>>, vector<1x32x8xbf16>
    %160 = vector.shape_cast %159 : vector<1x32x8xbf16> to vector<32x8xbf16>
    %cst_145 = arith.constant dense<0.000000e+00> : vector<328x8xf32>
    %161 = tpu.matmul %158, %160, %cst_145 {dimension_numbers = #tpu.dot_dimension_numbers<[1], [0], [0], [1], [0, 0, 1, 1], [], []>} : vector<328x32xbf16>, vector<32x8xbf16>, vector<328x8xf32> -> vector<328x8xf32>
    %162 = arith.addf %156, %161 : vector<328x8xf32>
    %c41_146 = arith.constant 41 : index
    %c0_147 = arith.constant 0 : index
    %163 = vector.load %arg8[%c41_146, %c0_147] : memref<376x128xf32, #tpu.memory_space<vmem>>, vector<328x32xf32>
    %164 = arith.truncf %163 : vector<328x32xf32> to vector<328x32xbf16>
    %c6_148 = arith.constant 6 : index
    %c0_149 = arith.constant 0 : index
    %c0_150 = arith.constant 0 : index
    %165 = vector.load %arg5[%c6_148, %c0_149, %c0_150] : memref<9x32x8xbf16, #tpu.memory_space<vmem>>, vector<1x32x8xbf16>
    %166 = vector.shape_cast %165 : vector<1x32x8xbf16> to vector<32x8xbf16>
    %cst_151 = arith.constant dense<0.000000e+00> : vector<328x8xf32>
    %167 = tpu.matmul %164, %166, %cst_151 {dimension_numbers = #tpu.dot_dimension_numbers<[1], [0], [0], [1], [0, 0, 1, 1], [], []>} : vector<328x32xbf16>, vector<32x8xbf16>, vector<328x8xf32> -> vector<328x8xf32>
    %168 = arith.addf %162, %167 : vector<328x8xf32>
    %c42_152 = arith.constant 42 : index
    %c0_153 = arith.constant 0 : index
    %169 = vector.load %arg8[%c42_152, %c0_153] : memref<376x128xf32, #tpu.memory_space<vmem>>, vector<328x32xf32>
    %170 = arith.truncf %169 : vector<328x32xf32> to vector<328x32xbf16>
    %c7_154 = arith.constant 7 : index
    %c0_155 = arith.constant 0 : index
    %c0_156 = arith.constant 0 : index
    %171 = vector.load %arg5[%c7_154, %c0_155, %c0_156] : memref<9x32x8xbf16, #tpu.memory_space<vmem>>, vector<1x32x8xbf16>
    %172 = vector.shape_cast %171 : vector<1x32x8xbf16> to vector<32x8xbf16>
    %cst_157 = arith.constant dense<0.000000e+00> : vector<328x8xf32>
    %173 = tpu.matmul %170, %172, %cst_157 {dimension_numbers = #tpu.dot_dimension_numbers<[1], [0], [0], [1], [0, 0, 1, 1], [], []>} : vector<328x32xbf16>, vector<32x8xbf16>, vector<328x8xf32> -> vector<328x8xf32>
    %174 = arith.addf %168, %173 : vector<328x8xf32>
    %c43_158 = arith.constant 43 : index
    %c0_159 = arith.constant 0 : index
    %175 = vector.load %arg8[%c43_158, %c0_159] : memref<376x128xf32, #tpu.memory_space<vmem>>, vector<328x32xf32>
    %176 = arith.truncf %175 : vector<328x32xf32> to vector<328x32xbf16>
    %c8_160 = arith.constant 8 : index
    %c0_161 = arith.constant 0 : index
    %c0_162 = arith.constant 0 : index
    %177 = vector.load %arg5[%c8_160, %c0_161, %c0_162] : memref<9x32x8xbf16, #tpu.memory_space<vmem>>, vector<1x32x8xbf16>
    %178 = vector.shape_cast %177 : vector<1x32x8xbf16> to vector<32x8xbf16>
    %cst_163 = arith.constant dense<0.000000e+00> : vector<328x8xf32>
    %179 = tpu.matmul %176, %178, %cst_163 {dimension_numbers = #tpu.dot_dimension_numbers<[1], [0], [0], [1], [0, 0, 1, 1], [], []>} : vector<328x32xbf16>, vector<32x8xbf16>, vector<328x8xf32> -> vector<328x8xf32>
    %180 = arith.addf %174, %179 : vector<328x8xf32>
    %cst_164 = arith.constant 0.000000e+00 : f32
    %181 = vector.broadcast %cst_164 : f32 to vector<328x8xf32>
    %182 = arith.maximumf %180, %181 : vector<328x8xf32>
    %183 = vector.broadcast %2 : vector<328x1xf32> to vector<328x8xf32>
    %184 = arith.mulf %182, %183 : vector<328x8xf32>
    %c24_165 = arith.constant 24 : index
    %c32 = arith.constant 32 : index
    %185 = vector.load %arg8[%c24_165, %c32] : memref<376x128xf32, #tpu.memory_space<vmem>>, vector<328x8xf32>
    tpu.vector_store %arg8[%c24_165, %c32], %184 {strides = array<i32>} : memref<376x128xf32, #tpu.memory_space<vmem>>, vector<328x8xf32>,
    %c24_166 = arith.constant 24 : index
    %c0_167 = arith.constant 0 : index
    %186 = vector.load %arg8[%c24_166, %c0_167] : memref<376x128xf32, #tpu.memory_space<vmem>>, vector<328x40xf32>
    %187 = arith.truncf %186 : vector<328x40xf32> to vector<328x40xbf16>
    %c0_168 = arith.constant 0 : index
    %c0_169 = arith.constant 0 : index
    %188 = vector.load %arg6[%c0_168, %c0_169] : memref<40x128xbf16, #tpu.memory_space<vmem>>, vector<40x128xbf16>
    %cst_170 = arith.constant dense<0.000000e+00> : vector<328x128xf32>
    %189 = tpu.matmul %187, %188, %cst_170 {dimension_numbers = #tpu.dot_dimension_numbers<[1], [0], [0], [1], [0, 0, 1, 1], [], []>} : vector<328x40xbf16>, vector<40x128xbf16>, vector<328x128xf32> -> vector<328x128xf32>
    %190 = arith.addf %189, %1 : vector<328x128xf32>
    %c0_171 = arith.constant 0 : index
    %c0_172 = arith.constant 0 : index
    %c0_173 = arith.constant 0 : index
    %191 = vector.load %arg7[%c0_171, %c0_172, %c0_173] : memref<1x328x128xf32, #tpu.memory_space<vmem>>, vector<1x328x128xf32>
    %192 = vector.shape_cast %191 : vector<1x328x128xf32> to vector<328x128xf32>
    %193 = vector.shape_cast %190 : vector<328x128xf32> to vector<1x328x128xf32>
    tpu.vector_store %arg7[%c0_171, %c0_172, %c0_173], %193 {strides = array<i32>} : memref<1x328x128xf32, #tpu.memory_space<vmem>>, vector<1x328x128xf32>,
    return
  }
  func.func @transform_0(%arg0: i32) -> (i32, i32, i32) {
    %c0_i32 = arith.constant 0 : i32
    %c0_i32_0 = arith.constant 0 : i32
    %c0_i32_1 = arith.constant 0 : i32
    return %arg0, %c0_i32, %c0_i32_0 : i32, i32, i32
  }
  func.func @transform_1(%arg0: i32) -> (i32, i32) {
    %c0_i32 = arith.constant 0 : i32
    %c0_i32_0 = arith.constant 0 : i32
    %c0_i32_1 = arith.constant 0 : i32
    return %c0_i32, %c0_i32_0 : i32, i32
  }
  func.func @transform_2(%arg0: i32) -> (i32, i32, i32) {
    %c0_i32 = arith.constant 0 : i32
    %c0_i32_0 = arith.constant 0 : i32
    %c0_i32_1 = arith.constant 0 : i32
    %c0_i32_2 = arith.constant 0 : i32
    return %c0_i32, %c0_i32_0, %c0_i32_1 : i32, i32, i32
  }
  func.func @transform_3(%arg0: i32) -> (i32, i32, i32) {
    %c0_i32 = arith.constant 0 : i32
    %c0_i32_0 = arith.constant 0 : i32
    %c0_i32_1 = arith.constant 0 : i32
    %c0_i32_2 = arith.constant 0 : i32
    return %c0_i32, %c0_i32_0, %c0_i32_1 : i32, i32, i32
  }
  func.func @transform_4(%arg0: i32) -> (i32, i32, i32) {
    %c0_i32 = arith.constant 0 : i32
    %c0_i32_0 = arith.constant 0 : i32
    %c0_i32_1 = arith.constant 0 : i32
    %c0_i32_2 = arith.constant 0 : i32
    return %c0_i32, %c0_i32_0, %c0_i32_1 : i32, i32, i32
  }
  func.func @transform_5(%arg0: i32) -> (i32, i32) {
    %c0_i32 = arith.constant 0 : i32
    %c0_i32_0 = arith.constant 0 : i32
    %c0_i32_1 = arith.constant 0 : i32
    return %c0_i32, %c0_i32_0 : i32, i32
  }
  func.func @transform_6(%arg0: i32) -> (i32, i32, i32) {
    %c0_i32 = arith.constant 0 : i32
    %c0_i32_0 = arith.constant 0 : i32
    %c0_i32_1 = arith.constant 0 : i32
    return %arg0, %c0_i32, %c0_i32_0 : i32, i32, i32
  }
}

</mosaic_0001>

<llo_original>
// kernel: rdb_forward.1
$region0: #{rdb_forward.1}
  #allocation0 [shape = 'u32[]', space=smem, size = 0x4, offset = 0x4, fixed_abs, tag = 'smem constant byte address 0x4 - core index']
  #allocation1 [shape = 'u32[144,128]{1,0:T(1,128)}', space=vmem, size = 0x12000, scoped, tag = 'internal scratch']
  #allocation2 [shape = 'f32[376,128]{1,0:T(8,128)}', space=vmem, size = 0x2f000, scoped, tag = 'scratch operand']
  %s0 = inlined_call_operand.vmem [shape: f32[2,328,128], index: 0, kind: input, shape index: {}]
  %s1 = inlined_call_operand.vmem [shape: f32[328,1], index: 1, kind: input, shape index: {}]
  %s2 = inlined_call_operand.vmem [shape: bf16[9,16,8], index: 2, kind: input, shape index: {}]
  %s3 = inlined_call_operand.vmem [shape: bf16[9,24,8], index: 3, kind: input, shape index: {}]
  %s4 = inlined_call_operand.vmem [shape: bf16[9,32,8], index: 4, kind: input, shape index: {}]
  %s5 = inlined_call_operand.vmem [shape: bf16[40,128], index: 5, kind: input, shape index: {}]
  %s6 = inlined_call_operand.vmem [shape: f32[2,328,128], index: 6, kind: output, shape index: {}]
  %s7 = sld [smem:[#allocation0]]
  $region57: #{rdb_forward.1} parent=0
    _
  %s9 = ssub.s32 1, %s7
  %s10 = scalar_select 0, %s9, %s7
  loop: start=0, step=1, limit=4
  $region2: #{rdb_forward.1} parent=0 // loop_pre_header
    _
  $region3: #{rdb_forward.1} parent=0 // loop_header
    %s12 = sphi 0, %s16
    %p13 = scmp.ge.s32.totalorder %s12, 4
    %s22 = sphi 0, %s24
    %s25 = sphi 0, %s22
    %s26 = sphi 0, %s25
    %s42 = sphi 0, %s26
    %s46 = sphi 0, %s46
    %s48 = sphi 0, %s46
    %s49 = sphi 0, %s48
    %s63 = sphi 0, %s49
    %s67 = sphi 0, %s67
    %s69 = sphi 0, %s67
    %s70 = sphi 0, %s69
    %s84 = sphi 0, %s70
    %s88 = sphi 0, %s88
    %s90 = sphi 0, %s88
    %s91 = sphi 0, %s90
    %s105 = sphi 0, %s91
    %s109 = sphi 0, %s109
    %s111 = sphi 0, %s109
    %s112 = sphi 0, %s111
    %s126 = sphi 0, %s112
    %s130 = sphi 0, %s130
    %s132 = sphi 0, %s130
    %s133 = sphi 0, %s132
    %s147 = sphi 0, %s133
    %s153 = sphi 0, %s155
    %s156 = sphi 0, %s153
    %s157 = sphi 0, %s156
    %s173 = sphi 0, %s157
  $region4: #{rdb_forward.1} parent=0 // loop_header_branch
    %15 = sbr.rel (%p13) target = $region8
  $region5: #{rdb_forward.1} parent=0 // loop_body
    %s17 = ssub.s32 %s12, 1
    %s18 = ssub.s32 %s12, 2
    %s19 = sadd.s32 %s12, 1
    %s20 = ssub.s32 %s12, %s19
    %p21 = scmp.eq.s32.totalorder %s20, 0
    %s23 = sadd.s32 %s22, 1
    %s24 = scalar_select %p21, %s22, %s23
    %p27 = pneg %p21
    %p28 = scmp.eq.s32.totalorder %s12, 1
    %p29 = por %p27, %p28
    %p30 = scmp.ne.s32.totalorder %s22, %s25
    %p31 = scmp.eq.s32.totalorder %s12, 0
    %p32 = por %p30, %p31
    %p33 = scmp.ne.s32.totalorder %s22, %s25
    %p34 = scmp.eq.s32.totalorder %s17, 1
    %p35 = por %p33, %p34
    %p36 = scmp.ne.s32.totalorder %s25, %s26
    %p37 = scmp.eq.s32.totalorder %s17, 0
    %p38 = por %p36, %p37
    %p39 = scmp.ne.s32.totalorder %s25, %s26
    %p40 = scmp.eq.s32.totalorder %s18, 1
    %p41 = por %p39, %p40
    %p43 = scmp.ne.s32.totalorder %s26, %s42
    %p44 = scmp.eq.s32.totalorder %s18, 0
    %p45 = por %p43, %p44
    %s47 = sadd.s32 %s46, 1
    %p50 = scmp.eq.s32.totalorder %s12, 1
    %p51 = scmp.ne.s32.totalorder %s46, %s48
    %p52 = scmp.eq.s32.totalorder %s12, 0
    %p53 = por %p51, %p52
    %p54 = scmp.ne.s32.totalorder %s46, %s48
    %p55 = scmp.eq.s32.totalorder %s17, 1
    %p56 = por %p54, %p55
    %p57 = scmp.ne.s32.totalorder %s48, %s49
    %p58 = scmp.eq.s32.totalorder %s17, 0
    %p59 = por %p57, %p58
    %p60 = scmp.ne.s32.totalorder %s48, %s49
    %p61 = scmp.eq.s32.totalorder %s18, 1
    %p62 = por %p60, %p61
    %p64 = scmp.ne.s32.totalorder %s49, %s63
    %p65 = scmp.eq.s32.totalorder %s18, 0
    %p66 = por %p64, %p65
    %s68 = sadd.s32 %s67, 1
    %p71 = scmp.eq.s32.totalorder %s12, 1
    %p72 = scmp.ne.s32.totalorder %s67, %s69
    %p73 = scmp.eq.s32.totalorder %s12, 0
    %p74 = por %p72, %p73
    %p75 = scmp.ne.s32.totalorder %s67, %s69
    %p76 = scmp.eq.s32.totalorder %s17, 1
    %p77 = por %p75, %p76
    %p78 = scmp.ne.s32.totalorder %s69, %s70
    %p79 = scmp.eq.s32.totalorder %s17, 0
    %p80 = por %p78, %p79
    %p81 = scmp.ne.s32.totalorder %s69, %s70
    %p82 = scmp.eq.s32.totalorder %s18, 1
    %p83 = por %p81, %p82
    %p85 = scmp.ne.s32.totalorder %s70, %s84
    %p86 = scmp.eq.s32.totalorder %s18, 0
    %p87 = por %p85, %p86
    %s89 = sadd.s32 %s88, 1
    %p92 = scmp.eq.s32.totalorder %s12, 1
    %p93 = scmp.ne.s32.totalorder %s88, %s90
    %p94 = scmp.eq.s32.totalorder %s12, 0
    %p95 = por %p93, %p94
    %p96 = scmp.ne.s32.totalorder %s88, %s90
    %p97 = scmp.eq.s32.totalorder %s17, 1
    %p98 = por %p96, %p97
    %p99 = scmp.ne.s32.totalorder %s90, %s91
    %p100 = scmp.eq.s32.totalorder %s17, 0
    %p101 = por %p99, %p100
    %p102 = scmp.ne.s32.totalorder %s90, %s91
    %p103 = scmp.eq.s32.totalorder %s18, 1
    %p104 = por %p102, %p103
    %p106 = scmp.ne.s32.totalorder %s91, %s105
    %p107 = scmp.eq.s32.totalorder %s18, 0
    %p108 = por %p106, %p107
    %s110 = sadd.s32 %s109, 1
    %p113 = scmp.eq.s32.totalorder %s12, 1
    %p114 = scmp.ne.s32.totalorder %s109, %s111
    %p115 = scmp.eq.s32.totalorder %s12, 0
    %p116 = por %p114, %p115
    %p117 = scmp.ne.s32.totalorder %s109, %s111
    %p118 = scmp.eq.s32.totalorder %s17, 1
    %p119 = por %p117, %p118
    %p120 = scmp.ne.s32.totalorder %s111, %s112
    %p121 = scmp.eq.s32.totalorder %s17, 0
    %p122 = por %p120, %p121
    %p123 = scmp.ne.s32.totalorder %s111, %s112
    %p124 = scmp.eq.s32.totalorder %s18, 1
    %p125 = por %p123, %p124
    %p127 = scmp.ne.s32.totalorder %s112, %s126
    %p128 = scmp.eq.s32.totalorder %s18, 0
    %p129 = por %p127, %p128
    %s131 = sadd.s32 %s130, 1
    %p134 = scmp.eq.s32.totalorder %s12, 1
    %p135 = scmp.ne.s32.totalorder %s130, %s132
    %p136 = scmp.eq.s32.totalorder %s12, 0
    %p137 = por %p135, %p136
    %p138 = scmp.ne.s32.totalorder %s130, %s132
    %p139 = scmp.eq.s32.totalorder %s17, 1
    %p140 = por %p138, %p139
    %p141 = scmp.ne.s32.totalorder %s132, %s133
    %p142 = scmp.eq.s32.totalorder %s17, 0
    %p143 = por %p141, %p142
    %p144 = scmp.ne.s32.totalorder %s132, %s133
    %p145 = scmp.eq.s32.totalorder %s18, 1
    %p146 = por %p144, %p145
    %p148 = scmp.ne.s32.totalorder %s133, %s147
    %p149 = scmp.eq.s32.totalorder %s18, 0
    %p150 = por %p148, %p149
    %s151 = ssub.s32 %s12, %s19
    %p152 = scmp.eq.s32.totalorder %s151, 0
    %s154 = sadd.s32 %s153, 1
    %s155 = scalar_select %p152, %s153, %s154
    %p158 = pneg %p152
    %p159 = scmp.eq.s32.totalorder %s12, 1
    %p160 = por %p158, %p159
    %p161 = scmp.ne.s32.totalorder %s153, %s156
    %p162 = scmp.eq.s32.totalorder %s12, 0
    %p163 = por %p161, %p162
    %p164 = scmp.ne.s32.totalorder %s153, %s156
    %p165 = scmp.eq.s32.totalorder %s17, 1
    %p166 = por %p164, %p165
    %p167 = scmp.ne.s32.totalorder %s156, %s157
    %p168 = scmp.eq.s32.totalorder %s17, 0
    %p169 = por %p167, %p168
    %p170 = scmp.ne.s32.totalorder %s156, %s157
    %p171 = scmp.eq.s32.totalorder %s18, 1
    %p172 = por %p170, %p171
    %p174 = scmp.ne.s32.totalorder %s157, %s173
    %p175 = scmp.eq.s32.totalorder %s18, 0
    %p176 = por %p174, %p175
    %p177 = scmp.le.s32.totalorder 1, %s12
    %p178 = scmp.lt.s32.totalorder %s12, 3
    %p179 = pnand %p177, %p178
    %p180 = pneg %p179
    // Predicated region
    $region9: #{rdb_forward.1} parent=5 // pred_check
      _
    $region10: #{rdb_forward.1} parent=5 // pred_check_branch
      %182 = sbr.rel (%p179) target = $region12
    $region11: #{rdb_forward.1} parent=5 // pred_region
      %s183 = ssub.s32 %s12, 1
      // Predicated region
      $region13: #{rdb_forward.1} parent=11 // pred_check
        %p184 = pneg %p59
      $region14: #{rdb_forward.1} parent=11 // pred_check_branch
        %186 = sbr.rel (%p184) target = $region16
      $region15: #{rdb_forward.1} parent=11 // pred_region
        _
      $region16: #{rdb_forward.1} parent=11 // pred_fallthru
        _
      // Predicated region
      $region17: #{rdb_forward.1} parent=11 // pred_check
        %p187 = pneg %p80
      $region18: #{rdb_forward.1} parent=11 // pred_check_branch
        %189 = sbr.rel (%p187) target = $region20
      $region19: #{rdb_forward.1} parent=11 // pred_region
        _
      $region20: #{rdb_forward.1} parent=11 // pred_fallthru
        _
      // Predicated region
      $region21: #{rdb_forward.1} parent=11 // pred_check
        %p190 = pneg %p101
      $region22: #{rdb_forward.1} parent=11 // pred_check_branch
        %192 = sbr.rel (%p190) target = $region24
      $region23: #{rdb_forward.1} parent=11 // pred_region
        _
      $region24: #{rdb_forward.1} parent=11 // pred_fallthru
        _
      // Predicated region
      $region25: #{rdb_forward.1} parent=11 // pred_check
        %p193 = pneg %p122
      $region26: #{rdb_forward.1} parent=11 // pred_check_branch
        %195 = sbr.rel (%p193) target = $region28
      $region27: #{rdb_forward.1} parent=11 // pred_region
        _
      $region28: #{rdb_forward.1} parent=11 // pred_fallthru
        _
      // Predicated region
      $region29: #{rdb_forward.1} parent=11 // pred_check
        %p196 = pneg %p143
      $region30: #{rdb_forward.1} parent=11 // pred_check_branch
        %198 = sbr.rel (%p196) target = $region32
      $region31: #{rdb_forward.1} parent=11 // pred_region
        _
      $region32: #{rdb_forward.1} parent=11 // pred_fallthru
        _
    $region12: #{rdb_forward.1} parent=5 // pred_fallthru
      _
    %p199 = scmp.lt.s32.totalorder %s12, 2
    // Predicated region
    $region33: #{rdb_forward.1} parent=5 // pred_check
      %p200 = pneg %p199
    $region34: #{rdb_forward.1} parent=5 // pred_check_branch
      %202 = sbr.rel (%p200) target = $region36
    $region35: #{rdb_forward.1} parent=5 // pred_region
      // Predicated region
      $region37: #{rdb_forward.1} parent=35 // pred_check
        %p203 = pneg %p32
      $region38: #{rdb_forward.1} parent=35 // pred_check_branch
        %205 = sbr.rel (%p203) target = $region40
      $region39: #{rdb_forward.1} parent=35 // pred_region
        %p206 = scmp.lt.s32.totalorder %s12, 1
        %s207 = scalar_select %p206, %s12, 1
        %s208 = smul.addr %s207, 41
        %s209 = smul.addr %s208, 8
        %s210 = scalar_lea.vmem %s0, %s209
      $region40: #{rdb_forward.1} parent=35 // pred_fallthru
        _
    $region36: #{rdb_forward.1} parent=5 // pred_fallthru
      _
    %p211 = scmp.le.s32.totalorder 1, %s12
    %p212 = scmp.lt.s32.totalorder %s12, 3
    %p213 = pnand %p211, %p212
    %p214 = pneg %p213
    // Predicated region
    $region41: #{rdb_forward.1} parent=5 // pred_check
      _
    $region42: #{rdb_forward.1} parent=5 // pred_check_branch
      %216 = sbr.rel (%p213) target = $region44
    $region43: #{rdb_forward.1} parent=5 // pred_region
      %s217 = ssub.s32 %s12, 1
      %p218 = scmp.lt.s32.totalorder %s17, 1
      %s219 = scalar_select %p218, %s17, 1
      %s220 = smul.addr %s219, 41
      %s221 = smul.addr %s220, 8
      %s222 = scalar_lea.vmem %s0, %s221
      %p223 = pneg %p38
      %p224 = pneg %p35
      %p225 = pneg %p59
      %p226 = pneg %p56
      %p227 = pneg %p80
      %p228 = pneg %p77
      %p229 = pneg %p101
      %p230 = pneg %p98
      %p231 = pneg %p122
      %p232 = pneg %p119
      %p233 = pneg %p143
      %p234 = pneg %p140
      %p235 = pneg %p169
      %p236 = pneg %p166
      %p237 = scmp.lt.s32.totalorder %s17, 1
      %s238 = scalar_select %p237, %s17, 1
      %s239 = smul.addr %s238, 41
      %s240 = smul.addr %s239, 8
      %s241 = scalar_lea.vmem %s6, %s240
      %p242 = scmp.lt.s32.totalorder %s17, 1
      %s243 = scalar_select %p242, %s17, 1
      %s244 = smul.addr %s243, 41
      %s245 = smul.addr %s244, 8
      %s246 = scalar_lea.vmem %s0, %s245
      %p247 = scmp.lt.s32.totalorder %s17, 1
      %s248 = scalar_select %p247, %s17, 1
      %s249 = smul.addr %s248, 41
      %s250 = smul.addr %s249, 8
      %s251 = scalar_lea.vmem %s6, %s250
      %v253 = vld [vmem:[%s246] sm:$0xff]
      %v254 = vld [vmem:[%s246 + $0x8] sm:$0xff]
      %v255 = vld [vmem:[%s246 + $0x10] sm:$0xff]
      %v256 = vld [vmem:[%s246 + $0x18] sm:$0xff]
      %v257 = vld [vmem:[%s246 + $0x20] sm:$0xff]
      %v258 = vld [vmem:[%s246 + $0x28] sm:$0xff]
      %v259 = vld [vmem:[%s246 + $0x30] sm:$0xff]
      %v260 = vld [vmem:[%s246 + $0x38] sm:$0xff]
      %v261 = vld [vmem:[%s246 + $0x40] sm:$0xff]
      %v262 = vld [vmem:[%s246 + $0x48] sm:$0xff]
      %v263 = vld [vmem:[%s246 + $0x50] sm:$0xff]
      %v264 = vld [vmem:[%s246 + $0x58] sm:$0xff]
      %v265 = vld [vmem:[%s246 + $0x60] sm:$0xff]
      %v266 = vld [vmem:[%s246 + $0x68] sm:$0xff]
      %v267 = vld [vmem:[%s246 + $0x70] sm:$0xff]
      %v268 = vld [vmem:[%s246 + $0x78] sm:$0xff]
      %v269 = vld [vmem:[%s246 + $0x80] sm:$0xff]
      %v270 = vld [vmem:[%s246 + $0x88] sm:$0xff]
      %v271 = vld [vmem:[%s246 + $0x90] sm:$0xff]
      %v272 = vld [vmem:[%s246 + $0x98] sm:$0xff]
      %v273 = vld [vmem:[%s246 + $0xa0] sm:$0xff]
      %v274 = vld [vmem:[%s246 + $0xa8] sm:$0xff]
      %v275 = vld [vmem:[%s246 + $0xb0] sm:$0xff]
      %v276 = vld [vmem:[%s246 + $0xb8] sm:$0xff]
      %v277 = vld [vmem:[%s246 + $0xc0] sm:$0xff]
      %v278 = vld [vmem:[%s246 + $0xc8] sm:$0xff]
      %v279 = vld [vmem:[%s246 + $0xd0] sm:$0xff]
      %v280 = vld [vmem:[%s246 + $0xd8] sm:$0xff]
      %v281 = vld [vmem:[%s246 + $0xe0] sm:$0xff]
      %v282 = vld [vmem:[%s246 + $0xe8] sm:$0xff]
      %v283 = vld [vmem:[%s246 + $0xf0] sm:$0xff]
      %v284 = vld [vmem:[%s246 + $0xf8] sm:$0xff]
      %v285 = vld [vmem:[%s246 + $0x100] sm:$0xff]
      %v286 = vld [vmem:[%s246 + $0x108] sm:$0xff]
      %v287 = vld [vmem:[%s246 + $0x110] sm:$0xff]
      %v288 = vld [vmem:[%s246 + $0x118] sm:$0xff]
      %v289 = vld [vmem:[%s246 + $0x120] sm:$0xff]
      %v290 = vld [vmem:[%s246 + $0x128] sm:$0xff]
      %v291 = vld [vmem:[%s246 + $0x130] sm:$0xff]
      %v292 = vld [vmem:[%s246 + $0x138] sm:$0xff]
      %v293 = vld [vmem:[%s246 + $0x140] sm:$0xff]
      %v294 = vld [vmem:[%s1] sm:$0xff]
      %v295 = vld [vmem:[%s1 + $0x8] sm:$0xff]
      %v296 = vld [vmem:[%s1 + $0x10] sm:$0xff]
      %v297 = vld [vmem:[%s1 + $0x18] sm:$0xff]
      %v298 = vld [vmem:[%s1 + $0x20] sm:$0xff]
      %v299 = vld [vmem:[%s1 + $0x28] sm:$0xff]
      %v300 = vld [vmem:[%s1 + $0x30] sm:$0xff]
      %v301 = vld [vmem:[%s1 + $0x38] sm:$0xff]
      %v302 = vld [vmem:[%s1 + $0x40] sm:$0xff]
      %v303 = vld [vmem:[%s1 + $0x48] sm:$0xff]
      %v304 = vld [vmem:[%s1 + $0x50] sm:$0xff]
      %v305 = vld [vmem:[%s1 + $0x58] sm:$0xff]
      %v306 = vld [vmem:[%s1 + $0x60] sm:$0xff]
      %v307 = vld [vmem:[%s1 + $0x68] sm:$0xff]
      %v308 = vld [vmem:[%s1 + $0x70] sm:$0xff]
      %v309 = vld [vmem:[%s1 + $0x78] sm:$0xff]
      %v310 = vld [vmem:[%s1 + $0x80] sm:$0xff]
      %v311 = vld [vmem:[%s1 + $0x88] sm:$0xff]
      %v312 = vld [vmem:[%s1 + $0x90] sm:$0xff]
      %v313 = vld [vmem:[%s1 + $0x98] sm:$0xff]
      %v314 = vld [vmem:[%s1 + $0xa0] sm:$0xff]
      %v315 = vld [vmem:[%s1 + $0xa8] sm:$0xff]
      %v316 = vld [vmem:[%s1 + $0xb0] sm:$0xff]
      %v317 = vld [vmem:[%s1 + $0xb8] sm:$0xff]
      %v318 = vld [vmem:[%s1 + $0xc0] sm:$0xff]
      %v319 = vld [vmem:[%s1 + $0xc8] sm:$0xff]
      %v320 = vld [vmem:[%s1 + $0xd0] sm:$0xff]
      %v321 = vld [vmem:[%s1 + $0xd8] sm:$0xff]
      %v322 = vld [vmem:[%s1 + $0xe0] sm:$0xff]
      %v323 = vld [vmem:[%s1 + $0xe8] sm:$0xff]
      %v324 = vld [vmem:[%s1 + $0xf0] sm:$0xff]
      %v325 = vld [vmem:[%s1 + $0xf8] sm:$0xff]
      %v326 = vld [vmem:[%s1 + $0x100] sm:$0xff]
      %v327 = vld [vmem:[%s1 + $0x108] sm:$0xff]
      %v328 = vld [vmem:[%s1 + $0x110] sm:$0xff]
      %v329 = vld [vmem:[%s1 + $0x118] sm:$0xff]
      %v330 = vld [vmem:[%s1 + $0x120] sm:$0xff]
      %v331 = vld [vmem:[%s1 + $0x128] sm:$0xff]
      %v332 = vld [vmem:[%s1 + $0x130] sm:$0xff]
      %v333 = vld [vmem:[%s1 + $0x138] sm:$0xff]
      %v334 = vld [vmem:[%s1 + $0x140] sm:$0xff]
      %335 = vst [vmem:[#allocation2] sm:$0xff] 0.0
      %336 = vst [vmem:[#allocation2 + $0x8] sm:$0xff] 0.0
      %337 = vst [vmem:[#allocation2 + $0x10] sm:$0xff] 0.0
      %338 = vst [vmem:[#allocation2 + $0x18] sm:$0xff] 0.0
      %339 = vst [vmem:[#allocation2 + $0x20] sm:$0xff] 0.0
      %340 = vst [vmem:[#allocation2 + $0x28] sm:$0xff] 0.0
      %341 = vst [vmem:[#allocation2 + $0x30] sm:$0xff] 0.0
      %342 = vst [vmem:[#allocation2 + $0x38] sm:$0xff] 0.0
      %343 = vst [vmem:[#allocation2 + $0x40] sm:$0xff] 0.0
      %344 = vst [vmem:[#allocation2 + $0x48] sm:$0xff] 0.0
      %345 = vst [vmem:[#allocation2 + $0x50] sm:$0xff] 0.0
      %346 = vst [vmem:[#allocation2 + $0x58] sm:$0xff] 0.0
      %347 = vst [vmem:[#allocation2 + $0x60] sm:$0xff] 0.0
      %348 = vst [vmem:[#allocation2 + $0x68] sm:$0xff] 0.0
      %349 = vst [vmem:[#allocation2 + $0x70] sm:$0xff] 0.0
      %350 = vst [vmem:[#allocation2 + $0x78] sm:$0xff] 0.0
      %351 = vst [vmem:[#allocation2 + $0x80] sm:$0xff] 0.0
      %352 = vst [vmem:[#allocation2 + $0x88] sm:$0xff] 0.0
      %353 = vst [vmem:[#allocation2 + $0x90] sm:$0xff] 0.0
      %354 = vst [vmem:[#allocation2 + $0x98] sm:$0xff] 0.0
      %355 = vst [vmem:[#allocation2 + $0xa0] sm:$0xff] 0.0
      %356 = vst [vmem:[#allocation2 + $0xa8] sm:$0xff] 0.0
      %357 = vst [vmem:[#allocation2 + $0xb0] sm:$0xff] 0.0
      %358 = vst [vmem:[#allocation2 + $0xb8] sm:$0xff] 0.0
      %359 = vst [vmem:[#allocation2 + $0xc0] sm:$0xff] 0.0
      %360 = vst [vmem:[#allocation2 + $0xc8] sm:$0xff] 0.0
      %361 = vst [vmem:[#allocation2 + $0xd0] sm:$0xff] 0.0
      %362 = vst [vmem:[#allocation2 + $0xd8] sm:$0xff] 0.0
      %363 = vst [vmem:[#allocation2 + $0xe0] sm:$0xff] 0.0
      %364 = vst [vmem:[#allocation2 + $0xe8] sm:$0xff] 0.0
      %365 = vst [vmem:[#allocation2 + $0xf0] sm:$0xff] 0.0
      %366 = vst [vmem:[#allocation2 + $0xf8] sm:$0xff] 0.0
      %367 = vst [vmem:[#allocation2 + $0x100] sm:$0xff] 0.0
      %368 = vst [vmem:[#allocation2 + $0x108] sm:$0xff] 0.0
      %369 = vst [vmem:[#allocation2 + $0x110] sm:$0xff] 0.0
      %370 = vst [vmem:[#allocation2 + $0x118] sm:$0xff] 0.0
      %371 = vst [vmem:[#allocation2 + $0x120] sm:$0xff] 0.0
      %372 = vst [vmem:[#allocation2 + $0x128] sm:$0xff] 0.0
      %373 = vst [vmem:[#allocation2 + $0x130] sm:$0xff] 0.0
      %374 = vst [vmem:[#allocation2 + $0x138] sm:$0xff] 0.0
      %375 = vst [vmem:[#allocation2 + $0x140] sm:$0xff] 0.0
      %376 = vst [vmem:[#allocation2 + $0x148] sm:$0xff] 0.0
      %377 = vst [vmem:[#allocation2 + $0x150] sm:$0xff] 0.0
      %378 = vst [vmem:[#allocation2 + $0x158] sm:$0xff] 0.0
      %379 = vst [vmem:[#allocation2 + $0x160] sm:$0xff] 0.0
      %380 = vst [vmem:[#allocation2 + $0x168] sm:$0xff] 0.0
      %381 = vst [vmem:[#allocation2 + $0x170] sm:$0xff] 0.0
      %382 = vst [vmem:[#allocation2 + $0x18] sm:$0xff] %v253
      %383 = vst [vmem:[#allocation2 + $0x20] sm:$0xff] %v254
      %384 = vst [vmem:[#allocation2 + $0x28] sm:$0xff] %v255
      %385 = vst [vmem:[#allocation2 + $0x30] sm:$0xff] %v256
      %386 = vst [vmem:[#allocation2 + $0x38] sm:$0xff] %v257
      %387 = vst [vmem:[#allocation2 + $0x40] sm:$0xff] %v258
      %388 = vst [vmem:[#allocation2 + $0x48] sm:$0xff] %v259
      %389 = vst [vmem:[#allocation2 + $0x50] sm:$0xff] %v260
      %390 = vst [vmem:[#allocation2 + $0x58] sm:$0xff] %v261
      %391 = vst [vmem:[#allocation2 + $0x60] sm:$0xff] %v262
      %392 = vst [vmem:[#allocation2 + $0x68] sm:$0xff] %v263
      %393 = vst [vmem:[#allocation2 + $0x70] sm:$0xff] %v264
      %394 = vst [vmem:[#allocation2 + $0x78] sm:$0xff] %v265
      %395 = vst [vmem:[#allocation2 + $0x80] sm:$0xff] %v266
      %396 = vst [vmem:[#allocation2 + $0x88] sm:$0xff] %v267
      %397 = vst [vmem:[#allocation2 + $0x90] sm:$0xff] %v268
      %398 = vst [vmem:[#allocation2 + $0x98] sm:$0xff] %v269
      %399 = vst [vmem:[#allocation2 + $0xa0] sm:$0xff] %v270
      %400 = vst [vmem:[#allocation2 + $0xa8] sm:$0xff] %v271
      %401 = vst [vmem:[#allocation2 + $0xb0] sm:$0xff] %v272
      %402 = vst [vmem:[#allocation2 + $0xb8] sm:$0xff] %v273
      %403 = vst [vmem:[#allocation2 + $0xc0] sm:$0xff] %v274
      %404 = vst [vmem:[#allocation2 + $0xc8] sm:$0xff] %v275
      %405 = vst [vmem:[#allocation2 + $0xd0] sm:$0xff] %v276
      %406 = vst [vmem:[#allocation2 + $0xd8] sm:$0xff] %v277
      %407 = vst [vmem:[#allocation2 + $0xe0] sm:$0xff] %v278
      %408 = vst [vmem:[#allocation2 + $0xe8] sm:$0xff] %v279
      %409 = vst [vmem:[#allocation2 + $0xf0] sm:$0xff] %v280
      %410 = vst [vmem:[#allocation2 + $0xf8] sm:$0xff] %v281
      %411 = vst [vmem:[#allocation2 + $0x100] sm:$0xff] %v282
      %412 = vst [vmem:[#allocation2 + $0x108] sm:$0xff] %v283
      %413 = vst [vmem:[#allocation2 + $0x110] sm:$0xff] %v284
      %414 = vst [vmem:[#allocation2 + $0x118] sm:$0xff] %v285
      %415 = vst [vmem:[#allocation2 + $0x120] sm:$0xff] %v286
      %416 = vst [vmem:[#allocation2 + $0x128] sm:$0xff] %v287
      %417 = vst [vmem:[#allocation2 + $0x130] sm:$0xff] %v288
      %418 = vst [vmem:[#allocation2 + $0x138] sm:$0xff] %v289
      %419 = vst [vmem:[#allocation2 + $0x140] sm:$0xff] %v290
      %420 = vst [vmem:[#allocation2 + $0x148] sm:$0xff] %v291
      %421 = vst [vmem:[#allocation2 + $0x150] sm:$0xff] %v292
      %422 = vst [vmem:[#allocation2 + $0x158] sm:$0xff] %v293
      %v423 = vld [vmem:[#allocation2 + $0x5] sm:$0xff]
      %v424 = vld [vmem:[#allocation2 + $0xd] sm:$0xff]
      %v425 = vld [vmem:[#allocation2 + $0x15] sm:$0xff]
      %v426 = vld [vmem:[#allocation2 + $0x1d] sm:$0xff]
      %v427 = vld [vmem:[#allocation2 + $0x25] sm:$0xff]
      %v428 = vld [vmem:[#allocation2 + $0x2d] sm:$0xff]
      %v429 = vld [vmem:[#allocation2 + $0x35] sm:$0xff]
      %v430 = vld [vmem:[#allocation2 + $0x3d] sm:$0xff]
      %v431 = vld [vmem:[#allocation2 + $0x45] sm:$0xff]
      %v432 = vld [vmem:[#allocation2 + $0x4d] sm:$0xff]
      %v433 = vld [vmem:[#allocation2 + $0x55] sm:$0xff]
      %v434 = vld [vmem:[#allocation2 + $0x5d] sm:$0xff]
      %v435 = vld [vmem:[#allocation2 + $0x65] sm:$0xff]
      %v436 = vld [vmem:[#allocation2 + $0x6d] sm:$0xff]
      %v437 = vld [vmem:[#allocation2 + $0x75] sm:$0xff]
      %v438 = vld [vmem:[#allocation2 + $0x7d] sm:$0xff]
      %v439 = vld [vmem:[#allocation2 + $0x85] sm:$0xff]
      %v440 = vld [vmem:[#allocation2 + $0x8d] sm:$0xff]
      %v441 = vld [vmem:[#allocation2 + $0x95] sm:$0xff]
      %v442 = vld [vmem:[#allocation2 + $0x9d] sm:$0xff]
      %v443 = vld [vmem:[#allocation2 + $0xa5] sm:$0xff]
      %v444 = vld [vmem:[#allocation2 + $0xad] sm:$0xff]
      %v445 = vld [vmem:[#allocation2 + $0xb5] sm:$0xff]
      %v446 = vld [vmem:[#allocation2 + $0xbd] sm:$0xff]
      %v447 = vld [vmem:[#allocation2 + $0xc5] sm:$0xff]
      %v448 = vld [vmem:[#allocation2 + $0xcd] sm:$0xff]
      %v449 = vld [vmem:[#allocation2 + $0xd5] sm:$0xff]
      %v450 = vld [vmem:[#allocation2 + $0xdd] sm:$0xff]
      %v451 = vld [vmem:[#allocation2 + $0xe5] sm:$0xff]
      %v452 = vld [vmem:[#allocation2 + $0xed] sm:$0xff]
      %v453 = vld [vmem:[#allocation2 + $0xf5] sm:$0xff]
      %v454 = vld [vmem:[#allocation2 + $0xfd] sm:$0xff]
      %v455 = vld [vmem:[#allocation2 + $0x105] sm:$0xff]
      %v456 = vld [vmem:[#allocation2 + $0x10d] sm:$0xff]
      %v457 = vld [vmem:[#allocation2 + $0x115] sm:$0xff]
      %v458 = vld [vmem:[#allocation2 + $0x11d] sm:$0xff]
      %v459 = vld [vmem:[#allocation2 + $0x125] sm:$0xff]
      %v460 = vld [vmem:[#allocation2 + $0x12d] sm:$0xff]
      %v461 = vld [vmem:[#allocation2 + $0x135] sm:$0xff]
      %v462 = vld [vmem:[#allocation2 + $0x13d] sm:$0xff]
      %v463 = vld [vmem:[#allocation2 + $0x145] sm:$0xff]
      %v464 = vpack.c.bf16 %v424, %v423
      %v465 = vpack.c.bf16 %v426, %v425
      %v466 = vpack.c.bf16 %v428, %v427
      %v467 = vpack.c.bf16 %v430, %v429
      %v468 = vpack.c.bf16 %v432, %v431
      %v469 = vpack.c.bf16 %v434, %v433
      %v470 = vpack.c.bf16 %v436, %v435
      %v471 = vpack.c.bf16 %v438, %v437
      %v472 = vpack.c.bf16 %v440, %v439
      %v473 = vpack.c.bf16 %v442, %v441
      %v474 = vpack.c.bf16 %v444, %v443
      %v475 = vpack.c.bf16 %v446, %v445
      %v476 = vpack.c.bf16 %v448, %v447
      %v477 = vpack.c.bf16 %v450, %v449
      %v478 = vpack.c.bf16 %v452, %v451
      %v479 = vpack.c.bf16 %v454, %v453
      %v480 = vpack.c.bf16 %v456, %v455
      %v481 = vpack.c.bf16 %v458, %v457
      %v482 = vpack.c.bf16 %v460, %v459
      %v483 = vpack.c.bf16 %v462, %v461
      %v484 = vpack.c.bf16 %v463, %v463
      %v485 = vld [vmem:[%s2] sm:$0xf]
      %v486 = vld [vmem:[%s2 + $0x4] sm:$0xf]
      %v487 = vld [vmem:[#allocation2 + $0x6] sm:$0xff]
      %v488 = vld [vmem:[#allocation2 + $0xe] sm:$0xff]
      %v489 = vld [vmem:[#allocation2 + $0x16] sm:$0xff]
      %v490 = vld [vmem:[#allocation2 + $0x1e] sm:$0xff]
      %v491 = vld [vmem:[#allocation2 + $0x26] sm:$0xff]
      %v492 = vld [vmem:[#allocation2 + $0x2e] sm:$0xff]
      %v493 = vld [vmem:[#allocation2 + $0x36] sm:$0xff]
      %v494 = vld [vmem:[#allocation2 + $0x3e] sm:$0xff]
      %v495 = vld [vmem:[#allocation2 + $0x46] sm:$0xff]
      %v496 = vld [vmem:[#allocation2 + $0x4e] sm:$0xff]
      %v497 = vld [vmem:[#allocation2 + $0x56] sm:$0xff]
      %v498 = vld [vmem:[#allocation2 + $0x5e] sm:$0xff]
      %v499 = vld [vmem:[#allocation2 + $0x66] sm:$0xff]
      %v500 = vld [vmem:[#allocation2 + $0x6e] sm:$0xff]
      %v501 = vld [vmem:[#allocation2 + $0x76] sm:$0xff]
      %v502 = vld [vmem:[#allocation2 + $0x7e] sm:$0xff]
      %v503 = vld [vmem:[#allocation2 + $0x86] sm:$0xff]
      %v504 = vld [vmem:[#allocation2 + $0x8e] sm:$0xff]
      %v505 = vld [vmem:[#allocation2 + $0x96] sm:$0xff]
      %v506 = vld [vmem:[#allocation2 + $0x9e] sm:$0xff]
      %v507 = vld [vmem:[#allocation2 + $0xa6] sm:$0xff]
      %v508 = vld [vmem:[#allocation2 + $0xae] sm:$0xff]
      %v509 = vld [vmem:[#allocation2 + $0xb6] sm:$0xff]
      %v510 = vld [vmem:[#allocation2 + $0xbe] sm:$0xff]
      %v511 = vld [vmem:[#allocation2 + $0xc6] sm:$0xff]
      %v512 = vld [vmem:[#allocation2 + $0xce] sm:$0xff]
      %v513 = vld [vmem:[#allocation2 + $0xd6] sm:$0xff]
      %v514 = vld [vmem:[#allocation2 + $0xde] sm:$0xff]
      %v515 = vld [vmem:[#allocation2 + $0xe6] sm:$0xff]
      %v516 = vld [vmem:[#allocation2 + $0xee] sm:$0xff]
      %v517 = vld [vmem:[#allocation2 + $0xf6] sm:$0xff]
      %v518 = vld [vmem:[#allocation2 + $0xfe] sm:$0xff]
      %v519 = vld [vmem:[#allocation2 + $0x106] sm:$0xff]
      %v520 = vld [vmem:[#allocation2 + $0x10e] sm:$0xff]
      %v521 = vld [vmem:[#allocation2 + $0x116] sm:$0xff]
      %v522 = vld [vmem:[#allocation2 + $0x11e] sm:$0xff]
      %v523 = vld [vmem:[#allocation2 + $0x126] sm:$0xff]
      %v524 = vld [vmem:[#allocation2 + $0x12e] sm:$0xff]
      %v525 = vld [vmem:[#allocation2 + $0x136] sm:$0xff]
      %v526 = vld [vmem:[#allocation2 + $0x13e] sm:$0xff]
      %v527 = vld [vmem:[#allocation2 + $0x146] sm:$0xff]
      %v528 = vpack.c.bf16 %v488, %v487
      %v529 = vpack.c.bf16 %v490, %v489
      %v530 = vpack.c.bf16 %v492, %v491
      %v531 = vpack.c.bf16 %v494, %v493
      %v532 = vpack.c.bf16 %v496, %v495
      %v533 = vpack.c.bf16 %v498, %v497
      %v534 = vpack.c.bf16 %v500, %v499
      %v535 = vpack.c.bf16 %v502, %v501
      %v536 = vpack.c.bf16 %v504, %v503
      %v537 = vpack.c.bf16 %v506, %v505
      %v538 = vpack.c.bf16 %v508, %v507
      %v539 = vpack.c.bf16 %v510, %v509
      %v540 = vpack.c.bf16 %v512, %v511
      %v541 = vpack.c.bf16 %v514, %v513
      %v542 = vpack.c.bf16 %v516, %v515
      %v543 = vpack.c.bf16 %v518, %v517
      %v544 = vpack.c.bf16 %v520, %v519
      %v545 = vpack.c.bf16 %v522, %v521
      %v546 = vpack.c.bf16 %v524, %v523
      %v547 = vpack.c.bf16 %v526, %v525
      %v548 = vpack.c.bf16 %v527, %v527
      %s549 = scalar_lea.vmem %s2, 8
      %v550 = vld [vmem:[%s549] sm:$0xf]
      %v551 = vld [vmem:[%s549 + $0x4] sm:$0xf]
      %v554 = vunpack.c.l.b16 %v550
      %v555 = vunpack.c.l.b16 %v551
      %v556 = vpack.c.b16 %v555, %v554
      %vm558 = vcmask 130048
      %v560 = vsel %vm558, %v528, 0
      %v563 = vsel %vm558, %v529, 0
      %v566 = vsel %vm558, %v530, 0
      %v569 = vsel %vm558, %v531, 0
      %v572 = vsel %vm558, %v532, 0
      %v575 = vsel %vm558, %v533, 0
      %v578 = vsel %vm558, %v534, 0
      %v581 = vsel %vm558, %v535, 0
      %v584 = vsel %vm558, %v536, 0
      %v587 = vsel %vm558, %v537, 0
      %v590 = vsel %vm558, %v538, 0
      %v593 = vsel %vm558, %v539, 0
      %v596 = vsel %vm558, %v540, 0
      %v599 = vsel %vm558, %v541, 0
      %v602 = vsel %vm558, %v542, 0
      %v605 = vsel %vm558, %v543, 0
      %v608 = vsel %vm558, %v544, 0
      %v611 = vsel %vm558, %v545, 0
      %v614 = vsel %vm558, %v546, 0
      %v617 = vsel %vm558, %v547, 0
      %v620 = vsel %vm558, %v548, 0
      %622 = vmatprep.subr.bf16.mxu0 0
      %623 = vmatpush1.bf16.msra.mxu0 0
      %624 = vmatprep.subr.bf16.mxu0 0
      %625 = vmatpush1.bf16.msra.mxu0 0
      %626 = vmatprep.subr.bf16.mxu0 0
      %627 = vmatpush1.bf16.msra.mxu0 0
      %628 = vmatprep.subr.bf16.mxu0 0
      %629 = vmatpush1.bf16.msra.mxu0 0
      %630 = vmatprep.subr.bf16.mxu0 0
      %631 = vmatpush1.bf16.msra.mxu0 0
      %632 = vmatprep.subr.bf16.mxu0 0
      %633 = vmatpush1.bf16.msra.mxu0 0
      %634 = vmatprep.subr.bf16.mxu0 0
      %635 = vmatpush1.bf16.msra.mxu0 0
      %636 = vmatprep.subr.bf16.mxu0 0
      %637 = vmatpush1.bf16.msra.mxu0 %v556
      %638 = vmatprep.subr.bf16.mxu0 0
      %639 = vmatpush2.bf16.msra.mxu0 0
      %640 = vmatprep.subr.bf16.mxu0 0
      %641 = vmatpush2.bf16.msra.mxu0 0
      %642 = vmatprep.subr.bf16.mxu0 0
      %643 = vmatpush2.bf16.msra.mxu0 0
      %644 = vmatprep.subr.bf16.mxu0 0
      %645 = vmatpush2.bf16.msra.mxu0 0
      %646 = vmatprep.subr.bf16.mxu0 0
      %647 = vmatpush2.bf16.msra.mxu0 0
      %648 = vmatprep.subr.bf16.mxu0 0
      %649 = vmatpush2.bf16.msra.mxu0 0
      %650 = vmatprep.subr.bf16.mxu0 0
      %651 = vmatpush2.bf16.msra.mxu0 0
      %652 = vmatprep.subr.bf16.mxu0 0
      %653 = vmatpush2.bf16.msra.mxu0 0
      %654 = vmatprep.mubr.bf16.mxu0 0
      %655 = vmatmul.mubr.bf16.gmra.mxu0 %v560
      %v656 = vpop.f32.mrf.mxu0
      %v657 = vadd.f32 0.0, %v656
      %v658 = vpop.f32.mrf.mxu0
      %v659 = vpop.f32.mrf.mxu0
      %v660 = vadd.f32 0.0, %v659
      %v661 = vpop.f32.mrf.mxu0
      %662 = vmatprep.mubr.bf16.mxu0 0
      %663 = vmatmul.mubr.bf16.gmra.mxu0 %v563
      %v664 = vpop.f32.mrf.mxu0
      %v665 = vadd.f32 0.0, %v664
      %v666 = vpop.f32.mrf.mxu0
      %v667 = vpop.f32.mrf.mxu0
      %v668 = vadd.f32 0.0, %v667
      %v669 = vpop.f32.mrf.mxu0
      %670 = vmatprep.mubr.bf16.mxu0 0
      %671 = vmatmul.mubr.bf16.gmra.mxu0 %v566
      %v672 = vpop.f32.mrf.mxu0
      %v673 = vadd.f32 0.0, %v672
      %v674 = vpop.f32.mrf.mxu0
      %v675 = vpop.f32.mrf.mxu0
      %v676 = vadd.f32 0.0, %v675
      %v677 = vpop.f32.mrf.mxu0
      %678 = vmatprep.mubr.bf16.mxu0 0
      %679 = vmatmul.mubr.bf16.gmra.mxu0 %v569
      %v680 = vpop.f32.mrf.mxu0
      %v681 = vadd.f32 0.0, %v680
      %v682 = vpop.f32.mrf.mxu0
      %v683 = vpop.f32.mrf.mxu0
      %v684 = vadd.f32 0.0, %v683
      %v685 = vpop.f32.mrf.mxu0
      %686 = vmatprep.mubr.bf16.mxu0 0
      %687 = vmatmul.mubr.bf16.gmra.mxu0 %v572
      %v688 = vpop.f32.mrf.mxu0
      %v689 = vadd.f32 0.0, %v688
      %v690 = vpop.f32.mrf.mxu0
      %v691 = vpop.f32.mrf.mxu0
      %v692 = vadd.f32 0.0, %v691
      %v693 = vpop.f32.mrf.mxu0
      %694 = vmatprep.mubr.bf16.mxu0 0
      %695 = vmatmul.mubr.bf16.gmra.mxu0 %v575
      %v696 = vpop.f32.mrf.mxu0
      %v697 = vadd.f32 0.0, %v696
      %v698 = vpop.f32.mrf.mxu0
      %v699 = vpop.f32.mrf.mxu0
      %v700 = vadd.f32 0.0, %v699
      %v701 = vpop.f32.mrf.mxu0
      %702 = vmatprep.mubr.bf16.mxu0 0
      %703 = vmatmul.mubr.bf16.gmra.mxu0 %v578
      %v704 = vpop.f32.mrf.mxu0
      %v705 = vadd.f32 0.0, %v704
      %v706 = vpop.f32.mrf.mxu0
      %v707 = vpop.f32.mrf.mxu0
      %v708 = vadd.f32 0.0, %v707
      %v709 = vpop.f32.mrf.mxu0
      %710 = vmatprep.mubr.bf16.mxu0 0
      %711 = vmatmul.mubr.bf16.gmra.mxu0 %v581
      %v712 = vpop.f32.mrf.mxu0
      %v713 = vadd.f32 0.0, %v712
      %v714 = vpop.f32.mrf.mxu0
      %v715 = vpop.f32.mrf.mxu0
      %v716 = vadd.f32 0.0, %v715
      %v717 = vpop.f32.mrf.mxu0
      %718 = vmatprep.mubr.bf16.mxu0 0
      %719 = vmatmul.mubr.bf16.gmra.mxu0 %v584
      %v720 = vpop.f32.mrf.mxu0
      %v721 = vadd.f32 0.0, %v720
      %v722 = vpop.f32.mrf.mxu0
      %v723 = vpop.f32.mrf.mxu0
      %v724 = vadd.f32 0.0, %v723
      %v725 = vpop.f32.mrf.mxu0
      %726 = vmatprep.mubr.bf16.mxu0 0
      %727 = vmatmul.mubr.bf16.gmra.mxu0 %v587
      %v728 = vpop.f32.mrf.mxu0
      %v729 = vadd.f32 0.0, %v728
      %v730 = vpop.f32.mrf.mxu0
      %v731 = vpop.f32.mrf.mxu0
      %v732 = vadd.f32 0.0, %v731
      %v733 = vpop.f32.mrf.mxu0
      %734 = vmatprep.mubr.bf16.mxu0 0
      %735 = vmatmul.mubr.bf16.gmra.mxu0 %v590
      %v736 = vpop.f32.mrf.mxu0
      %v737 = vadd.f32 0.0, %v736
      %v738 = vpop.f32.mrf.mxu0
      %v739 = vpop.f32.mrf.mxu0
      %v740 = vadd.f32 0.0, %v739
      %v741 = vpop.f32.mrf.mxu0
      %742 = vmatprep.mubr.bf16.mxu0 0
      %743 = vmatmul.mubr.bf16.gmra.mxu0 %v593
      %v744 = vpop.f32.mrf.mxu0
      %v745 = vadd.f32 0.0, %v744
      %v746 = vpop.f32.mrf.mxu0
      %v747 = vpop.f32.mrf.mxu0
      %v748 = vadd.f32 0.0, %v747
      %v749 = vpop.f32.mrf.mxu0
      %750 = vmatprep.mubr.bf16.mxu0 0
      %751 = vmatmul.mubr.bf16.gmra.mxu0 %v596
      %v752 = vpop.f32.mrf.mxu0
      %v753 = vadd.f32 0.0, %v752
      %v754 = vpop.f32.mrf.mxu0
      %v755 = vpop.f32.mrf.mxu0
      %v756 = vadd.f32 0.0, %v755
      %v757 = vpop.f32.mrf.mxu0
      %758 = vmatprep.mubr.bf16.mxu0 0
      %759 = vmatmul.mubr.bf16.gmra.mxu0 %v599
      %v760 = vpop.f32.mrf.mxu0
      %v761 = vadd.f32 0.0, %v760
      %v762 = vpop.f32.mrf.mxu0
      %v763 = vpop.f32.mrf.mxu0
      %v764 = vadd.f32 0.0, %v763
      %v765 = vpop.f32.mrf.mxu0
      %766 = vmatprep.mubr.bf16.mxu0 0
      %767 = vmatmul.mubr.bf16.gmra.mxu0 %v602
      %v768 = vpop.f32.mrf.mxu0
      %v769 = vadd.f32 0.0, %v768
      %v770 = vpop.f32.mrf.mxu0
      %v771 = vpop.f32.mrf.mxu0
      %v772 = vadd.f32 0.0, %v771
      %v773 = vpop.f32.mrf.mxu0
      %774 = vmatprep.mubr.bf16.mxu0 0
      %775 = vmatmul.mubr.bf16.gmra.mxu0 %v605
      %v776 = vpop.f32.mrf.mxu0
      %v777 = vadd.f32 0.0, %v776
      %v778 = vpop.f32.mrf.mxu0
      %v779 = vpop.f32.mrf.mxu0
      %v780 = vadd.f32 0.0, %v779
      %v781 = vpop.f32.mrf.mxu0
      %782 = vmatprep.mubr.bf16.mxu0 0
      %783 = vmatmul.mubr.bf16.gmra.mxu0 %v608
      %v784 = vpop.f32.mrf.mxu0
      %v785 = vadd.f32 0.0, %v784
      %v786 = vpop.f32.mrf.mxu0
      %v787 = vpop.f32.mrf.mxu0
      %v788 = vadd.f32 0.0, %v787
      %v789 = vpop.f32.mrf.mxu0
      %790 = vmatprep.mubr.bf16.mxu0 0
      %791 = vmatmul.mubr.bf16.gmra.mxu0 %v611
      %v792 = vpop.f32.mrf.mxu0
      %v793 = vadd.f32 0.0, %v792
      %v794 = vpop.f32.mrf.mxu0
      %v795 = vpop.f32.mrf.mxu0
      %v796 = vadd.f32 0.0, %v795
      %v797 = vpop.f32.mrf.mxu0
      %798 = vmatprep.mubr.bf16.mxu0 0
      %799 = vmatmul.mubr.bf16.gmra.mxu0 %v614
      %v800 = vpop.f32.mrf.mxu0
      %v801 = vadd.f32 0.0, %v800
      %v802 = vpop.f32.mrf.mxu0
      %v803 = vpop.f32.mrf.mxu0
      %v804 = vadd.f32 0.0, %v803
      %v805 = vpop.f32.mrf.mxu0
      %806 = vmatprep.mubr.bf16.mxu0 0
      %807 = vmatmul.mubr.bf16.gmra.mxu0 %v617
      %v808 = vpop.f32.mrf.mxu0
      %v809 = vadd.f32 0.0, %v808
      %v810 = vpop.f32.mrf.mxu0
      %v811 = vpop.f32.mrf.mxu0
      %v812 = vadd.f32 0.0, %v811
      %v813 = vpop.f32.mrf.mxu0
      %814 = vmatprep.mubr.bf16.mxu0 0
      %815 = vmatmul.mubr.bf16.gmra.mxu0 %v620
      %v816 = vpop.f32.mrf.mxu0
      %v817 = vadd.f32 0.0, %v816
      %v818 = vpop.f32.mrf.mxu0
      %v819 = vpop.f32.mrf.mxu0
      %v820 = vpop.f32.mrf.mxu0
      %821 = vdwg.mxu0
      %v824 = vunpack.c.l.b16 %v485
      %v825 = vunpack.c.l.b16 %v486
      %v826 = vpack.c.b16 %v825, %v824
      %v829 = vsel %vm558, %v464, 0
      %v832 = vsel %vm558, %v465, 0
      %v835 = vsel %vm558, %v466, 0
      %v838 = vsel %vm558, %v467, 0
      %v841 = vsel %vm558, %v468, 0
      %v844 = vsel %vm558, %v469, 0
      %v847 = vsel %vm558, %v470, 0
      %v850 = vsel %vm558, %v471, 0
      %v853 = vsel %vm558, %v472, 0
      %v856 = vsel %vm558, %v473, 0
      %v859 = vsel %vm558, %v474, 0
      %v862 = vsel %vm558, %v475, 0
      %v865 = vsel %vm558, %v476, 0
      %v868 = vsel %vm558, %v477, 0
      %v871 = vsel %vm558, %v478, 0
      %v874 = vsel %vm558, %v479, 0
      %v877 = vsel %vm558, %v480, 0
      %v880 = vsel %vm558, %v481, 0
      %v883 = vsel %vm558, %v482, 0
      %v886 = vsel %vm558, %v483, 0
      %v889 = vsel %vm558, %v484, 0
      %891 = vmatprep.subr.bf16.mxu0 0
      %892 = vmatpush1.bf16.msra.mxu0 0
      %893 = vmatprep.subr.bf16.mxu0 0
      %894 = vmatpush1.bf16.msra.mxu0 0
      %895 = vmatprep.subr.bf16.mxu0 0
      %896 = vmatpush1.bf16.msra.mxu0 0
      %897 = vmatprep.subr.bf16.mxu0 0
      %898 = vmatpush1.bf16.msra.mxu0 0
      %899 = vmatprep.subr.bf16.mxu0 0
      %900 = vmatpush1.bf16.msra.mxu0 0
      %901 = vmatprep.subr.bf16.mxu0 0
      %902 = vmatpush1.bf16.msra.mxu0 0
      %903 = vmatprep.subr.bf16.mxu0 0
      %904 = vmatpush1.bf16.msra.mxu0 0
      %905 = vmatprep.subr.bf16.mxu0 0
      %906 = vmatpush1.bf16.msra.mxu0 %v826
      %907 = vmatprep.subr.bf16.mxu0 0
      %908 = vmatpush2.bf16.msra.mxu0 0
      %909 = vmatprep.subr.bf16.mxu0 0
      %910 = vmatpush2.bf16.msra.mxu0 0
      %911 = vmatprep.subr.bf16.mxu0 0
      %912 = vmatpush2.bf16.msra.mxu0 0
      %913 = vmatprep.subr.bf16.mxu0 0
      %914 = vmatpush2.bf16.msra.mxu0 0
      %915 = vmatprep.subr.bf16.mxu0 0
      %916 = vmatpush2.bf16.msra.mxu0 0
      %917 = vmatprep.subr.bf16.mxu0 0
      %918 = vmatpush2.bf16.msra.mxu0 0
      %919 = vmatprep.subr.bf16.mxu0 0
      %920 = vmatpush2.bf16.msra.mxu0 0
      %921 = vmatprep.subr.bf16.mxu0 0
      %922 = vmatpush2.bf16.msra.mxu0 0
      %923 = vmatprep.mubr.bf16.mxu0 0
      %924 = vmatmul.mubr.bf16.gmra.mxu0 %v829
      %v925 = vpop.f32.mrf.mxu0
      %v926 = vadd.f32 %v657, %v925
      %v927 = vpop.f32.mrf.mxu0
      %v928 = vpop.f32.mrf.mxu0
      %v929 = vadd.f32 %v660, %v928
      %v930 = vpop.f32.mrf.mxu0
      %931 = vmatprep.mubr.bf16.mxu0 0
      %932 = vmatmul.mubr.bf16.gmra.mxu0 %v832
      %v933 = vpop.f32.mrf.mxu0
      %v934 = vadd.f32 %v665, %v933
      %v935 = vpop.f32.mrf.mxu0
      %v936 = vpop.f32.mrf.mxu0
      %v937 = vadd.f32 %v668, %v936
      %v938 = vpop.f32.mrf.mxu0
      %939 = vmatprep.mubr.bf16.mxu0 0
      %940 = vmatmul.mubr.bf16.gmra.mxu0 %v835
      %v941 = vpop.f32.mrf.mxu0
      %v942 = vadd.f32 %v673, %v941
      %v943 = vpop.f32.mrf.mxu0
      %v944 = vpop.f32.mrf.mxu0
      %v945 = vadd.f32 %v676, %v944
      %v946 = vpop.f32.mrf.mxu0
      %947 = vmatprep.mubr.bf16.mxu0 0
      %948 = vmatmul.mubr.bf16.gmra.mxu0 %v838
      %v949 = vpop.f32.mrf.mxu0
      %v950 = vadd.f32 %v681, %v949
      %v951 = vpop.f32.mrf.mxu0
      %v952 = vpop.f32.mrf.mxu0
      %v953 = vadd.f32 %v684, %v952
      %v954 = vpop.f32.mrf.mxu0
      %955 = vmatprep.mubr.bf16.mxu0 0
      %956 = vmatmul.mubr.bf16.gmra.mxu0 %v841
      %v957 = vpop.f32.mrf.mxu0
      %v958 = vadd.f32 %v689, %v957
      %v959 = vpop.f32.mrf.mxu0
      %v960 = vpop.f32.mrf.mxu0
      %v961 = vadd.f32 %v692, %v960
      %v962 = vpop.f32.mrf.mxu0
      %963 = vmatprep.mubr.bf16.mxu0 0
      %964 = vmatmul.mubr.bf16.gmra.mxu0 %v844
      %v965 = vpop.f32.mrf.mxu0
      %v966 = vadd.f32 %v697, %v965
      %v967 = vpop.f32.mrf.mxu0
      %v968 = vpop.f32.mrf.mxu0
      %v969 = vadd.f32 %v700, %v968
      %v970 = vpop.f32.mrf.mxu0
      %971 = vmatprep.mubr.bf16.mxu0 0
      %972 = vmatmul.mubr.bf16.gmra.mxu0 %v847
      %v973 = vpop.f32.mrf.mxu0
      %v974 = vadd.f32 %v705, %v973
      %v975 = vpop.f32.mrf.mxu0
      %v976 = vpop.f32.mrf.mxu0
      %v977 = vadd.f32 %v708, %v976
      %v978 = vpop.f32.mrf.mxu0
      %979 = vmatprep.mubr.bf16.mxu0 0
      %980 = vmatmul.mubr.bf16.gmra.mxu0 %v850
      %v981 = vpop.f32.mrf.mxu0
      %v982 = vadd.f32 %v713, %v981
      %v983 = vpop.f32.mrf.mxu0
      %v984 = vpop.f32.mrf.mxu0
      %v985 = vadd.f32 %v716, %v984
      %v986 = vpop.f32.mrf.mxu0
      %987 = vmatprep.mubr.bf16.mxu0 0
      %988 = vmatmul.mubr.bf16.gmra.mxu0 %v853
      %v989 = vpop.f32.mrf.mxu0
      %v990 = vadd.f32 %v721, %v989
      %v991 = vpop.f32.mrf.mxu0
      %v992 = vpop.f32.mrf.mxu0
      %v993 = vadd.f32 %v724, %v992
      %v994 = vpop.f32.mrf.mxu0
      %995 = vmatprep.mubr.bf16.mxu0 0
      %996 = vmatmul.mubr.bf16.gmra.mxu0 %v856
      %v997 = vpop.f32.mrf.mxu0
      %v998 = vadd.f32 %v729, %v997
      %v999 = vpop.f32.mrf.mxu0
      %v1000 = vpop.f32.mrf.mxu0
      %v1001 = vadd.f32 %v732, %v1000
      %v1002 = vpop.f32.mrf.mxu0
      %1003 = vmatprep.mubr.bf16.mxu0 0
      %1004 = vmatmul.mubr.bf16.gmra.mxu0 %v859
      %v1005 = vpop.f32.mrf.mxu0
      %v1006 = vadd.f32 %v737, %v1005
      %v1007 = vpop.f32.mrf.mxu0
      %v1008 = vpop.f32.mrf.mxu0
      %v1009 = vadd.f32 %v740, %v1008
      %v1010 = vpop.f32.mrf.mxu0
      %1011 = vmatprep.mubr.bf16.mxu0 0
      %1012 = vmatmul.mubr.bf16.gmra.mxu0 %v862
      %v1013 = vpop.f32.mrf.mxu0
      %v1014 = vadd.f32 %v745, %v1013
      %v1015 = vpop.f32.mrf.mxu0
      %v1016 = vpop.f32.mrf.mxu0
      %v1017 = vadd.f32 %v748, %v1016
      %v1018 = vpop.f32.mrf.mxu0
      %1019 = vmatprep.mubr.bf16.mxu0 0
      %1020 = vmatmul.mubr.bf16.gmra.mxu0 %v865
      %v1021 = vpop.f32.mrf.mxu0
      %v1022 = vadd.f32 %v753, %v1021
      %v1023 = vpop.f32.mrf.mxu0
      %v1024 = vpop.f32.mrf.mxu0
      %v1025 = vadd.f32 %v756, %v1024
      %v1026 = vpop.f32.mrf.mxu0
      %1027 = vmatprep.mubr.bf16.mxu0 0
      %1028 = vmatmul.mubr.bf16.gmra.mxu0 %v868
      %v1029 = vpop.f32.mrf.mxu0
      %v1030 = vadd.f32 %v761, %v1029
      %v1031 = vpop.f32.mrf.mxu0
      %v1032 = vpop.f32.mrf.mxu0
      %v1033 = vadd.f32 %v764, %v1032
      %v1034 = vpop.f32.mrf.mxu0
      %1035 = vmatprep.mubr.bf16.mxu0 0
      %1036 = vmatmul.mubr.bf16.gmra.mxu0 %v871
      %v1037 = vpop.f32.mrf.mxu0
      %v1038 = vadd.f32 %v769, %v1037
      %v1039 = vpop.f32.mrf.mxu0
      %v1040 = vpop.f32.mrf.mxu0
      %v1041 = vadd.f32 %v772, %v1040
      %v1042 = vpop.f32.mrf.mxu0
      %1043 = vmatprep.mubr.bf16.mxu0 0
      %1044 = vmatmul.mubr.bf16.gmra.mxu0 %v874
      %v1045 = vpop.f32.mrf.mxu0
      %v1046 = vadd.f32 %v777, %v1045
      %v1047 = vpop.f32.mrf.mxu0
      %v1048 = vpop.f32.mrf.mxu0
      %v1049 = vadd.f32 %v780, %v1048
      %v1050 = vpop.f32.mrf.mxu0
      %1051 = vmatprep.mubr.bf16.mxu0 0
      %1052 = vmatmul.mubr.bf16.gmra.mxu0 %v877
      %v1053 = vpop.f32.mrf.mxu0
      %v1054 = vadd.f32 %v785, %v1053
      %v1055 = vpop.f32.mrf.mxu0
      %v1056 = vpop.f32.mrf.mxu0
      %v1057 = vadd.f32 %v788, %v1056
      %v1058 = vpop.f32.mrf.mxu0
      %1059 = vmatprep.mubr.bf16.mxu0 0
      %1060 = vmatmul.mubr.bf16.gmra.mxu0 %v880
      %v1061 = vpop.f32.mrf.mxu0
      %v1062 = vadd.f32 %v793, %v1061
      %v1063 = vpop.f32.mrf.mxu0
      %v1064 = vpop.f32.mrf.mxu0
      %v1065 = vadd.f32 %v796, %v1064
      %v1066 = vpop.f32.mrf.mxu0
      %1067 = vmatprep.mubr.bf16.mxu0 0
      %1068 = vmatmul.mubr.bf16.gmra.mxu0 %v883
      %v1069 = vpop.f32.mrf.mxu0
      %v1070 = vadd.f32 %v801, %v1069
      %v1071 = vpop.f32.mrf.mxu0
      %v1072 = vpop.f32.mrf.mxu0
      %v1073 = vadd.f32 %v804, %v1072
      %v1074 = vpop.f32.mrf.mxu0
      %1075 = vmatprep.mubr.bf16.mxu0 0
      %1076 = vmatmul.mubr.bf16.gmra.mxu0 %v886
      %v1077 = vpop.f32.mrf.mxu0
      %v1078 = vadd.f32 %v809, %v1077
      %v1079 = vpop.f32.mrf.mxu0
      %v1080 = vpop.f32.mrf.mxu0
      %v1081 = vadd.f32 %v812, %v1080
      %v1082 = vpop.f32.mrf.mxu0
      %1083 = vmatprep.mubr.bf16.mxu0 0
      %1084 = vmatmul.mubr.bf16.gmra.mxu0 %v889
      %v1085 = vpop.f32.mrf.mxu0
      %v1086 = vadd.f32 %v817, %v1085
      %v1087 = vpop.f32.mrf.mxu0
      %v1088 = vpop.f32.mrf.mxu0
      %v1089 = vpop.f32.mrf.mxu0
      %1090 = vdwg.mxu0
      %v1091 = vld [vmem:[#allocation2 + $0x7] sm:$0xff]
      %v1092 = vld [vmem:[#allocation2 + $0xf] sm:$0xff]
      %v1093 = vld [vmem:[#allocation2 + $0x17] sm:$0xff]
      %v1094 = vld [vmem:[#allocation2 + $0x1f] sm:$0xff]
      %v1095 = vld [vmem:[#allocation2 + $0x27] sm:$0xff]
      %v1096 = vld [vmem:[#allocation2 + $0x2f] sm:$0xff]
      %v1097 = vld [vmem:[#allocation2 + $0x37] sm:$0xff]
      %v1098 = vld [vmem:[#allocation2 + $0x3f] sm:$0xff]
      %v1099 = vld [vmem:[#allocation2 + $0x47] sm:$0xff]
      %v1100 = vld [vmem:[#allocation2 + $0x4f] sm:$0xff]
      %v1101 = vld [vmem:[#allocation2 + $0x57] sm:$0xff]
      %v1102 = vld [vmem:[#allocation2 + $0x5f] sm:$0xff]
      %v1103 = vld [vmem:[#allocation2 + $0x67] sm:$0xff]
      %v1104 = vld [vmem:[#allocation2 + $0x6f] sm:$0xff]
      %v1105 = vld [vmem:[#allocation2 + $0x77] sm:$0xff]
      %v1106 = vld [vmem:[#allocation2 + $0x7f] sm:$0xff]
      %v1107 = vld [vmem:[#allocation2 + $0x87] sm:$0xff]
      %v1108 = vld [vmem:[#allocation2 + $0x8f] sm:$0xff]
      %v1109 = vld [vmem:[#allocation2 + $0x97] sm:$0xff]
      %v1110 = vld [vmem:[#allocation2 + $0x9f] sm:$0xff]
      %v1111 = vld [vmem:[#allocation2 + $0xa7] sm:$0xff]
      %v1112 = vld [vmem:[#allocation2 + $0xaf] sm:$0xff]
      %v1113 = vld [vmem:[#allocation2 + $0xb7] sm:$0xff]
      %v1114 = vld [vmem:[#allocation2 + $0xbf] sm:$0xff]
      %v1115 = vld [vmem:[#allocation2 + $0xc7] sm:$0xff]
      %v1116 = vld [vmem:[#allocation2 + $0xcf] sm:$0xff]
      %v1117 = vld [vmem:[#allocation2 + $0xd7] sm:$0xff]
      %v1118 = vld [vmem:[#allocation2 + $0xdf] sm:$0xff]
      %v1119 = vld [vmem:[#allocation2 + $0xe7] sm:$0xff]
      %v1120 = vld [vmem:[#allocation2 + $0xef] sm:$0xff]
      %v1121 = vld [vmem:[#allocation2 + $0xf7] sm:$0xff]
      %v1122 = vld [vmem:[#allocation2 + $0xff] sm:$0xff]
      %v1123 = vld [vmem:[#allocation2 + $0x107] sm:$0xff]
      %v1124 = vld [vmem:[#allocation2 + $0x10f] sm:$0xff]
      %v1125 = vld [vmem:[#allocation2 + $0x117] sm:$0xff]
      %v1126 = vld [vmem:[#allocation2 + $0x11f] sm:$0xff]
      %v1127 = vld [vmem:[#allocation2 + $0x127] sm:$0xff]
      %v1128 = vld [vmem:[#allocation2 + $0x12f] sm:$0xff]
      %v1129 = vld [vmem:[#allocation2 + $0x137] sm:$0xff]
      %v1130 = vld [vmem:[#allocation2 + $0x13f] sm:$0xff]
      %v1131 = vld [vmem:[#allocation2 + $0x147] sm:$0xff]
      %v1132 = vpack.c.bf16 %v1092, %v1091
      %v1133 = vpack.c.bf16 %v1094, %v1093
      %v1134 = vpack.c.bf16 %v1096, %v1095
      %v1135 = vpack.c.bf16 %v1098, %v1097
      %v1136 = vpack.c.bf16 %v1100, %v1099
      %v1137 = vpack.c.bf16 %v1102, %v1101
      %v1138 = vpack.c.bf16 %v1104, %v1103
      %v1139 = vpack.c.bf16 %v1106, %v1105
      %v1140 = vpack.c.bf16 %v1108, %v1107
      %v1141 = vpack.c.bf16 %v1110, %v1109
      %v1142 = vpack.c.bf16 %v1112, %v1111
      %v1143 = vpack.c.bf16 %v1114, %v1113
      %v1144 = vpack.c.bf16 %v1116, %v1115
      %v1145 = vpack.c.bf16 %v1118, %v1117
      %v1146 = vpack.c.bf16 %v1120, %v1119
      %v1147 = vpack.c.bf16 %v1122, %v1121
      %v1148 = vpack.c.bf16 %v1124, %v1123
      %v1149 = vpack.c.bf16 %v1126, %v1125
      %v1150 = vpack.c.bf16 %v1128, %v1127
      %v1151 = vpack.c.bf16 %v1130, %v1129
      %v1152 = vpack.c.bf16 %v1131, %v1131
      %s1153 = scalar_lea.vmem %s2, 16
      %v1154 = vld [vmem:[%s1153] sm:$0xf]
      %v1155 = vld [vmem:[%s1153 + $0x4] sm:$0xf]
      %v1158 = vunpack.c.l.b16 %v1154
      %v1159 = vunpack.c.l.b16 %v1155
      %v1160 = vpack.c.b16 %v1159, %v1158
      %v1163 = vsel %vm558, %v1132, 0
      %v1166 = vsel %vm558, %v1133, 0
      %v1169 = vsel %vm558, %v1134, 0
      %v1172 = vsel %vm558, %v1135, 0
      %v1175 = vsel %vm558, %v1136, 0
      %v1178 = vsel %vm558, %v1137, 0
      %v1181 = vsel %vm558, %v1138, 0
      %v1184 = vsel %vm558, %v1139, 0
      %v1187 = vsel %vm558, %v1140, 0
      %v1190 = vsel %vm558, %v1141, 0
      %v1193 = vsel %vm558, %v1142, 0
      %v1196 = vsel %vm558, %v1143, 0
      %v1199 = vsel %vm558, %v1144, 0
      %v1202 = vsel %vm558, %v1145, 0
      %v1205 = vsel %vm558, %v1146, 0
      %v1208 = vsel %vm558, %v1147, 0
      %v1211 = vsel %vm558, %v1148, 0
      %v1214 = vsel %vm558, %v1149, 0
      %v1217 = vsel %vm558, %v1150, 0
      %v1220 = vsel %vm558, %v1151, 0
      %v1223 = vsel %vm558, %v1152, 0
      %1225 = vmatprep.subr.bf16.mxu0 0
      %1226 = vmatpush1.bf16.msra.mxu0 0
      %1227 = vmatprep.subr.bf16.mxu0 0
      %1228 = vmatpush1.bf16.msra.mxu0 0
      %1229 = vmatprep.subr.bf16.mxu0 0
      %1230 = vmatpush1.bf16.msra.mxu0 0
      %1231 = vmatprep.subr.bf16.mxu0 0
      %1232 = vmatpush1.bf16.msra.mxu0 0
      %1233 = vmatprep.subr.bf16.mxu0 0
      %1234 = vmatpush1.bf16.msra.mxu0 0
      %1235 = vmatprep.subr.bf16.mxu0 0
      %1236 = vmatpush1.bf16.msra.mxu0 0
      %1237 = vmatprep.subr.bf16.mxu0 0
      %1238 = vmatpush1.bf16.msra.mxu0 0
      %1239 = vmatprep.subr.bf16.mxu0 0
      %1240 = vmatpush1.bf16.msra.mxu0 %v1160
      %1241 = vmatprep.subr.bf16.mxu0 0
      %1242 = vmatpush2.bf16.msra.mxu0 0
      %1243 = vmatprep.subr.bf16.mxu0 0
      %1244 = vmatpush2.bf16.msra.mxu0 0
      %1245 = vmatprep.subr.bf16.mxu0 0
      %1246 = vmatpush2.bf16.msra.mxu0 0
      %1247 = vmatprep.subr.bf16.mxu0 0
      %1248 = vmatpush2.bf16.msra.mxu0 0
      %1249 = vmatprep.subr.bf16.mxu0 0
      %1250 = vmatpush2.bf16.msra.mxu0 0
      %1251 = vmatprep.subr.bf16.mxu0 0
      %1252 = vmatpush2.bf16.msra.mxu0 0
      %1253 = vmatprep.subr.bf16.mxu0 0
      %1254 = vmatpush2.bf16.msra.mxu0 0
      %1255 = vmatprep.subr.bf16.mxu0 0
      %1256 = vmatpush2.bf16.msra.mxu0 0
      %1257 = vmatprep.mubr.bf16.mxu0 0
      %1258 = vmatmul.mubr.bf16.gmra.mxu0 %v1163
      %v1259 = vpop.f32.mrf.mxu0
      %v1260 = vadd.f32 0.0, %v1259
      %v1261 = vpop.f32.mrf.mxu0
      %v1262 = vpop.f32.mrf.mxu0
      %v1263 = vadd.f32 0.0, %v1262
      %v1264 = vpop.f32.mrf.mxu0
      %1265 = vmatprep.mubr.bf16.mxu0 0
      %1266 = vmatmul.mubr.bf16.gmra.mxu0 %v1166
      %v1267 = vpop.f32.mrf.mxu0
      %v1268 = vadd.f32 0.0, %v1267
      %v1269 = vpop.f32.mrf.mxu0
      %v1270 = vpop.f32.mrf.mxu0
      %v1271 = vadd.f32 0.0, %v1270
      %v1272 = vpop.f32.mrf.mxu0
      %1273 = vmatprep.mubr.bf16.mxu0 0
      %1274 = vmatmul.mubr.bf16.gmra.mxu0 %v1169
      %v1275 = vpop.f32.mrf.mxu0
      %v1276 = vadd.f32 0.0, %v1275
      %v1277 = vpop.f32.mrf.mxu0
      %v1278 = vpop.f32.mrf.mxu0
      %v1279 = vadd.f32 0.0, %v1278
      %v1280 = vpop.f32.mrf.mxu0
      %1281 = vmatprep.mubr.bf16.mxu0 0
      %1282 = vmatmul.mubr.bf16.gmra.mxu0 %v1172
      %v1283 = vpop.f32.mrf.mxu0
      %v1284 = vadd.f32 0.0, %v1283
      %v1285 = vpop.f32.mrf.mxu0
      %v1286 = vpop.f32.mrf.mxu0
      %v1287 = vadd.f32 0.0, %v1286
      %v1288 = vpop.f32.mrf.mxu0
      %1289 = vmatprep.mubr.bf16.mxu0 0
      %1290 = vmatmul.mubr.bf16.gmra.mxu0 %v1175
      %v1291 = vpop.f32.mrf.mxu0
      %v1292 = vadd.f32 0.0, %v1291
      %v1293 = vpop.f32.mrf.mxu0
      %v1294 = vpop.f32.mrf.mxu0
      %v1295 = vadd.f32 0.0, %v1294
      %v1296 = vpop.f32.mrf.mxu0
      %1297 = vmatprep.mubr.bf16.mxu0 0
      %1298 = vmatmul.mubr.bf16.gmra.mxu0 %v1178
      %v1299 = vpop.f32.mrf.mxu0
      %v1300 = vadd.f32 0.0, %v1299
      %v1301 = vpop.f32.mrf.mxu0
      %v1302 = vpop.f32.mrf.mxu0
      %v1303 = vadd.f32 0.0, %v1302
      %v1304 = vpop.f32.mrf.mxu0
      %1305 = vmatprep.mubr.bf16.mxu0 0
      %1306 = vmatmul.mubr.bf16.gmra.mxu0 %v1181
      %v1307 = vpop.f32.mrf.mxu0
      %v1308 = vadd.f32 0.0, %v1307
      %v1309 = vpop.f32.mrf.mxu0
      %v1310 = vpop.f32.mrf.mxu0
      %v1311 = vadd.f32 0.0, %v1310
      %v1312 = vpop.f32.mrf.mxu0
      %1313 = vmatprep.mubr.bf16.mxu0 0
      %1314 = vmatmul.mubr.bf16.gmra.mxu0 %v1184
      %v1315 = vpop.f32.mrf.mxu0
      %v1316 = vadd.f32 0.0, %v1315
      %v1317 = vpop.f32.mrf.mxu0
      %v1318 = vpop.f32.mrf.mxu0
      %v1319 = vadd.f32 0.0, %v1318
      %v1320 = vpop.f32.mrf.mxu0
      %1321 = vmatprep.mubr.bf16.mxu0 0
      %1322 = vmatmul.mubr.bf16.gmra.mxu0 %v1187
      %v1323 = vpop.f32.mrf.mxu0
      %v1324 = vadd.f32 0.0, %v1323
      %v1325 = vpop.f32.mrf.mxu0
      %v1326 = vpop.f32.mrf.mxu0
      %v1327 = vadd.f32 0.0, %v1326
      %v1328 = vpop.f32.mrf.mxu0
      %1329 = vmatprep.mubr.bf16.mxu0 0
      %1330 = vmatmul.mubr.bf16.gmra.mxu0 %v1190
      %v1331 = vpop.f32.mrf.mxu0
      %v1332 = vadd.f32 0.0, %v1331
      %v1333 = vpop.f32.mrf.mxu0
      %v1334 = vpop.f32.mrf.mxu0
      %v1335 = vadd.f32 0.0, %v1334
      %v1336 = vpop.f32.mrf.mxu0
      %1337 = vmatprep.mubr.bf16.mxu0 0
      %1338 = vmatmul.mubr.bf16.gmra.mxu0 %v1193
      %v1339 = vpop.f32.mrf.mxu0
      %v1340 = vadd.f32 0.0, %v1339
      %v1341 = vpop.f32.mrf.mxu0
      %v1342 = vpop.f32.mrf.mxu0
      %v1343 = vadd.f32 0.0, %v1342
      %v1344 = vpop.f32.mrf.mxu0
      %1345 = vmatprep.mubr.bf16.mxu0 0
      %1346 = vmatmul.mubr.bf16.gmra.mxu0 %v1196
      %v1347 = vpop.f32.mrf.mxu0
      %v1348 = vadd.f32 0.0, %v1347
      %v1349 = vpop.f32.mrf.mxu0
      %v1350 = vpop.f32.mrf.mxu0
      %v1351 = vadd.f32 0.0, %v1350
      %v1352 = vpop.f32.mrf.mxu0
      %1353 = vmatprep.mubr.bf16.mxu0 0
      %1354 = vmatmul.mubr.bf16.gmra.mxu0 %v1199
      %v1355 = vpop.f32.mrf.mxu0
      %v1356 = vadd.f32 0.0, %v1355
      %v1357 = vpop.f32.mrf.mxu0
      %v1358 = vpop.f32.mrf.mxu0
      %v1359 = vadd.f32 0.0, %v1358
      %v1360 = vpop.f32.mrf.mxu0
      %1361 = vmatprep.mubr.bf16.mxu0 0
      %1362 = vmatmul.mubr.bf16.gmra.mxu0 %v1202
      %v1363 = vpop.f32.mrf.mxu0
      %v1364 = vadd.f32 0.0, %v1363
      %v1365 = vpop.f32.mrf.mxu0
      %v1366 = vpop.f32.mrf.mxu0
      %v1367 = vadd.f32 0.0, %v1366
      %v1368 = vpop.f32.mrf.mxu0
      %1369 = vmatprep.mubr.bf16.mxu0 0
      %1370 = vmatmul.mubr.bf16.gmra.mxu0 %v1205
      %v1371 = vpop.f32.mrf.mxu0
      %v1372 = vadd.f32 0.0, %v1371
      %v1373 = vpop.f32.mrf.mxu0
      %v1374 = vpop.f32.mrf.mxu0
      %v1375 = vadd.f32 0.0, %v1374
      %v1376 = vpop.f32.mrf.mxu0
      %1377 = vmatprep.mubr.bf16.mxu0 0
      %1378 = vmatmul.mubr.bf16.gmra.mxu0 %v1208
      %v1379 = vpop.f32.mrf.mxu0
      %v1380 = vadd.f32 0.0, %v1379
      %v1381 = vpop.f32.mrf.mxu0
      %v1382 = vpop.f32.mrf.mxu0
      %v1383 = vadd.f32 0.0, %v1382
      %v1384 = vpop.f32.mrf.mxu0
      %1385 = vmatprep.mubr.bf16.mxu0 0
      %1386 = vmatmul.mubr.bf16.gmra.mxu0 %v1211
      %v1387 = vpop.f32.mrf.mxu0
      %v1388 = vadd.f32 0.0, %v1387
      %v1389 = vpop.f32.mrf.mxu0
      %v1390 = vpop.f32.mrf.mxu0
      %v1391 = vadd.f32 0.0, %v1390
      %v1392 = vpop.f32.mrf.mxu0
      %1393 = vmatprep.mubr.bf16.mxu0 0
      %1394 = vmatmul.mubr.bf16.gmra.mxu0 %v1214
      %v1395 = vpop.f32.mrf.mxu0
      %v1396 = vadd.f32 0.0, %v1395
      %v1397 = vpop.f32.mrf.mxu0
      %v1398 = vpop.f32.mrf.mxu0
      %v1399 = vadd.f32 0.0, %v1398
      %v1400 = vpop.f32.mrf.mxu0
      %1401 = vmatprep.mubr.bf16.mxu0 0
      %1402 = vmatmul.mubr.bf16.gmra.mxu0 %v1217
      %v1403 = vpop.f32.mrf.mxu0
      %v1404 = vadd.f32 0.0, %v1403
      %v1405 = vpop.f32.mrf.mxu0
      %v1406 = vpop.f32.mrf.mxu0
      %v1407 = vadd.f32 0.0, %v1406
      %v1408 = vpop.f32.mrf.mxu0
      %1409 = vmatprep.mubr.bf16.mxu0 0
      %1410 = vmatmul.mubr.bf16.gmra.mxu0 %v1220
      %v1411 = vpop.f32.mrf.mxu0
      %v1412 = vadd.f32 0.0, %v1411
      %v1413 = vpop.f32.mrf.mxu0
      %v1414 = vpop.f32.mrf.mxu0
      %v1415 = vadd.f32 0.0, %v1414
      %v1416 = vpop.f32.mrf.mxu0
      %1417 = vmatprep.mubr.bf16.mxu0 0
      %1418 = vmatmul.mubr.bf16.gmra.mxu0 %v1223
      %v1419 = vpop.f32.mrf.mxu0
      %v1420 = vadd.f32 0.0, %v1419
      %v1421 = vpop.f32.mrf.mxu0
      %v1422 = vpop.f32.mrf.mxu0
      %v1423 = vpop.f32.mrf.mxu0
      %1424 = vdwg.mxu0
      %v1425 = vadd.f32 %v926, %v1260
      %v1426 = vadd.f32 %v929, %v1263
      %v1427 = vadd.f32 %v934, %v1268
      %v1428 = vadd.f32 %v937, %v1271
      %v1429 = vadd.f32 %v942, %v1276
      %v1430 = vadd.f32 %v945, %v1279
      %v1431 = vadd.f32 %v950, %v1284
      %v1432 = vadd.f32 %v953, %v1287
      %v1433 = vadd.f32 %v958, %v1292
      %v1434 = vadd.f32 %v961, %v1295
      %v1435 = vadd.f32 %v966, %v1300
      %v1436 = vadd.f32 %v969, %v1303
      %v1437 = vadd.f32 %v974, %v1308
      %v1438 = vadd.f32 %v977, %v1311
      %v1439 = vadd.f32 %v982, %v1316
      %v1440 = vadd.f32 %v985, %v1319
      %v1441 = vadd.f32 %v990, %v1324
      %v1442 = vadd.f32 %v993, %v1327
      %v1443 = vadd.f32 %v998, %v1332
      %v1444 = vadd.f32 %v1001, %v1335
      %v1445 = vadd.f32 %v1006, %v1340
      %v1446 = vadd.f32 %v1009, %v1343
      %v1447 = vadd.f32 %v1014, %v1348
      %v1448 = vadd.f32 %v1017, %v1351
      %v1449 = vadd.f32 %v1022, %v1356
      %v1450 = vadd.f32 %v1025, %v1359
      %v1451 = vadd.f32 %v1030, %v1364
      %v1452 = vadd.f32 %v1033, %v1367
      %v1453 = vadd.f32 %v1038, %v1372
      %v1454 = vadd.f32 %v1041, %v1375
      %v1455 = vadd.f32 %v1046, %v1380
      %v1456 = vadd.f32 %v1049, %v1383
      %v1457 = vadd.f32 %v1054, %v1388
      %v1458 = vadd.f32 %v1057, %v1391
      %v1459 = vadd.f32 %v1062, %v1396
      %v1460 = vadd.f32 %v1065, %v1399
      %v1461 = vadd.f32 %v1070, %v1404
      %v1462 = vadd.f32 %v1073, %v1407
      %v1463 = vadd.f32 %v1078, %v1412
      %v1464 = vadd.f32 %v1081, %v1415
      %v1465 = vadd.f32 %v1086, %v1420
      %v1466 = vld [vmem:[#allocation2 + $0x17] sm:$0xff]
      %v1467 = vld [vmem:[#allocation2 + $0x1f] sm:$0xff]
      %v1468 = vld [vmem:[#allocation2 + $0x27] sm:$0xff]
      %v1469 = vld [vmem:[#allocation2 + $0x2f] sm:$0xff]
      %v1470 = vld [vmem:[#allocation2 + $0x37] sm:$0xff]
      %v1471 = vld [vmem:[#allocation2 + $0x3f] sm:$0xff]
      %v1472 = vld [vmem:[#allocation2 + $0x47] sm:$0xff]
      %v1473 = vld [vmem:[#allocation2 + $0x4f] sm:$0xff]
      %v1474 = vld [vmem:[#allocation2 + $0x57] sm:$0xff]
      %v1475 = vld [vmem:[#allocation2 + $0x5f] sm:$0xff]
      %v1476 = vld [vmem:[#allocation2 + $0x67] sm:$0xff]
      %v1477 = vld [vmem:[#allocation2 + $0x6f] sm:$0xff]
      %v1478 = vld [vmem:[#allocation2 + $0x77] sm:$0xff]
      %v1479 = vld [vmem:[#allocation2 + $0x7f] sm:$0xff]
      %v1480 = vld [vmem:[#allocation2 + $0x87] sm:$0xff]
      %v1481 = vld [vmem:[#allocation2 + $0x8f] sm:$0xff]
      %v1482 = vld [vmem:[#allocation2 + $0x97] sm:$0xff]
      %v1483 = vld [vmem:[#allocation2 + $0x9f] sm:$0xff]
      %v1484 = vld [vmem:[#allocation2 + $0xa7] sm:$0xff]
      %v1485 = vld [vmem:[#allocation2 + $0xaf] sm:$0xff]
      %v1486 = vld [vmem:[#allocation2 + $0xb7] sm:$0xff]
      %v1487 = vld [vmem:[#allocation2 + $0xbf] sm:$0xff]
      %v1488 = vld [vmem:[#allocation2 + $0xc7] sm:$0xff]
      %v1489 = vld [vmem:[#allocation2 + $0xcf] sm:$0xff]
      %v1490 = vld [vmem:[#allocation2 + $0xd7] sm:$0xff]
      %v1491 = vld [vmem:[#allocation2 + $0xdf] sm:$0xff]
      %v1492 = vld [vmem:[#allocation2 + $0xe7] sm:$0xff]
      %v1493 = vld [vmem:[#allocation2 + $0xef] sm:$0xff]
      %v1494 = vld [vmem:[#allocation2 + $0xf7] sm:$0xff]
      %v1495 = vld [vmem:[#allocation2 + $0xff] sm:$0xff]
      %v1496 = vld [vmem:[#allocation2 + $0x107] sm:$0xff]
      %v1497 = vld [vmem:[#allocation2 + $0x10f] sm:$0xff]
      %v1498 = vld [vmem:[#allocation2 + $0x117] sm:$0xff]
      %v1499 = vld [vmem:[#allocation2 + $0x11f] sm:$0xff]
      %v1500 = vld [vmem:[#allocation2 + $0x127] sm:$0xff]
      %v1501 = vld [vmem:[#allocation2 + $0x12f] sm:$0xff]
      %v1502 = vld [vmem:[#allocation2 + $0x137] sm:$0xff]
      %v1503 = vld [vmem:[#allocation2 + $0x13f] sm:$0xff]
      %v1504 = vld [vmem:[#allocation2 + $0x147] sm:$0xff]
      %v1505 = vld [vmem:[#allocation2 + $0x14f] sm:$0xff]
      %v1506 = vld [vmem:[#allocation2 + $0x157] sm:$0xff]
      %v1507 = vpack.c.bf16 %v1467, %v1466
      %v1508 = vpack.c.bf16 %v1469, %v1468
      %v1509 = vpack.c.bf16 %v1471, %v1470
      %v1510 = vpack.c.bf16 %v1473, %v1472
      %v1511 = vpack.c.bf16 %v1475, %v1474
      %v1512 = vpack.c.bf16 %v1477, %v1476
      %v1513 = vpack.c.bf16 %v1479, %v1478
      %v1514 = vpack.c.bf16 %v1481, %v1480
      %v1515 = vpack.c.bf16 %v1483, %v1482
      %v1516 = vpack.c.bf16 %v1485, %v1484
      %v1517 = vpack.c.bf16 %v1487, %v1486
      %v1518 = vpack.c.bf16 %v1489, %v1488
      %v1519 = vpack.c.bf16 %v1491, %v1490
      %v1520 = vpack.c.bf16 %v1493, %v1492
      %v1521 = vpack.c.bf16 %v1495, %v1494
      %v1522 = vpack.c.bf16 %v1497, %v1496
      %v1523 = vpack.c.bf16 %v1499, %v1498
      %v1524 = vpack.c.bf16 %v1501, %v1500
      %v1525 = vpack.c.bf16 %v1503, %v1502
      %v1526 = vpack.c.bf16 %v1505, %v1504
      %v1527 = vpack.c.bf16 %v1506, %v1506
      %s1528 = scalar_lea.vmem %s2, 24
      %v1529 = vld [vmem:[%s1528] sm:$0xf]
      %v1530 = vld [vmem:[%s1528 + $0x4] sm:$0xf]
      %v1533 = vunpack.c.l.b16 %v1529
      %v1534 = vunpack.c.l.b16 %v1530
      %v1535 = vpack.c.b16 %v1534, %v1533
      %v1538 = vsel %vm558, %v1507, 0
      %v1541 = vsel %vm558, %v1508, 0
      %v1544 = vsel %vm558, %v1509, 0
      %v1547 = vsel %vm558, %v1510, 0
      %v1550 = vsel %vm558, %v1511, 0
      %v1553 = vsel %vm558, %v1512, 0
      %v1556 = vsel %vm558, %v1513, 0
      %v1559 = vsel %vm558, %v1514, 0
      %v1562 = vsel %vm558, %v1515, 0
      %v1565 = vsel %vm558, %v1516, 0
      %v1568 = vsel %vm558, %v1517, 0
      %v1571 = vsel %vm558, %v1518, 0
      %v1574 = vsel %vm558, %v1519, 0
      %v1577 = vsel %vm558, %v1520, 0
      %v1580 = vsel %vm558, %v1521, 0
      %v1583 = vsel %vm558, %v1522, 0
      %v1586 = vsel %vm558, %v1523, 0
      %v1589 = vsel %vm558, %v1524, 0
      %v1592 = vsel %vm558, %v1525, 0
      %v1595 = vsel %vm558, %v1526, 0
      %v1598 = vsel %vm558, %v1527, 0
      %1600 = vmatprep.subr.bf16.mxu0 0
      %1601 = vmatpush1.bf16.msra.mxu0 0
      %1602 = vmatprep.subr.bf16.mxu0 0
      %1603 = vmatpush1.bf16.msra.mxu0 0
      %1604 = vmatprep.subr.bf16.mxu0 0
      %1605 = vmatpush1.bf16.msra.mxu0 0
      %1606 = vmatprep.subr.bf16.mxu0 0
      %1607 = vmatpush1.bf16.msra.mxu0 0
      %1608 = vmatprep.subr.bf16.mxu0 0
      %1609 = vmatpush1.bf16.msra.mxu0 0
      %1610 = vmatprep.subr.bf16.mxu0 0
      %1611 = vmatpush1.bf16.msra.mxu0 0
      %1612 = vmatprep.subr.bf16.mxu0 0
      %1613 = vmatpush1.bf16.msra.mxu0 0
      %1614 = vmatprep.subr.bf16.mxu0 0
      %1615 = vmatpush1.bf16.msra.mxu0 %v1535
      %1616 = vmatprep.subr.bf16.mxu0 0
      %1617 = vmatpush2.bf16.msra.mxu0 0
      %1618 = vmatprep.subr.bf16.mxu0 0
      %1619 = vmatpush2.bf16.msra.mxu0 0
      %1620 = vmatprep.subr.bf16.mxu0 0
      %1621 = vmatpush2.bf16.msra.mxu0 0
      %1622 = vmatprep.subr.bf16.mxu0 0
      %1623 = vmatpush2.bf16.msra.mxu0 0
      %1624 = vmatprep.subr.bf16.mxu0 0
      %1625 = vmatpush2.bf16.msra.mxu0 0
      %1626 = vmatprep.subr.bf16.mxu0 0
      %1627 = vmatpush2.bf16.msra.mxu0 0
      %1628 = vmatprep.subr.bf16.mxu0 0
      %1629 = vmatpush2.bf16.msra.mxu0 0
      %1630 = vmatprep.subr.bf16.mxu0 0
      %1631 = vmatpush2.bf16.msra.mxu0 0
      %1632 = vmatprep.mubr.bf16.mxu0 0
      %1633 = vmatmul.mubr.bf16.gmra.mxu0 %v1538
      %v1634 = vpop.f32.mrf.mxu0
      %v1635 = vadd.f32 0.0, %v1634
      %v1636 = vpop.f32.mrf.mxu0
      %v1637 = vpop.f32.mrf.mxu0
      %v1638 = vadd.f32 0.0, %v1637
      %v1639 = vpop.f32.mrf.mxu0
      %1640 = vmatprep.mubr.bf16.mxu0 0
      %1641 = vmatmul.mubr.bf16.gmra.mxu0 %v1541
      %v1642 = vpop.f32.mrf.mxu0
      %v1643 = vadd.f32 0.0, %v1642
      %v1644 = vpop.f32.mrf.mxu0
      %v1645 = vpop.f32.mrf.mxu0
      %v1646 = vadd.f32 0.0, %v1645
      %v1647 = vpop.f32.mrf.mxu0
      %1648 = vmatprep.mubr.bf16.mxu0 0
      %1649 = vmatmul.mubr.bf16.gmra.mxu0 %v1544
      %v1650 = vpop.f32.mrf.mxu0
      %v1651 = vadd.f32 0.0, %v1650
      %v1652 = vpop.f32.mrf.mxu0
      %v1653 = vpop.f32.mrf.mxu0
      %v1654 = vadd.f32 0.0, %v1653
      %v1655 = vpop.f32.mrf.mxu0
      %1656 = vmatprep.mubr.bf16.mxu0 0
      %1657 = vmatmul.mubr.bf16.gmra.mxu0 %v1547
      %v1658 = vpop.f32.mrf.mxu0
      %v1659 = vadd.f32 0.0, %v1658
      %v1660 = vpop.f32.mrf.mxu0
      %v1661 = vpop.f32.mrf.mxu0
      %v1662 = vadd.f32 0.0, %v1661
      %v1663 = vpop.f32.mrf.mxu0
      %1664 = vmatprep.mubr.bf16.mxu0 0
      %1665 = vmatmul.mubr.bf16.gmra.mxu0 %v1550
      %v1666 = vpop.f32.mrf.mxu0
      %v1667 = vadd.f32 0.0, %v1666
      %v1668 = vpop.f32.mrf.mxu0
      %v1669 = vpop.f32.mrf.mxu0
      %v1670 = vadd.f32 0.0, %v1669
      %v1671 = vpop.f32.mrf.mxu0
      %1672 = vmatprep.mubr.bf16.mxu0 0
      %1673 = vmatmul.mubr.bf16.gmra.mxu0 %v1553
      %v1674 = vpop.f32.mrf.mxu0
      %v1675 = vadd.f32 0.0, %v1674
      %v1676 = vpop.f32.mrf.mxu0
      %v1677 = vpop.f32.mrf.mxu0
      %v1678 = vadd.f32 0.0, %v1677
      %v1679 = vpop.f32.mrf.mxu0
      %1680 = vmatprep.mubr.bf16.mxu0 0
      %1681 = vmatmul.mubr.bf16.gmra.mxu0 %v1556
      %v1682 = vpop.f32.mrf.mxu0
      %v1683 = vadd.f32 0.0, %v1682
      %v1684 = vpop.f32.mrf.mxu0
      %v1685 = vpop.f32.mrf.mxu0
      %v1686 = vadd.f32 0.0, %v1685
      %v1687 = vpop.f32.mrf.mxu0
      %1688 = vmatprep.mubr.bf16.mxu0 0
      %1689 = vmatmul.mubr.bf16.gmra.mxu0 %v1559
      %v1690 = vpop.f32.mrf.mxu0
      %v1691 = vadd.f32 0.0, %v1690
      %v1692 = vpop.f32.mrf.mxu0
      %v1693 = vpop.f32.mrf.mxu0
      %v1694 = vadd.f32 0.0, %v1693
      %v1695 = vpop.f32.mrf.mxu0
      %1696 = vmatprep.mubr.bf16.mxu0 0
      %1697 = vmatmul.mubr.bf16.gmra.mxu0 %v1562
      %v1698 = vpop.f32.mrf.mxu0
      %v1699 = vadd.f32 0.0, %v1698
      %v1700 = vpop.f32.mrf.mxu0
      %v1701 = vpop.f32.mrf.mxu0
      %v1702 = vadd.f32 0.0, %v1701
      %v1703 = vpop.f32.mrf.mxu0
      %1704 = vmatprep.mubr.bf16.mxu0 0
      %1705 = vmatmul.mubr.bf16.gmra.mxu0 %v1565
      %v1706 = vpop.f32.mrf.mxu0
      %v1707 = vadd.f32 0.0, %v1706
      %v1708 = vpop.f32.mrf.mxu0
      %v1709 = vpop.f32.mrf.mxu0
      %v1710 = vadd.f32 0.0, %v1709
      %v1711 = vpop.f32.mrf.mxu0
      %1712 = vmatprep.mubr.bf16.mxu0 0
      %1713 = vmatmul.mubr.bf16.gmra.mxu0 %v1568
      %v1714 = vpop.f32.mrf.mxu0
      %v1715 = vadd.f32 0.0, %v1714
      %v1716 = vpop.f32.mrf.mxu0
      %v1717 = vpop.f32.mrf.mxu0
      %v1718 = vadd.f32 0.0, %v1717
      %v1719 = vpop.f32.mrf.mxu0
      %1720 = vmatprep.mubr.bf16.mxu0 0
      %1721 = vmatmul.mubr.bf16.gmra.mxu0 %v1571
      %v1722 = vpop.f32.mrf.mxu0
      %v1723 = vadd.f32 0.0, %v1722
      %v1724 = vpop.f32.mrf.mxu0
      %v1725 = vpop.f32.mrf.mxu0
      %v1726 = vadd.f32 0.0, %v1725
      %v1727 = vpop.f32.mrf.mxu0
      %1728 = vmatprep.mubr.bf16.mxu0 0
      %1729 = vmatmul.mubr.bf16.gmra.mxu0 %v1574
      %v1730 = vpop.f32.mrf.mxu0
      %v1731 = vadd.f32 0.0, %v1730
      %v1732 = vpop.f32.mrf.mxu0
      %v1733 = vpop.f32.mrf.mxu0
      %v1734 = vadd.f32 0.0, %v1733
      %v1735 = vpop.f32.mrf.mxu0
      %1736 = vmatprep.mubr.bf16.mxu0 0
      %1737 = vmatmul.mubr.bf16.gmra.mxu0 %v1577
      %v1738 = vpop.f32.mrf.mxu0
      %v1739 = vadd.f32 0.0, %v1738
      %v1740 = vpop.f32.mrf.mxu0
      %v1741 = vpop.f32.mrf.mxu0
      %v1742 = vadd.f32 0.0, %v1741
      %v1743 = vpop.f32.mrf.mxu0
      %1744 = vmatprep.mubr.bf16.mxu0 0
      %1745 = vmatmul.mubr.bf16.gmra.mxu0 %v1580
      %v1746 = vpop.f32.mrf.mxu0
      %v1747 = vadd.f32 0.0, %v1746
      %v1748 = vpop.f32.mrf.mxu0
      %v1749 = vpop.f32.mrf.mxu0
      %v1750 = vadd.f32 0.0, %v1749
      %v1751 = vpop.f32.mrf.mxu0
      %1752 = vmatprep.mubr.bf16.mxu0 0
      %1753 = vmatmul.mubr.bf16.gmra.mxu0 %v1583
      %v1754 = vpop.f32.mrf.mxu0
      %v1755 = vadd.f32 0.0, %v1754
      %v1756 = vpop.f32.mrf.mxu0
      %v1757 = vpop.f32.mrf.mxu0
      %v1758 = vadd.f32 0.0, %v1757
      %v1759 = vpop.f32.mrf.mxu0
      %1760 = vmatprep.mubr.bf16.mxu0 0
      %1761 = vmatmul.mubr.bf16.gmra.mxu0 %v1586
      %v1762 = vpop.f32.mrf.mxu0
      %v1763 = vadd.f32 0.0, %v1762
      %v1764 = vpop.f32.mrf.mxu0
      %v1765 = vpop.f32.mrf.mxu0
      %v1766 = vadd.f32 0.0, %v1765
      %v1767 = vpop.f32.mrf.mxu0
      %1768 = vmatprep.mubr.bf16.mxu0 0
      %1769 = vmatmul.mubr.bf16.gmra.mxu0 %v1589
      %v1770 = vpop.f32.mrf.mxu0
      %v1771 = vadd.f32 0.0, %v1770
      %v1772 = vpop.f32.mrf.mxu0
      %v1773 = vpop.f32.mrf.mxu0
      %v1774 = vadd.f32 0.0, %v1773
      %v1775 = vpop.f32.mrf.mxu0
      %1776 = vmatprep.mubr.bf16.mxu0 0
      %1777 = vmatmul.mubr.bf16.gmra.mxu0 %v1592
      %v1778 = vpop.f32.mrf.mxu0
      %v1779 = vadd.f32 0.0, %v1778
      %v1780 = vpop.f32.mrf.mxu0
      %v1781 = vpop.f32.mrf.mxu0
      %v1782 = vadd.f32 0.0, %v1781
      %v1783 = vpop.f32.mrf.mxu0
      %1784 = vmatprep.mubr.bf16.mxu0 0
      %1785 = vmatmul.mubr.bf16.gmra.mxu0 %v1595
      %v1786 = vpop.f32.mrf.mxu0
      %v1787 = vadd.f32 0.0, %v1786
      %v1788 = vpop.f32.mrf.mxu0
      %v1789 = vpop.f32.mrf.mxu0
      %v1790 = vadd.f32 0.0, %v1789
      %v1791 = vpop.f32.mrf.mxu0
      %1792 = vmatprep.mubr.bf16.mxu0 0
      %1793 = vmatmul.mubr.bf16.gmra.mxu0 %v1598
      %v1794 = vpop.f32.mrf.mxu0
      %v1795 = vadd.f32 0.0, %v1794
      %v1796 = vpop.f32.mrf.mxu0
      %v1797 = vpop.f32.mrf.mxu0
      %v1798 = vpop.f32.mrf.mxu0
      %1799 = vdwg.mxu0
      %v1800 = vadd.f32 %v1425, %v1635
      %v1801 = vadd.f32 %v1426, %v1638
      %v1802 = vadd.f32 %v1427, %v1643
      %v1803 = vadd.f32 %v1428, %v1646
      %v1804 = vadd.f32 %v1429, %v1651
      %v1805 = vadd.f32 %v1430, %v1654
      %v1806 = vadd.f32 %v1431, %v1659
      %v1807 = vadd.f32 %v1432, %v1662
      %v1808 = vadd.f32 %v1433, %v1667
      %v1809 = vadd.f32 %v1434, %v1670
      %v1810 = vadd.f32 %v1435, %v1675
      %v1811 = vadd.f32 %v1436, %v1678
      %v1812 = vadd.f32 %v1437, %v1683
      %v1813 = vadd.f32 %v1438, %v1686
      %v1814 = vadd.f32 %v1439, %v1691
      %v1815 = vadd.f32 %v1440, %v1694
      %v1816 = vadd.f32 %v1441, %v1699
      %v1817 = vadd.f32 %v1442, %v1702
      %v1818 = vadd.f32 %v1443, %v1707
      %v1819 = vadd.f32 %v1444, %v1710
      %v1820 = vadd.f32 %v1445, %v1715
      %v1821 = vadd.f32 %v1446, %v1718
      %v1822 = vadd.f32 %v1447, %v1723
      %v1823 = vadd.f32 %v1448, %v1726
      %v1824 = vadd.f32 %v1449, %v1731
      %v1825 = vadd.f32 %v1450, %v1734
      %v1826 = vadd.f32 %v1451, %v1739
      %v1827 = vadd.f32 %v1452, %v1742
      %v1828 = vadd.f32 %v1453, %v1747
      %v1829 = vadd.f32 %v1454, %v1750
      %v1830 = vadd.f32 %v1455, %v1755
      %v1831 = vadd.f32 %v1456, %v1758
      %v1832 = vadd.f32 %v1457, %v1763
      %v1833 = vadd.f32 %v1458, %v1766
      %v1834 = vadd.f32 %v1459, %v1771
      %v1835 = vadd.f32 %v1460, %v1774
      %v1836 = vadd.f32 %v1461, %v1779
      %v1837 = vadd.f32 %v1462, %v1782
      %v1838 = vadd.f32 %v1463, %v1787
      %v1839 = vadd.f32 %v1464, %v1790
      %v1840 = vadd.f32 %v1465, %v1795
      %v1841 = vld [vmem:[#allocation2 + $0x18] sm:$0xff]
      %v1842 = vld [vmem:[#allocation2 + $0x20] sm:$0xff]
      %v1843 = vld [vmem:[#allocation2 + $0x28] sm:$0xff]
      %v1844 = vld [vmem:[#allocation2 + $0x30] sm:$0xff]
      %v1845 = vld [vmem:[#allocation2 + $0x38] sm:$0xff]
      %v1846 = vld [vmem:[#allocation2 + $0x40] sm:$0xff]
      %v1847 = vld [vmem:[#allocation2 + $0x48] sm:$0xff]
      %v1848 = vld [vmem:[#allocation2 + $0x50] sm:$0xff]
      %v1849 = vld [vmem:[#allocation2 + $0x58] sm:$0xff]
      %v1850 = vld [vmem:[#allocation2 + $0x60] sm:$0xff]
      %v1851 = vld [vmem:[#allocation2 + $0x68] sm:$0xff]
      %v1852 = vld [vmem:[#allocation2 + $0x70] sm:$0xff]
      %v1853 = vld [vmem:[#allocation2 + $0x78] sm:$0xff]
      %v1854 = vld [vmem:[#allocation2 + $0x80] sm:$0xff]
      %v1855 = vld [vmem:[#allocation2 + $0x88] sm:$0xff]
      %v1856 = vld [vmem:[#allocation2 + $0x90] sm:$0xff]
      %v1857 = vld [vmem:[#allocation2 + $0x98] sm:$0xff]
      %v1858 = vld [vmem:[#allocation2 + $0xa0] sm:$0xff]
      %v1859 = vld [vmem:[#allocation2 + $0xa8] sm:$0xff]
      %v1860 = vld [vmem:[#allocation2 + $0xb0] sm:$0xff]
      %v1861 = vld [vmem:[#allocation2 + $0xb8] sm:$0xff]
      %v1862 = vld [vmem:[#allocation2 + $0xc0] sm:$0xff]
      %v1863 = vld [vmem:[#allocation2 + $0xc8] sm:$0xff]
      %v1864 = vld [vmem:[#allocation2 + $0xd0] sm:$0xff]
      %v1865 = vld [vmem:[#allocation2 + $0xd8] sm:$0xff]
      %v1866 = vld [vmem:[#allocation2 + $0xe0] sm:$0xff]
      %v1867 = vld [vmem:[#allocation2 + $0xe8] sm:$0xff]
      %v1868 = vld [vmem:[#allocation2 + $0xf0] sm:$0xff]
      %v1869 = vld [vmem:[#allocation2 + $0xf8] sm:$0xff]
      %v1870 = vld [vmem:[#allocation2 + $0x100] sm:$0xff]
      %v1871 = vld [vmem:[#allocation2 + $0x108] sm:$0xff]
      %v1872 = vld [vmem:[#allocation2 + $0x110] sm:$0xff]
      %v1873 = vld [vmem:[#allocation2 + $0x118] sm:$0xff]
      %v1874 = vld [vmem:[#allocation2 + $0x120] sm:$0xff]
      %v1875 = vld [vmem:[#allocation2 + $0x128] sm:$0xff]
      %v1876 = vld [vmem:[#allocation2 + $0x130] sm:$0xff]
      %v1877 = vld [vmem:[#allocation2 + $0x138] sm:$0xff]
      %v1878 = vld [vmem:[#allocation2 + $0x140] sm:$0xff]
      %v1879 = vld [vmem:[#allocation2 + $0x148] sm:$0xff]
      %v1880 = vld [vmem:[#allocation2 + $0x150] sm:$0xff]
      %v1881 = vld [vmem:[#allocation2 + $0x158] sm:$0xff]
      %v1882 = vpack.c.bf16 %v1842, %v1841
      %v1883 = vpack.c.bf16 %v1844, %v1843
      %v1884 = vpack.c.bf16 %v1846, %v1845
      %v1885 = vpack.c.bf16 %v1848, %v1847
      %v1886 = vpack.c.bf16 %v1850, %v1849
      %v1887 = vpack.c.bf16 %v1852, %v1851
      %v1888 = vpack.c.bf16 %v1854, %v1853
      %v1889 = vpack.c.bf16 %v1856, %v1855
      %v1890 = vpack.c.bf16 %v1858, %v1857
      %v1891 = vpack.c.bf16 %v1860, %v1859
      %v1892 = vpack.c.bf16 %v1862, %v1861
      %v1893 = vpack.c.bf16 %v1864, %v1863
      %v1894 = vpack.c.bf16 %v1866, %v1865
      %v1895 = vpack.c.bf16 %v1868, %v1867
      %v1896 = vpack.c.bf16 %v1870, %v1869
      %v1897 = vpack.c.bf16 %v1872, %v1871
      %v1898 = vpack.c.bf16 %v1874, %v1873
      %v1899 = vpack.c.bf16 %v1876, %v1875
      %v1900 = vpack.c.bf16 %v1878, %v1877
      %v1901 = vpack.c.bf16 %v1880, %v1879
      %v1902 = vpack.c.bf16 %v1881, %v1881
      %s1903 = scalar_lea.vmem %s2, 32
      %v1904 = vld [vmem:[%s1903] sm:$0xf]
      %v1905 = vld [vmem:[%s1903 + $0x4] sm:$0xf]
      %v1908 = vunpack.c.l.b16 %v1904
      %v1909 = vunpack.c.l.b16 %v1905
      %v1910 = vpack.c.b16 %v1909, %v1908
      %v1913 = vsel %vm558, %v1882, 0
      %v1916 = vsel %vm558, %v1883, 0
      %v1919 = vsel %vm558, %v1884, 0
      %v1922 = vsel %vm558, %v1885, 0
      %v1925 = vsel %vm558, %v1886, 0
      %v1928 = vsel %vm558, %v1887, 0
      %v1931 = vsel %vm558, %v1888, 0
      %v1934 = vsel %vm558, %v1889, 0
      %v1937 = vsel %vm558, %v1890, 0
      %v1940 = vsel %vm558, %v1891, 0
      %v1943 = vsel %vm558, %v1892, 0
      %v1946 = vsel %vm558, %v1893, 0
      %v1949 = vsel %vm558, %v1894, 0
      %v1952 = vsel %vm558, %v1895, 0
      %v1955 = vsel %vm558, %v1896, 0
      %v1958 = vsel %vm558, %v1897, 0
      %v1961 = vsel %vm558, %v1898, 0
      %v1964 = vsel %vm558, %v1899, 0
      %v1967 = vsel %vm558, %v1900, 0
      %v1970 = vsel %vm558, %v1901, 0
      %v1973 = vsel %vm558, %v1902, 0
      %1975 = vmatprep.subr.bf16.mxu0 0
      %1976 = vmatpush1.bf16.msra.mxu0 0
      %1977 = vmatprep.subr.bf16.mxu0 0
      %1978 = vmatpush1.bf16.msra.mxu0 0
      %1979 = vmatprep.subr.bf16.mxu0 0
      %1980 = vmatpush1.bf16.msra.mxu0 0
      %1981 = vmatprep.subr.bf16.mxu0 0
      %1982 = vmatpush1.bf16.msra.mxu0 0
      %1983 = vmatprep.subr.bf16.mxu0 0
      %1984 = vmatpush1.bf16.msra.mxu0 0
      %1985 = vmatprep.subr.bf16.mxu0 0
      %1986 = vmatpush1.bf16.msra.mxu0 0
      %1987 = vmatprep.subr.bf16.mxu0 0
      %1988 = vmatpush1.bf16.msra.mxu0 0
      %1989 = vmatprep.subr.bf16.mxu0 0
      %1990 = vmatpush1.bf16.msra.mxu0 %v1910
      %1991 = vmatprep.subr.bf16.mxu0 0
      %1992 = vmatpush2.bf16.msra.mxu0 0
      %1993 = vmatprep.subr.bf16.mxu0 0
      %1994 = vmatpush2.bf16.msra.mxu0 0
      %1995 = vmatprep.subr.bf16.mxu0 0
      %1996 = vmatpush2.bf16.msra.mxu0 0
      %1997 = vmatprep.subr.bf16.mxu0 0
      %1998 = vmatpush2.bf16.msra.mxu0 0
      %1999 = vmatprep.subr.bf16.mxu0 0
      %2000 = vmatpush2.bf16.msra.mxu0 0
      %2001 = vmatprep.subr.bf16.mxu0 0
      %2002 = vmatpush2.bf16.msra.mxu0 0
      %2003 = vmatprep.subr.bf16.mxu0 0
      %2004 = vmatpush2.bf16.msra.mxu0 0
      %2005 = vmatprep.subr.bf16.mxu0 0
      %2006 = vmatpush2.bf16.msra.mxu0 0
      %2007 = vmatprep.mubr.bf16.mxu0 0
      %2008 = vmatmul.mubr.bf16.gmra.mxu0 %v1913
      %v2009 = vpop.f32.mrf.mxu0
      %v2010 = vadd.f32 0.0, %v2009
      %v2011 = vpop.f32.mrf.mxu0
      %v2012 = vpop.f32.mrf.mxu0
      %v2013 = vadd.f32 0.0, %v2012
      %v2014 = vpop.f32.mrf.mxu0
      %2015 = vmatprep.mubr.bf16.mxu0 0
      %2016 = vmatmul.mubr.bf16.gmra.mxu0 %v1916
      %v2017 = vpop.f32.mrf.mxu0
      %v2018 = vadd.f32 0.0, %v2017
      %v2019 = vpop.f32.mrf.mxu0
      %v2020 = vpop.f32.mrf.mxu0
      %v2021 = vadd.f32 0.0, %v2020
      %v2022 = vpop.f32.mrf.mxu0
      %2023 = vmatprep.mubr.bf16.mxu0 0
      %2024 = vmatmul.mubr.bf16.gmra.mxu0 %v1919
      %v2025 = vpop.f32.mrf.mxu0
      %v2026 = vadd.f32 0.0, %v2025
      %v2027 = vpop.f32.mrf.mxu0
      %v2028 = vpop.f32.mrf.mxu0
      %v2029 = vadd.f32 0.0, %v2028
      %v2030 = vpop.f32.mrf.mxu0
      %2031 = vmatprep.mubr.bf16.mxu0 0
      %2032 = vmatmul.mubr.bf16.gmra.mxu0 %v1922
      %v2033 = vpop.f32.mrf.mxu0
      %v2034 = vadd.f32 0.0, %v2033
      %v2035 = vpop.f32.mrf.mxu0
      %v2036 = vpop.f32.mrf.mxu0
      %v2037 = vadd.f32 0.0, %v2036
      %v2038 = vpop.f32.mrf.mxu0
      %2039 = vmatprep.mubr.bf16.mxu0 0
      %2040 = vmatmul.mubr.bf16.gmra.mxu0 %v1925
      %v2041 = vpop.f32.mrf.mxu0
      %v2042 = vadd.f32 0.0, %v2041
      %v2043 = vpop.f32.mrf.mxu0
      %v2044 = vpop.f32.mrf.mxu0
      %v2045 = vadd.f32 0.0, %v2044
      %v2046 = vpop.f32.mrf.mxu0
      %2047 = vmatprep.mubr.bf16.mxu0 0
      %2048 = vmatmul.mubr.bf16.gmra.mxu0 %v1928
      %v2049 = vpop.f32.mrf.mxu0
      %v2050 = vadd.f32 0.0, %v2049
      %v2051 = vpop.f32.mrf.mxu0
      %v2052 = vpop.f32.mrf.mxu0
      %v2053 = vadd.f32 0.0, %v2052
      %v2054 = vpop.f32.mrf.mxu0
      %2055 = vmatprep.mubr.bf16.mxu0 0
      %2056 = vmatmul.mubr.bf16.gmra.mxu0 %v1931
      %v2057 = vpop.f32.mrf.mxu0
      %v2058 = vadd.f32 0.0, %v2057
      %v2059 = vpop.f32.mrf.mxu0
      %v2060 = vpop.f32.mrf.mxu0
      %v2061 = vadd.f32 0.0, %v2060
      %v2062 = vpop.f32.mrf.mxu0
      %2063 = vmatprep.mubr.bf16.mxu0 0
      %2064 = vmatmul.mubr.bf16.gmra.mxu0 %v1934
      %v2065 = vpop.f32.mrf.mxu0
      %v2066 = vadd.f32 0.0, %v2065
      %v2067 = vpop.f32.mrf.mxu0
      %v2068 = vpop.f32.mrf.mxu0
      %v2069 = vadd.f32 0.0, %v2068
      %v2070 = vpop.f32.mrf.mxu0
      %2071 = vmatprep.mubr.bf16.mxu0 0
      %2072 = vmatmul.mubr.bf16.gmra.mxu0 %v1937
      %v2073 = vpop.f32.mrf.mxu0
      %v2074 = vadd.f32 0.0, %v2073
      %v2075 = vpop.f32.mrf.mxu0
      %v2076 = vpop.f32.mrf.mxu0
      %v2077 = vadd.f32 0.0, %v2076
      %v2078 = vpop.f32.mrf.mxu0
      %2079 = vmatprep.mubr.bf16.mxu0 0
      %2080 = vmatmul.mubr.bf16.gmra.mxu0 %v1940
      %v2081 = vpop.f32.mrf.mxu0
      %v2082 = vadd.f32 0.0, %v2081
      %v2083 = vpop.f32.mrf.mxu0
      %v2084 = vpop.f32.mrf.mxu0
      %v2085 = vadd.f32 0.0, %v2084
      %v2086 = vpop.f32.mrf.mxu0
      %2087 = vmatprep.mubr.bf16.mxu0 0
      %2088 = vmatmul.mubr.bf16.gmra.mxu0 %v1943
      %v2089 = vpop.f32.mrf.mxu0
      %v2090 = vadd.f32 0.0, %v2089
      %v2091 = vpop.f32.mrf.mxu0
      %v2092 = vpop.f32.mrf.mxu0
      %v2093 = vadd.f32 0.0, %v2092
      %v2094 = vpop.f32.mrf.mxu0
      %2095 = vmatprep.mubr.bf16.mxu0 0
      %2096 = vmatmul.mubr.bf16.gmra.mxu0 %v1946
      %v2097 = vpop.f32.mrf.mxu0
      %v2098 = vadd.f32 0.0, %v2097
      %v2099 = vpop.f32.mrf.mxu0
      %v2100 = vpop.f32.mrf.mxu0
      %v2101 = vadd.f32 0.0, %v2100
      %v2102 = vpop.f32.mrf.mxu0
      %2103 = vmatprep.mubr.bf16.mxu0 0
      %2104 = vmatmul.mubr.bf16.gmra.mxu0 %v1949
      %v2105 = vpop.f32.mrf.mxu0
      %v2106 = vadd.f32 0.0, %v2105
      %v2107 = vpop.f32.mrf.mxu0
      %v2108 = vpop.f32.mrf.mxu0
      %v2109 = vadd.f32 0.0, %v2108
      %v2110 = vpop.f32.mrf.mxu0
      %2111 = vmatprep.mubr.bf16.mxu0 0
      %2112 = vmatmul.mubr.bf16.gmra.mxu0 %v1952
      %v2113 = vpop.f32.mrf.mxu0
      %v2114 = vadd.f32 0.0, %v2113
      %v2115 = vpop.f32.mrf.mxu0
      %v2116 = vpop.f32.mrf.mxu0
      %v2117 = vadd.f32 0.0, %v2116
      %v2118 = vpop.f32.mrf.mxu0
      %2119 = vmatprep.mubr.bf16.mxu0 0
      %2120 = vmatmul.mubr.bf16.gmra.mxu0 %v1955
      %v2121 = vpop.f32.mrf.mxu0
      %v2122 = vadd.f32 0.0, %v2121
      %v2123 = vpop.f32.mrf.mxu0
      %v2124 = vpop.f32.mrf.mxu0
      %v2125 = vadd.f32 0.0, %v2124
      %v2126 = vpop.f32.mrf.mxu0
      %2127 = vmatprep.mubr.bf16.mxu0 0
      %2128 = vmatmul.mubr.bf16.gmra.mxu0 %v1958
      %v2129 = vpop.f32.mrf.mxu0
      %v2130 = vadd.f32 0.0, %v2129
      %v2131 = vpop.f32.mrf.mxu0
      %v2132 = vpop.f32.mrf.mxu0
      %v2133 = vadd.f32 0.0, %v2132
      %v2134 = vpop.f32.mrf.mxu0
      %2135 = vmatprep.mubr.bf16.mxu0 0
      %2136 = vmatmul.mubr.bf16.gmra.mxu0 %v1961
      %v2137 = vpop.f32.mrf.mxu0
      %v2138 = vadd.f32 0.0, %v2137
      %v2139 = vpop.f32.mrf.mxu0
      %v2140 = vpop.f32.mrf.mxu0
      %v2141 = vadd.f32 0.0, %v2140
      %v2142 = vpop.f32.mrf.mxu0
      %2143 = vmatprep.mubr.bf16.mxu0 0
      %2144 = vmatmul.mubr.bf16.gmra.mxu0 %v1964
      %v2145 = vpop.f32.mrf.mxu0
      %v2146 = vadd.f32 0.0, %v2145
      %v2147 = vpop.f32.mrf.mxu0
      %v2148 = vpop.f32.mrf.mxu0
      %v2149 = vadd.f32 0.0, %v2148
      %v2150 = vpop.f32.mrf.mxu0
      %2151 = vmatprep.mubr.bf16.mxu0 0
      %2152 = vmatmul.mubr.bf16.gmra.mxu0 %v1967
      %v2153 = vpop.f32.mrf.mxu0
      %v2154 = vadd.f32 0.0, %v2153
      %v2155 = vpop.f32.mrf.mxu0
      %v2156 = vpop.f32.mrf.mxu0
      %v2157 = vadd.f32 0.0, %v2156
      %v2158 = vpop.f32.mrf.mxu0
      %2159 = vmatprep.mubr.bf16.mxu0 0
      %2160 = vmatmul.mubr.bf16.gmra.mxu0 %v1970
      %v2161 = vpop.f32.mrf.mxu0
      %v2162 = vadd.f32 0.0, %v2161
      %v2163 = vpop.f32.mrf.mxu0
      %v2164 = vpop.f32.mrf.mxu0
      %v2165 = vadd.f32 0.0, %v2164
      %v2166 = vpop.f32.mrf.mxu0
      %2167 = vmatprep.mubr.bf16.mxu0 0
      %2168 = vmatmul.mubr.bf16.gmra.mxu0 %v1973
      %v2169 = vpop.f32.mrf.mxu0
      %v2170 = vadd.f32 0.0, %v2169
      %v2171 = vpop.f32.mrf.mxu0
      %v2172 = vpop.f32.mrf.mxu0
      %v2173 = vpop.f32.mrf.mxu0
      %2174 = vdwg.mxu0
      %v2175 = vadd.f32 %v1800, %v2010
      %v2176 = vadd.f32 %v1801, %v2013
      %v2177 = vadd.f32 %v1802, %v2018
      %v2178 = vadd.f32 %v1803, %v2021
      %v2179 = vadd.f32 %v1804, %v2026
      %v2180 = vadd.f32 %v1805, %v2029
      %v2181 = vadd.f32 %v1806, %v2034
      %v2182 = vadd.f32 %v1807, %v2037
      %v2183 = vadd.f32 %v1808, %v2042
      %v2184 = vadd.f32 %v1809, %v2045
      %v2185 = vadd.f32 %v1810, %v2050
      %v2186 = vadd.f32 %v1811, %v2053
      %v2187 = vadd.f32 %v1812, %v2058
      %v2188 = vadd.f32 %v1813, %v2061
      %v2189 = vadd.f32 %v1814, %v2066
      %v2190 = vadd.f32 %v1815, %v2069
      %v2191 = vadd.f32 %v1816, %v2074
      %v2192 = vadd.f32 %v1817, %v2077
      %v2193 = vadd.f32 %v1818, %v2082
      %v2194 = vadd.f32 %v1819, %v2085
      %v2195 = vadd.f32 %v1820, %v2090
      %v2196 = vadd.f32 %v1821, %v2093
      %v2197 = vadd.f32 %v1822, %v2098
      %v2198 = vadd.f32 %v1823, %v2101
      %v2199 = vadd.f32 %v1824, %v2106
      %v2200 = vadd.f32 %v1825, %v2109
      %v2201 = vadd.f32 %v1826, %v2114
      %v2202 = vadd.f32 %v1827, %v2117
      %v2203 = vadd.f32 %v1828, %v2122
      %v2204 = vadd.f32 %v1829, %v2125
      %v2205 = vadd.f32 %v1830, %v2130
      %v2206 = vadd.f32 %v1831, %v2133
      %v2207 = vadd.f32 %v1832, %v2138
      %v2208 = vadd.f32 %v1833, %v2141
      %v2209 = vadd.f32 %v1834, %v2146
      %v2210 = vadd.f32 %v1835, %v2149
      %v2211 = vadd.f32 %v1836, %v2154
      %v2212 = vadd.f32 %v1837, %v2157
      %v2213 = vadd.f32 %v1838, %v2162
      %v2214 = vadd.f32 %v1839, %v2165
      %v2215 = vadd.f32 %v1840, %v2170
      %v2216 = vld [vmem:[#allocation2 + $0x19] sm:$0xff]
      %v2217 = vld [vmem:[#allocation2 + $0x21] sm:$0xff]
      %v2218 = vld [vmem:[#allocation2 + $0x29] sm:$0xff]
      %v2219 = vld [vmem:[#allocation2 + $0x31] sm:$0xff]
      %v2220 = vld [vmem:[#allocation2 + $0x39] sm:$0xff]
      %v2221 = vld [vmem:[#allocation2 + $0x41] sm:$0xff]
      %v2222 = vld [vmem:[#allocation2 + $0x49] sm:$0xff]
      %v2223 = vld [vmem:[#allocation2 + $0x51] sm:$0xff]
      %v2224 = vld [vmem:[#allocation2 + $0x59] sm:$0xff]
      %v2225 = vld [vmem:[#allocation2 + $0x61] sm:$0xff]
      %v2226 = vld [vmem:[#allocation2 + $0x69] sm:$0xff]
      %v2227 = vld [vmem:[#allocation2 + $0x71] sm:$0xff]
      %v2228 = vld [vmem:[#allocation2 + $0x79] sm:$0xff]
      %v2229 = vld [vmem:[#allocation2 + $0x81] sm:$0xff]
      %v2230 = vld [vmem:[#allocation2 + $0x89] sm:$0xff]
      %v2231 = vld [vmem:[#allocation2 + $0x91] sm:$0xff]
      %v2232 = vld [vmem:[#allocation2 + $0x99] sm:$0xff]
      %v2233 = vld [vmem:[#allocation2 + $0xa1] sm:$0xff]
      %v2234 = vld [vmem:[#allocation2 + $0xa9] sm:$0xff]
      %v2235 = vld [vmem:[#allocation2 + $0xb1] sm:$0xff]
      %v2236 = vld [vmem:[#allocation2 + $0xb9] sm:$0xff]
      %v2237 = vld [vmem:[#allocation2 + $0xc1] sm:$0xff]
      %v2238 = vld [vmem:[#allocation2 + $0xc9] sm:$0xff]
      %v2239 = vld [vmem:[#allocation2 + $0xd1] sm:$0xff]
      %v2240 = vld [vmem:[#allocation2 + $0xd9] sm:$0xff]
      %v2241 = vld [vmem:[#allocation2 + $0xe1] sm:$0xff]
      %v2242 = vld [vmem:[#allocation2 + $0xe9] sm:$0xff]
      %v2243 = vld [vmem:[#allocation2 + $0xf1] sm:$0xff]
      %v2244 = vld [vmem:[#allocation2 + $0xf9] sm:$0xff]
      %v2245 = vld [vmem:[#allocation2 + $0x101] sm:$0xff]
      %v2246 = vld [vmem:[#allocation2 + $0x109] sm:$0xff]
      %v2247 = vld [vmem:[#allocation2 + $0x111] sm:$0xff]
      %v2248 = vld [vmem:[#allocation2 + $0x119] sm:$0xff]
      %v2249 = vld [vmem:[#allocation2 + $0x121] sm:$0xff]
      %v2250 = vld [vmem:[#allocation2 + $0x129] sm:$0xff]
      %v2251 = vld [vmem:[#allocation2 + $0x131] sm:$0xff]
      %v2252 = vld [vmem:[#allocation2 + $0x139] sm:$0xff]
      %v2253 = vld [vmem:[#allocation2 + $0x141] sm:$0xff]
      %v2254 = vld [vmem:[#allocation2 + $0x149] sm:$0xff]
      %v2255 = vld [vmem:[#allocation2 + $0x151] sm:$0xff]
      %v2256 = vld [vmem:[#allocation2 + $0x159] sm:$0xff]
      %v2257 = vpack.c.bf16 %v2217, %v2216
      %v2258 = vpack.c.bf16 %v2219, %v2218
      %v2259 = vpack.c.bf16 %v2221, %v2220
      %v2260 = vpack.c.bf16 %v2223, %v2222
      %v2261 = vpack.c.bf16 %v2225, %v2224
      %v2262 = vpack.c.bf16 %v2227, %v2226
      %v2263 = vpack.c.bf16 %v2229, %v2228
      %v2264 = vpack.c.bf16 %v2231, %v2230
      %v2265 = vpack.c.bf16 %v2233, %v2232
      %v2266 = vpack.c.bf16 %v2235, %v2234
      %v2267 = vpack.c.bf16 %v2237, %v2236
      %v2268 = vpack.c.bf16 %v2239, %v2238
      %v2269 = vpack.c.bf16 %v2241, %v2240
      %v2270 = vpack.c.bf16 %v2243, %v2242
      %v2271 = vpack.c.bf16 %v2245, %v2244
      %v2272 = vpack.c.bf16 %v2247, %v2246
      %v2273 = vpack.c.bf16 %v2249, %v2248
      %v2274 = vpack.c.bf16 %v2251, %v2250
      %v2275 = vpack.c.bf16 %v2253, %v2252
      %v2276 = vpack.c.bf16 %v2255, %v2254
      %v2277 = vpack.c.bf16 %v2256, %v2256
      %s2278 = scalar_lea.vmem %s2, 40
      %v2279 = vld [vmem:[%s2278] sm:$0xf]
      %v2280 = vld [vmem:[%s2278 + $0x4] sm:$0xf]
      %v2283 = vunpack.c.l.b16 %v2279
      %v2284 = vunpack.c.l.b16 %v2280
      %v2285 = vpack.c.b16 %v2284, %v2283
      %v2288 = vsel %vm558, %v2257, 0
      %v2291 = vsel %vm558, %v2258, 0
      %v2294 = vsel %vm558, %v2259, 0
      %v2297 = vsel %vm558, %v2260, 0
      %v2300 = vsel %vm558, %v2261, 0
      %v2303 = vsel %vm558, %v2262, 0
      %v2306 = vsel %vm558, %v2263, 0
      %v2309 = vsel %vm558, %v2264, 0
      %v2312 = vsel %vm558, %v2265, 0
      %v2315 = vsel %vm558, %v2266, 0
      %v2318 = vsel %vm558, %v2267, 0
      %v2321 = vsel %vm558, %v2268, 0
      %v2324 = vsel %vm558, %v2269, 0
      %v2327 = vsel %vm558, %v2270, 0
      %v2330 = vsel %vm558, %v2271, 0
      %v2333 = vsel %vm558, %v2272, 0
      %v2336 = vsel %vm558, %v2273, 0
      %v2339 = vsel %vm558, %v2274, 0
      %v2342 = vsel %vm558, %v2275, 0
      %v2345 = vsel %vm558, %v2276, 0
      %v2348 = vsel %vm558, %v2277, 0
      %2350 = vmatprep.subr.bf16.mxu0 0
      %2351 = vmatpush1.bf16.msra.mxu0 0
      %2352 = vmatprep.subr.bf16.mxu0 0
      %2353 = vmatpush1.bf16.msra.mxu0 0
      %2354 = vmatprep.subr.bf16.mxu0 0
      %2355 = vmatpush1.bf16.msra.mxu0 0
      %2356 = vmatprep.subr.bf16.mxu0 0
      %2357 = vmatpush1.bf16.msra.mxu0 0
      %2358 = vmatprep.subr.bf16.mxu0 0
      %2359 = vmatpush1.bf16.msra.mxu0 0
      %2360 = vmatprep.subr.bf16.mxu0 0
      %2361 = vmatpush1.bf16.msra.mxu0 0
      %2362 = vmatprep.subr.bf16.mxu0 0
      %2363 = vmatpush1.bf16.msra.mxu0 0
      %2364 = vmatprep.subr.bf16.mxu0 0
      %2365 = vmatpush1.bf16.msra.mxu0 %v2285
      %2366 = vmatprep.subr.bf16.mxu0 0
      %2367 = vmatpush2.bf16.msra.mxu0 0
      %2368 = vmatprep.subr.bf16.mxu0 0
      %2369 = vmatpush2.bf16.msra.mxu0 0
      %2370 = vmatprep.subr.bf16.mxu0 0
      %2371 = vmatpush2.bf16.msra.mxu0 0
      %2372 = vmatprep.subr.bf16.mxu0 0
      %2373 = vmatpush2.bf16.msra.mxu0 0
      %2374 = vmatprep.subr.bf16.mxu0 0
      %2375 = vmatpush2.bf16.msra.mxu0 0
      %2376 = vmatprep.subr.bf16.mxu0 0
      %2377 = vmatpush2.bf16.msra.mxu0 0
      %2378 = vmatprep.subr.bf16.mxu0 0
      %2379 = vmatpush2.bf16.msra.mxu0 0
      %2380 = vmatprep.subr.bf16.mxu0 0
      %2381 = vmatpush2.bf16.msra.mxu0 0
      %2382 = vmatprep.mubr.bf16.mxu0 0
      %2383 = vmatmul.mubr.bf16.gmra.mxu0 %v2288
      %v2384 = vpop.f32.mrf.mxu0
      %v2385 = vadd.f32 0.0, %v2384
      %v2386 = vpop.f32.mrf.mxu0
      %v2387 = vpop.f32.mrf.mxu0
      %v2388 = vadd.f32 0.0, %v2387
      %v2389 = vpop.f32.mrf.mxu0
      %2390 = vmatprep.mubr.bf16.mxu0 0
      %2391 = vmatmul.mubr.bf16.gmra.mxu0 %v2291
      %v2392 = vpop.f32.mrf.mxu0
      %v2393 = vadd.f32 0.0, %v2392
      %v2394 = vpop.f32.mrf.mxu0
      %v2395 = vpop.f32.mrf.mxu0
      %v2396 = vadd.f32 0.0, %v2395
      %v2397 = vpop.f32.mrf.mxu0
      %2398 = vmatprep.mubr.bf16.mxu0 0
      %2399 = vmatmul.mubr.bf16.gmra.mxu0 %v2294
      %v2400 = vpop.f32.mrf.mxu0
      %v2401 = vadd.f32 0.0, %v2400
      %v2402 = vpop.f32.mrf.mxu0
      %v2403 = vpop.f32.mrf.mxu0
      %v2404 = vadd.f32 0.0, %v2403
      %v2405 = vpop.f32.mrf.mxu0
      %2406 = vmatprep.mubr.bf16.mxu0 0
      %2407 = vmatmul.mubr.bf16.gmra.mxu0 %v2297
      %v2408 = vpop.f32.mrf.mxu0
      %v2409 = vadd.f32 0.0, %v2408
      %v2410 = vpop.f32.mrf.mxu0
      %v2411 = vpop.f32.mrf.mxu0
      %v2412 = vadd.f32 0.0, %v2411
      %v2413 = vpop.f32.mrf.mxu0
      %2414 = vmatprep.mubr.bf16.mxu0 0
      %2415 = vmatmul.mubr.bf16.gmra.mxu0 %v2300
      %v2416 = vpop.f32.mrf.mxu0
      %v2417 = vadd.f32 0.0, %v2416
      %v2418 = vpop.f32.mrf.mxu0
      %v2419 = vpop.f32.mrf.mxu0
      %v2420 = vadd.f32 0.0, %v2419
      %v2421 = vpop.f32.mrf.mxu0
      %2422 = vmatprep.mubr.bf16.mxu0 0
      %2423 = vmatmul.mubr.bf16.gmra.mxu0 %v2303
      %v2424 = vpop.f32.mrf.mxu0
      %v2425 = vadd.f32 0.0, %v2424
      %v2426 = vpop.f32.mrf.mxu0
      %v2427 = vpop.f32.mrf.mxu0
      %v2428 = vadd.f32 0.0, %v2427
      %v2429 = vpop.f32.mrf.mxu0
      %2430 = vmatprep.mubr.bf16.mxu0 0
      %2431 = vmatmul.mubr.bf16.gmra.mxu0 %v2306
      %v2432 = vpop.f32.mrf.mxu0
      %v2433 = vadd.f32 0.0, %v2432
      %v2434 = vpop.f32.mrf.mxu0
      %v2435 = vpop.f32.mrf.mxu0
      %v2436 = vadd.f32 0.0, %v2435
      %v2437 = vpop.f32.mrf.mxu0
      %2438 = vmatprep.mubr.bf16.mxu0 0
      %2439 = vmatmul.mubr.bf16.gmra.mxu0 %v2309
      %v2440 = vpop.f32.mrf.mxu0
      %v2441 = vadd.f32 0.0, %v2440
      %v2442 = vpop.f32.mrf.mxu0
      %v2443 = vpop.f32.mrf.mxu0
      %v2444 = vadd.f32 0.0, %v2443
      %v2445 = vpop.f32.mrf.mxu0
      %2446 = vmatprep.mubr.bf16.mxu0 0
      %2447 = vmatmul.mubr.bf16.gmra.mxu0 %v2312
      %v2448 = vpop.f32.mrf.mxu0
      %v2449 = vadd.f32 0.0, %v2448
      %v2450 = vpop.f32.mrf.mxu0
      %v2451 = vpop.f32.mrf.mxu0
      %v2452 = vadd.f32 0.0, %v2451
      %v2453 = vpop.f32.mrf.mxu0
      %2454 = vmatprep.mubr.bf16.mxu0 0
      %2455 = vmatmul.mubr.bf16.gmra.mxu0 %v2315
      %v2456 = vpop.f32.mrf.mxu0
      %v2457 = vadd.f32 0.0, %v2456
      %v2458 = vpop.f32.mrf.mxu0
      %v2459 = vpop.f32.mrf.mxu0
      %v2460 = vadd.f32 0.0, %v2459
      %v2461 = vpop.f32.mrf.mxu0
      %2462 = vmatprep.mubr.bf16.mxu0 0
      %2463 = vmatmul.mubr.bf16.gmra.mxu0 %v2318
      %v2464 = vpop.f32.mrf.mxu0
      %v2465 = vadd.f32 0.0, %v2464
      %v2466 = vpop.f32.mrf.mxu0
      %v2467 = vpop.f32.mrf.mxu0
      %v2468 = vadd.f32 0.0, %v2467
      %v2469 = vpop.f32.mrf.mxu0
      %2470 = vmatprep.mubr.bf16.mxu0 0
      %2471 = vmatmul.mubr.bf16.gmra.mxu0 %v2321
      %v2472 = vpop.f32.mrf.mxu0
      %v2473 = vadd.f32 0.0, %v2472
      %v2474 = vpop.f32.mrf.mxu0
      %v2475 = vpop.f32.mrf.mxu0
      %v2476 = vadd.f32 0.0, %v2475
      %v2477 = vpop.f32.mrf.mxu0
      %2478 = vmatprep.mubr.bf16.mxu0 0
      %2479 = vmatmul.mubr.bf16.gmra.mxu0 %v2324
      %v2480 = vpop.f32.mrf.mxu0
      %v2481 = vadd.f32 0.0, %v2480
      %v2482 = vpop.f32.mrf.mxu0
      %v2483 = vpop.f32.mrf.mxu0
      %v2484 = vadd.f32 0.0, %v2483
      %v2485 = vpop.f32.mrf.mxu0
      %2486 = vmatprep.mubr.bf16.mxu0 0
      %2487 = vmatmul.mubr.bf16.gmra.mxu0 %v2327
      %v2488 = vpop.f32.mrf.mxu0
      %v2489 = vadd.f32 0.0, %v2488
      %v2490 = vpop.f32.mrf.mxu0
      %v2491 = vpop.f32.mrf.mxu0
      %v2492 = vadd.f32 0.0, %v2491
      %v2493 = vpop.f32.mrf.mxu0
      %2494 = vmatprep.mubr.bf16.mxu0 0
      %2495 = vmatmul.mubr.bf16.gmra.mxu0 %v2330
      %v2496 = vpop.f32.mrf.mxu0
      %v2497 = vadd.f32 0.0, %v2496
      %v2498 = vpop.f32.mrf.mxu0
      %v2499 = vpop.f32.mrf.mxu0
      %v2500 = vadd.f32 0.0, %v2499
      %v2501 = vpop.f32.mrf.mxu0
      %2502 = vmatprep.mubr.bf16.mxu0 0
      %2503 = vmatmul.mubr.bf16.gmra.mxu0 %v2333
      %v2504 = vpop.f32.mrf.mxu0
      %v2505 = vadd.f32 0.0, %v2504
      %v2506 = vpop.f32.mrf.mxu0
      %v2507 = vpop.f32.mrf.mxu0
      %v2508 = vadd.f32 0.0, %v2507
      %v2509 = vpop.f32.mrf.mxu0
      %2510 = vmatprep.mubr.bf16.mxu0 0
      %2511 = vmatmul.mubr.bf16.gmra.mxu0 %v2336
      %v2512 = vpop.f32.mrf.mxu0
      %v2513 = vadd.f32 0.0, %v2512
      %v2514 = vpop.f32.mrf.mxu0
      %v2515 = vpop.f32.mrf.mxu0
      %v2516 = vadd.f32 0.0, %v2515
      %v2517 = vpop.f32.mrf.mxu0
      %2518 = vmatprep.mubr.bf16.mxu0 0
      %2519 = vmatmul.mubr.bf16.gmra.mxu0 %v2339
      %v2520 = vpop.f32.mrf.mxu0
      %v2521 = vadd.f32 0.0, %v2520
      %v2522 = vpop.f32.mrf.mxu0
      %v2523 = vpop.f32.mrf.mxu0
      %v2524 = vadd.f32 0.0, %v2523
      %v2525 = vpop.f32.mrf.mxu0
      %2526 = vmatprep.mubr.bf16.mxu0 0
      %2527 = vmatmul.mubr.bf16.gmra.mxu0 %v2342
      %v2528 = vpop.f32.mrf.mxu0
      %v2529 = vadd.f32 0.0, %v2528
      %v2530 = vpop.f32.mrf.mxu0
      %v2531 = vpop.f32.mrf.mxu0
      %v2532 = vadd.f32 0.0, %v2531
      %v2533 = vpop.f32.mrf.mxu0
      %2534 = vmatprep.mubr.bf16.mxu0 0
      %2535 = vmatmul.mubr.bf16.gmra.mxu0 %v2345
      %v2536 = vpop.f32.mrf.mxu0
      %v2537 = vadd.f32 0.0, %v2536
      %v2538 = vpop.f32.mrf.mxu0
      %v2539 = vpop.f32.mrf.mxu0
      %v2540 = vadd.f32 0.0, %v2539
      %v2541 = vpop.f32.mrf.mxu0
      %2542 = vmatprep.mubr.bf16.mxu0 0
      %2543 = vmatmul.mubr.bf16.gmra.mxu0 %v2348
      %v2544 = vpop.f32.mrf.mxu0
      %v2545 = vadd.f32 0.0, %v2544
      %v2546 = vpop.f32.mrf.mxu0
      %v2547 = vpop.f32.mrf.mxu0
      %v2548 = vpop.f32.mrf.mxu0
      %2549 = vdwg.mxu0
      %v2550 = vadd.f32 %v2175, %v2385
      %v2551 = vadd.f32 %v2176, %v2388
      %v2552 = vadd.f32 %v2177, %v2393
      %v2553 = vadd.f32 %v2178, %v2396
      %v2554 = vadd.f32 %v2179, %v2401
      %v2555 = vadd.f32 %v2180, %v2404
      %v2556 = vadd.f32 %v2181, %v2409
      %v2557 = vadd.f32 %v2182, %v2412
      %v2558 = vadd.f32 %v2183, %v2417
      %v2559 = vadd.f32 %v2184, %v2420
      %v2560 = vadd.f32 %v2185, %v2425
      %v2561 = vadd.f32 %v2186, %v2428
      %v2562 = vadd.f32 %v2187, %v2433
      %v2563 = vadd.f32 %v2188, %v2436
      %v2564 = vadd.f32 %v2189, %v2441
      %v2565 = vadd.f32 %v2190, %v2444
      %v2566 = vadd.f32 %v2191, %v2449
      %v2567 = vadd.f32 %v2192, %v2452
      %v2568 = vadd.f32 %v2193, %v2457
      %v2569 = vadd.f32 %v2194, %v2460
      %v2570 = vadd.f32 %v2195, %v2465
      %v2571 = vadd.f32 %v2196, %v2468
      %v2572 = vadd.f32 %v2197, %v2473
      %v2573 = vadd.f32 %v2198, %v2476
      %v2574 = vadd.f32 %v2199, %v2481
      %v2575 = vadd.f32 %v2200, %v2484
      %v2576 = vadd.f32 %v2201, %v2489
      %v2577 = vadd.f32 %v2202, %v2492
      %v2578 = vadd.f32 %v2203, %v2497
      %v2579 = vadd.f32 %v2204, %v2500
      %v2580 = vadd.f32 %v2205, %v2505
      %v2581 = vadd.f32 %v2206, %v2508
      %v2582 = vadd.f32 %v2207, %v2513
      %v2583 = vadd.f32 %v2208, %v2516
      %v2584 = vadd.f32 %v2209, %v2521
      %v2585 = vadd.f32 %v2210, %v2524
      %v2586 = vadd.f32 %v2211, %v2529
      %v2587 = vadd.f32 %v2212, %v2532
      %v2588 = vadd.f32 %v2213, %v2537
      %v2589 = vadd.f32 %v2214, %v2540
      %v2590 = vadd.f32 %v2215, %v2545
      %v2591 = vld [vmem:[#allocation2 + $0x29] sm:$0xff]
      %v2592 = vld [vmem:[#allocation2 + $0x31] sm:$0xff]
      %v2593 = vld [vmem:[#allocation2 + $0x39] sm:$0xff]
      %v2594 = vld [vmem:[#allocation2 + $0x41] sm:$0xff]
      %v2595 = vld [vmem:[#allocation2 + $0x49] sm:$0xff]
      %v2596 = vld [vmem:[#allocation2 + $0x51] sm:$0xff]
      %v2597 = vld [vmem:[#allocation2 + $0x59] sm:$0xff]
      %v2598 = vld [vmem:[#allocation2 + $0x61] sm:$0xff]
      %v2599 = vld [vmem:[#allocation2 + $0x69] sm:$0xff]
      %v2600 = vld [vmem:[#allocation2 + $0x71] sm:$0xff]
      %v2601 = vld [vmem:[#allocation2 + $0x79] sm:$0xff]
      %v2602 = vld [vmem:[#allocation2 + $0x81] sm:$0xff]
      %v2603 = vld [vmem:[#allocation2 + $0x89] sm:$0xff]
      %v2604 = vld [vmem:[#allocation2 + $0x91] sm:$0xff]
      %v2605 = vld [vmem:[#allocation2 + $0x99] sm:$0xff]
      %v2606 = vld [vmem:[#allocation2 + $0xa1] sm:$0xff]
      %v2607 = vld [vmem:[#allocation2 + $0xa9] sm:$0xff]
      %v2608 = vld [vmem:[#allocation2 + $0xb1] sm:$0xff]
      %v2609 = vld [vmem:[#allocation2 + $0xb9] sm:$0xff]
      %v2610 = vld [vmem:[#allocation2 + $0xc1] sm:$0xff]
      %v2611 = vld [vmem:[#allocation2 + $0xc9] sm:$0xff]
      %v2612 = vld [vmem:[#allocation2 + $0xd1] sm:$0xff]
      %v2613 = vld [vmem:[#allocation2 + $0xd9] sm:$0xff]
      %v2614 = vld [vmem:[#allocation2 + $0xe1] sm:$0xff]
      %v2615 = vld [vmem:[#allocation2 + $0xe9] sm:$0xff]
      %v2616 = vld [vmem:[#allocation2 + $0xf1] sm:$0xff]
      %v2617 = vld [vmem:[#allocation2 + $0xf9] sm:$0xff]
      %v2618 = vld [vmem:[#allocation2 + $0x101] sm:$0xff]
      %v2619 = vld [vmem:[#allocation2 + $0x109] sm:$0xff]
      %v2620 = vld [vmem:[#allocation2 + $0x111] sm:$0xff]
      %v2621 = vld [vmem:[#allocation2 + $0x119] sm:$0xff]
      %v2622 = vld [vmem:[#allocation2 + $0x121] sm:$0xff]
      %v2623 = vld [vmem:[#allocation2 + $0x129] sm:$0xff]
      %v2624 = vld [vmem:[#allocation2 + $0x131] sm:$0xff]
      %v2625 = vld [vmem:[#allocation2 + $0x139] sm:$0xff]
      %v2626 = vld [vmem:[#allocation2 + $0x141] sm:$0xff]
      %v2627 = vld [vmem:[#allocation2 + $0x149] sm:$0xff]
      %v2628 = vld [vmem:[#allocation2 + $0x151] sm:$0xff]
      %v2629 = vld [vmem:[#allocation2 + $0x159] sm:$0xff]
      %v2630 = vld [vmem:[#allocation2 + $0x161] sm:$0xff]
      %v2631 = vld [vmem:[#allocation2 + $0x169] sm:$0xff]
      %v2632 = vpack.c.bf16 %v2592, %v2591
      %v2633 = vpack.c.bf16 %v2594, %v2593
      %v2634 = vpack.c.bf16 %v2596, %v2595
      %v2635 = vpack.c.bf16 %v2598, %v2597
      %v2636 = vpack.c.bf16 %v2600, %v2599
      %v2637 = vpack.c.bf16 %v2602, %v2601
      %v2638 = vpack.c.bf16 %v2604, %v2603
      %v2639 = vpack.c.bf16 %v2606, %v2605
      %v2640 = vpack.c.bf16 %v2608, %v2607
      %v2641 = vpack.c.bf16 %v2610, %v2609
      %v2642 = vpack.c.bf16 %v2612, %v2611
      %v2643 = vpack.c.bf16 %v2614, %v2613
      %v2644 = vpack.c.bf16 %v2616, %v2615
      %v2645 = vpack.c.bf16 %v2618, %v2617
      %v2646 = vpack.c.bf16 %v2620, %v2619
      %v2647 = vpack.c.bf16 %v2622, %v2621
      %v2648 = vpack.c.bf16 %v2624, %v2623
      %v2649 = vpack.c.bf16 %v2626, %v2625
      %v2650 = vpack.c.bf16 %v2628, %v2627
      %v2651 = vpack.c.bf16 %v2630, %v2629
      %v2652 = vpack.c.bf16 %v2631, %v2631
      %s2653 = scalar_lea.vmem %s2, 48
      %v2654 = vld [vmem:[%s2653] sm:$0xf]
      %v2655 = vld [vmem:[%s2653 + $0x4] sm:$0xf]
      %v2658 = vunpack.c.l.b16 %v2654
      %v2659 = vunpack.c.l.b16 %v2655
      %v2660 = vpack.c.b16 %v2659, %v2658
      %v2663 = vsel %vm558, %v2632, 0
      %v2666 = vsel %vm558, %v2633, 0
      %v2669 = vsel %vm558, %v2634, 0
      %v2672 = vsel %vm558, %v2635, 0
      %v2675 = vsel %vm558, %v2636, 0
      %v2678 = vsel %vm558, %v2637, 0
      %v2681 = vsel %vm558, %v2638, 0
      %v2684 = vsel %vm558, %v2639, 0
      %v2687 = vsel %vm558, %v2640, 0
      %v2690 = vsel %vm558, %v2641, 0
      %v2693 = vsel %vm558, %v2642, 0
      %v2696 = vsel %vm558, %v2643, 0
      %v2699 = vsel %vm558, %v2644, 0
      %v2702 = vsel %vm558, %v2645, 0
      %v2705 = vsel %vm558, %v2646, 0
      %v2708 = vsel %vm558, %v2647, 0
      %v2711 = vsel %vm558, %v2648, 0
      %v2714 = vsel %vm558, %v2649, 0
      %v2717 = vsel %vm558, %v2650, 0
      %v2720 = vsel %vm558, %v2651, 0
      %v2723 = vsel %vm558, %v2652, 0
      %2725 = vmatprep.subr.bf16.mxu0 0
      %2726 = vmatpush1.bf16.msra.mxu0 0
      %2727 = vmatprep.subr.bf16.mxu0 0
      %2728 = vmatpush1.bf16.msra.mxu0 0
      %2729 = vmatprep.subr.bf16.mxu0 0
      %2730 = vmatpush1.bf16.msra.mxu0 0
      %2731 = vmatprep.subr.bf16.mxu0 0
      %2732 = vmatpush1.bf16.msra.mxu0 0
      %2733 = vmatprep.subr.bf16.mxu0 0
      %2734 = vmatpush1.bf16.msra.mxu0 0
      %2735 = vmatprep.subr.bf16.mxu0 0
      %2736 = vmatpush1.bf16.msra.mxu0 0
      %2737 = vmatprep.subr.bf16.mxu0 0
      %2738 = vmatpush1.bf16.msra.mxu0 0
      %2739 = vmatprep.subr.bf16.mxu0 0
      %2740 = vmatpush1.bf16.msra.mxu0 %v2660
      %2741 = vmatprep.subr.bf16.mxu0 0
      %2742 = vmatpush2.bf16.msra.mxu0 0
      %2743 = vmatprep.subr.bf16.mxu0 0
      %2744 = vmatpush2.bf16.msra.mxu0 0
      %2745 = vmatprep.subr.bf16.mxu0 0
      %2746 = vmatpush2.bf16.msra.mxu0 0
      %2747 = vmatprep.subr.bf16.mxu0 0
      %2748 = vmatpush2.bf16.msra.mxu0 0
      %2749 = vmatprep.subr.bf16.mxu0 0
      %2750 = vmatpush2.bf16.msra.mxu0 0
      %2751 = vmatprep.subr.bf16.mxu0 0
      %2752 = vmatpush2.bf16.msra.mxu0 0
      %2753 = vmatprep.subr.bf16.mxu0 0
      %2754 = vmatpush2.bf16.msra.mxu0 0
      %2755 = vmatprep.subr.bf16.mxu0 0
      %2756 = vmatpush2.bf16.msra.mxu0 0
      %2757 = vmatprep.mubr.bf16.mxu0 0
      %2758 = vmatmul.mubr.bf16.gmra.mxu0 %v2663
      %v2759 = vpop.f32.mrf.mxu0
      %v2760 = vadd.f32 0.0, %v2759
      %v2761 = vpop.f32.mrf.mxu0
      %v2762 = vpop.f32.mrf.mxu0
      %v2763 = vadd.f32 0.0, %v2762
      %v2764 = vpop.f32.mrf.mxu0
      %2765 = vmatprep.mubr.bf16.mxu0 0
      %2766 = vmatmul.mubr.bf16.gmra.mxu0 %v2666
      %v2767 = vpop.f32.mrf.mxu0
      %v2768 = vadd.f32 0.0, %v2767
      %v2769 = vpop.f32.mrf.mxu0
      %v2770 = vpop.f32.mrf.mxu0
      %v2771 = vadd.f32 0.0, %v2770
      %v2772 = vpop.f32.mrf.mxu0
      %2773 = vmatprep.mubr.bf16.mxu0 0
      %2774 = vmatmul.mubr.bf16.gmra.mxu0 %v2669
      %v2775 = vpop.f32.mrf.mxu0
      %v2776 = vadd.f32 0.0, %v2775
      %v2777 = vpop.f32.mrf.mxu0
      %v2778 = vpop.f32.mrf.mxu0
      %v2779 = vadd.f32 0.0, %v2778
      %v2780 = vpop.f32.mrf.mxu0
      %2781 = vmatprep.mubr.bf16.mxu0 0
      %2782 = vmatmul.mubr.bf16.gmra.mxu0 %v2672
      %v2783 = vpop.f32.mrf.mxu0
      %v2784 = vadd.f32 0.0, %v2783
      %v2785 = vpop.f32.mrf.mxu0
      %v2786 = vpop.f32.mrf.mxu0
      %v2787 = vadd.f32 0.0, %v2786
      %v2788 = vpop.f32.mrf.mxu0
      %2789 = vmatprep.mubr.bf16.mxu0 0
      %2790 = vmatmul.mubr.bf16.gmra.mxu0 %v2675
      %v2791 = vpop.f32.mrf.mxu0
      %v2792 = vadd.f32 0.0, %v2791
      %v2793 = vpop.f32.mrf.mxu0
      %v2794 = vpop.f32.mrf.mxu0
      %v2795 = vadd.f32 0.0, %v2794
      %v2796 = vpop.f32.mrf.mxu0
      %2797 = vmatprep.mubr.bf16.mxu0 0
      %2798 = vmatmul.mubr.bf16.gmra.mxu0 %v2678
      %v2799 = vpop.f32.mrf.mxu0
      %v2800 = vadd.f32 0.0, %v2799
      %v2801 = vpop.f32.mrf.mxu0
      %v2802 = vpop.f32.mrf.mxu0
      %v2803 = vadd.f32 0.0, %v2802
      %v2804 = vpop.f32.mrf.mxu0
      %2805 = vmatprep.mubr.bf16.mxu0 0
      %2806 = vmatmul.mubr.bf16.gmra.mxu0 %v2681
      %v2807 = vpop.f32.mrf.mxu0
      %v2808 = vadd.f32 0.0, %v2807
      %v2809 = vpop.f32.mrf.mxu0
      %v2810 = vpop.f32.mrf.mxu0
      %v2811 = vadd.f32 0.0, %v2810
      %v2812 = vpop.f32.mrf.mxu0
      %2813 = vmatprep.mubr.bf16.mxu0 0
      %2814 = vmatmul.mubr.bf16.gmra.mxu0 %v2684
      %v2815 = vpop.f32.mrf.mxu0
      %v2816 = vadd.f32 0.0, %v2815
      %v2817 = vpop.f32.mrf.mxu0
      %v2818 = vpop.f32.mrf.mxu0
      %v2819 = vadd.f32 0.0, %v2818
      %v2820 = vpop.f32.mrf.mxu0
      %2821 = vmatprep.mubr.bf16.mxu0 0
      %2822 = vmatmul.mubr.bf16.gmra.mxu0 %v2687
      %v2823 = vpop.f32.mrf.mxu0
      %v2824 = vadd.f32 0.0, %v2823
      %v2825 = vpop.f32.mrf.mxu0
      %v2826 = vpop.f32.mrf.mxu0
      %v2827 = vadd.f32 0.0, %v2826
      %v2828 = vpop.f32.mrf.mxu0
      %2829 = vmatprep.mubr.bf16.mxu0 0
      %2830 = vmatmul.mubr.bf16.gmra.mxu0 %v2690
      %v2831 = vpop.f32.mrf.mxu0
      %v2832 = vadd.f32 0.0, %v2831
      %v2833 = vpop.f32.mrf.mxu0
      %v2834 = vpop.f32.mrf.mxu0
      %v2835 = vadd.f32 0.0, %v2834
      %v2836 = vpop.f32.mrf.mxu0
      %2837 = vmatprep.mubr.bf16.mxu0 0
      %2838 = vmatmul.mubr.bf16.gmra.mxu0 %v2693
      %v2839 = vpop.f32.mrf.mxu0
      %v2840 = vadd.f32 0.0, %v2839
      %v2841 = vpop.f32.mrf.mxu0
      %v2842 = vpop.f32.mrf.mxu0
      %v2843 = vadd.f32 0.0, %v2842
      %v2844 = vpop.f32.mrf.mxu0
      %2845 = vmatprep.mubr.bf16.mxu0 0
      %2846 = vmatmul.mubr.bf16.gmra.mxu0 %v2696
      %v2847 = vpop.f32.mrf.mxu0
      %v2848 = vadd.f32 0.0, %v2847
      %v2849 = vpop.f32.mrf.mxu0
      %v2850 = vpop.f32.mrf.mxu0
      %v2851 = vadd.f32 0.0, %v2850
      %v2852 = vpop.f32.mrf.mxu0
      %2853 = vmatprep.mubr.bf16.mxu0 0
      %2854 = vmatmul.mubr.bf16.gmra.mxu0 %v2699
      %v2855 = vpop.f32.mrf.mxu0
      %v2856 = vadd.f32 0.0, %v2855
      %v2857 = vpop.f32.mrf.mxu0
      %v2858 = vpop.f32.mrf.mxu0
      %v2859 = vadd.f32 0.0, %v2858
      %v2860 = vpop.f32.mrf.mxu0
      %2861 = vmatprep.mubr.bf16.mxu0 0
      %2862 = vmatmul.mubr.bf16.gmra.mxu0 %v2702
      %v2863 = vpop.f32.mrf.mxu0
      %v2864 = vadd.f32 0.0, %v2863
      %v2865 = vpop.f32.mrf.mxu0
      %v2866 = vpop.f32.mrf.mxu0
      %v2867 = vadd.f32 0.0, %v2866
      %v2868 = vpop.f32.mrf.mxu0
      %2869 = vmatprep.mubr.bf16.mxu0 0
      %2870 = vmatmul.mubr.bf16.gmra.mxu0 %v2705
      %v2871 = vpop.f32.mrf.mxu0
      %v2872 = vadd.f32 0.0, %v2871
      %v2873 = vpop.f32.mrf.mxu0
      %v2874 = vpop.f32.mrf.mxu0
      %v2875 = vadd.f32 0.0, %v2874
      %v2876 = vpop.f32.mrf.mxu0
      %2877 = vmatprep.mubr.bf16.mxu0 0
      %2878 = vmatmul.mubr.bf16.gmra.mxu0 %v2708
      %v2879 = vpop.f32.mrf.mxu0
      %v2880 = vadd.f32 0.0, %v2879
      %v2881 = vpop.f32.mrf.mxu0
      %v2882 = vpop.f32.mrf.mxu0
      %v2883 = vadd.f32 0.0, %v2882
      %v2884 = vpop.f32.mrf.mxu0
      %2885 = vmatprep.mubr.bf16.mxu0 0
      %2886 = vmatmul.mubr.bf16.gmra.mxu0 %v2711
      %v2887 = vpop.f32.mrf.mxu0
      %v2888 = vadd.f32 0.0, %v2887
      %v2889 = vpop.f32.mrf.mxu0
      %v2890 = vpop.f32.mrf.mxu0
      %v2891 = vadd.f32 0.0, %v2890
      %v2892 = vpop.f32.mrf.mxu0
      %2893 = vmatprep.mubr.bf16.mxu0 0
      %2894 = vmatmul.mubr.bf16.gmra.mxu0 %v2714
      %v2895 = vpop.f32.mrf.mxu0
      %v2896 = vadd.f32 0.0, %v2895
      %v2897 = vpop.f32.mrf.mxu0
      %v2898 = vpop.f32.mrf.mxu0
      %v2899 = vadd.f32 0.0, %v2898
      %v2900 = vpop.f32.mrf.mxu0
      %2901 = vmatprep.mubr.bf16.mxu0 0
      %2902 = vmatmul.mubr.bf16.gmra.mxu0 %v2717
      %v2903 = vpop.f32.mrf.mxu0
      %v2904 = vadd.f32 0.0, %v2903
      %v2905 = vpop.f32.mrf.mxu0
      %v2906 = vpop.f32.mrf.mxu0
      %v2907 = vadd.f32 0.0, %v2906
      %v2908 = vpop.f32.mrf.mxu0
      %2909 = vmatprep.mubr.bf16.mxu0 0
      %2910 = vmatmul.mubr.bf16.gmra.mxu0 %v2720
      %v2911 = vpop.f32.mrf.mxu0
      %v2912 = vadd.f32 0.0, %v2911
      %v2913 = vpop.f32.mrf.mxu0
      %v2914 = vpop.f32.mrf.mxu0
      %v2915 = vadd.f32 0.0, %v2914
      %v2916 = vpop.f32.mrf.mxu0
      %2917 = vmatprep.mubr.bf16.mxu0 0
      %2918 = vmatmul.mubr.bf16.gmra.mxu0 %v2723
      %v2919 = vpop.f32.mrf.mxu0
      %v2920 = vadd.f32 0.0, %v2919
      %v2921 = vpop.f32.mrf.mxu0
      %v2922 = vpop.f32.mrf.mxu0
      %v2923 = vpop.f32.mrf.mxu0
      %2924 = vdwg.mxu0
      %v2925 = vadd.f32 %v2550, %v2760
      %v2926 = vadd.f32 %v2551, %v2763
      %v2927 = vadd.f32 %v2552, %v2768
      %v2928 = vadd.f32 %v2553, %v2771
      %v2929 = vadd.f32 %v2554, %v2776
      %v2930 = vadd.f32 %v2555, %v2779
      %v2931 = vadd.f32 %v2556, %v2784
      %v2932 = vadd.f32 %v2557, %v2787
      %v2933 = vadd.f32 %v2558, %v2792
      %v2934 = vadd.f32 %v2559, %v2795
      %v2935 = vadd.f32 %v2560, %v2800
      %v2936 = vadd.f32 %v2561, %v2803
      %v2937 = vadd.f32 %v2562, %v2808
      %v2938 = vadd.f32 %v2563, %v2811
      %v2939 = vadd.f32 %v2564, %v2816
      %v2940 = vadd.f32 %v2565, %v2819
      %v2941 = vadd.f32 %v2566, %v2824
      %v2942 = vadd.f32 %v2567, %v2827
      %v2943 = vadd.f32 %v2568, %v2832
      %v2944 = vadd.f32 %v2569, %v2835
      %v2945 = vadd.f32 %v2570, %v2840
      %v2946 = vadd.f32 %v2571, %v2843
      %v2947 = vadd.f32 %v2572, %v2848
      %v2948 = vadd.f32 %v2573, %v2851
      %v2949 = vadd.f32 %v2574, %v2856
      %v2950 = vadd.f32 %v2575, %v2859
      %v2951 = vadd.f32 %v2576, %v2864
      %v2952 = vadd.f32 %v2577, %v2867
      %v2953 = vadd.f32 %v2578, %v2872
      %v2954 = vadd.f32 %v2579, %v2875
      %v2955 = vadd.f32 %v2580, %v2880
      %v2956 = vadd.f32 %v2581, %v2883
      %v2957 = vadd.f32 %v2582, %v2888
      %v2958 = vadd.f32 %v2583, %v2891
      %v2959 = vadd.f32 %v2584, %v2896
      %v2960 = vadd.f32 %v2585, %v2899
      %v2961 = vadd.f32 %v2586, %v2904
      %v2962 = vadd.f32 %v2587, %v2907
      %v2963 = vadd.f32 %v2588, %v2912
      %v2964 = vadd.f32 %v2589, %v2915
      %v2965 = vadd.f32 %v2590, %v2920
      %v2966 = vld [vmem:[#allocation2 + $0x2a] sm:$0xff]
      %v2967 = vld [vmem:[#allocation2 + $0x32] sm:$0xff]
      %v2968 = vld [vmem:[#allocation2 + $0x3a] sm:$0xff]
      %v2969 = vld [vmem:[#allocation2 + $0x42] sm:$0xff]
      %v2970 = vld [vmem:[#allocation2 + $0x4a] sm:$0xff]
      %v2971 = vld [vmem:[#allocation2 + $0x52] sm:$0xff]
      %v2972 = vld [vmem:[#allocation2 + $0x5a] sm:$0xff]
      %v2973 = vld [vmem:[#allocation2 + $0x62] sm:$0xff]
      %v2974 = vld [vmem:[#allocation2 + $0x6a] sm:$0xff]
      %v2975 = vld [vmem:[#allocation2 + $0x72] sm:$0xff]
      %v2976 = vld [vmem:[#allocation2 + $0x7a] sm:$0xff]
      %v2977 = vld [vmem:[#allocation2 + $0x82] sm:$0xff]
      %v2978 = vld [vmem:[#allocation2 + $0x8a] sm:$0xff]
      %v2979 = vld [vmem:[#allocation2 + $0x92] sm:$0xff]
      %v2980 = vld [vmem:[#allocation2 + $0x9a] sm:$0xff]
      %v2981 = vld [vmem:[#allocation2 + $0xa2] sm:$0xff]
      %v2982 = vld [vmem:[#allocation2 + $0xaa] sm:$0xff]
      %v2983 = vld [vmem:[#allocation2 + $0xb2] sm:$0xff]
      %v2984 = vld [vmem:[#allocation2 + $0xba] sm:$0xff]
      %v2985 = vld [vmem:[#allocation2 + $0xc2] sm:$0xff]
      %v2986 = vld [vmem:[#allocation2 + $0xca] sm:$0xff]
      %v2987 = vld [vmem:[#allocation2 + $0xd2] sm:$0xff]
      %v2988 = vld [vmem:[#allocation2 + $0xda] sm:$0xff]
      %v2989 = vld [vmem:[#allocation2 + $0xe2] sm:$0xff]
      %v2990 = vld [vmem:[#allocation2 + $0xea] sm:$0xff]
      %v2991 = vld [vmem:[#allocation2 + $0xf2] sm:$0xff]
      %v2992 = vld [vmem:[#allocation2 + $0xfa] sm:$0xff]
      %v2993 = vld [vmem:[#allocation2 + $0x102] sm:$0xff]
      %v2994 = vld [vmem:[#allocation2 + $0x10a] sm:$0xff]
      %v2995 = vld [vmem:[#allocation2 + $0x112] sm:$0xff]
      %v2996 = vld [vmem:[#allocation2 + $0x11a] sm:$0xff]
      %v2997 = vld [vmem:[#allocation2 + $0x122] sm:$0xff]
      %v2998 = vld [vmem:[#allocation2 + $0x12a] sm:$0xff]
      %v2999 = vld [vmem:[#allocation2 + $0x132] sm:$0xff]
      %v3000 = vld [vmem:[#allocation2 + $0x13a] sm:$0xff]
      %v3001 = vld [vmem:[#allocation2 + $0x142] sm:$0xff]
      %v3002 = vld [vmem:[#allocation2 + $0x14a] sm:$0xff]
      %v3003 = vld [vmem:[#allocation2 + $0x152] sm:$0xff]
      %v3004 = vld [vmem:[#allocation2 + $0x15a] sm:$0xff]
      %v3005 = vld [vmem:[#allocation2 + $0x162] sm:$0xff]
      %v3006 = vld [vmem:[#allocation2 + $0x16a] sm:$0xff]
      %v3007 = vpack.c.bf16 %v2967, %v2966
      %v3008 = vpack.c.bf16 %v2969, %v2968
      %v3009 = vpack.c.bf16 %v2971, %v2970
      %v3010 = vpack.c.bf16 %v2973, %v2972
      %v3011 = vpack.c.bf16 %v2975, %v2974
      %v3012 = vpack.c.bf16 %v2977, %v2976
      %v3013 = vpack.c.bf16 %v2979, %v2978
      %v3014 = vpack.c.bf16 %v2981, %v2980
      %v3015 = vpack.c.bf16 %v2983, %v2982
      %v3016 = vpack.c.bf16 %v2985, %v2984
      %v3017 = vpack.c.bf16 %v2987, %v2986
      %v3018 = vpack.c.bf16 %v2989, %v2988
      %v3019 = vpack.c.bf16 %v2991, %v2990
      %v3020 = vpack.c.bf16 %v2993, %v2992
      %v3021 = vpack.c.bf16 %v2995, %v2994
      %v3022 = vpack.c.bf16 %v2997, %v2996
      %v3023 = vpack.c.bf16 %v2999, %v2998
      %v3024 = vpack.c.bf16 %v3001, %v3000
      %v3025 = vpack.c.bf16 %v3003, %v3002
      %v3026 = vpack.c.bf16 %v3005, %v3004
      %v3027 = vpack.c.bf16 %v3006, %v3006
      %s3028 = scalar_lea.vmem %s2, 56
      %v3029 = vld [vmem:[%s3028] sm:$0xf]
      %v3030 = vld [vmem:[%s3028 + $0x4] sm:$0xf]
      %v3033 = vunpack.c.l.b16 %v3029
      %v3034 = vunpack.c.l.b16 %v3030
      %v3035 = vpack.c.b16 %v3034, %v3033
      %v3038 = vsel %vm558, %v3007, 0
      %v3041 = vsel %vm558, %v3008, 0
      %v3044 = vsel %vm558, %v3009, 0
      %v3047 = vsel %vm558, %v3010, 0
      %v3050 = vsel %vm558, %v3011, 0
      %v3053 = vsel %vm558, %v3012, 0
      %v3056 = vsel %vm558, %v3013, 0
      %v3059 = vsel %vm558, %v3014, 0
      %v3062 = vsel %vm558, %v3015, 0
      %v3065 = vsel %vm558, %v3016, 0
      %v3068 = vsel %vm558, %v3017, 0
      %v3071 = vsel %vm558, %v3018, 0
      %v3074 = vsel %vm558, %v3019, 0
      %v3077 = vsel %vm558, %v3020, 0
      %v3080 = vsel %vm558, %v3021, 0
      %v3083 = vsel %vm558, %v3022, 0
      %v3086 = vsel %vm558, %v3023, 0
      %v3089 = vsel %vm558, %v3024, 0
      %v3092 = vsel %vm558, %v3025, 0
      %v3095 = vsel %vm558, %v3026, 0
      %v3098 = vsel %vm558, %v3027, 0
      %3100 = vmatprep.subr.bf16.mxu0 0
      %3101 = vmatpush1.bf16.msra.mxu0 0
      %3102 = vmatprep.subr.bf16.mxu0 0
      %3103 = vmatpush1.bf16.msra.mxu0 0
      %3104 = vmatprep.subr.bf16.mxu0 0
      %3105 = vmatpush1.bf16.msra.mxu0 0
      %3106 = vmatprep.subr.bf16.mxu0 0
      %3107 = vmatpush1.bf16.msra.mxu0 0
      %3108 = vmatprep.subr.bf16.mxu0 0
      %3109 = vmatpush1.bf16.msra.mxu0 0
      %3110 = vmatprep.subr.bf16.mxu0 0
      %3111 = vmatpush1.bf16.msra.mxu0 0
      %3112 = vmatprep.subr.bf16.mxu0 0
      %3113 = vmatpush1.bf16.msra.mxu0 0
      %3114 = vmatprep.subr.bf16.mxu0 0
      %3115 = vmatpush1.bf16.msra.mxu0 %v3035
      %3116 = vmatprep.subr.bf16.mxu0 0
      %3117 = vmatpush2.bf16.msra.mxu0 0
      %3118 = vmatprep.subr.bf16.mxu0 0
      %3119 = vmatpush2.bf16.msra.mxu0 0
      %3120 = vmatprep.subr.bf16.mxu0 0
      %3121 = vmatpush2.bf16.msra.mxu0 0
      %3122 = vmatprep.subr.bf16.mxu0 0
      %3123 = vmatpush2.bf16.msra.mxu0 0
      %3124 = vmatprep.subr.bf16.mxu0 0
      %3125 = vmatpush2.bf16.msra.mxu0 0
      %3126 = vmatprep.subr.bf16.mxu0 0
      %3127 = vmatpush2.bf16.msra.mxu0 0
      %3128 = vmatprep.subr.bf16.mxu0 0
      %3129 = vmatpush2.bf16.msra.mxu0 0
      %3130 = vmatprep.subr.bf16.mxu0 0
      %3131 = vmatpush2.bf16.msra.mxu0 0
      %3132 = vmatprep.mubr.bf16.mxu0 0
      %3133 = vmatmul.mubr.bf16.gmra.mxu0 %v3038
      %v3134 = vpop.f32.mrf.mxu0
      %v3135 = vadd.f32 0.0, %v3134
      %v3136 = vpop.f32.mrf.mxu0
      %v3137 = vpop.f32.mrf.mxu0
      %v3138 = vadd.f32 0.0, %v3137
      %v3139 = vpop.f32.mrf.mxu0
      %3140 = vmatprep.mubr.bf16.mxu0 0
      %3141 = vmatmul.mubr.bf16.gmra.mxu0 %v3041
      %v3142 = vpop.f32.mrf.mxu0
      %v3143 = vadd.f32 0.0, %v3142
      %v3144 = vpop.f32.mrf.mxu0
      %v3145 = vpop.f32.mrf.mxu0
      %v3146 = vadd.f32 0.0, %v3145
      %v3147 = vpop.f32.mrf.mxu0
      %3148 = vmatprep.mubr.bf16.mxu0 0
      %3149 = vmatmul.mubr.bf16.gmra.mxu0 %v3044
      %v3150 = vpop.f32.mrf.mxu0
      %v3151 = vadd.f32 0.0, %v3150
      %v3152 = vpop.f32.mrf.mxu0
      %v3153 = vpop.f32.mrf.mxu0
      %v3154 = vadd.f32 0.0, %v3153
      %v3155 = vpop.f32.mrf.mxu0
      %3156 = vmatprep.mubr.bf16.mxu0 0
      %3157 = vmatmul.mubr.bf16.gmra.mxu0 %v3047
      %v3158 = vpop.f32.mrf.mxu0
      %v3159 = vadd.f32 0.0, %v3158
      %v3160 = vpop.f32.mrf.mxu0
      %v3161 = vpop.f32.mrf.mxu0
      %v3162 = vadd.f32 0.0, %v3161
      %v3163 = vpop.f32.mrf.mxu0
      %3164 = vmatprep.mubr.bf16.mxu0 0
      %3165 = vmatmul.mubr.bf16.gmra.mxu0 %v3050
      %v3166 = vpop.f32.mrf.mxu0
      %v3167 = vadd.f32 0.0, %v3166
      %v3168 = vpop.f32.mrf.mxu0
      %v3169 = vpop.f32.mrf.mxu0
      %v3170 = vadd.f32 0.0, %v3169
      %v3171 = vpop.f32.mrf.mxu0
      %3172 = vmatprep.mubr.bf16.mxu0 0
      %3173 = vmatmul.mubr.bf16.gmra.mxu0 %v3053
      %v3174 = vpop.f32.mrf.mxu0
      %v3175 = vadd.f32 0.0, %v3174
      %v3176 = vpop.f32.mrf.mxu0
      %v3177 = vpop.f32.mrf.mxu0
      %v3178 = vadd.f32 0.0, %v3177
      %v3179 = vpop.f32.mrf.mxu0
      %3180 = vmatprep.mubr.bf16.mxu0 0
      %3181 = vmatmul.mubr.bf16.gmra.mxu0 %v3056
      %v3182 = vpop.f32.mrf.mxu0
      %v3183 = vadd.f32 0.0, %v3182
      %v3184 = vpop.f32.mrf.mxu0
      %v3185 = vpop.f32.mrf.mxu0
      %v3186 = vadd.f32 0.0, %v3185
      %v3187 = vpop.f32.mrf.mxu0
      %3188 = vmatprep.mubr.bf16.mxu0 0
      %3189 = vmatmul.mubr.bf16.gmra.mxu0 %v3059
      %v3190 = vpop.f32.mrf.mxu0
      %v3191 = vadd.f32 0.0, %v3190
      %v3192 = vpop.f32.mrf.mxu0
      %v3193 = vpop.f32.mrf.mxu0
      %v3194 = vadd.f32 0.0, %v3193
      %v3195 = vpop.f32.mrf.mxu0
      %3196 = vmatprep.mubr.bf16.mxu0 0
      %3197 = vmatmul.mubr.bf16.gmra.mxu0 %v3062
      %v3198 = vpop.f32.mrf.mxu0
      %v3199 = vadd.f32 0.0, %v3198
      %v3200 = vpop.f32.mrf.mxu0
      %v3201 = vpop.f32.mrf.mxu0
      %v3202 = vadd.f32 0.0, %v3201
      %v3203 = vpop.f32.mrf.mxu0
      %3204 = vmatprep.mubr.bf16.mxu0 0
      %3205 = vmatmul.mubr.bf16.gmra.mxu0 %v3065
      %v3206 = vpop.f32.mrf.mxu0
      %v3207 = vadd.f32 0.0, %v3206
      %v3208 = vpop.f32.mrf.mxu0
      %v3209 = vpop.f32.mrf.mxu0
      %v3210 = vadd.f32 0.0, %v3209
      %v3211 = vpop.f32.mrf.mxu0
      %3212 = vmatprep.mubr.bf16.mxu0 0
      %3213 = vmatmul.mubr.bf16.gmra.mxu0 %v3068
      %v3214 = vpop.f32.mrf.mxu0
      %v3215 = vadd.f32 0.0, %v3214
      %v3216 = vpop.f32.mrf.mxu0
      %v3217 = vpop.f32.mrf.mxu0
      %v3218 = vadd.f32 0.0, %v3217
      %v3219 = vpop.f32.mrf.mxu0
      %3220 = vmatprep.mubr.bf16.mxu0 0
      %3221 = vmatmul.mubr.bf16.gmra.mxu0 %v3071
      %v3222 = vpop.f32.mrf.mxu0
      %v3223 = vadd.f32 0.0, %v3222
      %v3224 = vpop.f32.mrf.mxu0
      %v3225 = vpop.f32.mrf.mxu0
      %v3226 = vadd.f32 0.0, %v3225
      %v3227 = vpop.f32.mrf.mxu0
      %3228 = vmatprep.mubr.bf16.mxu0 0
      %3229 = vmatmul.mubr.bf16.gmra.mxu0 %v3074
      %v3230 = vpop.f32.mrf.mxu0
      %v3231 = vadd.f32 0.0, %v3230
      %v3232 = vpop.f32.mrf.mxu0
      %v3233 = vpop.f32.mrf.mxu0
      %v3234 = vadd.f32 0.0, %v3233
      %v3235 = vpop.f32.mrf.mxu0
      %3236 = vmatprep.mubr.bf16.mxu0 0
      %3237 = vmatmul.mubr.bf16.gmra.mxu0 %v3077
      %v3238 = vpop.f32.mrf.mxu0
      %v3239 = vadd.f32 0.0, %v3238
      %v3240 = vpop.f32.mrf.mxu0
      %v3241 = vpop.f32.mrf.mxu0
      %v3242 = vadd.f32 0.0, %v3241
      %v3243 = vpop.f32.mrf.mxu0
      %3244 = vmatprep.mubr.bf16.mxu0 0
      %3245 = vmatmul.mubr.bf16.gmra.mxu0 %v3080
      %v3246 = vpop.f32.mrf.mxu0
      %v3247 = vadd.f32 0.0, %v3246
      %v3248 = vpop.f32.mrf.mxu0
      %v3249 = vpop.f32.mrf.mxu0
      %v3250 = vadd.f32 0.0, %v3249
      %v3251 = vpop.f32.mrf.mxu0
      %3252 = vmatprep.mubr.bf16.mxu0 0
      %3253 = vmatmul.mubr.bf16.gmra.mxu0 %v3083
      %v3254 = vpop.f32.mrf.mxu0
      %v3255 = vadd.f32 0.0, %v3254
      %v3256 = vpop.f32.mrf.mxu0
      %v3257 = vpop.f32.mrf.mxu0
      %v3258 = vadd.f32 0.0, %v3257
      %v3259 = vpop.f32.mrf.mxu0
      %3260 = vmatprep.mubr.bf16.mxu0 0
      %3261 = vmatmul.mubr.bf16.gmra.mxu0 %v3086
      %v3262 = vpop.f32.mrf.mxu0
      %v3263 = vadd.f32 0.0, %v3262
      %v3264 = vpop.f32.mrf.mxu0
      %v3265 = vpop.f32.mrf.mxu0
      %v3266 = vadd.f32 0.0, %v3265
      %v3267 = vpop.f32.mrf.mxu0
      %3268 = vmatprep.mubr.bf16.mxu0 0
      %3269 = vmatmul.mubr.bf16.gmra.mxu0 %v3089
      %v3270 = vpop.f32.mrf.mxu0
      %v3271 = vadd.f32 0.0, %v3270
      %v3272 = vpop.f32.mrf.mxu0
      %v3273 = vpop.f32.mrf.mxu0
      %v3274 = vadd.f32 0.0, %v3273
      %v3275 = vpop.f32.mrf.mxu0
      %3276 = vmatprep.mubr.bf16.mxu0 0
      %3277 = vmatmul.mubr.bf16.gmra.mxu0 %v3092
      %v3278 = vpop.f32.mrf.mxu0
      %v3279 = vadd.f32 0.0, %v3278
      %v3280 = vpop.f32.mrf.mxu0
      %v3281 = vpop.f32.mrf.mxu0
      %v3282 = vadd.f32 0.0, %v3281
      %v3283 = vpop.f32.mrf.mxu0
      %3284 = vmatprep.mubr.bf16.mxu0 0
      %3285 = vmatmul.mubr.bf16.gmra.mxu0 %v3095
      %v3286 = vpop.f32.mrf.mxu0
      %v3287 = vadd.f32 0.0, %v3286
      %v3288 = vpop.f32.mrf.mxu0
      %v3289 = vpop.f32.mrf.mxu0
      %v3290 = vadd.f32 0.0, %v3289
      %v3291 = vpop.f32.mrf.mxu0
      %3292 = vmatprep.mubr.bf16.mxu0 0
      %3293 = vmatmul.mubr.bf16.gmra.mxu0 %v3098
      %v3294 = vpop.f32.mrf.mxu0
      %v3295 = vadd.f32 0.0, %v3294
      %v3296 = vpop.f32.mrf.mxu0
      %v3297 = vpop.f32.mrf.mxu0
      %v3298 = vpop.f32.mrf.mxu0
      %3299 = vdwg.mxu0
      %v3300 = vadd.f32 %v2925, %v3135
      %v3301 = vadd.f32 %v2926, %v3138
      %v3302 = vadd.f32 %v2927, %v3143
      %v3303 = vadd.f32 %v2928, %v3146
      %v3304 = vadd.f32 %v2929, %v3151
      %v3305 = vadd.f32 %v2930, %v3154
      %v3306 = vadd.f32 %v2931, %v3159
      %v3307 = vadd.f32 %v2932, %v3162
      %v3308 = vadd.f32 %v2933, %v3167
      %v3309 = vadd.f32 %v2934, %v3170
      %v3310 = vadd.f32 %v2935, %v3175
      %v3311 = vadd.f32 %v2936, %v3178
      %v3312 = vadd.f32 %v2937, %v3183
      %v3313 = vadd.f32 %v2938, %v3186
      %v3314 = vadd.f32 %v2939, %v3191
      %v3315 = vadd.f32 %v2940, %v3194
      %v3316 = vadd.f32 %v2941, %v3199
      %v3317 = vadd.f32 %v2942, %v3202
      %v3318 = vadd.f32 %v2943, %v3207
      %v3319 = vadd.f32 %v2944, %v3210
      %v3320 = vadd.f32 %v2945, %v3215
      %v3321 = vadd.f32 %v2946, %v3218
      %v3322 = vadd.f32 %v2947, %v3223
      %v3323 = vadd.f32 %v2948, %v3226
      %v3324 = vadd.f32 %v2949, %v3231
      %v3325 = vadd.f32 %v2950, %v3234
      %v3326 = vadd.f32 %v2951, %v3239
      %v3327 = vadd.f32 %v2952, %v3242
      %v3328 = vadd.f32 %v2953, %v3247
      %v3329 = vadd.f32 %v2954, %v3250
      %v3330 = vadd.f32 %v2955, %v3255
      %v3331 = vadd.f32 %v2956, %v3258
      %v3332 = vadd.f32 %v2957, %v3263
      %v3333 = vadd.f32 %v2958, %v3266
      %v3334 = vadd.f32 %v2959, %v3271
      %v3335 = vadd.f32 %v2960, %v3274
      %v3336 = vadd.f32 %v2961, %v3279
      %v3337 = vadd.f32 %v2962, %v3282
      %v3338 = vadd.f32 %v2963, %v3287
      %v3339 = vadd.f32 %v2964, %v3290
      %v3340 = vadd.f32 %v2965, %v3295
      %v3341 = vld [vmem:[#allocation2 + $0x2b] sm:$0xff]
      %v3342 = vld [vmem:[#allocation2 + $0x33] sm:$0xff]
      %v3343 = vld [vmem:[#allocation2 + $0x3b] sm:$0xff]
      %v3344 = vld [vmem:[#allocation2 + $0x43] sm:$0xff]
      %v3345 = vld [vmem:[#allocation2 + $0x4b] sm:$0xff]
      %v3346 = vld [vmem:[#allocation2 + $0x53] sm:$0xff]
      %v3347 = vld [vmem:[#allocation2 + $0x5b] sm:$0xff]
      %v3348 = vld [vmem:[#allocation2 + $0x63] sm:$0xff]
      %v3349 = vld [vmem:[#allocation2 + $0x6b] sm:$0xff]
      %v3350 = vld [vmem:[#allocation2 + $0x73] sm:$0xff]
      %v3351 = vld [vmem:[#allocation2 + $0x7b] sm:$0xff]
      %v3352 = vld [vmem:[#allocation2 + $0x83] sm:$0xff]
      %v3353 = vld [vmem:[#allocation2 + $0x8b] sm:$0xff]
      %v3354 = vld [vmem:[#allocation2 + $0x93] sm:$0xff]
      %v3355 = vld [vmem:[#allocation2 + $0x9b] sm:$0xff]
      %v3356 = vld [vmem:[#allocation2 + $0xa3] sm:$0xff]
      %v3357 = vld [vmem:[#allocation2 + $0xab] sm:$0xff]
      %v3358 = vld [vmem:[#allocation2 + $0xb3] sm:$0xff]
      %v3359 = vld [vmem:[#allocation2 + $0xbb] sm:$0xff]
      %v3360 = vld [vmem:[#allocation2 + $0xc3] sm:$0xff]
      %v3361 = vld [vmem:[#allocation2 + $0xcb] sm:$0xff]
      %v3362 = vld [vmem:[#allocation2 + $0xd3] sm:$0xff]
      %v3363 = vld [vmem:[#allocation2 + $0xdb] sm:$0xff]
      %v3364 = vld [vmem:[#allocation2 + $0xe3] sm:$0xff]
      %v3365 = vld [vmem:[#allocation2 + $0xeb] sm:$0xff]
      %v3366 = vld [vmem:[#allocation2 + $0xf3] sm:$0xff]
      %v3367 = vld [vmem:[#allocation2 + $0xfb] sm:$0xff]
      %v3368 = vld [vmem:[#allocation2 + $0x103] sm:$0xff]
      %v3369 = vld [vmem:[#allocation2 + $0x10b] sm:$0xff]
      %v3370 = vld [vmem:[#allocation2 + $0x113] sm:$0xff]
      %v3371 = vld [vmem:[#allocation2 + $0x11b] sm:$0xff]
      %v3372 = vld [vmem:[#allocation2 + $0x123] sm:$0xff]
      %v3373 = vld [vmem:[#allocation2 + $0x12b] sm:$0xff]
      %v3374 = vld [vmem:[#allocation2 + $0x133] sm:$0xff]
      %v3375 = vld [vmem:[#allocation2 + $0x13b] sm:$0xff]
      %v3376 = vld [vmem:[#allocation2 + $0x143] sm:$0xff]
      %v3377 = vld [vmem:[#allocation2 + $0x14b] sm:$0xff]
      %v3378 = vld [vmem:[#allocation2 + $0x153] sm:$0xff]
      %v3379 = vld [vmem:[#allocation2 + $0x15b] sm:$0xff]
      %v3380 = vld [vmem:[#allocation2 + $0x163] sm:$0xff]
      %v3381 = vld [vmem:[#allocation2 + $0x16b] sm:$0xff]
      %v3382 = vpack.c.bf16 %v3342, %v3341
      %v3383 = vpack.c.bf16 %v3344, %v3343
      %v3384 = vpack.c.bf16 %v3346, %v3345
      %v3385 = vpack.c.bf16 %v3348, %v3347
      %v3386 = vpack.c.bf16 %v3350, %v3349
      %v3387 = vpack.c.bf16 %v3352, %v3351
      %v3388 = vpack.c.bf16 %v3354, %v3353
      %v3389 = vpack.c.bf16 %v3356, %v3355
      %v3390 = vpack.c.bf16 %v3358, %v3357
      %v3391 = vpack.c.bf16 %v3360, %v3359
      %v3392 = vpack.c.bf16 %v3362, %v3361
      %v3393 = vpack.c.bf16 %v3364, %v3363
      %v3394 = vpack.c.bf16 %v3366, %v3365
      %v3395 = vpack.c.bf16 %v3368, %v3367
      %v3396 = vpack.c.bf16 %v3370, %v3369
      %v3397 = vpack.c.bf16 %v3372, %v3371
      %v3398 = vpack.c.bf16 %v3374, %v3373
      %v3399 = vpack.c.bf16 %v3376, %v3375
      %v3400 = vpack.c.bf16 %v3378, %v3377
      %v3401 = vpack.c.bf16 %v3380, %v3379
      %v3402 = vpack.c.bf16 %v3381, %v3381
      %s3403 = scalar_lea.vmem %s2, 64
      %v3404 = vld [vmem:[%s3403] sm:$0xf]
      %v3405 = vld [vmem:[%s3403 + $0x4] sm:$0xf]
      %v3408 = vunpack.c.l.b16 %v3404
      %v3409 = vunpack.c.l.b16 %v3405
      %v3410 = vpack.c.b16 %v3409, %v3408
      %v3413 = vsel %vm558, %v3382, 0
      %v3416 = vsel %vm558, %v3383, 0
      %v3419 = vsel %vm558, %v3384, 0
      %v3422 = vsel %vm558, %v3385, 0
      %v3425 = vsel %vm558, %v3386, 0
      %v3428 = vsel %vm558, %v3387, 0
      %v3431 = vsel %vm558, %v3388, 0
      %v3434 = vsel %vm558, %v3389, 0
      %v3437 = vsel %vm558, %v3390, 0
      %v3440 = vsel %vm558, %v3391, 0
      %v3443 = vsel %vm558, %v3392, 0
      %v3446 = vsel %vm558, %v3393, 0
      %v3449 = vsel %vm558, %v3394, 0
      %v3452 = vsel %vm558, %v3395, 0
      %v3455 = vsel %vm558, %v3396, 0
      %v3458 = vsel %vm558, %v3397, 0
      %v3461 = vsel %vm558, %v3398, 0
      %v3464 = vsel %vm558, %v3399, 0
      %v3467 = vsel %vm558, %v3400, 0
      %v3470 = vsel %vm558, %v3401, 0
      %v3473 = vsel %vm558, %v3402, 0
      %3475 = vmatprep.subr.bf16.mxu0 0
      %3476 = vmatpush1.bf16.msra.mxu0 0
      %3477 = vmatprep.subr.bf16.mxu0 0
      %3478 = vmatpush1.bf16.msra.mxu0 0
      %3479 = vmatprep.subr.bf16.mxu0 0
      %3480 = vmatpush1.bf16.msra.mxu0 0
      %3481 = vmatprep.subr.bf16.mxu0 0
      %3482 = vmatpush1.bf16.msra.mxu0 0
      %3483 = vmatprep.subr.bf16.mxu0 0
      %3484 = vmatpush1.bf16.msra.mxu0 0
      %3485 = vmatprep.subr.bf16.mxu0 0
      %3486 = vmatpush1.bf16.msra.mxu0 0
      %3487 = vmatprep.subr.bf16.mxu0 0
      %3488 = vmatpush1.bf16.msra.mxu0 0
      %3489 = vmatprep.subr.bf16.mxu0 0
      %3490 = vmatpush1.bf16.msra.mxu0 %v3410
      %3491 = vmatprep.subr.bf16.mxu0 0
      %3492 = vmatpush2.bf16.msra.mxu0 0
      %3493 = vmatprep.subr.bf16.mxu0 0
      %3494 = vmatpush2.bf16.msra.mxu0 0
      %3495 = vmatprep.subr.bf16.mxu0 0
      %3496 = vmatpush2.bf16.msra.mxu0 0
      %3497 = vmatprep.subr.bf16.mxu0 0
      %3498 = vmatpush2.bf16.msra.mxu0 0
      %3499 = vmatprep.subr.bf16.mxu0 0
      %3500 = vmatpush2.bf16.msra.mxu0 0
      %3501 = vmatprep.subr.bf16.mxu0 0
      %3502 = vmatpush2.bf16.msra.mxu0 0
      %3503 = vmatprep.subr.bf16.mxu0 0
      %3504 = vmatpush2.bf16.msra.mxu0 0
      %3505 = vmatprep.subr.bf16.mxu0 0
      %3506 = vmatpush2.bf16.msra.mxu0 0
      %3507 = vmatprep.mubr.bf16.mxu0 0
      %3508 = vmatmul.mubr.bf16.gmra.mxu0 %v3413
      %v3509 = vpop.f32.mrf.mxu0
      %v3510 = vadd.f32 0.0, %v3509
      %v3511 = vpop.f32.mrf.mxu0
      %v3512 = vpop.f32.mrf.mxu0
      %v3513 = vadd.f32 0.0, %v3512
      %v3514 = vpop.f32.mrf.mxu0
      %3515 = vmatprep.mubr.bf16.mxu0 0
      %3516 = vmatmul.mubr.bf16.gmra.mxu0 %v3416
      %v3517 = vpop.f32.mrf.mxu0
      %v3518 = vadd.f32 0.0, %v3517
      %v3519 = vpop.f32.mrf.mxu0
      %v3520 = vpop.f32.mrf.mxu0
      %v3521 = vadd.f32 0.0, %v3520
      %v3522 = vpop.f32.mrf.mxu0
      %3523 = vmatprep.mubr.bf16.mxu0 0
      %3524 = vmatmul.mubr.bf16.gmra.mxu0 %v3419
      %v3525 = vpop.f32.mrf.mxu0
      %v3526 = vadd.f32 0.0, %v3525
      %v3527 = vpop.f32.mrf.mxu0
      %v3528 = vpop.f32.mrf.mxu0
      %v3529 = vadd.f32 0.0, %v3528
      %v3530 = vpop.f32.mrf.mxu0
      %3531 = vmatprep.mubr.bf16.mxu0 0
      %3532 = vmatmul.mubr.bf16.gmra.mxu0 %v3422
      %v3533 = vpop.f32.mrf.mxu0
      %v3534 = vadd.f32 0.0, %v3533
      %v3535 = vpop.f32.mrf.mxu0
      %v3536 = vpop.f32.mrf.mxu0
      %v3537 = vadd.f32 0.0, %v3536
      %v3538 = vpop.f32.mrf.mxu0
      %3539 = vmatprep.mubr.bf16.mxu0 0
      %3540 = vmatmul.mubr.bf16.gmra.mxu0 %v3425
      %v3541 = vpop.f32.mrf.mxu0
      %v3542 = vadd.f32 0.0, %v3541
      %v3543 = vpop.f32.mrf.mxu0
      %v3544 = vpop.f32.mrf.mxu0
      %v3545 = vadd.f32 0.0, %v3544
      %v3546 = vpop.f32.mrf.mxu0
      %3547 = vmatprep.mubr.bf16.mxu0 0
      %3548 = vmatmul.mubr.bf16.gmra.mxu0 %v3428
      %v3549 = vpop.f32.mrf.mxu0
      %v3550 = vadd.f32 0.0, %v3549
      %v3551 = vpop.f32.mrf.mxu0
      %v3552 = vpop.f32.mrf.mxu0
      %v3553 = vadd.f32 0.0, %v3552
      %v3554 = vpop.f32.mrf.mxu0
      %3555 = vmatprep.mubr.bf16.mxu0 0
      %3556 = vmatmul.mubr.bf16.gmra.mxu0 %v3431
      %v3557 = vpop.f32.mrf.mxu0
      %v3558 = vadd.f32 0.0, %v3557
      %v3559 = vpop.f32.mrf.mxu0
      %v3560 = vpop.f32.mrf.mxu0
      %v3561 = vadd.f32 0.0, %v3560
      %v3562 = vpop.f32.mrf.mxu0
      %3563 = vmatprep.mubr.bf16.mxu0 0
      %3564 = vmatmul.mubr.bf16.gmra.mxu0 %v3434
      %v3565 = vpop.f32.mrf.mxu0
      %v3566 = vadd.f32 0.0, %v3565
      %v3567 = vpop.f32.mrf.mxu0
      %v3568 = vpop.f32.mrf.mxu0
      %v3569 = vadd.f32 0.0, %v3568
      %v3570 = vpop.f32.mrf.mxu0
      %3571 = vmatprep.mubr.bf16.mxu0 0
      %3572 = vmatmul.mubr.bf16.gmra.mxu0 %v3437
      %v3573 = vpop.f32.mrf.mxu0
      %v3574 = vadd.f32 0.0, %v3573
      %v3575 = vpop.f32.mrf.mxu0
      %v3576 = vpop.f32.mrf.mxu0
      %v3577 = vadd.f32 0.0, %v3576
      %v3578 = vpop.f32.mrf.mxu0
      %3579 = vmatprep.mubr.bf16.mxu0 0
      %3580 = vmatmul.mubr.bf16.gmra.mxu0 %v3440
      %v3581 = vpop.f32.mrf.mxu0
      %v3582 = vadd.f32 0.0, %v3581
      %v3583 = vpop.f32.mrf.mxu0
      %v3584 = vpop.f32.mrf.mxu0
      %v3585 = vadd.f32 0.0, %v3584
      %v3586 = vpop.f32.mrf.mxu0
      %3587 = vmatprep.mubr.bf16.mxu0 0
      %3588 = vmatmul.mubr.bf16.gmra.mxu0 %v3443
      %v3589 = vpop.f32.mrf.mxu0
      %v3590 = vadd.f32 0.0, %v3589
      %v3591 = vpop.f32.mrf.mxu0
      %v3592 = vpop.f32.mrf.mxu0
      %v3593 = vadd.f32 0.0, %v3592
      %v3594 = vpop.f32.mrf.mxu0
      %3595 = vmatprep.mubr.bf16.mxu0 0
      %3596 = vmatmul.mubr.bf16.gmra.mxu0 %v3446
      %v3597 = vpop.f32.mrf.mxu0
      %v3598 = vadd.f32 0.0, %v3597
      %v3599 = vpop.f32.mrf.mxu0
      %v3600 = vpop.f32.mrf.mxu0
      %v3601 = vadd.f32 0.0, %v3600
      %v3602 = vpop.f32.mrf.mxu0
      %3603 = vmatprep.mubr.bf16.mxu0 0
      %3604 = vmatmul.mubr.bf16.gmra.mxu0 %v3449
      %v3605 = vpop.f32.mrf.mxu0
      %v3606 = vadd.f32 0.0, %v3605
      %v3607 = vpop.f32.mrf.mxu0
      %v3608 = vpop.f32.mrf.mxu0
      %v3609 = vadd.f32 0.0, %v3608
      %v3610 = vpop.f32.mrf.mxu0
      %3611 = vmatprep.mubr.bf16.mxu0 0
      %3612 = vmatmul.mubr.bf16.gmra.mxu0 %v3452
      %v3613 = vpop.f32.mrf.mxu0
      %v3614 = vadd.f32 0.0, %v3613
      %v3615 = vpop.f32.mrf.mxu0
      %v3616 = vpop.f32.mrf.mxu0
      %v3617 = vadd.f32 0.0, %v3616
      %v3618 = vpop.f32.mrf.mxu0
      %3619 = vmatprep.mubr.bf16.mxu0 0
      %3620 = vmatmul.mubr.bf16.gmra.mxu0 %v3455
      %v3621 = vpop.f32.mrf.mxu0
      %v3622 = vadd.f32 0.0, %v3621
      %v3623 = vpop.f32.mrf.mxu0
      %v3624 = vpop.f32.mrf.mxu0
      %v3625 = vadd.f32 0.0, %v3624
      %v3626 = vpop.f32.mrf.mxu0
      %3627 = vmatprep.mubr.bf16.mxu0 0
      %3628 = vmatmul.mubr.bf16.gmra.mxu0 %v3458
      %v3629 = vpop.f32.mrf.mxu0
      %v3630 = vadd.f32 0.0, %v3629
      %v3631 = vpop.f32.mrf.mxu0
      %v3632 = vpop.f32.mrf.mxu0
      %v3633 = vadd.f32 0.0, %v3632
      %v3634 = vpop.f32.mrf.mxu0
      %3635 = vmatprep.mubr.bf16.mxu0 0
      %3636 = vmatmul.mubr.bf16.gmra.mxu0 %v3461
      %v3637 = vpop.f32.mrf.mxu0
      %v3638 = vadd.f32 0.0, %v3637
      %v3639 = vpop.f32.mrf.mxu0
      %v3640 = vpop.f32.mrf.mxu0
      %v3641 = vadd.f32 0.0, %v3640
      %v3642 = vpop.f32.mrf.mxu0
      %3643 = vmatprep.mubr.bf16.mxu0 0
      %3644 = vmatmul.mubr.bf16.gmra.mxu0 %v3464
      %v3645 = vpop.f32.mrf.mxu0
      %v3646 = vadd.f32 0.0, %v3645
      %v3647 = vpop.f32.mrf.mxu0
      %v3648 = vpop.f32.mrf.mxu0
      %v3649 = vadd.f32 0.0, %v3648
      %v3650 = vpop.f32.mrf.mxu0
      %3651 = vmatprep.mubr.bf16.mxu0 0
      %3652 = vmatmul.mubr.bf16.gmra.mxu0 %v3467
      %v3653 = vpop.f32.mrf.mxu0
      %v3654 = vadd.f32 0.0, %v3653
      %v3655 = vpop.f32.mrf.mxu0
      %v3656 = vpop.f32.mrf.mxu0
      %v3657 = vadd.f32 0.0, %v3656
      %v3658 = vpop.f32.mrf.mxu0
      %3659 = vmatprep.mubr.bf16.mxu0 0
      %3660 = vmatmul.mubr.bf16.gmra.mxu0 %v3470
      %v3661 = vpop.f32.mrf.mxu0
      %v3662 = vadd.f32 0.0, %v3661
      %v3663 = vpop.f32.mrf.mxu0
      %v3664 = vpop.f32.mrf.mxu0
      %v3665 = vadd.f32 0.0, %v3664
      %v3666 = vpop.f32.mrf.mxu0
      %3667 = vmatprep.mubr.bf16.mxu0 0
      %3668 = vmatmul.mubr.bf16.gmra.mxu0 %v3473
      %v3669 = vpop.f32.mrf.mxu0
      %v3670 = vadd.f32 0.0, %v3669
      %v3671 = vpop.f32.mrf.mxu0
      %v3672 = vpop.f32.mrf.mxu0
      %v3673 = vpop.f32.mrf.mxu0
      %3674 = vdwg.mxu0
      %v3675 = vadd.f32 %v3300, %v3510
      %v3676 = vadd.f32 %v3301, %v3513
      %v3677 = vadd.f32 %v3302, %v3518
      %v3678 = vadd.f32 %v3303, %v3521
      %v3679 = vadd.f32 %v3304, %v3526
      %v3680 = vadd.f32 %v3305, %v3529
      %v3681 = vadd.f32 %v3306, %v3534
      %v3682 = vadd.f32 %v3307, %v3537
      %v3683 = vadd.f32 %v3308, %v3542
      %v3684 = vadd.f32 %v3309, %v3545
      %v3685 = vadd.f32 %v3310, %v3550
      %v3686 = vadd.f32 %v3311, %v3553
      %v3687 = vadd.f32 %v3312, %v3558
      %v3688 = vadd.f32 %v3313, %v3561
      %v3689 = vadd.f32 %v3314, %v3566
      %v3690 = vadd.f32 %v3315, %v3569
      %v3691 = vadd.f32 %v3316, %v3574
      %v3692 = vadd.f32 %v3317, %v3577
      %v3693 = vadd.f32 %v3318, %v3582
      %v3694 = vadd.f32 %v3319, %v3585
      %v3695 = vadd.f32 %v3320, %v3590
      %v3696 = vadd.f32 %v3321, %v3593
      %v3697 = vadd.f32 %v3322, %v3598
      %v3698 = vadd.f32 %v3323, %v3601
      %v3699 = vadd.f32 %v3324, %v3606
      %v3700 = vadd.f32 %v3325, %v3609
      %v3701 = vadd.f32 %v3326, %v3614
      %v3702 = vadd.f32 %v3327, %v3617
      %v3703 = vadd.f32 %v3328, %v3622
      %v3704 = vadd.f32 %v3329, %v3625
      %v3705 = vadd.f32 %v3330, %v3630
      %v3706 = vadd.f32 %v3331, %v3633
      %v3707 = vadd.f32 %v3332, %v3638
      %v3708 = vadd.f32 %v3333, %v3641
      %v3709 = vadd.f32 %v3334, %v3646
      %v3710 = vadd.f32 %v3335, %v3649
      %v3711 = vadd.f32 %v3336, %v3654
      %v3712 = vadd.f32 %v3337, %v3657
      %v3713 = vadd.f32 %v3338, %v3662
      %v3714 = vadd.f32 %v3339, %v3665
      %v3715 = vadd.f32 %v3340, %v3670
      %v3716 = vmax.f32 %v3675, 0.0
      %v3717 = vmax.f32 %v3676, 0.0
      %v3718 = vmax.f32 %v3677, 0.0
      %v3719 = vmax.f32 %v3678, 0.0
      %v3720 = vmax.f32 %v3679, 0.0
      %v3721 = vmax.f32 %v3680, 0.0
      %v3722 = vmax.f32 %v3681, 0.0
      %v3723 = vmax.f32 %v3682, 0.0
      %v3724 = vmax.f32 %v3683, 0.0
      %v3725 = vmax.f32 %v3684, 0.0
      %v3726 = vmax.f32 %v3685, 0.0
      %v3727 = vmax.f32 %v3686, 0.0
      %v3728 = vmax.f32 %v3687, 0.0
      %v3729 = vmax.f32 %v3688, 0.0
      %v3730 = vmax.f32 %v3689, 0.0
      %v3731 = vmax.f32 %v3690, 0.0
      %v3732 = vmax.f32 %v3691, 0.0
      %v3733 = vmax.f32 %v3692, 0.0
      %v3734 = vmax.f32 %v3693, 0.0
      %v3735 = vmax.f32 %v3694, 0.0
      %v3736 = vmax.f32 %v3695, 0.0
      %v3737 = vmax.f32 %v3696, 0.0
      %v3738 = vmax.f32 %v3697, 0.0
      %v3739 = vmax.f32 %v3698, 0.0
      %v3740 = vmax.f32 %v3699, 0.0
      %v3741 = vmax.f32 %v3700, 0.0
      %v3742 = vmax.f32 %v3701, 0.0
      %v3743 = vmax.f32 %v3702, 0.0
      %v3744 = vmax.f32 %v3703, 0.0
      %v3745 = vmax.f32 %v3704, 0.0
      %v3746 = vmax.f32 %v3705, 0.0
      %v3747 = vmax.f32 %v3706, 0.0
      %v3748 = vmax.f32 %v3707, 0.0
      %v3749 = vmax.f32 %v3708, 0.0
      %v3750 = vmax.f32 %v3709, 0.0
      %v3751 = vmax.f32 %v3710, 0.0
      %v3752 = vmax.f32 %v3711, 0.0
      %v3753 = vmax.f32 %v3712, 0.0
      %v3754 = vmax.f32 %v3713, 0.0
      %v3755 = vmax.f32 %v3714, 0.0
      %v3756 = vmax.f32 %v3715, 0.0
      %3758 = vset.pattern.permute.xlu0 0
      %3759 = vperm.xlu0 %3758, %v294
      %v3760 = vpop.permute.xlu0 %3759
      %3763 = vset.pattern.permute.xlu0 0
      %3764 = vperm.xlu0 %3763, %v295
      %v3765 = vpop.permute.xlu0 %3764
      %3768 = vset.pattern.permute.xlu0 0
      %3769 = vperm.xlu0 %3768, %v296
      %v3770 = vpop.permute.xlu0 %3769
      %3773 = vset.pattern.permute.xlu0 0
      %3774 = vperm.xlu0 %3773, %v297
      %v3775 = vpop.permute.xlu0 %3774
      %3778 = vset.pattern.permute.xlu0 0
      %3779 = vperm.xlu0 %3778, %v298
      %v3780 = vpop.permute.xlu0 %3779
      %3783 = vset.pattern.permute.xlu0 0
      %3784 = vperm.xlu0 %3783, %v299
      %v3785 = vpop.permute.xlu0 %3784
      %3788 = vset.pattern.permute.xlu0 0
      %3789 = vperm.xlu0 %3788, %v300
      %v3790 = vpop.permute.xlu0 %3789
      %3793 = vset.pattern.permute.xlu0 0
      %3794 = vperm.xlu0 %3793, %v301
      %v3795 = vpop.permute.xlu0 %3794
      %3798 = vset.pattern.permute.xlu0 0
      %3799 = vperm.xlu0 %3798, %v302
      %v3800 = vpop.permute.xlu0 %3799
      %3803 = vset.pattern.permute.xlu0 0
      %3804 = vperm.xlu0 %3803, %v303
      %v3805 = vpop.permute.xlu0 %3804
      %3808 = vset.pattern.permute.xlu0 0
      %3809 = vperm.xlu0 %3808, %v304
      %v3810 = vpop.permute.xlu0 %3809
      %3813 = vset.pattern.permute.xlu0 0
      %3814 = vperm.xlu0 %3813, %v305
      %v3815 = vpop.permute.xlu0 %3814
      %3818 = vset.pattern.permute.xlu0 0
      %3819 = vperm.xlu0 %3818, %v306
      %v3820 = vpop.permute.xlu0 %3819
      %3823 = vset.pattern.permute.xlu0 0
      %3824 = vperm.xlu0 %3823, %v307
      %v3825 = vpop.permute.xlu0 %3824
      %3828 = vset.pattern.permute.xlu0 0
      %3829 = vperm.xlu0 %3828, %v308
      %v3830 = vpop.permute.xlu0 %3829
      %3833 = vset.pattern.permute.xlu0 0
      %3834 = vperm.xlu0 %3833, %v309
      %v3835 = vpop.permute.xlu0 %3834
      %3838 = vset.pattern.permute.xlu0 0
      %3839 = vperm.xlu0 %3838, %v310
      %v3840 = vpop.permute.xlu0 %3839
      %3843 = vset.pattern.permute.xlu0 0
      %3844 = vperm.xlu0 %3843, %v311
      %v3845 = vpop.permute.xlu0 %3844
      %3848 = vset.pattern.permute.xlu0 0
      %3849 = vperm.xlu0 %3848, %v312
      %v3850 = vpop.permute.xlu0 %3849
      %3853 = vset.pattern.permute.xlu0 0
      %3854 = vperm.xlu0 %3853, %v313
      %v3855 = vpop.permute.xlu0 %3854
      %3858 = vset.pattern.permute.xlu0 0
      %3859 = vperm.xlu0 %3858, %v314
      %v3860 = vpop.permute.xlu0 %3859
      %3863 = vset.pattern.permute.xlu0 0
      %3864 = vperm.xlu0 %3863, %v315
      %v3865 = vpop.permute.xlu0 %3864
      %3868 = vset.pattern.permute.xlu0 0
      %3869 = vperm.xlu0 %3868, %v316
      %v3870 = vpop.permute.xlu0 %3869
      %3873 = vset.pattern.permute.xlu0 0
      %3874 = vperm.xlu0 %3873, %v317
      %v3875 = vpop.permute.xlu0 %3874
      %3878 = vset.pattern.permute.xlu0 0
      %3879 = vperm.xlu0 %3878, %v318
      %v3880 = vpop.permute.xlu0 %3879
      %3883 = vset.pattern.permute.xlu0 0
      %3884 = vperm.xlu0 %3883, %v319
      %v3885 = vpop.permute.xlu0 %3884
      %3888 = vset.pattern.permute.xlu0 0
      %3889 = vperm.xlu0 %3888, %v320
      %v3890 = vpop.permute.xlu0 %3889
      %3893 = vset.pattern.permute.xlu0 0
      %3894 = vperm.xlu0 %3893, %v321
      %v3895 = vpop.permute.xlu0 %3894
      %3898 = vset.pattern.permute.xlu0 0
      %3899 = vperm.xlu0 %3898, %v322
      %v3900 = vpop.permute.xlu0 %3899
      %3903 = vset.pattern.permute.xlu0 0
      %3904 = vperm.xlu0 %3903, %v323
      %v3905 = vpop.permute.xlu0 %3904
      %3908 = vset.pattern.permute.xlu0 0
      %3909 = vperm.xlu0 %3908, %v324
      %v3910 = vpop.permute.xlu0 %3909
      %3913 = vset.pattern.permute.xlu0 0
      %3914 = vperm.xlu0 %3913, %v325
      %v3915 = vpop.permute.xlu0 %3914
      %3918 = vset.pattern.permute.xlu0 0
      %3919 = vperm.xlu0 %3918, %v326
      %v3920 = vpop.permute.xlu0 %3919
      %3923 = vset.pattern.permute.xlu0 0
      %3924 = vperm.xlu0 %3923, %v327
      %v3925 = vpop.permute.xlu0 %3924
      %3928 = vset.pattern.permute.xlu0 0
      %3929 = vperm.xlu0 %3928, %v328
      %v3930 = vpop.permute.xlu0 %3929
      %3933 = vset.pattern.permute.xlu0 0
      %3934 = vperm.xlu0 %3933, %v329
      %v3935 = vpop.permute.xlu0 %3934
      %3938 = vset.pattern.permute.xlu0 0
      %3939 = vperm.xlu0 %3938, %v330
      %v3940 = vpop.permute.xlu0 %3939
      %3943 = vset.pattern.permute.xlu0 0
      %3944 = vperm.xlu0 %3943, %v331
      %v3945 = vpop.permute.xlu0 %3944
      %3948 = vset.pattern.permute.xlu0 0
      %3949 = vperm.xlu0 %3948, %v332
      %v3950 = vpop.permute.xlu0 %3949
      %3953 = vset.pattern.permute.xlu0 0
      %3954 = vperm.xlu0 %3953, %v333
      %v3955 = vpop.permute.xlu0 %3954
      %3958 = vset.pattern.permute.xlu0 0
      %3959 = vperm.xlu0 %3958, %v334
      %v3960 = vpop.permute.xlu0 %3959
      %v3962 = vmul.f32 %v3716, %v3760
      %v3963 = vmul.f32 %v3717, %v3765
      %v3964 = vmul.f32 %v3718, %v3770
      %v3965 = vmul.f32 %v3719, %v3775
      %v3966 = vmul.f32 %v3720, %v3780
      %v3967 = vmul.f32 %v3721, %v3785
      %v3968 = vmul.f32 %v3722, %v3790
      %v3969 = vmul.f32 %v3723, %v3795
      %v3970 = vmul.f32 %v3724, %v3800
      %v3971 = vmul.f32 %v3725, %v3805
      %v3972 = vmul.f32 %v3726, %v3810
      %v3973 = vmul.f32 %v3727, %v3815
      %v3974 = vmul.f32 %v3728, %v3820
      %v3975 = vmul.f32 %v3729, %v3825
      %v3976 = vmul.f32 %v3730, %v3830
      %v3977 = vmul.f32 %v3731, %v3835
      %v3978 = vmul.f32 %v3732, %v3840
      %v3979 = vmul.f32 %v3733, %v3845
      %v3980 = vmul.f32 %v3734, %v3850
      %v3981 = vmul.f32 %v3735, %v3855
      %v3982 = vmul.f32 %v3736, %v3860
      %v3983 = vmul.f32 %v3737, %v3865
      %v3984 = vmul.f32 %v3738, %v3870
      %v3985 = vmul.f32 %v3739, %v3875
      %v3986 = vmul.f32 %v3740, %v3880
      %v3987 = vmul.f32 %v3741, %v3885
      %v3988 = vmul.f32 %v3742, %v3890
      %v3989 = vmul.f32 %v3743, %v3895
      %v3990 = vmul.f32 %v3744, %v3900
      %v3991 = vmul.f32 %v3745, %v3905
      %v3992 = vmul.f32 %v3746, %v3910
      %v3993 = vmul.f32 %v3747, %v3915
      %v3994 = vmul.f32 %v3748, %v3920
      %v3995 = vmul.f32 %v3749, %v3925
      %v3996 = vmul.f32 %v3750, %v3930
      %v3997 = vmul.f32 %v3751, %v3935
      %v3998 = vmul.f32 %v3752, %v3940
      %v3999 = vmul.f32 %v3753, %v3945
      %v4000 = vmul.f32 %v3754, %v3950
      %v4001 = vmul.f32 %v3755, %v3955
      %v4002 = vmul.f32 %v3756, %v3960
      %4044 = vrot.lane.b32.xlu0 %v3962, 16
      %v4045 = vpop.permute.xlu0 %4044
      %4046 = vrot.lane.b32.xlu0 %v3963, 16
      %v4047 = vpop.permute.xlu0 %4046
      %4048 = vrot.lane.b32.xlu0 %v3964, 16
      %v4049 = vpop.permute.xlu0 %4048
      %4050 = vrot.lane.b32.xlu0 %v3965, 16
      %v4051 = vpop.permute.xlu0 %4050
      %4052 = vrot.lane.b32.xlu0 %v3966, 16
      %v4053 = vpop.permute.xlu0 %4052
      %4054 = vrot.lane.b32.xlu0 %v3967, 16
      %v4055 = vpop.permute.xlu0 %4054
      %4056 = vrot.lane.b32.xlu0 %v3968, 16
      %v4057 = vpop.permute.xlu0 %4056
      %4058 = vrot.lane.b32.xlu0 %v3969, 16
      %v4059 = vpop.permute.xlu0 %4058
      %4060 = vrot.lane.b32.xlu0 %v3970, 16
      %v4061 = vpop.permute.xlu0 %4060
      %4062 = vrot.lane.b32.xlu0 %v3971, 16
      %v4063 = vpop.permute.xlu0 %4062
      %4064 = vrot.lane.b32.xlu0 %v3972, 16
      %v4065 = vpop.permute.xlu0 %4064
      %4066 = vrot.lane.b32.xlu0 %v3973, 16
      %v4067 = vpop.permute.xlu0 %4066
      %4068 = vrot.lane.b32.xlu0 %v3974, 16
      %v4069 = vpop.permute.xlu0 %4068
      %4070 = vrot.lane.b32.xlu0 %v3975, 16
      %v4071 = vpop.permute.xlu0 %4070
      %4072 = vrot.lane.b32.xlu0 %v3976, 16
      %v4073 = vpop.permute.xlu0 %4072
      %4074 = vrot.lane.b32.xlu0 %v3977, 16
      %v4075 = vpop.permute.xlu0 %4074
      %4076 = vrot.lane.b32.xlu0 %v3978, 16
      %v4077 = vpop.permute.xlu0 %4076
      %4078 = vrot.lane.b32.xlu0 %v3979, 16
      %v4079 = vpop.permute.xlu0 %4078
      %4080 = vrot.lane.b32.xlu0 %v3980, 16
      %v4081 = vpop.permute.xlu0 %4080
      %4082 = vrot.lane.b32.xlu0 %v3981, 16
      %v4083 = vpop.permute.xlu0 %4082
      %4084 = vrot.lane.b32.xlu0 %v3982, 16
      %v4085 = vpop.permute.xlu0 %4084
      %4086 = vrot.lane.b32.xlu0 %v3983, 16
      %v4087 = vpop.permute.xlu0 %4086
      %4088 = vrot.lane.b32.xlu0 %v3984, 16
      %v4089 = vpop.permute.xlu0 %4088
      %4090 = vrot.lane.b32.xlu0 %v3985, 16
      %v4091 = vpop.permute.xlu0 %4090
      %4092 = vrot.lane.b32.xlu0 %v3986, 16
      %v4093 = vpop.permute.xlu0 %4092
      %4094 = vrot.lane.b32.xlu0 %v3987, 16
      %v4095 = vpop.permute.xlu0 %4094
      %4096 = vrot.lane.b32.xlu0 %v3988, 16
      %v4097 = vpop.permute.xlu0 %4096
      %4098 = vrot.lane.b32.xlu0 %v3989, 16
      %v4099 = vpop.permute.xlu0 %4098
      %4100 = vrot.lane.b32.xlu0 %v3990, 16
      %v4101 = vpop.permute.xlu0 %4100
      %4102 = vrot.lane.b32.xlu0 %v3991, 16
      %v4103 = vpop.permute.xlu0 %4102
      %4104 = vrot.lane.b32.xlu0 %v3992, 16
      %v4105 = vpop.permute.xlu0 %4104
      %4106 = vrot.lane.b32.xlu0 %v3993, 16
      %v4107 = vpop.permute.xlu0 %4106
      %4108 = vrot.lane.b32.xlu0 %v3994, 16
      %v4109 = vpop.permute.xlu0 %4108
      %4110 = vrot.lane.b32.xlu0 %v3995, 16
      %v4111 = vpop.permute.xlu0 %4110
      %4112 = vrot.lane.b32.xlu0 %v3996, 16
      %v4113 = vpop.permute.xlu0 %4112
      %4114 = vrot.lane.b32.xlu0 %v3997, 16
      %v4115 = vpop.permute.xlu0 %4114
      %4116 = vrot.lane.b32.xlu0 %v3998, 16
      %v4117 = vpop.permute.xlu0 %4116
      %4118 = vrot.lane.b32.xlu0 %v3999, 16
      %v4119 = vpop.permute.xlu0 %4118
      %4120 = vrot.lane.b32.xlu0 %v4000, 16
      %v4121 = vpop.permute.xlu0 %4120
      %4122 = vrot.lane.b32.xlu0 %v4001, 16
      %v4123 = vpop.permute.xlu0 %4122
      %4124 = vrot.lane.b32.xlu0 %v4002, 16
      %v4125 = vpop.permute.xlu0 %4124
      %vm4167 = vcmask 195712
      %4168 = vst.msk [vmem:[#allocation2 + $0x18] sm:$0xff] %vm4167, %v4045
      %4169 = vst.msk [vmem:[#allocation2 + $0x20] sm:$0xff] %vm4167, %v4047
      %4170 = vst.msk [vmem:[#allocation2 + $0x28] sm:$0xff] %vm4167, %v4049
      %4171 = vst.msk [vmem:[#allocation2 + $0x30] sm:$0xff] %vm4167, %v4051
      %4172 = vst.msk [vmem:[#allocation2 + $0x38] sm:$0xff] %vm4167, %v4053
      %4173 = vst.msk [vmem:[#allocation2 + $0x40] sm:$0xff] %vm4167, %v4055
      %4174 = vst.msk [vmem:[#allocation2 + $0x48] sm:$0xff] %vm4167, %v4057
      %4175 = vst.msk [vmem:[#allocation2 + $0x50] sm:$0xff] %vm4167, %v4059
      %4176 = vst.msk [vmem:[#allocation2 + $0x58] sm:$0xff] %vm4167, %v4061
      %4177 = vst.msk [vmem:[#allocation2 + $0x60] sm:$0xff] %vm4167, %v4063
      %4178 = vst.msk [vmem:[#allocation2 + $0x68] sm:$0xff] %vm4167, %v4065
      %4179 = vst.msk [vmem:[#allocation2 + $0x70] sm:$0xff] %vm4167, %v4067
      %4180 = vst.msk [vmem:[#allocation2 + $0x78] sm:$0xff] %vm4167, %v4069
      %4181 = vst.msk [vmem:[#allocation2 + $0x80] sm:$0xff] %vm4167, %v4071
      %4182 = vst.msk [vmem:[#allocation2 + $0x88] sm:$0xff] %vm4167, %v4073
      %4183 = vst.msk [vmem:[#allocation2 + $0x90] sm:$0xff] %vm4167, %v4075
      %4184 = vst.msk [vmem:[#allocation2 + $0x98] sm:$0xff] %vm4167, %v4077
      %4185 = vst.msk [vmem:[#allocation2 + $0xa0] sm:$0xff] %vm4167, %v4079
      %4186 = vst.msk [vmem:[#allocation2 + $0xa8] sm:$0xff] %vm4167, %v4081
      %4187 = vst.msk [vmem:[#allocation2 + $0xb0] sm:$0xff] %vm4167, %v4083
      %4188 = vst.msk [vmem:[#allocation2 + $0xb8] sm:$0xff] %vm4167, %v4085
      %4189 = vst.msk [vmem:[#allocation2 + $0xc0] sm:$0xff] %vm4167, %v4087
      %4190 = vst.msk [vmem:[#allocation2 + $0xc8] sm:$0xff] %vm4167, %v4089
      %4191 = vst.msk [vmem:[#allocation2 + $0xd0] sm:$0xff] %vm4167, %v4091
      %4192 = vst.msk [vmem:[#allocation2 + $0xd8] sm:$0xff] %vm4167, %v4093
      %4193 = vst.msk [vmem:[#allocation2 + $0xe0] sm:$0xff] %vm4167, %v4095
      %4194 = vst.msk [vmem:[#allocation2 + $0xe8] sm:$0xff] %vm4167, %v4097
      %4195 = vst.msk [vmem:[#allocation2 + $0xf0] sm:$0xff] %vm4167, %v4099
      %4196 = vst.msk [vmem:[#allocation2 + $0xf8] sm:$0xff] %vm4167, %v4101
      %4197 = vst.msk [vmem:[#allocation2 + $0x100] sm:$0xff] %vm4167, %v4103
      %4198 = vst.msk [vmem:[#allocation2 + $0x108] sm:$0xff] %vm4167, %v4105
      %4199 = vst.msk [vmem:[#allocation2 + $0x110] sm:$0xff] %vm4167, %v4107
      %4200 = vst.msk [vmem:[#allocation2 + $0x118] sm:$0xff] %vm4167, %v4109
      %4201 = vst.msk [vmem:[#allocation2 + $0x120] sm:$0xff] %vm4167, %v4111
      %4202 = vst.msk [vmem:[#allocation2 + $0x128] sm:$0xff] %vm4167, %v4113
      %4203 = vst.msk [vmem:[#allocation2 + $0x130] sm:$0xff] %vm4167, %v4115
      %4204 = vst.msk [vmem:[#allocation2 + $0x138] sm:$0xff] %vm4167, %v4117
      %4205 = vst.msk [vmem:[#allocation2 + $0x140] sm:$0xff] %vm4167, %v4119
      %4206 = vst.msk [vmem:[#allocation2 + $0x148] sm:$0xff] %vm4167, %v4121
      %4207 = vst.msk [vmem:[#allocation2 + $0x150] sm:$0xff] %vm4167, %v4123
      %4208 = vst.msk [vmem:[#allocation2 + $0x158] sm:$0xff] %vm4167, %v4125
      %v4209 = vld [vmem:[#allocation2 + $0x5] sm:$0xff]
      %v4210 = vld [vmem:[#allocation2 + $0xd] sm:$0xff]
      %v4211 = vld [vmem:[#allocation2 + $0x15] sm:$0xff]
      %v4212 = vld [vmem:[#allocation2 + $0x1d] sm:$0xff]
      %v4213 = vld [vmem:[#allocation2 + $0x25] sm:$0xff]
      %v4214 = vld [vmem:[#allocation2 + $0x2d] sm:$0xff]
      %v4215 = vld [vmem:[#allocation2 + $0x35] sm:$0xff]
      %v4216 = vld [vmem:[#allocation2 + $0x3d] sm:$0xff]
      %v4217 = vld [vmem:[#allocation2 + $0x45] sm:$0xff]
      %v4218 = vld [vmem:[#allocation2 + $0x4d] sm:$0xff]
      %v4219 = vld [vmem:[#allocation2 + $0x55] sm:$0xff]
      %v4220 = vld [vmem:[#allocation2 + $0x5d] sm:$0xff]
      %v4221 = vld [vmem:[#allocation2 + $0x65] sm:$0xff]
      %v4222 = vld [vmem:[#allocation2 + $0x6d] sm:$0xff]
      %v4223 = vld [vmem:[#allocation2 + $0x75] sm:$0xff]
      %v4224 = vld [vmem:[#allocation2 + $0x7d] sm:$0xff]
      %v4225 = vld [vmem:[#allocation2 + $0x85] sm:$0xff]
      %v4226 = vld [vmem:[#allocation2 + $0x8d] sm:$0xff]
      %v4227 = vld [vmem:[#allocation2 + $0x95] sm:$0xff]
      %v4228 = vld [vmem:[#allocation2 + $0x9d] sm:$0xff]
      %v4229 = vld [vmem:[#allocation2 + $0xa5] sm:$0xff]
      %v4230 = vld [vmem:[#allocation2 + $0xad] sm:$0xff]
      %v4231 = vld [vmem:[#allocation2 + $0xb5] sm:$0xff]
      %v4232 = vld [vmem:[#allocation2 + $0xbd] sm:$0xff]
      %v4233 = vld [vmem:[#allocation2 + $0xc5] sm:$0xff]
      %v4234 = vld [vmem:[#allocation2 + $0xcd] sm:$0xff]
      %v4235 = vld [vmem:[#allocation2 + $0xd5] sm:$0xff]
      %v4236 = vld [vmem:[#allocation2 + $0xdd] sm:$0xff]
      %v4237 = vld [vmem:[#allocation2 + $0xe5] sm:$0xff]
      %v4238 = vld [vmem:[#allocation2 + $0xed] sm:$0xff]
      %v4239 = vld [vmem:[#allocation2 + $0xf5] sm:$0xff]
      %v4240 = vld [vmem:[#allocation2 + $0xfd] sm:$0xff]
      %v4241 = vld [vmem:[#allocation2 + $0x105] sm:$0xff]
      %v4242 = vld [vmem:[#allocation2 + $0x10d] sm:$0xff]
      %v4243 = vld [vmem:[#allocation2 + $0x115] sm:$0xff]
      %v4244 = vld [vmem:[#allocation2 + $0x11d] sm:$0xff]
      %v4245 = vld [vmem:[#allocation2 + $0x125] sm:$0xff]
      %v4246 = vld [vmem:[#allocation2 + $0x12d] sm:$0xff]
      %v4247 = vld [vmem:[#allocation2 + $0x135] sm:$0xff]
      %v4248 = vld [vmem:[#allocation2 + $0x13d] sm:$0xff]
      %v4249 = vld [vmem:[#allocation2 + $0x145] sm:$0xff]
      %v4250 = vpack.c.bf16 %v4210, %v4209
      %v4251 = vpack.c.bf16 %v4212, %v4211
      %v4252 = vpack.c.bf16 %v4214, %v4213
      %v4253 = vpack.c.bf16 %v4216, %v4215
      %v4254 = vpack.c.bf16 %v4218, %v4217
      %v4255 = vpack.c.bf16 %v4220, %v4219
      %v4256 = vpack.c.bf16 %v4222, %v4221
      %v4257 = vpack.c.bf16 %v4224, %v4223
      %v4258 = vpack.c.bf16 %v4226, %v4225
      %v4259 = vpack.c.bf16 %v4228, %v4227
      %v4260 = vpack.c.bf16 %v4230, %v4229
      %v4261 = vpack.c.bf16 %v4232, %v4231
      %v4262 = vpack.c.bf16 %v4234, %v4233
      %v4263 = vpack.c.bf16 %v4236, %v4235
      %v4264 = vpack.c.bf16 %v4238, %v4237
      %v4265 = vpack.c.bf16 %v4240, %v4239
      %v4266 = vpack.c.bf16 %v4242, %v4241
      %v4267 = vpack.c.bf16 %v4244, %v4243
      %v4268 = vpack.c.bf16 %v4246, %v4245
      %v4269 = vpack.c.bf16 %v4248, %v4247
      %v4270 = vpack.c.bf16 %v4249, %v4249
      %v4271 = vld [vmem:[%s3] sm:$0xf]
      %v4272 = vld [vmem:[%s3 + $0x4] sm:$0xf]
      %v4273 = vld [vmem:[%s3 + $0x8] sm:$0xf]
      %v4274 = vld [vmem:[#allocation2 + $0x6] sm:$0xff]
      %v4275 = vld [vmem:[#allocation2 + $0xe] sm:$0xff]
      %v4276 = vld [vmem:[#allocation2 + $0x16] sm:$0xff]
      %v4277 = vld [vmem:[#allocation2 + $0x1e] sm:$0xff]
      %v4278 = vld [vmem:[#allocation2 + $0x26] sm:$0xff]
      %v4279 = vld [vmem:[#allocation2 + $0x2e] sm:$0xff]
      %v4280 = vld [vmem:[#allocation2 + $0x36] sm:$0xff]
      %v4281 = vld [vmem:[#allocation2 + $0x3e] sm:$0xff]
      %v4282 = vld [vmem:[#allocation2 + $0x46] sm:$0xff]
      %v4283 = vld [vmem:[#allocation2 + $0x4e] sm:$0xff]
      %v4284 = vld [vmem:[#allocation2 + $0x56] sm:$0xff]
      %v4285 = vld [vmem:[#allocation2 + $0x5e] sm:$0xff]
      %v4286 = vld [vmem:[#allocation2 + $0x66] sm:$0xff]
      %v4287 = vld [vmem:[#allocation2 + $0x6e] sm:$0xff]
      %v4288 = vld [vmem:[#allocation2 + $0x76] sm:$0xff]
      %v4289 = vld [vmem:[#allocation2 + $0x7e] sm:$0xff]
      %v4290 = vld [vmem:[#allocation2 + $0x86] sm:$0xff]
      %v4291 = vld [vmem:[#allocation2 + $0x8e] sm:$0xff]
      %v4292 = vld [vmem:[#allocation2 + $0x96] sm:$0xff]
      %v4293 = vld [vmem:[#allocation2 + $0x9e] sm:$0xff]
      %v4294 = vld [vmem:[#allocation2 + $0xa6] sm:$0xff]
      %v4295 = vld [vmem:[#allocation2 + $0xae] sm:$0xff]
      %v4296 = vld [vmem:[#allocation2 + $0xb6] sm:$0xff]
      %v4297 = vld [vmem:[#allocation2 + $0xbe] sm:$0xff]
      %v4298 = vld [vmem:[#allocation2 + $0xc6] sm:$0xff]
      %v4299 = vld [vmem:[#allocation2 + $0xce] sm:$0xff]
      %v4300 = vld [vmem:[#allocation2 + $0xd6] sm:$0xff]
      %v4301 = vld [vmem:[#allocation2 + $0xde] sm:$0xff]
      %v4302 = vld [vmem:[#allocation2 + $0xe6] sm:$0xff]
      %v4303 = vld [vmem:[#allocation2 + $0xee] sm:$0xff]
      %v4304 = vld [vmem:[#allocation2 + $0xf6] sm:$0xff]
      %v4305 = vld [vmem:[#allocation2 + $0xfe] sm:$0xff]
      %v4306 = vld [vmem:[#allocation2 + $0x106] sm:$0xff]
      %v4307 = vld [vmem:[#allocation2 + $0x10e] sm:$0xff]
      %v4308 = vld [vmem:[#allocation2 + $0x116] sm:$0xff]
      %v4309 = vld [vmem:[#allocation2 + $0x11e] sm:$0xff]
      %v4310 = vld [vmem:[#allocation2 + $0x126] sm:$0xff]
      %v4311 = vld [vmem:[#allocation2 + $0x12e] sm:$0xff]
      %v4312 = vld [vmem:[#allocation2 + $0x136] sm:$0xff]
      %v4313 = vld [vmem:[#allocation2 + $0x13e] sm:$0xff]
      %v4314 = vld [vmem:[#allocation2 + $0x146] sm:$0xff]
      %v4315 = vpack.c.bf16 %v4275, %v4274
      %v4316 = vpack.c.bf16 %v4277, %v4276
      %v4317 = vpack.c.bf16 %v4279, %v4278
      %v4318 = vpack.c.bf16 %v4281, %v4280
      %v4319 = vpack.c.bf16 %v4283, %v4282
      %v4320 = vpack.c.bf16 %v4285, %v4284
      %v4321 = vpack.c.bf16 %v4287, %v4286
      %v4322 = vpack.c.bf16 %v4289, %v4288
      %v4323 = vpack.c.bf16 %v4291, %v4290
      %v4324 = vpack.c.bf16 %v4293, %v4292
      %v4325 = vpack.c.bf16 %v4295, %v4294
      %v4326 = vpack.c.bf16 %v4297, %v4296
      %v4327 = vpack.c.bf16 %v4299, %v4298
      %v4328 = vpack.c.bf16 %v4301, %v4300
      %v4329 = vpack.c.bf16 %v4303, %v4302
      %v4330 = vpack.c.bf16 %v4305, %v4304
      %v4331 = vpack.c.bf16 %v4307, %v4306
      %v4332 = vpack.c.bf16 %v4309, %v4308
      %v4333 = vpack.c.bf16 %v4311, %v4310
      %v4334 = vpack.c.bf16 %v4313, %v4312
      %v4335 = vpack.c.bf16 %v4314, %v4314
      %s4336 = scalar_lea.vmem %s3, 12
      %v4337 = vld [vmem:[%s4336] sm:$0xf]
      %v4338 = vld [vmem:[%s4336 + $0x4] sm:$0xf]
      %v4339 = vld [vmem:[%s4336 + $0x8] sm:$0xf]
      %v4343 = vunpack.c.l.b16 %v4337
      %v4344 = vunpack.c.l.b16 %v4338
      %v4345 = vunpack.c.l.b16 %v4339
      %v4346 = vpack.c.b16 %v4344, %v4343
      %v4347 = vpack.c.b16 %v4345, %v4345
      %vm4349 = vcmask 195584
      %v4351 = vsel %vm4349, %v4315, 0
      %v4354 = vsel %vm4349, %v4316, 0
      %v4357 = vsel %vm4349, %v4317, 0
      %v4360 = vsel %vm4349, %v4318, 0
      %v4363 = vsel %vm4349, %v4319, 0
      %v4366 = vsel %vm4349, %v4320, 0
      %v4369 = vsel %vm4349, %v4321, 0
      %v4372 = vsel %vm4349, %v4322, 0
      %v4375 = vsel %vm4349, %v4323, 0
      %v4378 = vsel %vm4349, %v4324, 0
      %v4381 = vsel %vm4349, %v4325, 0
      %v4384 = vsel %vm4349, %v4326, 0
      %v4387 = vsel %vm4349, %v4327, 0
      %v4390 = vsel %vm4349, %v4328, 0
      %v4393 = vsel %vm4349, %v4329, 0
      %v4396 = vsel %vm4349, %v4330, 0
      %v4399 = vsel %vm4349, %v4331, 0
      %v4402 = vsel %vm4349, %v4332, 0
      %v4405 = vsel %vm4349, %v4333, 0
      %v4408 = vsel %vm4349, %v4334, 0
      %v4411 = vsel %vm4349, %v4335, 0
      %vm4413 = vcmask 1043456
      %v4415 = vsel %vm4413, %v4347, 0
      %4417 = vmatprep.subr.bf16.mxu0 0
      %4418 = vmatpush1.bf16.msra.mxu0 0
      %4419 = vmatprep.subr.bf16.mxu0 0
      %4420 = vmatpush1.bf16.msra.mxu0 0
      %4421 = vmatprep.subr.bf16.mxu0 0
      %4422 = vmatpush1.bf16.msra.mxu0 0
      %4423 = vmatprep.subr.bf16.mxu0 0
      %4424 = vmatpush1.bf16.msra.mxu0 0
      %4425 = vmatprep.subr.bf16.mxu0 0
      %4426 = vmatpush1.bf16.msra.mxu0 0
      %4427 = vmatprep.subr.bf16.mxu0 0
      %4428 = vmatpush1.bf16.msra.mxu0 0
      %4429 = vmatprep.subr.bf16.mxu0 0
      %4430 = vmatpush1.bf16.msra.mxu0 %v4415
      %4431 = vmatprep.subr.bf16.mxu0 0
      %4432 = vmatpush1.bf16.msra.mxu0 %v4346
      %4433 = vmatprep.subr.bf16.mxu0 0
      %4434 = vmatpush2.bf16.msra.mxu0 0
      %4435 = vmatprep.subr.bf16.mxu0 0
      %4436 = vmatpush2.bf16.msra.mxu0 0
      %4437 = vmatprep.subr.bf16.mxu0 0
      %4438 = vmatpush2.bf16.msra.mxu0 0
      %4439 = vmatprep.subr.bf16.mxu0 0
      %4440 = vmatpush2.bf16.msra.mxu0 0
      %4441 = vmatprep.subr.bf16.mxu0 0
      %4442 = vmatpush2.bf16.msra.mxu0 0
      %4443 = vmatprep.subr.bf16.mxu0 0
      %4444 = vmatpush2.bf16.msra.mxu0 0
      %4445 = vmatprep.subr.bf16.mxu0 0
      %4446 = vmatpush2.bf16.msra.mxu0 0
      %4447 = vmatprep.subr.bf16.mxu0 0
      %4448 = vmatpush2.bf16.msra.mxu0 0
      %4449 = vmatprep.mubr.bf16.mxu0 0
      %4450 = vmatmul.mubr.bf16.gmra.mxu0 %v4351
      %v4451 = vpop.f32.mrf.mxu0
      %v4452 = vadd.f32 0.0, %v4451
      %v4453 = vpop.f32.mrf.mxu0
      %v4454 = vpop.f32.mrf.mxu0
      %v4455 = vadd.f32 0.0, %v4454
      %v4456 = vpop.f32.mrf.mxu0
      %4457 = vmatprep.mubr.bf16.mxu0 0
      %4458 = vmatmul.mubr.bf16.gmra.mxu0 %v4354
      %v4459 = vpop.f32.mrf.mxu0
      %v4460 = vadd.f32 0.0, %v4459
      %v4461 = vpop.f32.mrf.mxu0
      %v4462 = vpop.f32.mrf.mxu0
      %v4463 = vadd.f32 0.0, %v4462
      %v4464 = vpop.f32.mrf.mxu0
      %4465 = vmatprep.mubr.bf16.mxu0 0
      %4466 = vmatmul.mubr.bf16.gmra.mxu0 %v4357
      %v4467 = vpop.f32.mrf.mxu0
      %v4468 = vadd.f32 0.0, %v4467
      %v4469 = vpop.f32.mrf.mxu0
      %v4470 = vpop.f32.mrf.mxu0
      %v4471 = vadd.f32 0.0, %v4470
      %v4472 = vpop.f32.mrf.mxu0
      %4473 = vmatprep.mubr.bf16.mxu0 0
      %4474 = vmatmul.mubr.bf16.gmra.mxu0 %v4360
      %v4475 = vpop.f32.mrf.mxu0
      %v4476 = vadd.f32 0.0, %v4475
      %v4477 = vpop.f32.mrf.mxu0
      %v4478 = vpop.f32.mrf.mxu0
      %v4479 = vadd.f32 0.0, %v4478
      %v4480 = vpop.f32.mrf.mxu0
      %4481 = vmatprep.mubr.bf16.mxu0 0
      %4482 = vmatmul.mubr.bf16.gmra.mxu0 %v4363
      %v4483 = vpop.f32.mrf.mxu0
      %v4484 = vadd.f32 0.0, %v4483
      %v4485 = vpop.f32.mrf.mxu0
      %v4486 = vpop.f32.mrf.mxu0
      %v4487 = vadd.f32 0.0, %v4486
      %v4488 = vpop.f32.mrf.mxu0
      %4489 = vmatprep.mubr.bf16.mxu0 0
      %4490 = vmatmul.mubr.bf16.gmra.mxu0 %v4366
      %v4491 = vpop.f32.mrf.mxu0
      %v4492 = vadd.f32 0.0, %v4491
      %v4493 = vpop.f32.mrf.mxu0
      %v4494 = vpop.f32.mrf.mxu0
      %v4495 = vadd.f32 0.0, %v4494
      %v4496 = vpop.f32.mrf.mxu0
      %4497 = vmatprep.mubr.bf16.mxu0 0
      %4498 = vmatmul.mubr.bf16.gmra.mxu0 %v4369
      %v4499 = vpop.f32.mrf.mxu0
      %v4500 = vadd.f32 0.0, %v4499
      %v4501 = vpop.f32.mrf.mxu0
      %v4502 = vpop.f32.mrf.mxu0
      %v4503 = vadd.f32 0.0, %v4502
      %v4504 = vpop.f32.mrf.mxu0
      %4505 = vmatprep.mubr.bf16.mxu0 0
      %4506 = vmatmul.mubr.bf16.gmra.mxu0 %v4372
      %v4507 = vpop.f32.mrf.mxu0
      %v4508 = vadd.f32 0.0, %v4507
      %v4509 = vpop.f32.mrf.mxu0
      %v4510 = vpop.f32.mrf.mxu0
      %v4511 = vadd.f32 0.0, %v4510
      %v4512 = vpop.f32.mrf.mxu0
      %4513 = vmatprep.mubr.bf16.mxu0 0
      %4514 = vmatmul.mubr.bf16.gmra.mxu0 %v4375
      %v4515 = vpop.f32.mrf.mxu0
      %v4516 = vadd.f32 0.0, %v4515
      %v4517 = vpop.f32.mrf.mxu0
      %v4518 = vpop.f32.mrf.mxu0
      %v4519 = vadd.f32 0.0, %v4518
      %v4520 = vpop.f32.mrf.mxu0
      %4521 = vmatprep.mubr.bf16.mxu0 0
      %4522 = vmatmul.mubr.bf16.gmra.mxu0 %v4378
      %v4523 = vpop.f32.mrf.mxu0
      %v4524 = vadd.f32 0.0, %v4523
      %v4525 = vpop.f32.mrf.mxu0
      %v4526 = vpop.f32.mrf.mxu0
      %v4527 = vadd.f32 0.0, %v4526
      %v4528 = vpop.f32.mrf.mxu0
      %4529 = vmatprep.mubr.bf16.mxu0 0
      %4530 = vmatmul.mubr.bf16.gmra.mxu0 %v4381
      %v4531 = vpop.f32.mrf.mxu0
      %v4532 = vadd.f32 0.0, %v4531
      %v4533 = vpop.f32.mrf.mxu0
      %v4534 = vpop.f32.mrf.mxu0
      %v4535 = vadd.f32 0.0, %v4534
      %v4536 = vpop.f32.mrf.mxu0
      %4537 = vmatprep.mubr.bf16.mxu0 0
      %4538 = vmatmul.mubr.bf16.gmra.mxu0 %v4384
      %v4539 = vpop.f32.mrf.mxu0
      %v4540 = vadd.f32 0.0, %v4539
      %v4541 = vpop.f32.mrf.mxu0
      %v4542 = vpop.f32.mrf.mxu0
      %v4543 = vadd.f32 0.0, %v4542
      %v4544 = vpop.f32.mrf.mxu0
      %4545 = vmatprep.mubr.bf16.mxu0 0
      %4546 = vmatmul.mubr.bf16.gmra.mxu0 %v4387
      %v4547 = vpop.f32.mrf.mxu0
      %v4548 = vadd.f32 0.0, %v4547
      %v4549 = vpop.f32.mrf.mxu0
      %v4550 = vpop.f32.mrf.mxu0
      %v4551 = vadd.f32 0.0, %v4550
      %v4552 = vpop.f32.mrf.mxu0
      %4553 = vmatprep.mubr.bf16.mxu0 0
      %4554 = vmatmul.mubr.bf16.gmra.mxu0 %v4390
      %v4555 = vpop.f32.mrf.mxu0
      %v4556 = vadd.f32 0.0, %v4555
      %v4557 = vpop.f32.mrf.mxu0
      %v4558 = vpop.f32.mrf.mxu0
      %v4559 = vadd.f32 0.0, %v4558
      %v4560 = vpop.f32.mrf.mxu0
      %4561 = vmatprep.mubr.bf16.mxu0 0
      %4562 = vmatmul.mubr.bf16.gmra.mxu0 %v4393
      %v4563 = vpop.f32.mrf.mxu0
      %v4564 = vadd.f32 0.0, %v4563
      %v4565 = vpop.f32.mrf.mxu0
      %v4566 = vpop.f32.mrf.mxu0
      %v4567 = vadd.f32 0.0, %v4566
      %v4568 = vpop.f32.mrf.mxu0
      %4569 = vmatprep.mubr.bf16.mxu0 0
      %4570 = vmatmul.mubr.bf16.gmra.mxu0 %v4396
      %v4571 = vpop.f32.mrf.mxu0
      %v4572 = vadd.f32 0.0, %v4571
      %v4573 = vpop.f32.mrf.mxu0
      %v4574 = vpop.f32.mrf.mxu0
      %v4575 = vadd.f32 0.0, %v4574
      %v4576 = vpop.f32.mrf.mxu0
      %4577 = vmatprep.mubr.bf16.mxu0 0
      %4578 = vmatmul.mubr.bf16.gmra.mxu0 %v4399
      %v4579 = vpop.f32.mrf.mxu0
      %v4580 = vadd.f32 0.0, %v4579
      %v4581 = vpop.f32.mrf.mxu0
      %v4582 = vpop.f32.mrf.mxu0
      %v4583 = vadd.f32 0.0, %v4582
      %v4584 = vpop.f32.mrf.mxu0
      %4585 = vmatprep.mubr.bf16.mxu0 0
      %4586 = vmatmul.mubr.bf16.gmra.mxu0 %v4402
      %v4587 = vpop.f32.mrf.mxu0
      %v4588 = vadd.f32 0.0, %v4587
      %v4589 = vpop.f32.mrf.mxu0
      %v4590 = vpop.f32.mrf.mxu0
      %v4591 = vadd.f32 0.0, %v4590
      %v4592 = vpop.f32.mrf.mxu0
      %4593 = vmatprep.mubr.bf16.mxu0 0
      %4594 = vmatmul.mubr.bf16.gmra.mxu0 %v4405
      %v4595 = vpop.f32.mrf.mxu0
      %v4596 = vadd.f32 0.0, %v4595
      %v4597 = vpop.f32.mrf.mxu0
      %v4598 = vpop.f32.mrf.mxu0
      %v4599 = vadd.f32 0.0, %v4598
      %v4600 = vpop.f32.mrf.mxu0
      %4601 = vmatprep.mubr.bf16.mxu0 0
      %4602 = vmatmul.mubr.bf16.gmra.mxu0 %v4408
      %v4603 = vpop.f32.mrf.mxu0
      %v4604 = vadd.f32 0.0, %v4603
      %v4605 = vpop.f32.mrf.mxu0
      %v4606 = vpop.f32.mrf.mxu0
      %v4607 = vadd.f32 0.0, %v4606
      %v4608 = vpop.f32.mrf.mxu0
      %4609 = vmatprep.mubr.bf16.mxu0 0
      %4610 = vmatmul.mubr.bf16.gmra.mxu0 %v4411
      %v4611 = vpop.f32.mrf.mxu0
      %v4612 = vadd.f32 0.0, %v4611
      %v4613 = vpop.f32.mrf.mxu0
      %v4614 = vpop.f32.mrf.mxu0
      %v4615 = vpop.f32.mrf.mxu0
      %4616 = vdwg.mxu0
      %v4620 = vunpack.c.l.b16 %v4271
      %v4621 = vunpack.c.l.b16 %v4272
      %v4622 = vunpack.c.l.b16 %v4273
      %v4623 = vpack.c.b16 %v4621, %v4620
      %v4624 = vpack.c.b16 %v4622, %v4622
      %v4627 = vsel %vm4349, %v4250, 0
      %v4630 = vsel %vm4349, %v4251, 0
      %v4633 = vsel %vm4349, %v4252, 0
      %v4636 = vsel %vm4349, %v4253, 0
      %v4639 = vsel %vm4349, %v4254, 0
      %v4642 = vsel %vm4349, %v4255, 0
      %v4645 = vsel %vm4349, %v4256, 0
      %v4648 = vsel %vm4349, %v4257, 0
      %v4651 = vsel %vm4349, %v4258, 0
      %v4654 = vsel %vm4349, %v4259, 0
      %v4657 = vsel %vm4349, %v4260, 0
      %v4660 = vsel %vm4349, %v4261, 0
      %v4663 = vsel %vm4349, %v4262, 0
      %v4666 = vsel %vm4349, %v4263, 0
      %v4669 = vsel %vm4349, %v4264, 0
      %v4672 = vsel %vm4349, %v4265, 0
      %v4675 = vsel %vm4349, %v4266, 0
      %v4678 = vsel %vm4349, %v4267, 0
      %v4681 = vsel %vm4349, %v4268, 0
      %v4684 = vsel %vm4349, %v4269, 0
      %v4687 = vsel %vm4349, %v4270, 0
      %v4690 = vsel %vm4413, %v4624, 0
      %4692 = vmatprep.subr.bf16.mxu0 0
      %4693 = vmatpush1.bf16.msra.mxu0 0
      %4694 = vmatprep.subr.bf16.mxu0 0
      %4695 = vmatpush1.bf16.msra.mxu0 0
      %4696 = vmatprep.subr.bf16.mxu0 0
      %4697 = vmatpush1.bf16.msra.mxu0 0
      %4698 = vmatprep.subr.bf16.mxu0 0
      %4699 = vmatpush1.bf16.msra.mxu0 0
      %4700 = vmatprep.subr.bf16.mxu0 0
      %4701 = vmatpush1.bf16.msra.mxu0 0
      %4702 = vmatprep.subr.bf16.mxu0 0
      %4703 = vmatpush1.bf16.msra.mxu0 0
      %4704 = vmatprep.subr.bf16.mxu0 0
      %4705 = vmatpush1.bf16.msra.mxu0 %v4690
      %4706 = vmatprep.subr.bf16.mxu0 0
      %4707 = vmatpush1.bf16.msra.mxu0 %v4623
      %4708 = vmatprep.subr.bf16.mxu0 0
      %4709 = vmatpush2.bf16.msra.mxu0 0
      %4710 = vmatprep.subr.bf16.mxu0 0
      %4711 = vmatpush2.bf16.msra.mxu0 0
      %4712 = vmatprep.subr.bf16.mxu0 0
      %4713 = vmatpush2.bf16.msra.mxu0 0
      %4714 = vmatprep.subr.bf16.mxu0 0
      %4715 = vmatpush2.bf16.msra.mxu0 0
      %4716 = vmatprep.subr.bf16.mxu0 0
      %4717 = vmatpush2.bf16.msra.mxu0 0
      %4718 = vmatprep.subr.bf16.mxu0 0
      %4719 = vmatpush2.bf16.msra.mxu0 0
      %4720 = vmatprep.subr.bf16.mxu0 0
      %4721 = vmatpush2.bf16.msra.mxu0 0
      %4722 = vmatprep.subr.bf16.mxu0 0
      %4723 = vmatpush2.bf16.msra.mxu0 0
      %4724 = vmatprep.mubr.bf16.mxu0 0
      %4725 = vmatmul.mubr.bf16.gmra.mxu0 %v4627
      %v4726 = vpop.f32.mrf.mxu0
      %v4727 = vadd.f32 %v4452, %v4726
      %v4728 = vpop.f32.mrf.mxu0
      %v4729 = vpop.f32.mrf.mxu0
      %v4730 = vadd.f32 %v4455, %v4729
      %v4731 = vpop.f32.mrf.mxu0
      %4732 = vmatprep.mubr.bf16.mxu0 0
      %4733 = vmatmul.mubr.bf16.gmra.mxu0 %v4630
      %v4734 = vpop.f32.mrf.mxu0
      %v4735 = vadd.f32 %v4460, %v4734
      %v4736 = vpop.f32.mrf.mxu0
      %v4737 = vpop.f32.mrf.mxu0
      %v4738 = vadd.f32 %v4463, %v4737
      %v4739 = vpop.f32.mrf.mxu0
      %4740 = vmatprep.mubr.bf16.mxu0 0
      %4741 = vmatmul.mubr.bf16.gmra.mxu0 %v4633
      %v4742 = vpop.f32.mrf.mxu0
      %v4743 = vadd.f32 %v4468, %v4742
      %v4744 = vpop.f32.mrf.mxu0
      %v4745 = vpop.f32.mrf.mxu0
      %v4746 = vadd.f32 %v4471, %v4745
      %v4747 = vpop.f32.mrf.mxu0
      %4748 = vmatprep.mubr.bf16.mxu0 0
      %4749 = vmatmul.mubr.bf16.gmra.mxu0 %v4636
      %v4750 = vpop.f32.mrf.mxu0
      %v4751 = vadd.f32 %v4476, %v4750
      %v4752 = vpop.f32.mrf.mxu0
      %v4753 = vpop.f32.mrf.mxu0
      %v4754 = vadd.f32 %v4479, %v4753
      %v4755 = vpop.f32.mrf.mxu0
      %4756 = vmatprep.mubr.bf16.mxu0 0
      %4757 = vmatmul.mubr.bf16.gmra.mxu0 %v4639
      %v4758 = vpop.f32.mrf.mxu0
      %v4759 = vadd.f32 %v4484, %v4758
      %v4760 = vpop.f32.mrf.mxu0
      %v4761 = vpop.f32.mrf.mxu0
      %v4762 = vadd.f32 %v4487, %v4761
      %v4763 = vpop.f32.mrf.mxu0
      %4764 = vmatprep.mubr.bf16.mxu0 0
      %4765 = vmatmul.mubr.bf16.gmra.mxu0 %v4642
      %v4766 = vpop.f32.mrf.mxu0
      %v4767 = vadd.f32 %v4492, %v4766
      %v4768 = vpop.f32.mrf.mxu0
      %v4769 = vpop.f32.mrf.mxu0
      %v4770 = vadd.f32 %v4495, %v4769
      %v4771 = vpop.f32.mrf.mxu0
      %4772 = vmatprep.mubr.bf16.mxu0 0
      %4773 = vmatmul.mubr.bf16.gmra.mxu0 %v4645
      %v4774 = vpop.f32.mrf.mxu0
      %v4775 = vadd.f32 %v4500, %v4774
      %v4776 = vpop.f32.mrf.mxu0
      %v4777 = vpop.f32.mrf.mxu0
      %v4778 = vadd.f32 %v4503, %v4777
      %v4779 = vpop.f32.mrf.mxu0
      %4780 = vmatprep.mubr.bf16.mxu0 0
      %4781 = vmatmul.mubr.bf16.gmra.mxu0 %v4648
      %v4782 = vpop.f32.mrf.mxu0
      %v4783 = vadd.f32 %v4508, %v4782
      %v4784 = vpop.f32.mrf.mxu0
      %v4785 = vpop.f32.mrf.mxu0
      %v4786 = vadd.f32 %v4511, %v4785
      %v4787 = vpop.f32.mrf.mxu0
      %4788 = vmatprep.mubr.bf16.mxu0 0
      %4789 = vmatmul.mubr.bf16.gmra.mxu0 %v4651
      %v4790 = vpop.f32.mrf.mxu0
      %v4791 = vadd.f32 %v4516, %v4790
      %v4792 = vpop.f32.mrf.mxu0
      %v4793 = vpop.f32.mrf.mxu0
      %v4794 = vadd.f32 %v4519, %v4793
      %v4795 = vpop.f32.mrf.mxu0
      %4796 = vmatprep.mubr.bf16.mxu0 0
      %4797 = vmatmul.mubr.bf16.gmra.mxu0 %v4654
      %v4798 = vpop.f32.mrf.mxu0
      %v4799 = vadd.f32 %v4524, %v4798
      %v4800 = vpop.f32.mrf.mxu0
      %v4801 = vpop.f32.mrf.mxu0
      %v4802 = vadd.f32 %v4527, %v4801
      %v4803 = vpop.f32.mrf.mxu0
      %4804 = vmatprep.mubr.bf16.mxu0 0
      %4805 = vmatmul.mubr.bf16.gmra.mxu0 %v4657
      %v4806 = vpop.f32.mrf.mxu0
      %v4807 = vadd.f32 %v4532, %v4806
      %v4808 = vpop.f32.mrf.mxu0
      %v4809 = vpop.f32.mrf.mxu0
      %v4810 = vadd.f32 %v4535, %v4809
      %v4811 = vpop.f32.mrf.mxu0
      %4812 = vmatprep.mubr.bf16.mxu0 0
      %4813 = vmatmul.mubr.bf16.gmra.mxu0 %v4660
      %v4814 = vpop.f32.mrf.mxu0
      %v4815 = vadd.f32 %v4540, %v4814
      %v4816 = vpop.f32.mrf.mxu0
      %v4817 = vpop.f32.mrf.mxu0
      %v4818 = vadd.f32 %v4543, %v4817
      %v4819 = vpop.f32.mrf.mxu0
      %4820 = vmatprep.mubr.bf16.mxu0 0
      %4821 = vmatmul.mubr.bf16.gmra.mxu0 %v4663
      %v4822 = vpop.f32.mrf.mxu0
      %v4823 = vadd.f32 %v4548, %v4822
      %v4824 = vpop.f32.mrf.mxu0
      %v4825 = vpop.f32.mrf.mxu0
      %v4826 = vadd.f32 %v4551, %v4825
      %v4827 = vpop.f32.mrf.mxu0
      %4828 = vmatprep.mubr.bf16.mxu0 0
      %4829 = vmatmul.mubr.bf16.gmra.mxu0 %v4666
      %v4830 = vpop.f32.mrf.mxu0
      %v4831 = vadd.f32 %v4556, %v4830
      %v4832 = vpop.f32.mrf.mxu0
      %v4833 = vpop.f32.mrf.mxu0
      %v4834 = vadd.f32 %v4559, %v4833
      %v4835 = vpop.f32.mrf.mxu0
      %4836 = vmatprep.mubr.bf16.mxu0 0
      %4837 = vmatmul.mubr.bf16.gmra.mxu0 %v4669
      %v4838 = vpop.f32.mrf.mxu0
      %v4839 = vadd.f32 %v4564, %v4838
      %v4840 = vpop.f32.mrf.mxu0
      %v4841 = vpop.f32.mrf.mxu0
      %v4842 = vadd.f32 %v4567, %v4841
      %v4843 = vpop.f32.mrf.mxu0
      %4844 = vmatprep.mubr.bf16.mxu0 0
      %4845 = vmatmul.mubr.bf16.gmra.mxu0 %v4672
      %v4846 = vpop.f32.mrf.mxu0
      %v4847 = vadd.f32 %v4572, %v4846
      %v4848 = vpop.f32.mrf.mxu0
      %v4849 = vpop.f32.mrf.mxu0
      %v4850 = vadd.f32 %v4575, %v4849
      %v4851 = vpop.f32.mrf.mxu0
      %4852 = vmatprep.mubr.bf16.mxu0 0
      %4853 = vmatmul.mubr.bf16.gmra.mxu0 %v4675
      %v4854 = vpop.f32.mrf.mxu0
      %v4855 = vadd.f32 %v4580, %v4854
      %v4856 = vpop.f32.mrf.mxu0
      %v4857 = vpop.f32.mrf.mxu0
      %v4858 = vadd.f32 %v4583, %v4857
      %v4859 = vpop.f32.mrf.mxu0
      %4860 = vmatprep.mubr.bf16.mxu0 0
      %4861 = vmatmul.mubr.bf16.gmra.mxu0 %v4678
      %v4862 = vpop.f32.mrf.mxu0
      %v4863 = vadd.f32 %v4588, %v4862
      %v4864 = vpop.f32.mrf.mxu0
      %v4865 = vpop.f32.mrf.mxu0
      %v4866 = vadd.f32 %v4591, %v4865
      %v4867 = vpop.f32.mrf.mxu0
      %4868 = vmatprep.mubr.bf16.mxu0 0
      %4869 = vmatmul.mubr.bf16.gmra.mxu0 %v4681
      %v4870 = vpop.f32.mrf.mxu0
      %v4871 = vadd.f32 %v4596, %v4870
      %v4872 = vpop.f32.mrf.mxu0
      %v4873 = vpop.f32.mrf.mxu0
      %v4874 = vadd.f32 %v4599, %v4873
      %v4875 = vpop.f32.mrf.mxu0
      %4876 = vmatprep.mubr.bf16.mxu0 0
      %4877 = vmatmul.mubr.bf16.gmra.mxu0 %v4684
      %v4878 = vpop.f32.mrf.mxu0
      %v4879 = vadd.f32 %v4604, %v4878
      %v4880 = vpop.f32.mrf.mxu0
      %v4881 = vpop.f32.mrf.mxu0
      %v4882 = vadd.f32 %v4607, %v4881
      %v4883 = vpop.f32.mrf.mxu0
      %4884 = vmatprep.mubr.bf16.mxu0 0
      %4885 = vmatmul.mubr.bf16.gmra.mxu0 %v4687
      %v4886 = vpop.f32.mrf.mxu0
      %v4887 = vadd.f32 %v4612, %v4886
      %v4888 = vpop.f32.mrf.mxu0
      %v4889 = vpop.f32.mrf.mxu0
      %v4890 = vpop.f32.mrf.mxu0
      %4891 = vdwg.mxu0
      %v4892 = vld [vmem:[#allocation2 + $0x7] sm:$0xff]
      %v4893 = vld [vmem:[#allocation2 + $0xf] sm:$0xff]
      %v4894 = vld [vmem:[#allocation2 + $0x17] sm:$0xff]
      %v4895 = vld [vmem:[#allocation2 + $0x1f] sm:$0xff]
      %v4896 = vld [vmem:[#allocation2 + $0x27] sm:$0xff]
      %v4897 = vld [vmem:[#allocation2 + $0x2f] sm:$0xff]
      %v4898 = vld [vmem:[#allocation2 + $0x37] sm:$0xff]
      %v4899 = vld [vmem:[#allocation2 + $0x3f] sm:$0xff]
      %v4900 = vld [vmem:[#allocation2 + $0x47] sm:$0xff]
      %v4901 = vld [vmem:[#allocation2 + $0x4f] sm:$0xff]
      %v4902 = vld [vmem:[#allocation2 + $0x57] sm:$0xff]
      %v4903 = vld [vmem:[#allocation2 + $0x5f] sm:$0xff]
      %v4904 = vld [vmem:[#allocation2 + $0x67] sm:$0xff]
      %v4905 = vld [vmem:[#allocation2 + $0x6f] sm:$0xff]
      %v4906 = vld [vmem:[#allocation2 + $0x77] sm:$0xff]
      %v4907 = vld [vmem:[#allocation2 + $0x7f] sm:$0xff]
      %v4908 = vld [vmem:[#allocation2 + $0x87] sm:$0xff]
      %v4909 = vld [vmem:[#allocation2 + $0x8f] sm:$0xff]
      %v4910 = vld [vmem:[#allocation2 + $0x97] sm:$0xff]
      %v4911 = vld [vmem:[#allocation2 + $0x9f] sm:$0xff]
      %v4912 = vld [vmem:[#allocation2 + $0xa7] sm:$0xff]
      %v4913 = vld [vmem:[#allocation2 + $0xaf] sm:$0xff]
      %v4914 = vld [vmem:[#allocation2 + $0xb7] sm:$0xff]
      %v4915 = vld [vmem:[#allocation2 + $0xbf] sm:$0xff]
      %v4916 = vld [vmem:[#allocation2 + $0xc7] sm:$0xff]
      %v4917 = vld [vmem:[#allocation2 + $0xcf] sm:$0xff]
      %v4918 = vld [vmem:[#allocation2 + $0xd7] sm:$0xff]
      %v4919 = vld [vmem:[#allocation2 + $0xdf] sm:$0xff]
      %v4920 = vld [vmem:[#allocation2 + $0xe7] sm:$0xff]
      %v4921 = vld [vmem:[#allocation2 + $0xef] sm:$0xff]
      %v4922 = vld [vmem:[#allocation2 + $0xf7] sm:$0xff]
      %v4923 = vld [vmem:[#allocation2 + $0xff] sm:$0xff]
      %v4924 = vld [vmem:[#allocation2 + $0x107] sm:$0xff]
      %v4925 = vld [vmem:[#allocation2 + $0x10f] sm:$0xff]
      %v4926 = vld [vmem:[#allocation2 + $0x117] sm:$0xff]
      %v4927 = vld [vmem:[#allocation2 + $0x11f] sm:$0xff]
      %v4928 = vld [vmem:[#allocation2 + $0x127] sm:$0xff]
      %v4929 = vld [vmem:[#allocation2 + $0x12f] sm:$0xff]
      %v4930 = vld [vmem:[#allocation2 + $0x137] sm:$0xff]
      %v4931 = vld [vmem:[#allocation2 + $0x13f] sm:$0xff]
      %v4932 = vld [vmem:[#allocation2 + $0x147] sm:$0xff]
      %v4933 = vpack.c.bf16 %v4893, %v4892
      %v4934 = vpack.c.bf16 %v4895, %v4894
      %v4935 = vpack.c.bf16 %v4897, %v4896
      %v4936 = vpack.c.bf16 %v4899, %v4898
      %v4937 = vpack.c.bf16 %v4901, %v4900
      %v4938 = vpack.c.bf16 %v4903, %v4902
      %v4939 = vpack.c.bf16 %v4905, %v4904
      %v4940 = vpack.c.bf16 %v4907, %v4906
      %v4941 = vpack.c.bf16 %v4909, %v4908
      %v4942 = vpack.c.bf16 %v4911, %v4910
      %v4943 = vpack.c.bf16 %v4913, %v4912
      %v4944 = vpack.c.bf16 %v4915, %v4914
      %v4945 = vpack.c.bf16 %v4917, %v4916
      %v4946 = vpack.c.bf16 %v4919, %v4918
      %v4947 = vpack.c.bf16 %v4921, %v4920
      %v4948 = vpack.c.bf16 %v4923, %v4922
      %v4949 = vpack.c.bf16 %v4925, %v4924
      %v4950 = vpack.c.bf16 %v4927, %v4926
      %v4951 = vpack.c.bf16 %v4929, %v4928
      %v4952 = vpack.c.bf16 %v4931, %v4930
      %v4953 = vpack.c.bf16 %v4932, %v4932
      %s4954 = scalar_lea.vmem %s3, 24
      %v4955 = vld [vmem:[%s4954] sm:$0xf]
      %v4956 = vld [vmem:[%s4954 + $0x4] sm:$0xf]
      %v4957 = vld [vmem:[%s4954 + $0x8] sm:$0xf]
      %v4961 = vunpack.c.l.b16 %v4955
      %v4962 = vunpack.c.l.b16 %v4956
      %v4963 = vunpack.c.l.b16 %v4957
      %v4964 = vpack.c.b16 %v4962, %v4961
      %v4965 = vpack.c.b16 %v4963, %v4963
      %v4968 = vsel %vm4349, %v4933, 0
      %v4971 = vsel %vm4349, %v4934, 0
      %v4974 = vsel %vm4349, %v4935, 0
      %v4977 = vsel %vm4349, %v4936, 0
      %v4980 = vsel %vm4349, %v4937, 0
      %v4983 = vsel %vm4349, %v4938, 0
      %v4986 = vsel %vm4349, %v4939, 0
      %v4989 = vsel %vm4349, %v4940, 0
      %v4992 = vsel %vm4349, %v4941, 0
      %v4995 = vsel %vm4349, %v4942, 0
      %v4998 = vsel %vm4349, %v4943, 0
      %v5001 = vsel %vm4349, %v4944, 0
      %v5004 = vsel %vm4349, %v4945, 0
      %v5007 = vsel %vm4349, %v4946, 0
      %v5010 = vsel %vm4349, %v4947, 0
      %v5013 = vsel %vm4349, %v4948, 0
      %v5016 = vsel %vm4349, %v4949, 0
      %v5019 = vsel %vm4349, %v4950, 0
      %v5022 = vsel %vm4349, %v4951, 0
      %v5025 = vsel %vm4349, %v4952, 0
      %v5028 = vsel %vm4349, %v4953, 0
      %v5031 = vsel %vm4413, %v4965, 0
      %5033 = vmatprep.subr.bf16.mxu0 0
      %5034 = vmatpush1.bf16.msra.mxu0 0
      %5035 = vmatprep.subr.bf16.mxu0 0
      %5036 = vmatpush1.bf16.msra.mxu0 0
      %5037 = vmatprep.subr.bf16.mxu0 0
      %5038 = vmatpush1.bf16.msra.mxu0 0
      %5039 = vmatprep.subr.bf16.mxu0 0
      %5040 = vmatpush1.bf16.msra.mxu0 0
      %5041 = vmatprep.subr.bf16.mxu0 0
      %5042 = vmatpush1.bf16.msra.mxu0 0
      %5043 = vmatprep.subr.bf16.mxu0 0
      %5044 = vmatpush1.bf16.msra.mxu0 0
      %5045 = vmatprep.subr.bf16.mxu0 0
      %5046 = vmatpush1.bf16.msra.mxu0 %v5031
      %5047 = vmatprep.subr.bf16.mxu0 0
      %5048 = vmatpush1.bf16.msra.mxu0 %v4964
      %5049 = vmatprep.subr.bf16.mxu0 0
      %5050 = vmatpush2.bf16.msra.mxu0 0
      %5051 = vmatprep.subr.bf16.mxu0 0
      %5052 = vmatpush2.bf16.msra.mxu0 0
      %5053 = vmatprep.subr.bf16.mxu0 0
      %5054 = vmatpush2.bf16.msra.mxu0 0
      %5055 = vmatprep.subr.bf16.mxu0 0
      %5056 = vmatpush2.bf16.msra.mxu0 0
      %5057 = vmatprep.subr.bf16.mxu0 0
      %5058 = vmatpush2.bf16.msra.mxu0 0
      %5059 = vmatprep.subr.bf16.mxu0 0
      %5060 = vmatpush2.bf16.msra.mxu0 0
      %5061 = vmatprep.subr.bf16.mxu0 0
      %5062 = vmatpush2.bf16.msra.mxu0 0
      %5063 = vmatprep.subr.bf16.mxu0 0
      %5064 = vmatpush2.bf16.msra.mxu0 0
      %5065 = vmatprep.mubr.bf16.mxu0 0
      %5066 = vmatmul.mubr.bf16.gmra.mxu0 %v4968
      %v5067 = vpop.f32.mrf.mxu0
      %v5068 = vadd.f32 0.0, %v5067
      %v5069 = vpop.f32.mrf.mxu0
      %v5070 = vpop.f32.mrf.mxu0
      %v5071 = vadd.f32 0.0, %v5070
      %v5072 = vpop.f32.mrf.mxu0
      %5073 = vmatprep.mubr.bf16.mxu0 0
      %5074 = vmatmul.mubr.bf16.gmra.mxu0 %v4971
      %v5075 = vpop.f32.mrf.mxu0
      %v5076 = vadd.f32 0.0, %v5075
      %v5077 = vpop.f32.mrf.mxu0
      %v5078 = vpop.f32.mrf.mxu0
      %v5079 = vadd.f32 0.0, %v5078
      %v5080 = vpop.f32.mrf.mxu0
      %5081 = vmatprep.mubr.bf16.mxu0 0
      %5082 = vmatmul.mubr.bf16.gmra.mxu0 %v4974
      %v5083 = vpop.f32.mrf.mxu0
      %v5084 = vadd.f32 0.0, %v5083
      %v5085 = vpop.f32.mrf.mxu0
      %v5086 = vpop.f32.mrf.mxu0
      %v5087 = vadd.f32 0.0, %v5086
      %v5088 = vpop.f32.mrf.mxu0
      %5089 = vmatprep.mubr.bf16.mxu0 0
      %5090 = vmatmul.mubr.bf16.gmra.mxu0 %v4977
      %v5091 = vpop.f32.mrf.mxu0
      %v5092 = vadd.f32 0.0, %v5091
      %v5093 = vpop.f32.mrf.mxu0
      %v5094 = vpop.f32.mrf.mxu0
      %v5095 = vadd.f32 0.0, %v5094
      %v5096 = vpop.f32.mrf.mxu0
      %5097 = vmatprep.mubr.bf16.mxu0 0
      %5098 = vmatmul.mubr.bf16.gmra.mxu0 %v4980
      %v5099 = vpop.f32.mrf.mxu0
      %v5100 = vadd.f32 0.0, %v5099
      %v5101 = vpop.f32.mrf.mxu0
      %v5102 = vpop.f32.mrf.mxu0
      %v5103 = vadd.f32 0.0, %v5102
      %v5104 = vpop.f32.mrf.mxu0
      %5105 = vmatprep.mubr.bf16.mxu0 0
      %5106 = vmatmul.mubr.bf16.gmra.mxu0 %v4983
      %v5107 = vpop.f32.mrf.mxu0
      %v5108 = vadd.f32 0.0, %v5107
      %v5109 = vpop.f32.mrf.mxu0
      %v5110 = vpop.f32.mrf.mxu0
      %v5111 = vadd.f32 0.0, %v5110
      %v5112 = vpop.f32.mrf.mxu0
      %5113 = vmatprep.mubr.bf16.mxu0 0
      %5114 = vmatmul.mubr.bf16.gmra.mxu0 %v4986
      %v5115 = vpop.f32.mrf.mxu0
      %v5116 = vadd.f32 0.0, %v5115
      %v5117 = vpop.f32.mrf.mxu0
      %v5118 = vpop.f32.mrf.mxu0
      %v5119 = vadd.f32 0.0, %v5118
      %v5120 = vpop.f32.mrf.mxu0
      %5121 = vmatprep.mubr.bf16.mxu0 0
      %5122 = vmatmul.mubr.bf16.gmra.mxu0 %v4989
      %v5123 = vpop.f32.mrf.mxu0
      %v5124 = vadd.f32 0.0, %v5123
      %v5125 = vpop.f32.mrf.mxu0
      %v5126 = vpop.f32.mrf.mxu0
      %v5127 = vadd.f32 0.0, %v5126
      %v5128 = vpop.f32.mrf.mxu0
      %5129 = vmatprep.mubr.bf16.mxu0 0
      %5130 = vmatmul.mubr.bf16.gmra.mxu0 %v4992
      %v5131 = vpop.f32.mrf.mxu0
      %v5132 = vadd.f32 0.0, %v5131
      %v5133 = vpop.f32.mrf.mxu0
      %v5134 = vpop.f32.mrf.mxu0
      %v5135 = vadd.f32 0.0, %v5134
      %v5136 = vpop.f32.mrf.mxu0
      %5137 = vmatprep.mubr.bf16.mxu0 0
      %5138 = vmatmul.mubr.bf16.gmra.mxu0 %v4995
      %v5139 = vpop.f32.mrf.mxu0
      %v5140 = vadd.f32 0.0, %v5139
      %v5141 = vpop.f32.mrf.mxu0
      %v5142 = vpop.f32.mrf.mxu0
      %v5143 = vadd.f32 0.0, %v5142
      %v5144 = vpop.f32.mrf.mxu0
      %5145 = vmatprep.mubr.bf16.mxu0 0
      %5146 = vmatmul.mubr.bf16.gmra.mxu0 %v4998
      %v5147 = vpop.f32.mrf.mxu0
      %v5148 = vadd.f32 0.0, %v5147
      %v5149 = vpop.f32.mrf.mxu0
      %v5150 = vpop.f32.mrf.mxu0
      %v5151 = vadd.f32 0.0, %v5150
      %v5152 = vpop.f32.mrf.mxu0
      %5153 = vmatprep.mubr.bf16.mxu0 0
      %5154 = vmatmul.mubr.bf16.gmra.mxu0 %v5001
      %v5155 = vpop.f32.mrf.mxu0
      %v5156 = vadd.f32 0.0, %v5155
      %v5157 = vpop.f32.mrf.mxu0
      %v5158 = vpop.f32.mrf.mxu0
      %v5159 = vadd.f32 0.0, %v5158
      %v5160 = vpop.f32.mrf.mxu0
      %5161 = vmatprep.mubr.bf16.mxu0 0
      %5162 = vmatmul.mubr.bf16.gmra.mxu0 %v5004
      %v5163 = vpop.f32.mrf.mxu0
      %v5164 = vadd.f32 0.0, %v5163
      %v5165 = vpop.f32.mrf.mxu0
      %v5166 = vpop.f32.mrf.mxu0
      %v5167 = vadd.f32 0.0, %v5166
      %v5168 = vpop.f32.mrf.mxu0
      %5169 = vmatprep.mubr.bf16.mxu0 0
      %5170 = vmatmul.mubr.bf16.gmra.mxu0 %v5007
      %v5171 = vpop.f32.mrf.mxu0
      %v5172 = vadd.f32 0.0, %v5171
      %v5173 = vpop.f32.mrf.mxu0
      %v5174 = vpop.f32.mrf.mxu0
      %v5175 = vadd.f32 0.0, %v5174
      %v5176 = vpop.f32.mrf.mxu0
      %5177 = vmatprep.mubr.bf16.mxu0 0
      %5178 = vmatmul.mubr.bf16.gmra.mxu0 %v5010
      %v5179 = vpop.f32.mrf.mxu0
      %v5180 = vadd.f32 0.0, %v5179
      %v5181 = vpop.f32.mrf.mxu0
      %v5182 = vpop.f32.mrf.mxu0
      %v5183 = vadd.f32 0.0, %v5182
      %v5184 = vpop.f32.mrf.mxu0
      %5185 = vmatprep.mubr.bf16.mxu0 0
      %5186 = vmatmul.mubr.bf16.gmra.mxu0 %v5013
      %v5187 = vpop.f32.mrf.mxu0
      %v5188 = vadd.f32 0.0, %v5187
      %v5189 = vpop.f32.mrf.mxu0
      %v5190 = vpop.f32.mrf.mxu0
      %v5191 = vadd.f32 0.0, %v5190
      %v5192 = vpop.f32.mrf.mxu0
      %5193 = vmatprep.mubr.bf16.mxu0 0
      %5194 = vmatmul.mubr.bf16.gmra.mxu0 %v5016
      %v5195 = vpop.f32.mrf.mxu0
      %v5196 = vadd.f32 0.0, %v5195
      %v5197 = vpop.f32.mrf.mxu0
      %v5198 = vpop.f32.mrf.mxu0
      %v5199 = vadd.f32 0.0, %v5198
      %v5200 = vpop.f32.mrf.mxu0
      %5201 = vmatprep.mubr.bf16.mxu0 0
      %5202 = vmatmul.mubr.bf16.gmra.mxu0 %v5019
      %v5203 = vpop.f32.mrf.mxu0
      %v5204 = vadd.f32 0.0, %v5203
      %v5205 = vpop.f32.mrf.mxu0
      %v5206 = vpop.f32.mrf.mxu0
      %v5207 = vadd.f32 0.0, %v5206
      %v5208 = vpop.f32.mrf.mxu0
      %5209 = vmatprep.mubr.bf16.mxu0 0
      %5210 = vmatmul.mubr.bf16.gmra.mxu0 %v5022
      %v5211 = vpop.f32.mrf.mxu0
      %v5212 = vadd.f32 0.0, %v5211
      %v5213 = vpop.f32.mrf.mxu0
      %v5214 = vpop.f32.mrf.mxu0
      %v5215 = vadd.f32 0.0, %v5214
      %v5216 = vpop.f32.mrf.mxu0
      %5217 = vmatprep.mubr.bf16.mxu0 0
      %5218 = vmatmul.mubr.bf16.gmra.mxu0 %v5025
      %v5219 = vpop.f32.mrf.mxu0
      %v5220 = vadd.f32 0.0, %v5219
      %v5221 = vpop.f32.mrf.mxu0
      %v5222 = vpop.f32.mrf.mxu0
      %v5223 = vadd.f32 0.0, %v5222
      %v5224 = vpop.f32.mrf.mxu0
      %5225 = vmatprep.mubr.bf16.mxu0 0
      %5226 = vmatmul.mubr.bf16.gmra.mxu0 %v5028
      %v5227 = vpop.f32.mrf.mxu0
      %v5228 = vadd.f32 0.0, %v5227
      %v5229 = vpop.f32.mrf.mxu0
      %v5230 = vpop.f32.mrf.mxu0
      %v5231 = vpop.f32.mrf.mxu0
      %5232 = vdwg.mxu0
      %v5233 = vadd.f32 %v4727, %v5068
      %v5234 = vadd.f32 %v4730, %v5071
      %v5235 = vadd.f32 %v4735, %v5076
      %v5236 = vadd.f32 %v4738, %v5079
      %v5237 = vadd.f32 %v4743, %v5084
      %v5238 = vadd.f32 %v4746, %v5087
      %v5239 = vadd.f32 %v4751, %v5092
      %v5240 = vadd.f32 %v4754, %v5095
      %v5241 = vadd.f32 %v4759, %v5100
      %v5242 = vadd.f32 %v4762, %v5103
      %v5243 = vadd.f32 %v4767, %v5108
      %v5244 = vadd.f32 %v4770, %v5111
      %v5245 = vadd.f32 %v4775, %v5116
      %v5246 = vadd.f32 %v4778, %v5119
      %v5247 = vadd.f32 %v4783, %v5124
      %v5248 = vadd.f32 %v4786, %v5127
      %v5249 = vadd.f32 %v4791, %v5132
      %v5250 = vadd.f32 %v4794, %v5135
      %v5251 = vadd.f32 %v4799, %v5140
      %v5252 = vadd.f32 %v4802, %v5143
      %v5253 = vadd.f32 %v4807, %v5148
      %v5254 = vadd.f32 %v4810, %v5151
      %v5255 = vadd.f32 %v4815, %v5156
      %v5256 = vadd.f32 %v4818, %v5159
      %v5257 = vadd.f32 %v4823, %v5164
      %v5258 = vadd.f32 %v4826, %v5167
      %v5259 = vadd.f32 %v4831, %v5172
      %v5260 = vadd.f32 %v4834, %v5175
      %v5261 = vadd.f32 %v4839, %v5180
      %v5262 = vadd.f32 %v4842, %v5183
      %v5263 = vadd.f32 %v4847, %v5188
      %v5264 = vadd.f32 %v4850, %v5191
      %v5265 = vadd.f32 %v4855, %v5196
      %v5266 = vadd.f32 %v4858, %v5199
      %v5267 = vadd.f32 %v4863, %v5204
      %v5268 = vadd.f32 %v4866, %v5207
      %v5269 = vadd.f32 %v4871, %v5212
      %v5270 = vadd.f32 %v4874, %v5215
      %v5271 = vadd.f32 %v4879, %v5220
      %v5272 = vadd.f32 %v4882, %v5223
      %v5273 = vadd.f32 %v4887, %v5228
      %v5274 = vld [vmem:[#allocation2 + $0x17] sm:$0xff]
      %v5275 = vld [vmem:[#allocation2 + $0x1f] sm:$0xff]
      %v5276 = vld [vmem:[#allocation2 + $0x27] sm:$0xff]
      %v5277 = vld [vmem:[#allocation2 + $0x2f] sm:$0xff]
      %v5278 = vld [vmem:[#allocation2 + $0x37] sm:$0xff]
      %v5279 = vld [vmem:[#allocation2 + $0x3f] sm:$0xff]
      %v5280 = vld [vmem:[#allocation2 + $0x47] sm:$0xff]
      %v5281 = vld [vmem:[#allocation2 + $0x4f] sm:$0xff]
      %v5282 = vld [vmem:[#allocation2 + $0x57] sm:$0xff]
      %v5283 = vld [vmem:[#allocation2 + $0x5f] sm:$0xff]
      %v5284 = vld [vmem:[#allocation2 + $0x67] sm:$0xff]
      %v5285 = vld [vmem:[#allocation2 + $0x6f] sm:$0xff]
      %v5286 = vld [vmem:[#allocation2 + $0x77] sm:$0xff]
      %v5287 = vld [vmem:[#allocation2 + $0x7f] sm:$0xff]
      %v5288 = vld [vmem:[#allocation2 + $0x87] sm:$0xff]
      %v5289 = vld [vmem:[#allocation2 + $0x8f] sm:$0xff]
      %v5290 = vld [vmem:[#allocation2 + $0x97] sm:$0xff]
      %v5291 = vld [vmem:[#allocation2 + $0x9f] sm:$0xff]
      %v5292 = vld [vmem:[#allocation2 + $0xa7] sm:$0xff]
      %v5293 = vld [vmem:[#allocation2 + $0xaf] sm:$0xff]
      %v5294 = vld [vmem:[#allocation2 + $0xb7] sm:$0xff]
      %v5295 = vld [vmem:[#allocation2 + $0xbf] sm:$0xff]
      %v5296 = vld [vmem:[#allocation2 + $0xc7] sm:$0xff]
      %v5297 = vld [vmem:[#allocation2 + $0xcf] sm:$0xff]
      %v5298 = vld [vmem:[#allocation2 + $0xd7] sm:$0xff]
      %v5299 = vld [vmem:[#allocation2 + $0xdf] sm:$0xff]
      %v5300 = vld [vmem:[#allocation2 + $0xe7] sm:$0xff]
      %v5301 = vld [vmem:[#allocation2 + $0xef] sm:$0xff]
      %v5302 = vld [vmem:[#allocation2 + $0xf7] sm:$0xff]
      %v5303 = vld [vmem:[#allocation2 + $0xff] sm:$0xff]
      %v5304 = vld [vmem:[#allocation2 + $0x107] sm:$0xff]
      %v5305 = vld [vmem:[#allocation2 + $0x10f] sm:$0xff]
      %v5306 = vld [vmem:[#allocation2 + $0x117] sm:$0xff]
      %v5307 = vld [vmem:[#allocation2 + $0x11f] sm:$0xff]
      %v5308 = vld [vmem:[#allocation2 + $0x127] sm:$0xff]
      %v5309 = vld [vmem:[#allocation2 + $0x12f] sm:$0xff]
      %v5310 = vld [vmem:[#allocation2 + $0x137] sm:$0xff]
      %v5311 = vld [vmem:[#allocation2 + $0x13f] sm:$0xff]
      %v5312 = vld [vmem:[#allocation2 + $0x147] sm:$0xff]
      %v5313 = vld [vmem:[#allocation2 + $0x14f] sm:$0xff]
      %v5314 = vld [vmem:[#allocation2 + $0x157] sm:$0xff]
      %v5315 = vpack.c.bf16 %v5275, %v5274
      %v5316 = vpack.c.bf16 %v5277, %v5276
      %v5317 = vpack.c.bf16 %v5279, %v5278
      %v5318 = vpack.c.bf16 %v5281, %v5280
      %v5319 = vpack.c.bf16 %v5283, %v5282
      %v5320 = vpack.c.bf16 %v5285, %v5284
      %v5321 = vpack.c.bf16 %v5287, %v5286
      %v5322 = vpack.c.bf16 %v5289, %v5288
      %v5323 = vpack.c.bf16 %v5291, %v5290
      %v5324 = vpack.c.bf16 %v5293, %v5292
      %v5325 = vpack.c.bf16 %v5295, %v5294
      %v5326 = vpack.c.bf16 %v5297, %v5296
      %v5327 = vpack.c.bf16 %v5299, %v5298
      %v5328 = vpack.c.bf16 %v5301, %v5300
      %v5329 = vpack.c.bf16 %v5303, %v5302
      %v5330 = vpack.c.bf16 %v5305, %v5304
      %v5331 = vpack.c.bf16 %v5307, %v5306
      %v5332 = vpack.c.bf16 %v5309, %v5308
      %v5333 = vpack.c.bf16 %v5311, %v5310
      %v5334 = vpack.c.bf16 %v5313, %v5312
      %v5335 = vpack.c.bf16 %v5314, %v5314
      %s5336 = scalar_lea.vmem %s3, 36
      %v5337 = vld [vmem:[%s5336] sm:$0xf]
      %v5338 = vld [vmem:[%s5336 + $0x4] sm:$0xf]
      %v5339 = vld [vmem:[%s5336 + $0x8] sm:$0xf]
      %v5343 = vunpack.c.l.b16 %v5337
      %v5344 = vunpack.c.l.b16 %v5338
      %v5345 = vunpack.c.l.b16 %v5339
      %v5346 = vpack.c.b16 %v5344, %v5343
      %v5347 = vpack.c.b16 %v5345, %v5345
      %v5350 = vsel %vm4349, %v5315, 0
      %v5353 = vsel %vm4349, %v5316, 0
      %v5356 = vsel %vm4349, %v5317, 0
      %v5359 = vsel %vm4349, %v5318, 0
      %v5362 = vsel %vm4349, %v5319, 0
      %v5365 = vsel %vm4349, %v5320, 0
      %v5368 = vsel %vm4349, %v5321, 0
      %v5371 = vsel %vm4349, %v5322, 0
      %v5374 = vsel %vm4349, %v5323, 0
      %v5377 = vsel %vm4349, %v5324, 0
      %v5380 = vsel %vm4349, %v5325, 0
      %v5383 = vsel %vm4349, %v5326, 0
      %v5386 = vsel %vm4349, %v5327, 0
      %v5389 = vsel %vm4349, %v5328, 0
      %v5392 = vsel %vm4349, %v5329, 0
      %v5395 = vsel %vm4349, %v5330, 0
      %v5398 = vsel %vm4349, %v5331, 0
      %v5401 = vsel %vm4349, %v5332, 0
      %v5404 = vsel %vm4349, %v5333, 0
      %v5407 = vsel %vm4349, %v5334, 0
      %v5410 = vsel %vm4349, %v5335, 0
      %v5413 = vsel %vm4413, %v5347, 0
      %5415 = vmatprep.subr.bf16.mxu0 0
      %5416 = vmatpush1.bf16.msra.mxu0 0
      %5417 = vmatprep.subr.bf16.mxu0 0
      %5418 = vmatpush1.bf16.msra.mxu0 0
      %5419 = vmatprep.subr.bf16.mxu0 0
      %5420 = vmatpush1.bf16.msra.mxu0 0
      %5421 = vmatprep.subr.bf16.mxu0 0
      %5422 = vmatpush1.bf16.msra.mxu0 0
      %5423 = vmatprep.subr.bf16.mxu0 0
      %5424 = vmatpush1.bf16.msra.mxu0 0
      %5425 = vmatprep.subr.bf16.mxu0 0
      %5426 = vmatpush1.bf16.msra.mxu0 0
      %5427 = vmatprep.subr.bf16.mxu0 0
      %5428 = vmatpush1.bf16.msra.mxu0 %v5413
      %5429 = vmatprep.subr.bf16.mxu0 0
      %5430 = vmatpush1.bf16.msra.mxu0 %v5346
      %5431 = vmatprep.subr.bf16.mxu0 0
      %5432 = vmatpush2.bf16.msra.mxu0 0
      %5433 = vmatprep.subr.bf16.mxu0 0
      %5434 = vmatpush2.bf16.msra.mxu0 0
      %5435 = vmatprep.subr.bf16.mxu0 0
      %5436 = vmatpush2.bf16.msra.mxu0 0
      %5437 = vmatprep.subr.bf16.mxu0 0
      %5438 = vmatpush2.bf16.msra.mxu0 0
      %5439 = vmatprep.subr.bf16.mxu0 0
      %5440 = vmatpush2.bf16.msra.mxu0 0
      %5441 = vmatprep.subr.bf16.mxu0 0
      %5442 = vmatpush2.bf16.msra.mxu0 0
      %5443 = vmatprep.subr.bf16.mxu0 0
      %5444 = vmatpush2.bf16.msra.mxu0 0
      %5445 = vmatprep.subr.bf16.mxu0 0
      %5446 = vmatpush2.bf16.msra.mxu0 0
      %5447 = vmatprep.mubr.bf16.mxu0 0
      %5448 = vmatmul.mubr.bf16.gmra.mxu0 %v5350
      %v5449 = vpop.f32.mrf.mxu0
      %v5450 = vadd.f32 0.0, %v5449
      %v5451 = vpop.f32.mrf.mxu0
      %v5452 = vpop.f32.mrf.mxu0
      %v5453 = vadd.f32 0.0, %v5452
      %v5454 = vpop.f32.mrf.mxu0
      %5455 = vmatprep.mubr.bf16.mxu0 0
      %5456 = vmatmul.mubr.bf16.gmra.mxu0 %v5353
      %v5457 = vpop.f32.mrf.mxu0
      %v5458 = vadd.f32 0.0, %v5457
      %v5459 = vpop.f32.mrf.mxu0
      %v5460 = vpop.f32.mrf.mxu0
      %v5461 = vadd.f32 0.0, %v5460
      %v5462 = vpop.f32.mrf.mxu0
      %5463 = vmatprep.mubr.bf16.mxu0 0
      %5464 = vmatmul.mubr.bf16.gmra.mxu0 %v5356
      %v5465 = vpop.f32.mrf.mxu0
      %v5466 = vadd.f32 0.0, %v5465
      %v5467 = vpop.f32.mrf.mxu0
      %v5468 = vpop.f32.mrf.mxu0
      %v5469 = vadd.f32 0.0, %v5468
      %v5470 = vpop.f32.mrf.mxu0
      %5471 = vmatprep.mubr.bf16.mxu0 0
      %5472 = vmatmul.mubr.bf16.gmra.mxu0 %v5359
      %v5473 = vpop.f32.mrf.mxu0
      %v5474 = vadd.f32 0.0, %v5473
      %v5475 = vpop.f32.mrf.mxu0
      %v5476 = vpop.f32.mrf.mxu0
      %v5477 = vadd.f32 0.0, %v5476
      %v5478 = vpop.f32.mrf.mxu0
      %5479 = vmatprep.mubr.bf16.mxu0 0
      %5480 = vmatmul.mubr.bf16.gmra.mxu0 %v5362
      %v5481 = vpop.f32.mrf.mxu0
      %v5482 = vadd.f32 0.0, %v5481
      %v5483 = vpop.f32.mrf.mxu0
      %v5484 = vpop.f32.mrf.mxu0
      %v5485 = vadd.f32 0.0, %v5484
      %v5486 = vpop.f32.mrf.mxu0
      %5487 = vmatprep.mubr.bf16.mxu0 0
      %5488 = vmatmul.mubr.bf16.gmra.mxu0 %v5365
      %v5489 = vpop.f32.mrf.mxu0
      %v5490 = vadd.f32 0.0, %v5489
      %v5491 = vpop.f32.mrf.mxu0
      %v5492 = vpop.f32.mrf.mxu0
      %v5493 = vadd.f32 0.0, %v5492
      %v5494 = vpop.f32.mrf.mxu0
      %5495 = vmatprep.mubr.bf16.mxu0 0
      %5496 = vmatmul.mubr.bf16.gmra.mxu0 %v5368
      %v5497 = vpop.f32.mrf.mxu0
      %v5498 = vadd.f32 0.0, %v5497
      %v5499 = vpop.f32.mrf.mxu0
      %v5500 = vpop.f32.mrf.mxu0
      %v5501 = vadd.f32 0.0, %v5500
      %v5502 = vpop.f32.mrf.mxu0
      %5503 = vmatprep.mubr.bf16.mxu0 0
      %5504 = vmatmul.mubr.bf16.gmra.mxu0 %v5371
      %v5505 = vpop.f32.mrf.mxu0
      %v5506 = vadd.f32 0.0, %v5505
      %v5507 = vpop.f32.mrf.mxu0
      %v5508 = vpop.f32.mrf.mxu0
      %v5509 = vadd.f32 0.0, %v5508
      %v5510 = vpop.f32.mrf.mxu0
      %5511 = vmatprep.mubr.bf16.mxu0 0
      %5512 = vmatmul.mubr.bf16.gmra.mxu0 %v5374
      %v5513 = vpop.f32.mrf.mxu0
      %v5514 = vadd.f32 0.0, %v5513
      %v5515 = vpop.f32.mrf.mxu0
      %v5516 = vpop.f32.mrf.mxu0
      %v5517 = vadd.f32 0.0, %v5516
      %v5518 = vpop.f32.mrf.mxu0
      %5519 = vmatprep.mubr.bf16.mxu0 0
      %5520 = vmatmul.mubr.bf16.gmra.mxu0 %v5377
      %v5521 = vpop.f32.mrf.mxu0
      %v5522 = vadd.f32 0.0, %v5521
      %v5523 = vpop.f32.mrf.mxu0
      %v5524 = vpop.f32.mrf.mxu0
      %v5525 = vadd.f32 0.0, %v5524
      %v5526 = vpop.f32.mrf.mxu0
      %5527 = vmatprep.mubr.bf16.mxu0 0
      %5528 = vmatmul.mubr.bf16.gmra.mxu0 %v5380
      %v5529 = vpop.f32.mrf.mxu0
      %v5530 = vadd.f32 0.0, %v5529
      %v5531 = vpop.f32.mrf.mxu0
      %v5532 = vpop.f32.mrf.mxu0
      %v5533 = vadd.f32 0.0, %v5532
      %v5534 = vpop.f32.mrf.mxu0
      %5535 = vmatprep.mubr.bf16.mxu0 0
      %5536 = vmatmul.mubr.bf16.gmra.mxu0 %v5383
      %v5537 = vpop.f32.mrf.mxu0
      %v5538 = vadd.f32 0.0, %v5537
      %v5539 = vpop.f32.mrf.mxu0
      %v5540 = vpop.f32.mrf.mxu0
      %v5541 = vadd.f32 0.0, %v5540
      %v5542 = vpop.f32.mrf.mxu0
      %5543 = vmatprep.mubr.bf16.mxu0 0
      %5544 = vmatmul.mubr.bf16.gmra.mxu0 %v5386
      %v5545 = vpop.f32.mrf.mxu0
      %v5546 = vadd.f32 0.0, %v5545
      %v5547 = vpop.f32.mrf.mxu0
      %v5548 = vpop.f32.mrf.mxu0
      %v5549 = vadd.f32 0.0, %v5548
      %v5550 = vpop.f32.mrf.mxu0
      %5551 = vmatprep.mubr.bf16.mxu0 0
      %5552 = vmatmul.mubr.bf16.gmra.mxu0 %v5389
      %v5553 = vpop.f32.mrf.mxu0
      %v5554 = vadd.f32 0.0, %v5553
      %v5555 = vpop.f32.mrf.mxu0
      %v5556 = vpop.f32.mrf.mxu0
      %v5557 = vadd.f32 0.0, %v5556
      %v5558 = vpop.f32.mrf.mxu0
      %5559 = vmatprep.mubr.bf16.mxu0 0
      %5560 = vmatmul.mubr.bf16.gmra.mxu0 %v5392
      %v5561 = vpop.f32.mrf.mxu0
      %v5562 = vadd.f32 0.0, %v5561
      %v5563 = vpop.f32.mrf.mxu0
      %v5564 = vpop.f32.mrf.mxu0
      %v5565 = vadd.f32 0.0, %v5564
      %v5566 = vpop.f32.mrf.mxu0
      %5567 = vmatprep.mubr.bf16.mxu0 0
      %5568 = vmatmul.mubr.bf16.gmra.mxu0 %v5395
      %v5569 = vpop.f32.mrf.mxu0
      %v5570 = vadd.f32 0.0, %v5569
      %v5571 = vpop.f32.mrf.mxu0
      %v5572 = vpop.f32.mrf.mxu0
      %v5573 = vadd.f32 0.0, %v5572
      %v5574 = vpop.f32.mrf.mxu0
      %5575 = vmatprep.mubr.bf16.mxu0 0
      %5576 = vmatmul.mubr.bf16.gmra.mxu0 %v5398
      %v5577 = vpop.f32.mrf.mxu0
      %v5578 = vadd.f32 0.0, %v5577
      %v5579 = vpop.f32.mrf.mxu0
      %v5580 = vpop.f32.mrf.mxu0
      %v5581 = vadd.f32 0.0, %v5580
      %v5582 = vpop.f32.mrf.mxu0
      %5583 = vmatprep.mubr.bf16.mxu0 0
      %5584 = vmatmul.mubr.bf16.gmra.mxu0 %v5401
      %v5585 = vpop.f32.mrf.mxu0
      %v5586 = vadd.f32 0.0, %v5585
      %v5587 = vpop.f32.mrf.mxu0
      %v5588 = vpop.f32.mrf.mxu0
      %v5589 = vadd.f32 0.0, %v5588
      %v5590 = vpop.f32.mrf.mxu0
      %5591 = vmatprep.mubr.bf16.mxu0 0
      %5592 = vmatmul.mubr.bf16.gmra.mxu0 %v5404
      %v5593 = vpop.f32.mrf.mxu0
      %v5594 = vadd.f32 0.0, %v5593
      %v5595 = vpop.f32.mrf.mxu0
      %v5596 = vpop.f32.mrf.mxu0
      %v5597 = vadd.f32 0.0, %v5596
      %v5598 = vpop.f32.mrf.mxu0
      %5599 = vmatprep.mubr.bf16.mxu0 0
      %5600 = vmatmul.mubr.bf16.gmra.mxu0 %v5407
      %v5601 = vpop.f32.mrf.mxu0
      %v5602 = vadd.f32 0.0, %v5601
      %v5603 = vpop.f32.mrf.mxu0
      %v5604 = vpop.f32.mrf.mxu0
      %v5605 = vadd.f32 0.0, %v5604
      %v5606 = vpop.f32.mrf.mxu0
      %5607 = vmatprep.mubr.bf16.mxu0 0
      %5608 = vmatmul.mubr.bf16.gmra.mxu0 %v5410
      %v5609 = vpop.f32.mrf.mxu0
      %v5610 = vadd.f32 0.0, %v5609
      %v5611 = vpop.f32.mrf.mxu0
      %v5612 = vpop.f32.mrf.mxu0
      %v5613 = vpop.f32.mrf.mxu0
      %5614 = vdwg.mxu0
      %v5615 = vadd.f32 %v5233, %v5450
      %v5616 = vadd.f32 %v5234, %v5453
      %v5617 = vadd.f32 %v5235, %v5458
      %v5618 = vadd.f32 %v5236, %v5461
      %v5619 = vadd.f32 %v5237, %v5466
      %v5620 = vadd.f32 %v5238, %v5469
      %v5621 = vadd.f32 %v5239, %v5474
      %v5622 = vadd.f32 %v5240, %v5477
      %v5623 = vadd.f32 %v5241, %v5482
      %v5624 = vadd.f32 %v5242, %v5485
      %v5625 = vadd.f32 %v5243, %v5490
      %v5626 = vadd.f32 %v5244, %v5493
      %v5627 = vadd.f32 %v5245, %v5498
      %v5628 = vadd.f32 %v5246, %v5501
      %v5629 = vadd.f32 %v5247, %v5506
      %v5630 = vadd.f32 %v5248, %v5509
      %v5631 = vadd.f32 %v5249, %v5514
      %v5632 = vadd.f32 %v5250, %v5517
      %v5633 = vadd.f32 %v5251, %v5522
      %v5634 = vadd.f32 %v5252, %v5525
      %v5635 = vadd.f32 %v5253, %v5530
      %v5636 = vadd.f32 %v5254, %v5533
      %v5637 = vadd.f32 %v5255, %v5538
      %v5638 = vadd.f32 %v5256, %v5541
      %v5639 = vadd.f32 %v5257, %v5546
      %v5640 = vadd.f32 %v5258, %v5549
      %v5641 = vadd.f32 %v5259, %v5554
      %v5642 = vadd.f32 %v5260, %v5557
      %v5643 = vadd.f32 %v5261, %v5562
      %v5644 = vadd.f32 %v5262, %v5565
      %v5645 = vadd.f32 %v5263, %v5570
      %v5646 = vadd.f32 %v5264, %v5573
      %v5647 = vadd.f32 %v5265, %v5578
      %v5648 = vadd.f32 %v5266, %v5581
      %v5649 = vadd.f32 %v5267, %v5586
      %v5650 = vadd.f32 %v5268, %v5589
      %v5651 = vadd.f32 %v5269, %v5594
      %v5652 = vadd.f32 %v5270, %v5597
      %v5653 = vadd.f32 %v5271, %v5602
      %v5654 = vadd.f32 %v5272, %v5605
      %v5655 = vadd.f32 %v5273, %v5610
      %v5656 = vld [vmem:[#allocation2 + $0x18] sm:$0xff]
      %v5657 = vld [vmem:[#allocation2 + $0x20] sm:$0xff]
      %v5658 = vld [vmem:[#allocation2 + $0x28] sm:$0xff]
      %v5659 = vld [vmem:[#allocation2 + $0x30] sm:$0xff]
      %v5660 = vld [vmem:[#allocation2 + $0x38] sm:$0xff]
      %v5661 = vld [vmem:[#allocation2 + $0x40] sm:$0xff]
      %v5662 = vld [vmem:[#allocation2 + $0x48] sm:$0xff]
      %v5663 = vld [vmem:[#allocation2 + $0x50] sm:$0xff]
      %v5664 = vld [vmem:[#allocation2 + $0x58] sm:$0xff]
      %v5665 = vld [vmem:[#allocation2 + $0x60] sm:$0xff]
      %v5666 = vld [vmem:[#allocation2 + $0x68] sm:$0xff]
      %v5667 = vld [vmem:[#allocation2 + $0x70] sm:$0xff]
      %v5668 = vld [vmem:[#allocation2 + $0x78] sm:$0xff]
      %v5669 = vld [vmem:[#allocation2 + $0x80] sm:$0xff]
      %v5670 = vld [vmem:[#allocation2 + $0x88] sm:$0xff]
      %v5671 = vld [vmem:[#allocation2 + $0x90] sm:$0xff]
      %v5672 = vld [vmem:[#allocation2 + $0x98] sm:$0xff]
      %v5673 = vld [vmem:[#allocation2 + $0xa0] sm:$0xff]
      %v5674 = vld [vmem:[#allocation2 + $0xa8] sm:$0xff]
      %v5675 = vld [vmem:[#allocation2 + $0xb0] sm:$0xff]
      %v5676 = vld [vmem:[#allocation2 + $0xb8] sm:$0xff]
      %v5677 = vld [vmem:[#allocation2 + $0xc0] sm:$0xff]
      %v5678 = vld [vmem:[#allocation2 + $0xc8] sm:$0xff]
      %v5679 = vld [vmem:[#allocation2 + $0xd0] sm:$0xff]
      %v5680 = vld [vmem:[#allocation2 + $0xd8] sm:$0xff]
      %v5681 = vld [vmem:[#allocation2 + $0xe0] sm:$0xff]
      %v5682 = vld [vmem:[#allocation2 + $0xe8] sm:$0xff]
      %v5683 = vld [vmem:[#allocation2 + $0xf0] sm:$0xff]
      %v5684 = vld [vmem:[#allocation2 + $0xf8] sm:$0xff]
      %v5685 = vld [vmem:[#allocation2 + $0x100] sm:$0xff]
      %v5686 = vld [vmem:[#allocation2 + $0x108] sm:$0xff]
      %v5687 = vld [vmem:[#allocation2 + $0x110] sm:$0xff]
      %v5688 = vld [vmem:[#allocation2 + $0x118] sm:$0xff]
      %v5689 = vld [vmem:[#allocation2 + $0x120] sm:$0xff]
      %v5690 = vld [vmem:[#allocation2 + $0x128] sm:$0xff]
      %v5691 = vld [vmem:[#allocation2 + $0x130] sm:$0xff]
      %v5692 = vld [vmem:[#allocation2 + $0x138] sm:$0xff]
      %v5693 = vld [vmem:[#allocation2 + $0x140] sm:$0xff]
      %v5694 = vld [vmem:[#allocation2 + $0x148] sm:$0xff]
      %v5695 = vld [vmem:[#allocation2 + $0x150] sm:$0xff]
      %v5696 = vld [vmem:[#allocation2 + $0x158] sm:$0xff]
      %v5697 = vpack.c.bf16 %v5657, %v5656
      %v5698 = vpack.c.bf16 %v5659, %v5658
      %v5699 = vpack.c.bf16 %v5661, %v5660
      %v5700 = vpack.c.bf16 %v5663, %v5662
      %v5701 = vpack.c.bf16 %v5665, %v5664
      %v5702 = vpack.c.bf16 %v5667, %v5666
      %v5703 = vpack.c.bf16 %v5669, %v5668
      %v5704 = vpack.c.bf16 %v5671, %v5670
      %v5705 = vpack.c.bf16 %v5673, %v5672
      %v5706 = vpack.c.bf16 %v5675, %v5674
      %v5707 = vpack.c.bf16 %v5677, %v5676
      %v5708 = vpack.c.bf16 %v5679, %v5678
      %v5709 = vpack.c.bf16 %v5681, %v5680
      %v5710 = vpack.c.bf16 %v5683, %v5682
      %v5711 = vpack.c.bf16 %v5685, %v5684
      %v5712 = vpack.c.bf16 %v5687, %v5686
      %v5713 = vpack.c.bf16 %v5689, %v5688
      %v5714 = vpack.c.bf16 %v5691, %v5690
      %v5715 = vpack.c.bf16 %v5693, %v5692
      %v5716 = vpack.c.bf16 %v5695, %v5694
      %v5717 = vpack.c.bf16 %v5696, %v5696
      %s5718 = scalar_lea.vmem %s3, 48
      %v5719 = vld [vmem:[%s5718] sm:$0xf]
      %v5720 = vld [vmem:[%s5718 + $0x4] sm:$0xf]
      %v5721 = vld [vmem:[%s5718 + $0x8] sm:$0xf]
      %v5725 = vunpack.c.l.b16 %v5719
      %v5726 = vunpack.c.l.b16 %v5720
      %v5727 = vunpack.c.l.b16 %v5721
      %v5728 = vpack.c.b16 %v5726, %v5725
      %v5729 = vpack.c.b16 %v5727, %v5727
      %v5732 = vsel %vm4349, %v5697, 0
      %v5735 = vsel %vm4349, %v5698, 0
      %v5738 = vsel %vm4349, %v5699, 0
      %v5741 = vsel %vm4349, %v5700, 0
      %v5744 = vsel %vm4349, %v5701, 0
      %v5747 = vsel %vm4349, %v5702, 0
      %v5750 = vsel %vm4349, %v5703, 0
      %v5753 = vsel %vm4349, %v5704, 0
      %v5756 = vsel %vm4349, %v5705, 0
      %v5759 = vsel %vm4349, %v5706, 0
      %v5762 = vsel %vm4349, %v5707, 0
      %v5765 = vsel %vm4349, %v5708, 0
      %v5768 = vsel %vm4349, %v5709, 0
      %v5771 = vsel %vm4349, %v5710, 0
      %v5774 = vsel %vm4349, %v5711, 0
      %v5777 = vsel %vm4349, %v5712, 0
      %v5780 = vsel %vm4349, %v5713, 0
      %v5783 = vsel %vm4349, %v5714, 0
      %v5786 = vsel %vm4349, %v5715, 0
      %v5789 = vsel %vm4349, %v5716, 0
      %v5792 = vsel %vm4349, %v5717, 0
      %v5795 = vsel %vm4413, %v5729, 0
      %5797 = vmatprep.subr.bf16.mxu0 0
      %5798 = vmatpush1.bf16.msra.mxu0 0
      %5799 = vmatprep.subr.bf16.mxu0 0
      %5800 = vmatpush1.bf16.msra.mxu0 0
      %5801 = vmatprep.subr.bf16.mxu0 0
      %5802 = vmatpush1.bf16.msra.mxu0 0
      %5803 = vmatprep.subr.bf16.mxu0 0
      %5804 = vmatpush1.bf16.msra.mxu0 0
      %5805 = vmatprep.subr.bf16.mxu0 0
      %5806 = vmatpush1.bf16.msra.mxu0 0
      %5807 = vmatprep.subr.bf16.mxu0 0
      %5808 = vmatpush1.bf16.msra.mxu0 0
      %5809 = vmatprep.subr.bf16.mxu0 0
      %5810 = vmatpush1.bf16.msra.mxu0 %v5795
      %5811 = vmatprep.subr.bf16.mxu0 0
      %5812 = vmatpush1.bf16.msra.mxu0 %v5728
      %5813 = vmatprep.subr.bf16.mxu0 0
      %5814 = vmatpush2.bf16.msra.mxu0 0
      %5815 = vmatprep.subr.bf16.mxu0 0
      %5816 = vmatpush2.bf16.msra.mxu0 0
      %5817 = vmatprep.subr.bf16.mxu0 0
      %5818 = vmatpush2.bf16.msra.mxu0 0
      %5819 = vmatprep.subr.bf16.mxu0 0
      %5820 = vmatpush2.bf16.msra.mxu0 0
      %5821 = vmatprep.subr.bf16.mxu0 0
      %5822 = vmatpush2.bf16.msra.mxu0 0
      %5823 = vmatprep.subr.bf16.mxu0 0
      %5824 = vmatpush2.bf16.msra.mxu0 0
      %5825 = vmatprep.subr.bf16.mxu0 0
      %5826 = vmatpush2.bf16.msra.mxu0 0
      %5827 = vmatprep.subr.bf16.mxu0 0
      %5828 = vmatpush2.bf16.msra.mxu0 0
      %5829 = vmatprep.mubr.bf16.mxu0 0
      %5830 = vmatmul.mubr.bf16.gmra.mxu0 %v5732
      %v5831 = vpop.f32.mrf.mxu0
      %v5832 = vadd.f32 0.0, %v5831
      %v5833 = vpop.f32.mrf.mxu0
      %v5834 = vpop.f32.mrf.mxu0
      %v5835 = vadd.f32 0.0, %v5834
      %v5836 = vpop.f32.mrf.mxu0
      %5837 = vmatprep.mubr.bf16.mxu0 0
      %5838 = vmatmul.mubr.bf16.gmra.mxu0 %v5735
      %v5839 = vpop.f32.mrf.mxu0
      %v5840 = vadd.f32 0.0, %v5839
      %v5841 = vpop.f32.mrf.mxu0
      %v5842 = vpop.f32.mrf.mxu0
      %v5843 = vadd.f32 0.0, %v5842
      %v5844 = vpop.f32.mrf.mxu0
      %5845 = vmatprep.mubr.bf16.mxu0 0
      %5846 = vmatmul.mubr.bf16.gmra.mxu0 %v5738
      %v5847 = vpop.f32.mrf.mxu0
      %v5848 = vadd.f32 0.0, %v5847
      %v5849 = vpop.f32.mrf.mxu0
      %v5850 = vpop.f32.mrf.mxu0
      %v5851 = vadd.f32 0.0, %v5850
      %v5852 = vpop.f32.mrf.mxu0
      %5853 = vmatprep.mubr.bf16.mxu0 0
      %5854 = vmatmul.mubr.bf16.gmra.mxu0 %v5741
      %v5855 = vpop.f32.mrf.mxu0
      %v5856 = vadd.f32 0.0, %v5855
      %v5857 = vpop.f32.mrf.mxu0
      %v5858 = vpop.f32.mrf.mxu0
      %v5859 = vadd.f32 0.0, %v5858
      %v5860 = vpop.f32.mrf.mxu0
      %5861 = vmatprep.mubr.bf16.mxu0 0
      %5862 = vmatmul.mubr.bf16.gmra.mxu0 %v5744
      %v5863 = vpop.f32.mrf.mxu0
      %v5864 = vadd.f32 0.0, %v5863
      %v5865 = vpop.f32.mrf.mxu0
      %v5866 = vpop.f32.mrf.mxu0
      %v5867 = vadd.f32 0.0, %v5866
      %v5868 = vpop.f32.mrf.mxu0
      %5869 = vmatprep.mubr.bf16.mxu0 0
      %5870 = vmatmul.mubr.bf16.gmra.mxu0 %v5747
      %v5871 = vpop.f32.mrf.mxu0
      %v5872 = vadd.f32 0.0, %v5871
      %v5873 = vpop.f32.mrf.mxu0
      %v5874 = vpop.f32.mrf.mxu0
      %v5875 = vadd.f32 0.0, %v5874
      %v5876 = vpop.f32.mrf.mxu0
      %5877 = vmatprep.mubr.bf16.mxu0 0
      %5878 = vmatmul.mubr.bf16.gmra.mxu0 %v5750
      %v5879 = vpop.f32.mrf.mxu0
      %v5880 = vadd.f32 0.0, %v5879
      %v5881 = vpop.f32.mrf.mxu0
      %v5882 = vpop.f32.mrf.mxu0
      %v5883 = vadd.f32 0.0, %v5882
      %v5884 = vpop.f32.mrf.mxu0
      %5885 = vmatprep.mubr.bf16.mxu0 0
      %5886 = vmatmul.mubr.bf16.gmra.mxu0 %v5753
      %v5887 = vpop.f32.mrf.mxu0
      %v5888 = vadd.f32 0.0, %v5887
      %v5889 = vpop.f32.mrf.mxu0
      %v5890 = vpop.f32.mrf.mxu0
      %v5891 = vadd.f32 0.0, %v5890
      %v5892 = vpop.f32.mrf.mxu0
      %5893 = vmatprep.mubr.bf16.mxu0 0
      %5894 = vmatmul.mubr.bf16.gmra.mxu0 %v5756
      %v5895 = vpop.f32.mrf.mxu0
      %v5896 = vadd.f32 0.0, %v5895
      %v5897 = vpop.f32.mrf.mxu0
      %v5898 = vpop.f32.mrf.mxu0
      %v5899 = vadd.f32 0.0, %v5898
      %v5900 = vpop.f32.mrf.mxu0
      %5901 = vmatprep.mubr.bf16.mxu0 0
      %5902 = vmatmul.mubr.bf16.gmra.mxu0 %v5759
      %v5903 = vpop.f32.mrf.mxu0
      %v5904 = vadd.f32 0.0, %v5903
      %v5905 = vpop.f32.mrf.mxu0
      %v5906 = vpop.f32.mrf.mxu0
      %v5907 = vadd.f32 0.0, %v5906
      %v5908 = vpop.f32.mrf.mxu0
      %5909 = vmatprep.mubr.bf16.mxu0 0
      %5910 = vmatmul.mubr.bf16.gmra.mxu0 %v5762
      %v5911 = vpop.f32.mrf.mxu0
      %v5912 = vadd.f32 0.0, %v5911
      %v5913 = vpop.f32.mrf.mxu0
      %v5914 = vpop.f32.mrf.mxu0
      %v5915 = vadd.f32 0.0, %v5914
      %v5916 = vpop.f32.mrf.mxu0
      %5917 = vmatprep.mubr.bf16.mxu0 0
      %5918 = vmatmul.mubr.bf16.gmra.mxu0 %v5765
      %v5919 = vpop.f32.mrf.mxu0
      %v5920 = vadd.f32 0.0, %v5919
      %v5921 = vpop.f32.mrf.mxu0
      %v5922 = vpop.f32.mrf.mxu0
      %v5923 = vadd.f32 0.0, %v5922
      %v5924 = vpop.f32.mrf.mxu0
      %5925 = vmatprep.mubr.bf16.mxu0 0
      %5926 = vmatmul.mubr.bf16.gmra.mxu0 %v5768
      %v5927 = vpop.f32.mrf.mxu0
      %v5928 = vadd.f32 0.0, %v5927
      %v5929 = vpop.f32.mrf.mxu0
      %v5930 = vpop.f32.mrf.mxu0
      %v5931 = vadd.f32 0.0, %v5930
      %v5932 = vpop.f32.mrf.mxu0
      %5933 = vmatprep.mubr.bf16.mxu0 0
      %5934 = vmatmul.mubr.bf16.gmra.mxu0 %v5771
      %v5935 = vpop.f32.mrf.mxu0
      %v5936 = vadd.f32 0.0, %v5935
      %v5937 = vpop.f32.mrf.mxu0
      %v5938 = vpop.f32.mrf.mxu0
      %v5939 = vadd.f32 0.0, %v5938
      %v5940 = vpop.f32.mrf.mxu0
      %5941 = vmatprep.mubr.bf16.mxu0 0
      %5942 = vmatmul.mubr.bf16.gmra.mxu0 %v5774
      %v5943 = vpop.f32.mrf.mxu0
      %v5944 = vadd.f32 0.0, %v5943
      %v5945 = vpop.f32.mrf.mxu0
      %v5946 = vpop.f32.mrf.mxu0
      %v5947 = vadd.f32 0.0, %v5946
      %v5948 = vpop.f32.mrf.mxu0
      %5949 = vmatprep.mubr.bf16.mxu0 0
      %5950 = vmatmul.mubr.bf16.gmra.mxu0 %v5777
      %v5951 = vpop.f32.mrf.mxu0
      %v5952 = vadd.f32 0.0, %v5951
      %v5953 = vpop.f32.mrf.mxu0
      %v5954 = vpop.f32.mrf.mxu0
      %v5955 = vadd.f32 0.0, %v5954
      %v5956 = vpop.f32.mrf.mxu0
      %5957 = vmatprep.mubr.bf16.mxu0 0
      %5958 = vmatmul.mubr.bf16.gmra.mxu0 %v5780
      %v5959 = vpop.f32.mrf.mxu0
      %v5960 = vadd.f32 0.0, %v5959
      %v5961 = vpop.f32.mrf.mxu0
      %v5962 = vpop.f32.mrf.mxu0
      %v5963 = vadd.f32 0.0, %v5962
      %v5964 = vpop.f32.mrf.mxu0
      %5965 = vmatprep.mubr.bf16.mxu0 0
      %5966 = vmatmul.mubr.bf16.gmra.mxu0 %v5783
      %v5967 = vpop.f32.mrf.mxu0
      %v5968 = vadd.f32 0.0, %v5967
      %v5969 = vpop.f32.mrf.mxu0
      %v5970 = vpop.f32.mrf.mxu0
      %v5971 = vadd.f32 0.0, %v5970
      %v5972 = vpop.f32.mrf.mxu0
      %5973 = vmatprep.mubr.bf16.mxu0 0
      %5974 = vmatmul.mubr.bf16.gmra.mxu0 %v5786
      %v5975 = vpop.f32.mrf.mxu0
      %v5976 = vadd.f32 0.0, %v5975
      %v5977 = vpop.f32.mrf.mxu0
      %v5978 = vpop.f32.mrf.mxu0
      %v5979 = vadd.f32 0.0, %v5978
      %v5980 = vpop.f32.mrf.mxu0
      %5981 = vmatprep.mubr.bf16.mxu0 0
      %5982 = vmatmul.mubr.bf16.gmra.mxu0 %v5789
      %v5983 = vpop.f32.mrf.mxu0
      %v5984 = vadd.f32 0.0, %v5983
      %v5985 = vpop.f32.mrf.mxu0
      %v5986 = vpop.f32.mrf.mxu0
      %v5987 = vadd.f32 0.0, %v5986
      %v5988 = vpop.f32.mrf.mxu0
      %5989 = vmatprep.mubr.bf16.mxu0 0
      %5990 = vmatmul.mubr.bf16.gmra.mxu0 %v5792
      %v5991 = vpop.f32.mrf.mxu0
      %v5992 = vadd.f32 0.0, %v5991
      %v5993 = vpop.f32.mrf.mxu0
      %v5994 = vpop.f32.mrf.mxu0
      %v5995 = vpop.f32.mrf.mxu0
      %5996 = vdwg.mxu0
      %v5997 = vadd.f32 %v5615, %v5832
      %v5998 = vadd.f32 %v5616, %v5835
      %v5999 = vadd.f32 %v5617, %v5840
      %v6000 = vadd.f32 %v5618, %v5843
      %v6001 = vadd.f32 %v5619, %v5848
      %v6002 = vadd.f32 %v5620, %v5851
      %v6003 = vadd.f32 %v5621, %v5856
      %v6004 = vadd.f32 %v5622, %v5859
      %v6005 = vadd.f32 %v5623, %v5864
      %v6006 = vadd.f32 %v5624, %v5867
      %v6007 = vadd.f32 %v5625, %v5872
      %v6008 = vadd.f32 %v5626, %v5875
      %v6009 = vadd.f32 %v5627, %v5880
      %v6010 = vadd.f32 %v5628, %v5883
      %v6011 = vadd.f32 %v5629, %v5888
      %v6012 = vadd.f32 %v5630, %v5891
      %v6013 = vadd.f32 %v5631, %v5896
      %v6014 = vadd.f32 %v5632, %v5899
      %v6015 = vadd.f32 %v5633, %v5904
      %v6016 = vadd.f32 %v5634, %v5907
      %v6017 = vadd.f32 %v5635, %v5912
      %v6018 = vadd.f32 %v5636, %v5915
      %v6019 = vadd.f32 %v5637, %v5920
      %v6020 = vadd.f32 %v5638, %v5923
      %v6021 = vadd.f32 %v5639, %v5928
      %v6022 = vadd.f32 %v5640, %v5931
      %v6023 = vadd.f32 %v5641, %v5936
      %v6024 = vadd.f32 %v5642, %v5939
      %v6025 = vadd.f32 %v5643, %v5944
      %v6026 = vadd.f32 %v5644, %v5947
      %v6027 = vadd.f32 %v5645, %v5952
      %v6028 = vadd.f32 %v5646, %v5955
      %v6029 = vadd.f32 %v5647, %v5960
      %v6030 = vadd.f32 %v5648, %v5963
      %v6031 = vadd.f32 %v5649, %v5968
      %v6032 = vadd.f32 %v5650, %v5971
      %v6033 = vadd.f32 %v5651, %v5976
      %v6034 = vadd.f32 %v5652, %v5979
      %v6035 = vadd.f32 %v5653, %v5984
      %v6036 = vadd.f32 %v5654, %v5987
      %v6037 = vadd.f32 %v5655, %v5992
      %v6038 = vld [vmem:[#allocation2 + $0x19] sm:$0xff]
      %v6039 = vld [vmem:[#allocation2 + $0x21] sm:$0xff]
      %v6040 = vld [vmem:[#allocation2 + $0x29] sm:$0xff]
      %v6041 = vld [vmem:[#allocation2 + $0x31] sm:$0xff]
      %v6042 = vld [vmem:[#allocation2 + $0x39] sm:$0xff]
      %v6043 = vld [vmem:[#allocation2 + $0x41] sm:$0xff]
      %v6044 = vld [vmem:[#allocation2 + $0x49] sm:$0xff]
      %v6045 = vld [vmem:[#allocation2 + $0x51] sm:$0xff]
      %v6046 = vld [vmem:[#allocation2 + $0x59] sm:$0xff]
      %v6047 = vld [vmem:[#allocation2 + $0x61] sm:$0xff]
      %v6048 = vld [vmem:[#allocation2 + $0x69] sm:$0xff]
      %v6049 = vld [vmem:[#allocation2 + $0x71] sm:$0xff]
      %v6050 = vld [vmem:[#allocation2 + $0x79] sm:$0xff]
      %v6051 = vld [vmem:[#allocation2 + $0x81] sm:$0xff]
      %v6052 = vld [vmem:[#allocation2 + $0x89] sm:$0xff]
      %v6053 = vld [vmem:[#allocation2 + $0x91] sm:$0xff]
      %v6054 = vld [vmem:[#allocation2 + $0x99] sm:$0xff]
      %v6055 = vld [vmem:[#allocation2 + $0xa1] sm:$0xff]
      %v6056 = vld [vmem:[#allocation2 + $0xa9] sm:$0xff]
      %v6057 = vld [vmem:[#allocation2 + $0xb1] sm:$0xff]
      %v6058 = vld [vmem:[#allocation2 + $0xb9] sm:$0xff]
      %v6059 = vld [vmem:[#allocation2 + $0xc1] sm:$0xff]
      %v6060 = vld [vmem:[#allocation2 + $0xc9] sm:$0xff]
      %v6061 = vld [vmem:[#allocation2 + $0xd1] sm:$0xff]
      %v6062 = vld [vmem:[#allocation2 + $0xd9] sm:$0xff]
      %v6063 = vld [vmem:[#allocation2 + $0xe1] sm:$0xff]
      %v6064 = vld [vmem:[#allocation2 + $0xe9] sm:$0xff]
      %v6065 = vld [vmem:[#allocation2 + $0xf1] sm:$0xff]
      %v6066 = vld [vmem:[#allocation2 + $0xf9] sm:$0xff]
      %v6067 = vld [vmem:[#allocation2 + $0x101] sm:$0xff]
      %v6068 = vld [vmem:[#allocation2 + $0x109] sm:$0xff]
      %v6069 = vld [vmem:[#allocation2 + $0x111] sm:$0xff]
      %v6070 = vld [vmem:[#allocation2 + $0x119] sm:$0xff]
      %v6071 = vld [vmem:[#allocation2 + $0x121] sm:$0xff]
      %v6072 = vld [vmem:[#allocation2 + $0x129] sm:$0xff]
      %v6073 = vld [vmem:[#allocation2 + $0x131] sm:$0xff]
      %v6074 = vld [vmem:[#allocation2 + $0x139] sm:$0xff]
      %v6075 = vld [vmem:[#allocation2 + $0x141] sm:$0xff]
      %v6076 = vld [vmem:[#allocation2 + $0x149] sm:$0xff]
      %v6077 = vld [vmem:[#allocation2 + $0x151] sm:$0xff]
      %v6078 = vld [vmem:[#allocation2 + $0x159] sm:$0xff]
      %v6079 = vpack.c.bf16 %v6039, %v6038
      %v6080 = vpack.c.bf16 %v6041, %v6040
      %v6081 = vpack.c.bf16 %v6043, %v6042
      %v6082 = vpack.c.bf16 %v6045, %v6044
      %v6083 = vpack.c.bf16 %v6047, %v6046
      %v6084 = vpack.c.bf16 %v6049, %v6048
      %v6085 = vpack.c.bf16 %v6051, %v6050
      %v6086 = vpack.c.bf16 %v6053, %v6052
      %v6087 = vpack.c.bf16 %v6055, %v6054
      %v6088 = vpack.c.bf16 %v6057, %v6056
      %v6089 = vpack.c.bf16 %v6059, %v6058
      %v6090 = vpack.c.bf16 %v6061, %v6060
      %v6091 = vpack.c.bf16 %v6063, %v6062
      %v6092 = vpack.c.bf16 %v6065, %v6064
      %v6093 = vpack.c.bf16 %v6067, %v6066
      %v6094 = vpack.c.bf16 %v6069, %v6068
      %v6095 = vpack.c.bf16 %v6071, %v6070
      %v6096 = vpack.c.bf16 %v6073, %v6072
      %v6097 = vpack.c.bf16 %v6075, %v6074
      %v6098 = vpack.c.bf16 %v6077, %v6076
      %v6099 = vpack.c.bf16 %v6078, %v6078
      %s6100 = scalar_lea.vmem %s3, 60
      %v6101 = vld [vmem:[%s6100] sm:$0xf]
      %v6102 = vld [vmem:[%s6100 + $0x4] sm:$0xf]
      %v6103 = vld [vmem:[%s6100 + $0x8] sm:$0xf]
      %v6107 = vunpack.c.l.b16 %v6101
      %v6108 = vunpack.c.l.b16 %v6102
      %v6109 = vunpack.c.l.b16 %v6103
      %v6110 = vpack.c.b16 %v6108, %v6107
      %v6111 = vpack.c.b16 %v6109, %v6109
      %v6114 = vsel %vm4349, %v6079, 0
      %v6117 = vsel %vm4349, %v6080, 0
      %v6120 = vsel %vm4349, %v6081, 0
      %v6123 = vsel %vm4349, %v6082, 0
      %v6126 = vsel %vm4349, %v6083, 0
      %v6129 = vsel %vm4349, %v6084, 0
      %v6132 = vsel %vm4349, %v6085, 0
      %v6135 = vsel %vm4349, %v6086, 0
      %v6138 = vsel %vm4349, %v6087, 0
      %v6141 = vsel %vm4349, %v6088, 0
      %v6144 = vsel %vm4349, %v6089, 0
      %v6147 = vsel %vm4349, %v6090, 0
      %v6150 = vsel %vm4349, %v6091, 0
      %v6153 = vsel %vm4349, %v6092, 0
      %v6156 = vsel %vm4349, %v6093, 0
      %v6159 = vsel %vm4349, %v6094, 0
      %v6162 = vsel %vm4349, %v6095, 0
      %v6165 = vsel %vm4349, %v6096, 0
      %v6168 = vsel %vm4349, %v6097, 0
      %v6171 = vsel %vm4349, %v6098, 0
      %v6174 = vsel %vm4349, %v6099, 0
      %v6177 = vsel %vm4413, %v6111, 0
      %6179 = vmatprep.subr.bf16.mxu0 0
      %6180 = vmatpush1.bf16.msra.mxu0 0
      %6181 = vmatprep.subr.bf16.mxu0 0
      %6182 = vmatpush1.bf16.msra.mxu0 0
      %6183 = vmatprep.subr.bf16.mxu0 0
      %6184 = vmatpush1.bf16.msra.mxu0 0
      %6185 = vmatprep.subr.bf16.mxu0 0
      %6186 = vmatpush1.bf16.msra.mxu0 0
      %6187 = vmatprep.subr.bf16.mxu0 0
      %6188 = vmatpush1.bf16.msra.mxu0 0
      %6189 = vmatprep.subr.bf16.mxu0 0
      %6190 = vmatpush1.bf16.msra.mxu0 0
      %6191 = vmatprep.subr.bf16.mxu0 0
      %6192 = vmatpush1.bf16.msra.mxu0 %v6177
      %6193 = vmatprep.subr.bf16.mxu0 0
      %6194 = vmatpush1.bf16.msra.mxu0 %v6110
      %6195 = vmatprep.subr.bf16.mxu0 0
      %6196 = vmatpush2.bf16.msra.mxu0 0
      %6197 = vmatprep.subr.bf16.mxu0 0
      %6198 = vmatpush2.bf16.msra.mxu0 0
      %6199 = vmatprep.subr.bf16.mxu0 0
      %6200 = vmatpush2.bf16.msra.mxu0 0
      %6201 = vmatprep.subr.bf16.mxu0 0
      %6202 = vmatpush2.bf16.msra.mxu0 0
      %6203 = vmatprep.subr.bf16.mxu0 0
      %6204 = vmatpush2.bf16.msra.mxu0 0
      %6205 = vmatprep.subr.bf16.mxu0 0
      %6206 = vmatpush2.bf16.msra.mxu0 0
      %6207 = vmatprep.subr.bf16.mxu0 0
      %6208 = vmatpush2.bf16.msra.mxu0 0
      %6209 = vmatprep.subr.bf16.mxu0 0
      %6210 = vmatpush2.bf16.msra.mxu0 0
      %6211 = vmatprep.mubr.bf16.mxu0 0
      %6212 = vmatmul.mubr.bf16.gmra.mxu0 %v6114
      %v6213 = vpop.f32.mrf.mxu0
      %v6214 = vadd.f32 0.0, %v6213
      %v6215 = vpop.f32.mrf.mxu0
      %v6216 = vpop.f32.mrf.mxu0
      %v6217 = vadd.f32 0.0, %v6216
      %v6218 = vpop.f32.mrf.mxu0
      %6219 = vmatprep.mubr.bf16.mxu0 0
      %6220 = vmatmul.mubr.bf16.gmra.mxu0 %v6117
      %v6221 = vpop.f32.mrf.mxu0
      %v6222 = vadd.f32 0.0, %v6221
      %v6223 = vpop.f32.mrf.mxu0
      %v6224 = vpop.f32.mrf.mxu0
      %v6225 = vadd.f32 0.0, %v6224
      %v6226 = vpop.f32.mrf.mxu0
      %6227 = vmatprep.mubr.bf16.mxu0 0
      %6228 = vmatmul.mubr.bf16.gmra.mxu0 %v6120
      %v6229 = vpop.f32.mrf.mxu0
      %v6230 = vadd.f32 0.0, %v6229
      %v6231 = vpop.f32.mrf.mxu0
      %v6232 = vpop.f32.mrf.mxu0
      %v6233 = vadd.f32 0.0, %v6232
      %v6234 = vpop.f32.mrf.mxu0
      %6235 = vmatprep.mubr.bf16.mxu0 0
      %6236 = vmatmul.mubr.bf16.gmra.mxu0 %v6123
      %v6237 = vpop.f32.mrf.mxu0
      %v6238 = vadd.f32 0.0, %v6237
      %v6239 = vpop.f32.mrf.mxu0
      %v6240 = vpop.f32.mrf.mxu0
      %v6241 = vadd.f32 0.0, %v6240
      %v6242 = vpop.f32.mrf.mxu0
      %6243 = vmatprep.mubr.bf16.mxu0 0
      %6244 = vmatmul.mubr.bf16.gmra.mxu0 %v6126
      %v6245 = vpop.f32.mrf.mxu0
      %v6246 = vadd.f32 0.0, %v6245
      %v6247 = vpop.f32.mrf.mxu0
      %v6248 = vpop.f32.mrf.mxu0
      %v6249 = vadd.f32 0.0, %v6248
      %v6250 = vpop.f32.mrf.mxu0
      %6251 = vmatprep.mubr.bf16.mxu0 0
      %6252 = vmatmul.mubr.bf16.gmra.mxu0 %v6129
      %v6253 = vpop.f32.mrf.mxu0
      %v6254 = vadd.f32 0.0, %v6253
      %v6255 = vpop.f32.mrf.mxu0
      %v6256 = vpop.f32.mrf.mxu0
      %v6257 = vadd.f32 0.0, %v6256
      %v6258 = vpop.f32.mrf.mxu0
      %6259 = vmatprep.mubr.bf16.mxu0 0
      %6260 = vmatmul.mubr.bf16.gmra.mxu0 %v6132
      %v6261 = vpop.f32.mrf.mxu0
      %v6262 = vadd.f32 0.0, %v6261
      %v6263 = vpop.f32.mrf.mxu0
      %v6264 = vpop.f32.mrf.mxu0
      %v6265 = vadd.f32 0.0, %v6264
      %v6266 = vpop.f32.mrf.mxu0
      %6267 = vmatprep.mubr.bf16.mxu0 0
      %6268 = vmatmul.mubr.bf16.gmra.mxu0 %v6135
      %v6269 = vpop.f32.mrf.mxu0
      %v6270 = vadd.f32 0.0, %v6269
      %v6271 = vpop.f32.mrf.mxu0
      %v6272 = vpop.f32.mrf.mxu0
      %v6273 = vadd.f32 0.0, %v6272
      %v6274 = vpop.f32.mrf.mxu0
      %6275 = vmatprep.mubr.bf16.mxu0 0
      %6276 = vmatmul.mubr.bf16.gmra.mxu0 %v6138
      %v6277 = vpop.f32.mrf.mxu0
      %v6278 = vadd.f32 0.0, %v6277
      %v6279 = vpop.f32.mrf.mxu0
      %v6280 = vpop.f32.mrf.mxu0
      %v6281 = vadd.f32 0.0, %v6280
      %v6282 = vpop.f32.mrf.mxu0
      %6283 = vmatprep.mubr.bf16.mxu0 0
      %6284 = vmatmul.mubr.bf16.gmra.mxu0 %v6141
      %v6285 = vpop.f32.mrf.mxu0
      %v6286 = vadd.f32 0.0, %v6285
      %v6287 = vpop.f32.mrf.mxu0
      %v6288 = vpop.f32.mrf.mxu0
      %v6289 = vadd.f32 0.0, %v6288
      %v6290 = vpop.f32.mrf.mxu0
      %6291 = vmatprep.mubr.bf16.mxu0 0
      %6292 = vmatmul.mubr.bf16.gmra.mxu0 %v6144
      %v6293 = vpop.f32.mrf.mxu0
      %v6294 = vadd.f32 0.0, %v6293
      %v6295 = vpop.f32.mrf.mxu0
      %v6296 = vpop.f32.mrf.mxu0
      %v6297 = vadd.f32 0.0, %v6296
      %v6298 = vpop.f32.mrf.mxu0
      %6299 = vmatprep.mubr.bf16.mxu0 0
      %6300 = vmatmul.mubr.bf16.gmra.mxu0 %v6147
      %v6301 = vpop.f32.mrf.mxu0
      %v6302 = vadd.f32 0.0, %v6301
      %v6303 = vpop.f32.mrf.mxu0
      %v6304 = vpop.f32.mrf.mxu0
      %v6305 = vadd.f32 0.0, %v6304
      %v6306 = vpop.f32.mrf.mxu0
      %6307 = vmatprep.mubr.bf16.mxu0 0
      %6308 = vmatmul.mubr.bf16.gmra.mxu0 %v6150
      %v6309 = vpop.f32.mrf.mxu0
      %v6310 = vadd.f32 0.0, %v6309
      %v6311 = vpop.f32.mrf.mxu0
      %v6312 = vpop.f32.mrf.mxu0
      %v6313 = vadd.f32 0.0, %v6312
      %v6314 = vpop.f32.mrf.mxu0
      %6315 = vmatprep.mubr.bf16.mxu0 0
      %6316 = vmatmul.mubr.bf16.gmra.mxu0 %v6153
      %v6317 = vpop.f32.mrf.mxu0
      %v6318 = vadd.f32 0.0, %v6317
      %v6319 = vpop.f32.mrf.mxu0
      %v6320 = vpop.f32.mrf.mxu0
      %v6321 = vadd.f32 0.0, %v6320
      %v6322 = vpop.f32.mrf.mxu0
      %6323 = vmatprep.mubr.bf16.mxu0 0
      %6324 = vmatmul.mubr.bf16.gmra.mxu0 %v6156
      %v6325 = vpop.f32.mrf.mxu0
      %v6326 = vadd.f32 0.0, %v6325
      %v6327 = vpop.f32.mrf.mxu0
      %v6328 = vpop.f32.mrf.mxu0
      %v6329 = vadd.f32 0.0, %v6328
      %v6330 = vpop.f32.mrf.mxu0
      %6331 = vmatprep.mubr.bf16.mxu0 0
      %6332 = vmatmul.mubr.bf16.gmra.mxu0 %v6159
      %v6333 = vpop.f32.mrf.mxu0
      %v6334 = vadd.f32 0.0, %v6333
      %v6335 = vpop.f32.mrf.mxu0
      %v6336 = vpop.f32.mrf.mxu0
      %v6337 = vadd.f32 0.0, %v6336
      %v6338 = vpop.f32.mrf.mxu0
      %6339 = vmatprep.mubr.bf16.mxu0 0
      %6340 = vmatmul.mubr.bf16.gmra.mxu0 %v6162
      %v6341 = vpop.f32.mrf.mxu0
      %v6342 = vadd.f32 0.0, %v6341
      %v6343 = vpop.f32.mrf.mxu0
      %v6344 = vpop.f32.mrf.mxu0
      %v6345 = vadd.f32 0.0, %v6344
      %v6346 = vpop.f32.mrf.mxu0
      %6347 = vmatprep.mubr.bf16.mxu0 0
      %6348 = vmatmul.mubr.bf16.gmra.mxu0 %v6165
      %v6349 = vpop.f32.mrf.mxu0
      %v6350 = vadd.f32 0.0, %v6349
      %v6351 = vpop.f32.mrf.mxu0
      %v6352 = vpop.f32.mrf.mxu0
      %v6353 = vadd.f32 0.0, %v6352
      %v6354 = vpop.f32.mrf.mxu0
      %6355 = vmatprep.mubr.bf16.mxu0 0
      %6356 = vmatmul.mubr.bf16.gmra.mxu0 %v6168
      %v6357 = vpop.f32.mrf.mxu0
      %v6358 = vadd.f32 0.0, %v6357
      %v6359 = vpop.f32.mrf.mxu0
      %v6360 = vpop.f32.mrf.mxu0
      %v6361 = vadd.f32 0.0, %v6360
      %v6362 = vpop.f32.mrf.mxu0
      %6363 = vmatprep.mubr.bf16.mxu0 0
      %6364 = vmatmul.mubr.bf16.gmra.mxu0 %v6171
      %v6365 = vpop.f32.mrf.mxu0
      %v6366 = vadd.f32 0.0, %v6365
      %v6367 = vpop.f32.mrf.mxu0
      %v6368 = vpop.f32.mrf.mxu0
      %v6369 = vadd.f32 0.0, %v6368
      %v6370 = vpop.f32.mrf.mxu0
      %6371 = vmatprep.mubr.bf16.mxu0 0
      %6372 = vmatmul.mubr.bf16.gmra.mxu0 %v6174
      %v6373 = vpop.f32.mrf.mxu0
      %v6374 = vadd.f32 0.0, %v6373
      %v6375 = vpop.f32.mrf.mxu0
      %v6376 = vpop.f32.mrf.mxu0
      %v6377 = vpop.f32.mrf.mxu0
      %6378 = vdwg.mxu0
      %v6379 = vadd.f32 %v5997, %v6214
      %v6380 = vadd.f32 %v5998, %v6217
      %v6381 = vadd.f32 %v5999, %v6222
      %v6382 = vadd.f32 %v6000, %v6225
      %v6383 = vadd.f32 %v6001, %v6230
      %v6384 = vadd.f32 %v6002, %v6233
      %v6385 = vadd.f32 %v6003, %v6238
      %v6386 = vadd.f32 %v6004, %v6241
      %v6387 = vadd.f32 %v6005, %v6246
      %v6388 = vadd.f32 %v6006, %v6249
      %v6389 = vadd.f32 %v6007, %v6254
      %v6390 = vadd.f32 %v6008, %v6257
      %v6391 = vadd.f32 %v6009, %v6262
      %v6392 = vadd.f32 %v6010, %v6265
      %v6393 = vadd.f32 %v6011, %v6270
      %v6394 = vadd.f32 %v6012, %v6273
      %v6395 = vadd.f32 %v6013, %v6278
      %v6396 = vadd.f32 %v6014, %v6281
      %v6397 = vadd.f32 %v6015, %v6286
      %v6398 = vadd.f32 %v6016, %v6289
      %v6399 = vadd.f32 %v6017, %v6294
      %v6400 = vadd.f32 %v6018, %v6297
      %v6401 = vadd.f32 %v6019, %v6302
      %v6402 = vadd.f32 %v6020, %v6305
      %v6403 = vadd.f32 %v6021, %v6310
      %v6404 = vadd.f32 %v6022, %v6313
      %v6405 = vadd.f32 %v6023, %v6318
      %v6406 = vadd.f32 %v6024, %v6321
      %v6407 = vadd.f32 %v6025, %v6326
      %v6408 = vadd.f32 %v6026, %v6329
      %v6409 = vadd.f32 %v6027, %v6334
      %v6410 = vadd.f32 %v6028, %v6337
      %v6411 = vadd.f32 %v6029, %v6342
      %v6412 = vadd.f32 %v6030, %v6345
      %v6413 = vadd.f32 %v6031, %v6350
      %v6414 = vadd.f32 %v6032, %v6353
      %v6415 = vadd.f32 %v6033, %v6358
      %v6416 = vadd.f32 %v6034, %v6361
      %v6417 = vadd.f32 %v6035, %v6366
      %v6418 = vadd.f32 %v6036, %v6369
      %v6419 = vadd.f32 %v6037, %v6374
      %v6420 = vld [vmem:[#allocation2 + $0x29] sm:$0xff]
      %v6421 = vld [vmem:[#allocation2 + $0x31] sm:$0xff]
      %v6422 = vld [vmem:[#allocation2 + $0x39] sm:$0xff]
      %v6423 = vld [vmem:[#allocation2 + $0x41] sm:$0xff]
      %v6424 = vld [vmem:[#allocation2 + $0x49] sm:$0xff]
      %v6425 = vld [vmem:[#allocation2 + $0x51] sm:$0xff]
      %v6426 = vld [vmem:[#allocation2 + $0x59] sm:$0xff]
      %v6427 = vld [vmem:[#allocation2 + $0x61] sm:$0xff]
      %v6428 = vld [vmem:[#allocation2 + $0x69] sm:$0xff]
      %v6429 = vld [vmem:[#allocation2 + $0x71] sm:$0xff]
      %v6430 = vld [vmem:[#allocation2 + $0x79] sm:$0xff]
      %v6431 = vld [vmem:[#allocation2 + $0x81] sm:$0xff]
      %v6432 = vld [vmem:[#allocation2 + $0x89] sm:$0xff]
      %v6433 = vld [vmem:[#allocation2 + $0x91] sm:$0xff]
      %v6434 = vld [vmem:[#allocation2 + $0x99] sm:$0xff]
      %v6435 = vld [vmem:[#allocation2 + $0xa1] sm:$0xff]
      %v6436 = vld [vmem:[#allocation2 + $0xa9] sm:$0xff]
      %v6437 = vld [vmem:[#allocation2 + $0xb1] sm:$0xff]
      %v6438 = vld [vmem:[#allocation2 + $0xb9] sm:$0xff]
      %v6439 = vld [vmem:[#allocation2 + $0xc1] sm:$0xff]
      %v6440 = vld [vmem:[#allocation2 + $0xc9] sm:$0xff]
      %v6441 = vld [vmem:[#allocation2 + $0xd1] sm:$0xff]
      %v6442 = vld [vmem:[#allocation2 + $0xd9] sm:$0xff]
      %v6443 = vld [vmem:[#allocation2 + $0xe1] sm:$0xff]
      %v6444 = vld [vmem:[#allocation2 + $0xe9] sm:$0xff]
      %v6445 = vld [vmem:[#allocation2 + $0xf1] sm:$0xff]
      %v6446 = vld [vmem:[#allocation2 + $0xf9] sm:$0xff]
      %v6447 = vld [vmem:[#allocation2 + $0x101] sm:$0xff]
      %v6448 = vld [vmem:[#allocation2 + $0x109] sm:$0xff]
      %v6449 = vld [vmem:[#allocation2 + $0x111] sm:$0xff]
      %v6450 = vld [vmem:[#allocation2 + $0x119] sm:$0xff]
      %v6451 = vld [vmem:[#allocation2 + $0x121] sm:$0xff]
      %v6452 = vld [vmem:[#allocation2 + $0x129] sm:$0xff]
      %v6453 = vld [vmem:[#allocation2 + $0x131] sm:$0xff]
      %v6454 = vld [vmem:[#allocation2 + $0x139] sm:$0xff]
      %v6455 = vld [vmem:[#allocation2 + $0x141] sm:$0xff]
      %v6456 = vld [vmem:[#allocation2 + $0x149] sm:$0xff]
      %v6457 = vld [vmem:[#allocation2 + $0x151] sm:$0xff]
      %v6458 = vld [vmem:[#allocation2 + $0x159] sm:$0xff]
      %v6459 = vld [vmem:[#allocation2 + $0x161] sm:$0xff]
      %v6460 = vld [vmem:[#allocation2 + $0x169] sm:$0xff]
      %v6461 = vpack.c.bf16 %v6421, %v6420
      %v6462 = vpack.c.bf16 %v6423, %v6422
      %v6463 = vpack.c.bf16 %v6425, %v6424
      %v6464 = vpack.c.bf16 %v6427, %v6426
      %v6465 = vpack.c.bf16 %v6429, %v6428
      %v6466 = vpack.c.bf16 %v6431, %v6430
      %v6467 = vpack.c.bf16 %v6433, %v6432
      %v6468 = vpack.c.bf16 %v6435, %v6434
      %v6469 = vpack.c.bf16 %v6437, %v6436
      %v6470 = vpack.c.bf16 %v6439, %v6438
      %v6471 = vpack.c.bf16 %v6441, %v6440
      %v6472 = vpack.c.bf16 %v6443, %v6442
      %v6473 = vpack.c.bf16 %v6445, %v6444
      %v6474 = vpack.c.bf16 %v6447, %v6446
      %v6475 = vpack.c.bf16 %v6449, %v6448
      %v6476 = vpack.c.bf16 %v6451, %v6450
      %v6477 = vpack.c.bf16 %v6453, %v6452
      %v6478 = vpack.c.bf16 %v6455, %v6454
      %v6479 = vpack.c.bf16 %v6457, %v6456
      %v6480 = vpack.c.bf16 %v6459, %v6458
      %v6481 = vpack.c.bf16 %v6460, %v6460
      %s6482 = scalar_lea.vmem %s3, 72
      %v6483 = vld [vmem:[%s6482] sm:$0xf]
      %v6484 = vld [vmem:[%s6482 + $0x4] sm:$0xf]
      %v6485 = vld [vmem:[%s6482 + $0x8] sm:$0xf]
      %v6489 = vunpack.c.l.b16 %v6483
      %v6490 = vunpack.c.l.b16 %v6484
      %v6491 = vunpack.c.l.b16 %v6485
      %v6492 = vpack.c.b16 %v6490, %v6489
      %v6493 = vpack.c.b16 %v6491, %v6491
      %v6496 = vsel %vm4349, %v6461, 0
      %v6499 = vsel %vm4349, %v6462, 0
      %v6502 = vsel %vm4349, %v6463, 0
      %v6505 = vsel %vm4349, %v6464, 0
      %v6508 = vsel %vm4349, %v6465, 0
      %v6511 = vsel %vm4349, %v6466, 0
      %v6514 = vsel %vm4349, %v6467, 0
      %v6517 = vsel %vm4349, %v6468, 0
      %v6520 = vsel %vm4349, %v6469, 0
      %v6523 = vsel %vm4349, %v6470, 0
      %v6526 = vsel %vm4349, %v6471, 0
      %v6529 = vsel %vm4349, %v6472, 0
      %v6532 = vsel %vm4349, %v6473, 0
      %v6535 = vsel %vm4349, %v6474, 0
      %v6538 = vsel %vm4349, %v6475, 0
      %v6541 = vsel %vm4349, %v6476, 0
      %v6544 = vsel %vm4349, %v6477, 0
      %v6547 = vsel %vm4349, %v6478, 0
      %v6550 = vsel %vm4349, %v6479, 0
      %v6553 = vsel %vm4349, %v6480, 0
      %v6556 = vsel %vm4349, %v6481, 0
      %v6559 = vsel %vm4413, %v6493, 0
      %6561 = vmatprep.subr.bf16.mxu0 0
      %6562 = vmatpush1.bf16.msra.mxu0 0
      %6563 = vmatprep.subr.bf16.mxu0 0
      %6564 = vmatpush1.bf16.msra.mxu0 0
      %6565 = vmatprep.subr.bf16.mxu0 0
      %6566 = vmatpush1.bf16.msra.mxu0 0
      %6567 = vmatprep.subr.bf16.mxu0 0
      %6568 = vmatpush1.bf16.msra.mxu0 0
      %6569 = vmatprep.subr.bf16.mxu0 0
      %6570 = vmatpush1.bf16.msra.mxu0 0
      %6571 = vmatprep.subr.bf16.mxu0 0
      %6572 = vmatpush1.bf16.msra.mxu0 0
      %6573 = vmatprep.subr.bf16.mxu0 0
      %6574 = vmatpush1.bf16.msra.mxu0 %v6559
      %6575 = vmatprep.subr.bf16.mxu0 0
      %6576 = vmatpush1.bf16.msra.mxu0 %v6492
      %6577 = vmatprep.subr.bf16.mxu0 0
      %6578 = vmatpush2.bf16.msra.mxu0 0
      %6579 = vmatprep.subr.bf16.mxu0 0
      %6580 = vmatpush2.bf16.msra.mxu0 0
      %6581 = vmatprep.subr.bf16.mxu0 0
      %6582 = vmatpush2.bf16.msra.mxu0 0
      %6583 = vmatprep.subr.bf16.mxu0 0
      %6584 = vmatpush2.bf16.msra.mxu0 0
      %6585 = vmatprep.subr.bf16.mxu0 0
      %6586 = vmatpush2.bf16.msra.mxu0 0
      %6587 = vmatprep.subr.bf16.mxu0 0
      %6588 = vmatpush2.bf16.msra.mxu0 0
      %6589 = vmatprep.subr.bf16.mxu0 0
      %6590 = vmatpush2.bf16.msra.mxu0 0
      %6591 = vmatprep.subr.bf16.mxu0 0
      %6592 = vmatpush2.bf16.msra.mxu0 0
      %6593 = vmatprep.mubr.bf16.mxu0 0
      %6594 = vmatmul.mubr.bf16.gmra.mxu0 %v6496
      %v6595 = vpop.f32.mrf.mxu0
      %v6596 = vadd.f32 0.0, %v6595
      %v6597 = vpop.f32.mrf.mxu0
      %v6598 = vpop.f32.mrf.mxu0
      %v6599 = vadd.f32 0.0, %v6598
      %v6600 = vpop.f32.mrf.mxu0
      %6601 = vmatprep.mubr.bf16.mxu0 0
      %6602 = vmatmul.mubr.bf16.gmra.mxu0 %v6499
      %v6603 = vpop.f32.mrf.mxu0
      %v6604 = vadd.f32 0.0, %v6603
      %v6605 = vpop.f32.mrf.mxu0
      %v6606 = vpop.f32.mrf.mxu0
      %v6607 = vadd.f32 0.0, %v6606
      %v6608 = vpop.f32.mrf.mxu0
      %6609 = vmatprep.mubr.bf16.mxu0 0
      %6610 = vmatmul.mubr.bf16.gmra.mxu0 %v6502
      %v6611 = vpop.f32.mrf.mxu0
      %v6612 = vadd.f32 0.0, %v6611
      %v6613 = vpop.f32.mrf.mxu0
      %v6614 = vpop.f32.mrf.mxu0
      %v6615 = vadd.f32 0.0, %v6614
      %v6616 = vpop.f32.mrf.mxu0
      %6617 = vmatprep.mubr.bf16.mxu0 0
      %6618 = vmatmul.mubr.bf16.gmra.mxu0 %v6505
      %v6619 = vpop.f32.mrf.mxu0
      %v6620 = vadd.f32 0.0, %v6619
      %v6621 = vpop.f32.mrf.mxu0
      %v6622 = vpop.f32.mrf.mxu0
      %v6623 = vadd.f32 0.0, %v6622
      %v6624 = vpop.f32.mrf.mxu0
      %6625 = vmatprep.mubr.bf16.mxu0 0
      %6626 = vmatmul.mubr.bf16.gmra.mxu0 %v6508
      %v6627 = vpop.f32.mrf.mxu0
      %v6628 = vadd.f32 0.0, %v6627
      %v6629 = vpop.f32.mrf.mxu0
      %v6630 = vpop.f32.mrf.mxu0
      %v6631 = vadd.f32 0.0, %v6630
      %v6632 = vpop.f32.mrf.mxu0
      %6633 = vmatprep.mubr.bf16.mxu0 0
      %6634 = vmatmul.mubr.bf16.gmra.mxu0 %v6511
      %v6635 = vpop.f32.mrf.mxu0
      %v6636 = vadd.f32 0.0, %v6635
      %v6637 = vpop.f32.mrf.mxu0
      %v6638 = vpop.f32.mrf.mxu0
      %v6639 = vadd.f32 0.0, %v6638
      %v6640 = vpop.f32.mrf.mxu0
      %6641 = vmatprep.mubr.bf16.mxu0 0
      %6642 = vmatmul.mubr.bf16.gmra.mxu0 %v6514
      %v6643 = vpop.f32.mrf.mxu0
      %v6644 = vadd.f32 0.0, %v6643
      %v6645 = vpop.f32.mrf.mxu0
      %v6646 = vpop.f32.mrf.mxu0
      %v6647 = vadd.f32 0.0, %v6646
      %v6648 = vpop.f32.mrf.mxu0
      %6649 = vmatprep.mubr.bf16.mxu0 0
      %6650 = vmatmul.mubr.bf16.gmra.mxu0 %v6517
      %v6651 = vpop.f32.mrf.mxu0
      %v6652 = vadd.f32 0.0, %v6651
      %v6653 = vpop.f32.mrf.mxu0
      %v6654 = vpop.f32.mrf.mxu0
      %v6655 = vadd.f32 0.0, %v6654
      %v6656 = vpop.f32.mrf.mxu0
      %6657 = vmatprep.mubr.bf16.mxu0 0
      %6658 = vmatmul.mubr.bf16.gmra.mxu0 %v6520
      %v6659 = vpop.f32.mrf.mxu0
      %v6660 = vadd.f32 0.0, %v6659
      %v6661 = vpop.f32.mrf.mxu0
      %v6662 = vpop.f32.mrf.mxu0
      %v6663 = vadd.f32 0.0, %v6662
      %v6664 = vpop.f32.mrf.mxu0
      %6665 = vmatprep.mubr.bf16.mxu0 0
      %6666 = vmatmul.mubr.bf16.gmra.mxu0 %v6523
      %v6667 = vpop.f32.mrf.mxu0
      %v6668 = vadd.f32 0.0, %v6667
      %v6669 = vpop.f32.mrf.mxu0
      %v6670 = vpop.f32.mrf.mxu0
      %v6671 = vadd.f32 0.0, %v6670
      %v6672 = vpop.f32.mrf.mxu0
      %6673 = vmatprep.mubr.bf16.mxu0 0
      %6674 = vmatmul.mubr.bf16.gmra.mxu0 %v6526
      %v6675 = vpop.f32.mrf.mxu0
      %v6676 = vadd.f32 0.0, %v6675
      %v6677 = vpop.f32.mrf.mxu0
      %v6678 = vpop.f32.mrf.mxu0
      %v6679 = vadd.f32 0.0, %v6678
      %v6680 = vpop.f32.mrf.mxu0
      %6681 = vmatprep.mubr.bf16.mxu0 0
      %6682 = vmatmul.mubr.bf16.gmra.mxu0 %v6529
      %v6683 = vpop.f32.mrf.mxu0
      %v6684 = vadd.f32 0.0, %v6683
      %v6685 = vpop.f32.mrf.mxu0
      %v6686 = vpop.f32.mrf.mxu0
      %v6687 = vadd.f32 0.0, %v6686
      %v6688 = vpop.f32.mrf.mxu0
      %6689 = vmatprep.mubr.bf16.mxu0 0
      %6690 = vmatmul.mubr.bf16.gmra.mxu0 %v6532
      %v6691 = vpop.f32.mrf.mxu0
      %v6692 = vadd.f32 0.0, %v6691
      %v6693 = vpop.f32.mrf.mxu0
      %v6694 = vpop.f32.mrf.mxu0
      %v6695 = vadd.f32 0.0, %v6694
      %v6696 = vpop.f32.mrf.mxu0
      %6697 = vmatprep.mubr.bf16.mxu0 0
      %6698 = vmatmul.mubr.bf16.gmra.mxu0 %v6535
      %v6699 = vpop.f32.mrf.mxu0
      %v6700 = vadd.f32 0.0, %v6699
      %v6701 = vpop.f32.mrf.mxu0
      %v6702 = vpop.f32.mrf.mxu0
      %v6703 = vadd.f32 0.0, %v6702
      %v6704 = vpop.f32.mrf.mxu0
      %6705 = vmatprep.mubr.bf16.mxu0 0
      %6706 = vmatmul.mubr.bf16.gmra.mxu0 %v6538
      %v6707 = vpop.f32.mrf.mxu0
      %v6708 = vadd.f32 0.0, %v6707
      %v6709 = vpop.f32.mrf.mxu0
      %v6710 = vpop.f32.mrf.mxu0
      %v6711 = vadd.f32 0.0, %v6710
      %v6712 = vpop.f32.mrf.mxu0
      %6713 = vmatprep.mubr.bf16.mxu0 0
      %6714 = vmatmul.mubr.bf16.gmra.mxu0 %v6541
      %v6715 = vpop.f32.mrf.mxu0
      %v6716 = vadd.f32 0.0, %v6715
      %v6717 = vpop.f32.mrf.mxu0
      %v6718 = vpop.f32.mrf.mxu0
      %v6719 = vadd.f32 0.0, %v6718
      %v6720 = vpop.f32.mrf.mxu0
      %6721 = vmatprep.mubr.bf16.mxu0 0
      %6722 = vmatmul.mubr.bf16.gmra.mxu0 %v6544
      %v6723 = vpop.f32.mrf.mxu0
      %v6724 = vadd.f32 0.0, %v6723
      %v6725 = vpop.f32.mrf.mxu0
      %v6726 = vpop.f32.mrf.mxu0
      %v6727 = vadd.f32 0.0, %v6726
      %v6728 = vpop.f32.mrf.mxu0
      %6729 = vmatprep.mubr.bf16.mxu0 0
      %6730 = vmatmul.mubr.bf16.gmra.mxu0 %v6547
      %v6731 = vpop.f32.mrf.mxu0
      %v6732 = vadd.f32 0.0, %v6731
      %v6733 = vpop.f32.mrf.mxu0
      %v6734 = vpop.f32.mrf.mxu0
      %v6735 = vadd.f32 0.0, %v6734
      %v6736 = vpop.f32.mrf.mxu0
      %6737 = vmatprep.mubr.bf16.mxu0 0
      %6738 = vmatmul.mubr.bf16.gmra.mxu0 %v6550
      %v6739 = vpop.f32.mrf.mxu0
      %v6740 = vadd.f32 0.0, %v6739
      %v6741 = vpop.f32.mrf.mxu0
      %v6742 = vpop.f32.mrf.mxu0
      %v6743 = vadd.f32 0.0, %v6742
      %v6744 = vpop.f32.mrf.mxu0
      %6745 = vmatprep.mubr.bf16.mxu0 0
      %6746 = vmatmul.mubr.bf16.gmra.mxu0 %v6553
      %v6747 = vpop.f32.mrf.mxu0
      %v6748 = vadd.f32 0.0, %v6747
      %v6749 = vpop.f32.mrf.mxu0
      %v6750 = vpop.f32.mrf.mxu0
      %v6751 = vadd.f32 0.0, %v6750
      %v6752 = vpop.f32.mrf.mxu0
      %6753 = vmatprep.mubr.bf16.mxu0 0
      %6754 = vmatmul.mubr.bf16.gmra.mxu0 %v6556
      %v6755 = vpop.f32.mrf.mxu0
      %v6756 = vadd.f32 0.0, %v6755
      %v6757 = vpop.f32.mrf.mxu0
      %v6758 = vpop.f32.mrf.mxu0
      %v6759 = vpop.f32.mrf.mxu0
      %6760 = vdwg.mxu0
      %v6761 = vadd.f32 %v6379, %v6596
      %v6762 = vadd.f32 %v6380, %v6599
      %v6763 = vadd.f32 %v6381, %v6604
      %v6764 = vadd.f32 %v6382, %v6607
      %v6765 = vadd.f32 %v6383, %v6612
      %v6766 = vadd.f32 %v6384, %v6615
      %v6767 = vadd.f32 %v6385, %v6620
      %v6768 = vadd.f32 %v6386, %v6623
      %v6769 = vadd.f32 %v6387, %v6628
      %v6770 = vadd.f32 %v6388, %v6631
      %v6771 = vadd.f32 %v6389, %v6636
      %v6772 = vadd.f32 %v6390, %v6639
      %v6773 = vadd.f32 %v6391, %v6644
      %v6774 = vadd.f32 %v6392, %v6647
      %v6775 = vadd.f32 %v6393, %v6652
      %v6776 = vadd.f32 %v6394, %v6655
      %v6777 = vadd.f32 %v6395, %v6660
      %v6778 = vadd.f32 %v6396, %v6663
      %v6779 = vadd.f32 %v6397, %v6668
      %v6780 = vadd.f32 %v6398, %v6671
      %v6781 = vadd.f32 %v6399, %v6676
      %v6782 = vadd.f32 %v6400, %v6679
      %v6783 = vadd.f32 %v6401, %v6684
      %v6784 = vadd.f32 %v6402, %v6687
      %v6785 = vadd.f32 %v6403, %v6692
      %v6786 = vadd.f32 %v6404, %v6695
      %v6787 = vadd.f32 %v6405, %v6700
      %v6788 = vadd.f32 %v6406, %v6703
      %v6789 = vadd.f32 %v6407, %v6708
      %v6790 = vadd.f32 %v6408, %v6711
      %v6791 = vadd.f32 %v6409, %v6716
      %v6792 = vadd.f32 %v6410, %v6719
      %v6793 = vadd.f32 %v6411, %v6724
      %v6794 = vadd.f32 %v6412, %v6727
      %v6795 = vadd.f32 %v6413, %v6732
      %v6796 = vadd.f32 %v6414, %v6735
      %v6797 = vadd.f32 %v6415, %v6740
      %v6798 = vadd.f32 %v6416, %v6743
      %v6799 = vadd.f32 %v6417, %v6748
      %v6800 = vadd.f32 %v6418, %v6751
      %v6801 = vadd.f32 %v6419, %v6756
      %v6802 = vld [vmem:[#allocation2 + $0x2a] sm:$0xff]
      %v6803 = vld [vmem:[#allocation2 + $0x32] sm:$0xff]
      %v6804 = vld [vmem:[#allocation2 + $0x3a] sm:$0xff]
      %v6805 = vld [vmem:[#allocation2 + $0x42] sm:$0xff]
      %v6806 = vld [vmem:[#allocation2 + $0x4a] sm:$0xff]
      %v6807 = vld [vmem:[#allocation2 + $0x52] sm:$0xff]
      %v6808 = vld [vmem:[#allocation2 + $0x5a] sm:$0xff]
      %v6809 = vld [vmem:[#allocation2 + $0x62] sm:$0xff]
      %v6810 = vld [vmem:[#allocation2 + $0x6a] sm:$0xff]
      %v6811 = vld [vmem:[#allocation2 + $0x72] sm:$0xff]
      %v6812 = vld [vmem:[#allocation2 + $0x7a] sm:$0xff]
      %v6813 = vld [vmem:[#allocation2 + $0x82] sm:$0xff]
      %v6814 = vld [vmem:[#allocation2 + $0x8a] sm:$0xff]
      %v6815 = vld [vmem:[#allocation2 + $0x92] sm:$0xff]
      %v6816 = vld [vmem:[#allocation2 + $0x9a] sm:$0xff]
      %v6817 = vld [vmem:[#allocation2 + $0xa2] sm:$0xff]
      %v6818 = vld [vmem:[#allocation2 + $0xaa] sm:$0xff]
      %v6819 = vld [vmem:[#allocation2 + $0xb2] sm:$0xff]
      %v6820 = vld [vmem:[#allocation2 + $0xba] sm:$0xff]
      %v6821 = vld [vmem:[#allocation2 + $0xc2] sm:$0xff]
      %v6822 = vld [vmem:[#allocation2 + $0xca] sm:$0xff]
      %v6823 = vld [vmem:[#allocation2 + $0xd2] sm:$0xff]
      %v6824 = vld [vmem:[#allocation2 + $0xda] sm:$0xff]
      %v6825 = vld [vmem:[#allocation2 + $0xe2] sm:$0xff]
      %v6826 = vld [vmem:[#allocation2 + $0xea] sm:$0xff]
      %v6827 = vld [vmem:[#allocation2 + $0xf2] sm:$0xff]
      %v6828 = vld [vmem:[#allocation2 + $0xfa] sm:$0xff]
      %v6829 = vld [vmem:[#allocation2 + $0x102] sm:$0xff]
      %v6830 = vld [vmem:[#allocation2 + $0x10a] sm:$0xff]
      %v6831 = vld [vmem:[#allocation2 + $0x112] sm:$0xff]
      %v6832 = vld [vmem:[#allocation2 + $0x11a] sm:$0xff]
      %v6833 = vld [vmem:[#allocation2 + $0x122] sm:$0xff]
      %v6834 = vld [vmem:[#allocation2 + $0x12a] sm:$0xff]
      %v6835 = vld [vmem:[#allocation2 + $0x132] sm:$0xff]
      %v6836 = vld [vmem:[#allocation2 + $0x13a] sm:$0xff]
      %v6837 = vld [vmem:[#allocation2 + $0x142] sm:$0xff]
      %v6838 = vld [vmem:[#allocation2 + $0x14a] sm:$0xff]
      %v6839 = vld [vmem:[#allocation2 + $0x152] sm:$0xff]
      %v6840 = vld [vmem:[#allocation2 + $0x15a] sm:$0xff]
      %v6841 = vld [vmem:[#allocation2 + $0x162] sm:$0xff]
      %v6842 = vld [vmem:[#allocation2 + $0x16a] sm:$0xff]
      %v6843 = vpack.c.bf16 %v6803, %v6802
      %v6844 = vpack.c.bf16 %v6805, %v6804
      %v6845 = vpack.c.bf16 %v6807, %v6806
      %v6846 = vpack.c.bf16 %v6809, %v6808
      %v6847 = vpack.c.bf16 %v6811, %v6810
      %v6848 = vpack.c.bf16 %v6813, %v6812
      %v6849 = vpack.c.bf16 %v6815, %v6814
      %v6850 = vpack.c.bf16 %v6817, %v6816
      %v6851 = vpack.c.bf16 %v6819, %v6818
      %v6852 = vpack.c.bf16 %v6821, %v6820
      %v6853 = vpack.c.bf16 %v6823, %v6822
      %v6854 = vpack.c.bf16 %v6825, %v6824
      %v6855 = vpack.c.bf16 %v6827, %v6826
      %v6856 = vpack.c.bf16 %v6829, %v6828
      %v6857 = vpack.c.bf16 %v6831, %v6830
      %v6858 = vpack.c.bf16 %v6833, %v6832
      %v6859 = vpack.c.bf16 %v6835, %v6834
      %v6860 = vpack.c.bf16 %v6837, %v6836
      %v6861 = vpack.c.bf16 %v6839, %v6838
      %v6862 = vpack.c.bf16 %v6841, %v6840
      %v6863 = vpack.c.bf16 %v6842, %v6842
      %s6864 = scalar_lea.vmem %s3, 84
      %v6865 = vld [vmem:[%s6864] sm:$0xf]
      %v6866 = vld [vmem:[%s6864 + $0x4] sm:$0xf]
      %v6867 = vld [vmem:[%s6864 + $0x8] sm:$0xf]
      %v6871 = vunpack.c.l.b16 %v6865
      %v6872 = vunpack.c.l.b16 %v6866
      %v6873 = vunpack.c.l.b16 %v6867
      %v6874 = vpack.c.b16 %v6872, %v6871
      %v6875 = vpack.c.b16 %v6873, %v6873
      %v6878 = vsel %vm4349, %v6843, 0
      %v6881 = vsel %vm4349, %v6844, 0
      %v6884 = vsel %vm4349, %v6845, 0
      %v6887 = vsel %vm4349, %v6846, 0
      %v6890 = vsel %vm4349, %v6847, 0
      %v6893 = vsel %vm4349, %v6848, 0
      %v6896 = vsel %vm4349, %v6849, 0
      %v6899 = vsel %vm4349, %v6850, 0
      %v6902 = vsel %vm4349, %v6851, 0
      %v6905 = vsel %vm4349, %v6852, 0
      %v6908 = vsel %vm4349, %v6853, 0
      %v6911 = vsel %vm4349, %v6854, 0
      %v6914 = vsel %vm4349, %v6855, 0
      %v6917 = vsel %vm4349, %v6856, 0
      %v6920 = vsel %vm4349, %v6857, 0
      %v6923 = vsel %vm4349, %v6858, 0
      %v6926 = vsel %vm4349, %v6859, 0
      %v6929 = vsel %vm4349, %v6860, 0
      %v6932 = vsel %vm4349, %v6861, 0
      %v6935 = vsel %vm4349, %v6862, 0
      %v6938 = vsel %vm4349, %v6863, 0
      %v6941 = vsel %vm4413, %v6875, 0
      %6943 = vmatprep.subr.bf16.mxu0 0
      %6944 = vmatpush1.bf16.msra.mxu0 0
      %6945 = vmatprep.subr.bf16.mxu0 0
      %6946 = vmatpush1.bf16.msra.mxu0 0
      %6947 = vmatprep.subr.bf16.mxu0 0
      %6948 = vmatpush1.bf16.msra.mxu0 0
      %6949 = vmatprep.subr.bf16.mxu0 0
      %6950 = vmatpush1.bf16.msra.mxu0 0
      %6951 = vmatprep.subr.bf16.mxu0 0
      %6952 = vmatpush1.bf16.msra.mxu0 0
      %6953 = vmatprep.subr.bf16.mxu0 0
      %6954 = vmatpush1.bf16.msra.mxu0 0
      %6955 = vmatprep.subr.bf16.mxu0 0
      %6956 = vmatpush1.bf16.msra.mxu0 %v6941
      %6957 = vmatprep.subr.bf16.mxu0 0
      %6958 = vmatpush1.bf16.msra.mxu0 %v6874
      %6959 = vmatprep.subr.bf16.mxu0 0
      %6960 = vmatpush2.bf16.msra.mxu0 0
      %6961 = vmatprep.subr.bf16.mxu0 0
      %6962 = vmatpush2.bf16.msra.mxu0 0
      %6963 = vmatprep.subr.bf16.mxu0 0
      %6964 = vmatpush2.bf16.msra.mxu0 0
      %6965 = vmatprep.subr.bf16.mxu0 0
      %6966 = vmatpush2.bf16.msra.mxu0 0
      %6967 = vmatprep.subr.bf16.mxu0 0
      %6968 = vmatpush2.bf16.msra.mxu0 0
      %6969 = vmatprep.subr.bf16.mxu0 0
      %6970 = vmatpush2.bf16.msra.mxu0 0
      %6971 = vmatprep.subr.bf16.mxu0 0
      %6972 = vmatpush2.bf16.msra.mxu0 0
      %6973 = vmatprep.subr.bf16.mxu0 0
      %6974 = vmatpush2.bf16.msra.mxu0 0
      %6975 = vmatprep.mubr.bf16.mxu0 0
      %6976 = vmatmul.mubr.bf16.gmra.mxu0 %v6878
      %v6977 = vpop.f32.mrf.mxu0
      %v6978 = vadd.f32 0.0, %v6977
      %v6979 = vpop.f32.mrf.mxu0
      %v6980 = vpop.f32.mrf.mxu0
      %v6981 = vadd.f32 0.0, %v6980
      %v6982 = vpop.f32.mrf.mxu0
      %6983 = vmatprep.mubr.bf16.mxu0 0
      %6984 = vmatmul.mubr.bf16.gmra.mxu0 %v6881
      %v6985 = vpop.f32.mrf.mxu0
      %v6986 = vadd.f32 0.0, %v6985
      %v6987 = vpop.f32.mrf.mxu0
      %v6988 = vpop.f32.mrf.mxu0
      %v6989 = vadd.f32 0.0, %v6988
      %v6990 = vpop.f32.mrf.mxu0
      %6991 = vmatprep.mubr.bf16.mxu0 0
      %6992 = vmatmul.mubr.bf16.gmra.mxu0 %v6884
      %v6993 = vpop.f32.mrf.mxu0
      %v6994 = vadd.f32 0.0, %v6993
      %v6995 = vpop.f32.mrf.mxu0
      %v6996 = vpop.f32.mrf.mxu0
      %v6997 = vadd.f32 0.0, %v6996
      %v6998 = vpop.f32.mrf.mxu0
      %6999 = vmatprep.mubr.bf16.mxu0 0
      %7000 = vmatmul.mubr.bf16.gmra.mxu0 %v6887
      %v7001 = vpop.f32.mrf.mxu0
      %v7002 = vadd.f32 0.0, %v7001
      %v7003 = vpop.f32.mrf.mxu0
      %v7004 = vpop.f32.mrf.mxu0
      %v7005 = vadd.f32 0.0, %v7004
      %v7006 = vpop.f32.mrf.mxu0
      %7007 = vmatprep.mubr.bf16.mxu0 0
      %7008 = vmatmul.mubr.bf16.gmra.mxu0 %v6890
      %v7009 = vpop.f32.mrf.mxu0
      %v7010 = vadd.f32 0.0, %v7009
      %v7011 = vpop.f32.mrf.mxu0
      %v7012 = vpop.f32.mrf.mxu0
      %v7013 = vadd.f32 0.0, %v7012
      %v7014 = vpop.f32.mrf.mxu0
      %7015 = vmatprep.mubr.bf16.mxu0 0
      %7016 = vmatmul.mubr.bf16.gmra.mxu0 %v6893
      %v7017 = vpop.f32.mrf.mxu0
      %v7018 = vadd.f32 0.0, %v7017
      %v7019 = vpop.f32.mrf.mxu0
      %v7020 = vpop.f32.mrf.mxu0
      %v7021 = vadd.f32 0.0, %v7020
      %v7022 = vpop.f32.mrf.mxu0
      %7023 = vmatprep.mubr.bf16.mxu0 0
      %7024 = vmatmul.mubr.bf16.gmra.mxu0 %v6896
      %v7025 = vpop.f32.mrf.mxu0
      %v7026 = vadd.f32 0.0, %v7025
      %v7027 = vpop.f32.mrf.mxu0
      %v7028 = vpop.f32.mrf.mxu0
      %v7029 = vadd.f32 0.0, %v7028
      %v7030 = vpop.f32.mrf.mxu0
      %7031 = vmatprep.mubr.bf16.mxu0 0
      %7032 = vmatmul.mubr.bf16.gmra.mxu0 %v6899
      %v7033 = vpop.f32.mrf.mxu0
      %v7034 = vadd.f32 0.0, %v7033
      %v7035 = vpop.f32.mrf.mxu0
      %v7036 = vpop.f32.mrf.mxu0
      %v7037 = vadd.f32 0.0, %v7036
      %v7038 = vpop.f32.mrf.mxu0
      %7039 = vmatprep.mubr.bf16.mxu0 0
      %7040 = vmatmul.mubr.bf16.gmra.mxu0 %v6902
      %v7041 = vpop.f32.mrf.mxu0
      %v7042 = vadd.f32 0.0, %v7041
      %v7043 = vpop.f32.mrf.mxu0
      %v7044 = vpop.f32.mrf.mxu0
      %v7045 = vadd.f32 0.0, %v7044
      %v7046 = vpop.f32.mrf.mxu0
      %7047 = vmatprep.mubr.bf16.mxu0 0
      %7048 = vmatmul.mubr.bf16.gmra.mxu0 %v6905
      %v7049 = vpop.f32.mrf.mxu0
      %v7050 = vadd.f32 0.0, %v7049
      %v7051 = vpop.f32.mrf.mxu0
      %v7052 = vpop.f32.mrf.mxu0
      %v7053 = vadd.f32 0.0, %v7052
      %v7054 = vpop.f32.mrf.mxu0
      %7055 = vmatprep.mubr.bf16.mxu0 0
      %7056 = vmatmul.mubr.bf16.gmra.mxu0 %v6908
      %v7057 = vpop.f32.mrf.mxu0
      %v7058 = vadd.f32 0.0, %v7057
      %v7059 = vpop.f32.mrf.mxu0
      %v7060 = vpop.f32.mrf.mxu0
      %v7061 = vadd.f32 0.0, %v7060
      %v7062 = vpop.f32.mrf.mxu0
      %7063 = vmatprep.mubr.bf16.mxu0 0
      %7064 = vmatmul.mubr.bf16.gmra.mxu0 %v6911
      %v7065 = vpop.f32.mrf.mxu0
      %v7066 = vadd.f32 0.0, %v7065
      %v7067 = vpop.f32.mrf.mxu0
      %v7068 = vpop.f32.mrf.mxu0
      %v7069 = vadd.f32 0.0, %v7068
      %v7070 = vpop.f32.mrf.mxu0
      %7071 = vmatprep.mubr.bf16.mxu0 0
      %7072 = vmatmul.mubr.bf16.gmra.mxu0 %v6914
      %v7073 = vpop.f32.mrf.mxu0
      %v7074 = vadd.f32 0.0, %v7073
      %v7075 = vpop.f32.mrf.mxu0
      %v7076 = vpop.f32.mrf.mxu0
      %v7077 = vadd.f32 0.0, %v7076
      %v7078 = vpop.f32.mrf.mxu0
      %7079 = vmatprep.mubr.bf16.mxu0 0
      %7080 = vmatmul.mubr.bf16.gmra.mxu0 %v6917
      %v7081 = vpop.f32.mrf.mxu0
      %v7082 = vadd.f32 0.0, %v7081
      %v7083 = vpop.f32.mrf.mxu0
      %v7084 = vpop.f32.mrf.mxu0
      %v7085 = vadd.f32 0.0, %v7084
      %v7086 = vpop.f32.mrf.mxu0
      %7087 = vmatprep.mubr.bf16.mxu0 0
      %7088 = vmatmul.mubr.bf16.gmra.mxu0 %v6920
      %v7089 = vpop.f32.mrf.mxu0
      %v7090 = vadd.f32 0.0, %v7089
      %v7091 = vpop.f32.mrf.mxu0
      %v7092 = vpop.f32.mrf.mxu0
      %v7093 = vadd.f32 0.0, %v7092
      %v7094 = vpop.f32.mrf.mxu0
      %7095 = vmatprep.mubr.bf16.mxu0 0
      %7096 = vmatmul.mubr.bf16.gmra.mxu0 %v6923
      %v7097 = vpop.f32.mrf.mxu0
      %v7098 = vadd.f32 0.0, %v7097
      %v7099 = vpop.f32.mrf.mxu0
      %v7100 = vpop.f32.mrf.mxu0
      %v7101 = vadd.f32 0.0, %v7100
      %v7102 = vpop.f32.mrf.mxu0
      %7103 = vmatprep.mubr.bf16.mxu0 0
      %7104 = vmatmul.mubr.bf16.gmra.mxu0 %v6926
      %v7105 = vpop.f32.mrf.mxu0
      %v7106 = vadd.f32 0.0, %v7105
      %v7107 = vpop.f32.mrf.mxu0
      %v7108 = vpop.f32.mrf.mxu0
      %v7109 = vadd.f32 0.0, %v7108
      %v7110 = vpop.f32.mrf.mxu0
      %7111 = vmatprep.mubr.bf16.mxu0 0
      %7112 = vmatmul.mubr.bf16.gmra.mxu0 %v6929
      %v7113 = vpop.f32.mrf.mxu0
      %v7114 = vadd.f32 0.0, %v7113
      %v7115 = vpop.f32.mrf.mxu0
      %v7116 = vpop.f32.mrf.mxu0
      %v7117 = vadd.f32 0.0, %v7116
      %v7118 = vpop.f32.mrf.mxu0
      %7119 = vmatprep.mubr.bf16.mxu0 0
      %7120 = vmatmul.mubr.bf16.gmra.mxu0 %v6932
      %v7121 = vpop.f32.mrf.mxu0
      %v7122 = vadd.f32 0.0, %v7121
      %v7123 = vpop.f32.mrf.mxu0
      %v7124 = vpop.f32.mrf.mxu0
      %v7125 = vadd.f32 0.0, %v7124
      %v7126 = vpop.f32.mrf.mxu0
      %7127 = vmatprep.mubr.bf16.mxu0 0
      %7128 = vmatmul.mubr.bf16.gmra.mxu0 %v6935
      %v7129 = vpop.f32.mrf.mxu0
      %v7130 = vadd.f32 0.0, %v7129
      %v7131 = vpop.f32.mrf.mxu0
      %v7132 = vpop.f32.mrf.mxu0
      %v7133 = vadd.f32 0.0, %v7132
      %v7134 = vpop.f32.mrf.mxu0
      %7135 = vmatprep.mubr.bf16.mxu0 0
      %7136 = vmatmul.mubr.bf16.gmra.mxu0 %v6938
      %v7137 = vpop.f32.mrf.mxu0
      %v7138 = vadd.f32 0.0, %v7137
      %v7139 = vpop.f32.mrf.mxu0
      %v7140 = vpop.f32.mrf.mxu0
      %v7141 = vpop.f32.mrf.mxu0
      %7142 = vdwg.mxu0
      %v7143 = vadd.f32 %v6761, %v6978
      %v7144 = vadd.f32 %v6762, %v6981
      %v7145 = vadd.f32 %v6763, %v6986
      %v7146 = vadd.f32 %v6764, %v6989
      %v7147 = vadd.f32 %v6765, %v6994
      %v7148 = vadd.f32 %v6766, %v6997
      %v7149 = vadd.f32 %v6767, %v7002
      %v7150 = vadd.f32 %v6768, %v7005
      %v7151 = vadd.f32 %v6769, %v7010
      %v7152 = vadd.f32 %v6770, %v7013
      %v7153 = vadd.f32 %v6771, %v7018
      %v7154 = vadd.f32 %v6772, %v7021
      %v7155 = vadd.f32 %v6773, %v7026
      %v7156 = vadd.f32 %v6774, %v7029
      %v7157 = vadd.f32 %v6775, %v7034
      %v7158 = vadd.f32 %v6776, %v7037
      %v7159 = vadd.f32 %v6777, %v7042
      %v7160 = vadd.f32 %v6778, %v7045
      %v7161 = vadd.f32 %v6779, %v7050
      %v7162 = vadd.f32 %v6780, %v7053
      %v7163 = vadd.f32 %v6781, %v7058
      %v7164 = vadd.f32 %v6782, %v7061
      %v7165 = vadd.f32 %v6783, %v7066
      %v7166 = vadd.f32 %v6784, %v7069
      %v7167 = vadd.f32 %v6785, %v7074
      %v7168 = vadd.f32 %v6786, %v7077
      %v7169 = vadd.f32 %v6787, %v7082
      %v7170 = vadd.f32 %v6788, %v7085
      %v7171 = vadd.f32 %v6789, %v7090
      %v7172 = vadd.f32 %v6790, %v7093
      %v7173 = vadd.f32 %v6791, %v7098
      %v7174 = vadd.f32 %v6792, %v7101
      %v7175 = vadd.f32 %v6793, %v7106
      %v7176 = vadd.f32 %v6794, %v7109
      %v7177 = vadd.f32 %v6795, %v7114
      %v7178 = vadd.f32 %v6796, %v7117
      %v7179 = vadd.f32 %v6797, %v7122
      %v7180 = vadd.f32 %v6798, %v7125
      %v7181 = vadd.f32 %v6799, %v7130
      %v7182 = vadd.f32 %v6800, %v7133
      %v7183 = vadd.f32 %v6801, %v7138
      %v7184 = vld [vmem:[#allocation2 + $0x2b] sm:$0xff]
      %v7185 = vld [vmem:[#allocation2 + $0x33] sm:$0xff]
      %v7186 = vld [vmem:[#allocation2 + $0x3b] sm:$0xff]
      %v7187 = vld [vmem:[#allocation2 + $0x43] sm:$0xff]
      %v7188 = vld [vmem:[#allocation2 + $0x4b] sm:$0xff]
      %v7189 = vld [vmem:[#allocation2 + $0x53] sm:$0xff]
      %v7190 = vld [vmem:[#allocation2 + $0x5b] sm:$0xff]
      %v7191 = vld [vmem:[#allocation2 + $0x63] sm:$0xff]
      %v7192 = vld [vmem:[#allocation2 + $0x6b] sm:$0xff]
      %v7193 = vld [vmem:[#allocation2 + $0x73] sm:$0xff]
      %v7194 = vld [vmem:[#allocation2 + $0x7b] sm:$0xff]
      %v7195 = vld [vmem:[#allocation2 + $0x83] sm:$0xff]
      %v7196 = vld [vmem:[#allocation2 + $0x8b] sm:$0xff]
      %v7197 = vld [vmem:[#allocation2 + $0x93] sm:$0xff]
      %v7198 = vld [vmem:[#allocation2 + $0x9b] sm:$0xff]
      %v7199 = vld [vmem:[#allocation2 + $0xa3] sm:$0xff]
      %v7200 = vld [vmem:[#allocation2 + $0xab] sm:$0xff]
      %v7201 = vld [vmem:[#allocation2 + $0xb3] sm:$0xff]
      %v7202 = vld [vmem:[#allocation2 + $0xbb] sm:$0xff]
      %v7203 = vld [vmem:[#allocation2 + $0xc3] sm:$0xff]
      %v7204 = vld [vmem:[#allocation2 + $0xcb] sm:$0xff]
      %v7205 = vld [vmem:[#allocation2 + $0xd3] sm:$0xff]
      %v7206 = vld [vmem:[#allocation2 + $0xdb] sm:$0xff]
      %v7207 = vld [vmem:[#allocation2 + $0xe3] sm:$0xff]
      %v7208 = vld [vmem:[#allocation2 + $0xeb] sm:$0xff]
      %v7209 = vld [vmem:[#allocation2 + $0xf3] sm:$0xff]
      %v7210 = vld [vmem:[#allocation2 + $0xfb] sm:$0xff]
      %v7211 = vld [vmem:[#allocation2 + $0x103] sm:$0xff]
      %v7212 = vld [vmem:[#allocation2 + $0x10b] sm:$0xff]
      %v7213 = vld [vmem:[#allocation2 + $0x113] sm:$0xff]
      %v7214 = vld [vmem:[#allocation2 + $0x11b] sm:$0xff]
      %v7215 = vld [vmem:[#allocation2 + $0x123] sm:$0xff]
      %v7216 = vld [vmem:[#allocation2 + $0x12b] sm:$0xff]
      %v7217 = vld [vmem:[#allocation2 + $0x133] sm:$0xff]
      %v7218 = vld [vmem:[#allocation2 + $0x13b] sm:$0xff]
      %v7219 = vld [vmem:[#allocation2 + $0x143] sm:$0xff]
      %v7220 = vld [vmem:[#allocation2 + $0x14b] sm:$0xff]
      %v7221 = vld [vmem:[#allocation2 + $0x153] sm:$0xff]
      %v7222 = vld [vmem:[#allocation2 + $0x15b] sm:$0xff]
      %v7223 = vld [vmem:[#allocation2 + $0x163] sm:$0xff]
      %v7224 = vld [vmem:[#allocation2 + $0x16b] sm:$0xff]
      %v7225 = vpack.c.bf16 %v7185, %v7184
      %v7226 = vpack.c.bf16 %v7187, %v7186
      %v7227 = vpack.c.bf16 %v7189, %v7188
      %v7228 = vpack.c.bf16 %v7191, %v7190
      %v7229 = vpack.c.bf16 %v7193, %v7192
      %v7230 = vpack.c.bf16 %v7195, %v7194
      %v7231 = vpack.c.bf16 %v7197, %v7196
      %v7232 = vpack.c.bf16 %v7199, %v7198
      %v7233 = vpack.c.bf16 %v7201, %v7200
      %v7234 = vpack.c.bf16 %v7203, %v7202
      %v7235 = vpack.c.bf16 %v7205, %v7204
      %v7236 = vpack.c.bf16 %v7207, %v7206
      %v7237 = vpack.c.bf16 %v7209, %v7208
      %v7238 = vpack.c.bf16 %v7211, %v7210
      %v7239 = vpack.c.bf16 %v7213, %v7212
      %v7240 = vpack.c.bf16 %v7215, %v7214
      %v7241 = vpack.c.bf16 %v7217, %v7216
      %v7242 = vpack.c.bf16 %v7219, %v7218
      %v7243 = vpack.c.bf16 %v7221, %v7220
      %v7244 = vpack.c.bf16 %v7223, %v7222
      %v7245 = vpack.c.bf16 %v7224, %v7224
      %s7246 = scalar_lea.vmem %s3, 96
      %v7247 = vld [vmem:[%s7246] sm:$0xf]
      %v7248 = vld [vmem:[%s7246 + $0x4] sm:$0xf]
      %v7249 = vld [vmem:[%s7246 + $0x8] sm:$0xf]
      %v7253 = vunpack.c.l.b16 %v7247
      %v7254 = vunpack.c.l.b16 %v7248
      %v7255 = vunpack.c.l.b16 %v7249
      %v7256 = vpack.c.b16 %v7254, %v7253
      %v7257 = vpack.c.b16 %v7255, %v7255
      %v7260 = vsel %vm4349, %v7225, 0
      %v7263 = vsel %vm4349, %v7226, 0
      %v7266 = vsel %vm4349, %v7227, 0
      %v7269 = vsel %vm4349, %v7228, 0
      %v7272 = vsel %vm4349, %v7229, 0
      %v7275 = vsel %vm4349, %v7230, 0
      %v7278 = vsel %vm4349, %v7231, 0
      %v7281 = vsel %vm4349, %v7232, 0
      %v7284 = vsel %vm4349, %v7233, 0
      %v7287 = vsel %vm4349, %v7234, 0
      %v7290 = vsel %vm4349, %v7235, 0
      %v7293 = vsel %vm4349, %v7236, 0
      %v7296 = vsel %vm4349, %v7237, 0
      %v7299 = vsel %vm4349, %v7238, 0
      %v7302 = vsel %vm4349, %v7239, 0
      %v7305 = vsel %vm4349, %v7240, 0
      %v7308 = vsel %vm4349, %v7241, 0
      %v7311 = vsel %vm4349, %v7242, 0
      %v7314 = vsel %vm4349, %v7243, 0
      %v7317 = vsel %vm4349, %v7244, 0
      %v7320 = vsel %vm4349, %v7245, 0
      %v7323 = vsel %vm4413, %v7257, 0
      %7325 = vmatprep.subr.bf16.mxu0 0
      %7326 = vmatpush1.bf16.msra.mxu0 0
      %7327 = vmatprep.subr.bf16.mxu0 0
      %7328 = vmatpush1.bf16.msra.mxu0 0
      %7329 = vmatprep.subr.bf16.mxu0 0
      %7330 = vmatpush1.bf16.msra.mxu0 0
      %7331 = vmatprep.subr.bf16.mxu0 0
      %7332 = vmatpush1.bf16.msra.mxu0 0
      %7333 = vmatprep.subr.bf16.mxu0 0
      %7334 = vmatpush1.bf16.msra.mxu0 0
      %7335 = vmatprep.subr.bf16.mxu0 0
      %7336 = vmatpush1.bf16.msra.mxu0 0
      %7337 = vmatprep.subr.bf16.mxu0 0
      %7338 = vmatpush1.bf16.msra.mxu0 %v7323
      %7339 = vmatprep.subr.bf16.mxu0 0
      %7340 = vmatpush1.bf16.msra.mxu0 %v7256
      %7341 = vmatprep.subr.bf16.mxu0 0
      %7342 = vmatpush2.bf16.msra.mxu0 0
      %7343 = vmatprep.subr.bf16.mxu0 0
      %7344 = vmatpush2.bf16.msra.mxu0 0
      %7345 = vmatprep.subr.bf16.mxu0 0
      %7346 = vmatpush2.bf16.msra.mxu0 0
      %7347 = vmatprep.subr.bf16.mxu0 0
      %7348 = vmatpush2.bf16.msra.mxu0 0
      %7349 = vmatprep.subr.bf16.mxu0 0
      %7350 = vmatpush2.bf16.msra.mxu0 0
      %7351 = vmatprep.subr.bf16.mxu0 0
      %7352 = vmatpush2.bf16.msra.mxu0 0
      %7353 = vmatprep.subr.bf16.mxu0 0
      %7354 = vmatpush2.bf16.msra.mxu0 0
      %7355 = vmatprep.subr.bf16.mxu0 0
      %7356 = vmatpush2.bf16.msra.mxu0 0
      %7357 = vmatprep.mubr.bf16.mxu0 0
      %7358 = vmatmul.mubr.bf16.gmra.mxu0 %v7260
      %v7359 = vpop.f32.mrf.mxu0
      %v7360 = vadd.f32 0.0, %v7359
      %v7361 = vpop.f32.mrf.mxu0
      %v7362 = vpop.f32.mrf.mxu0
      %v7363 = vadd.f32 0.0, %v7362
      %v7364 = vpop.f32.mrf.mxu0
      %7365 = vmatprep.mubr.bf16.mxu0 0
      %7366 = vmatmul.mubr.bf16.gmra.mxu0 %v7263
      %v7367 = vpop.f32.mrf.mxu0
      %v7368 = vadd.f32 0.0, %v7367
      %v7369 = vpop.f32.mrf.mxu0
      %v7370 = vpop.f32.mrf.mxu0
      %v7371 = vadd.f32 0.0, %v7370
      %v7372 = vpop.f32.mrf.mxu0
      %7373 = vmatprep.mubr.bf16.mxu0 0
      %7374 = vmatmul.mubr.bf16.gmra.mxu0 %v7266
      %v7375 = vpop.f32.mrf.mxu0
      %v7376 = vadd.f32 0.0, %v7375
      %v7377 = vpop.f32.mrf.mxu0
      %v7378 = vpop.f32.mrf.mxu0
      %v7379 = vadd.f32 0.0, %v7378
      %v7380 = vpop.f32.mrf.mxu0
      %7381 = vmatprep.mubr.bf16.mxu0 0
      %7382 = vmatmul.mubr.bf16.gmra.mxu0 %v7269
      %v7383 = vpop.f32.mrf.mxu0
      %v7384 = vadd.f32 0.0, %v7383
      %v7385 = vpop.f32.mrf.mxu0
      %v7386 = vpop.f32.mrf.mxu0
      %v7387 = vadd.f32 0.0, %v7386
      %v7388 = vpop.f32.mrf.mxu0
      %7389 = vmatprep.mubr.bf16.mxu0 0
      %7390 = vmatmul.mubr.bf16.gmra.mxu0 %v7272
      %v7391 = vpop.f32.mrf.mxu0
      %v7392 = vadd.f32 0.0, %v7391
      %v7393 = vpop.f32.mrf.mxu0
      %v7394 = vpop.f32.mrf.mxu0
      %v7395 = vadd.f32 0.0, %v7394
      %v7396 = vpop.f32.mrf.mxu0
      %7397 = vmatprep.mubr.bf16.mxu0 0
      %7398 = vmatmul.mubr.bf16.gmra.mxu0 %v7275
      %v7399 = vpop.f32.mrf.mxu0
      %v7400 = vadd.f32 0.0, %v7399
      %v7401 = vpop.f32.mrf.mxu0
      %v7402 = vpop.f32.mrf.mxu0
      %v7403 = vadd.f32 0.0, %v7402
      %v7404 = vpop.f32.mrf.mxu0
      %7405 = vmatprep.mubr.bf16.mxu0 0
      %7406 = vmatmul.mubr.bf16.gmra.mxu0 %v7278
      %v7407 = vpop.f32.mrf.mxu0
      %v7408 = vadd.f32 0.0, %v7407
      %v7409 = vpop.f32.mrf.mxu0
      %v7410 = vpop.f32.mrf.mxu0
      %v7411 = vadd.f32 0.0, %v7410
      %v7412 = vpop.f32.mrf.mxu0
      %7413 = vmatprep.mubr.bf16.mxu0 0
      %7414 = vmatmul.mubr.bf16.gmra.mxu0 %v7281
      %v7415 = vpop.f32.mrf.mxu0
      %v7416 = vadd.f32 0.0, %v7415
      %v7417 = vpop.f32.mrf.mxu0
      %v7418 = vpop.f32.mrf.mxu0
      %v7419 = vadd.f32 0.0, %v7418
      %v7420 = vpop.f32.mrf.mxu0
      %7421 = vmatprep.mubr.bf16.mxu0 0
      %7422 = vmatmul.mubr.bf16.gmra.mxu0 %v7284
      %v7423 = vpop.f32.mrf.mxu0
      %v7424 = vadd.f32 0.0, %v7423
      %v7425 = vpop.f32.mrf.mxu0
      %v7426 = vpop.f32.mrf.mxu0
      %v7427 = vadd.f32 0.0, %v7426
      %v7428 = vpop.f32.mrf.mxu0
      %7429 = vmatprep.mubr.bf16.mxu0 0
      %7430 = vmatmul.mubr.bf16.gmra.mxu0 %v7287
      %v7431 = vpop.f32.mrf.mxu0
      %v7432 = vadd.f32 0.0, %v7431
      %v7433 = vpop.f32.mrf.mxu0
      %v7434 = vpop.f32.mrf.mxu0
      %v7435 = vadd.f32 0.0, %v7434
      %v7436 = vpop.f32.mrf.mxu0
      %7437 = vmatprep.mubr.bf16.mxu0 0
      %7438 = vmatmul.mubr.bf16.gmra.mxu0 %v7290
      %v7439 = vpop.f32.mrf.mxu0
      %v7440 = vadd.f32 0.0, %v7439
      %v7441 = vpop.f32.mrf.mxu0
      %v7442 = vpop.f32.mrf.mxu0
      %v7443 = vadd.f32 0.0, %v7442
      %v7444 = vpop.f32.mrf.mxu0
      %7445 = vmatprep.mubr.bf16.mxu0 0
      %7446 = vmatmul.mubr.bf16.gmra.mxu0 %v7293
      %v7447 = vpop.f32.mrf.mxu0
      %v7448 = vadd.f32 0.0, %v7447
      %v7449 = vpop.f32.mrf.mxu0
      %v7450 = vpop.f32.mrf.mxu0
      %v7451 = vadd.f32 0.0, %v7450
      %v7452 = vpop.f32.mrf.mxu0
      %7453 = vmatprep.mubr.bf16.mxu0 0
      %7454 = vmatmul.mubr.bf16.gmra.mxu0 %v7296
      %v7455 = vpop.f32.mrf.mxu0
      %v7456 = vadd.f32 0.0, %v7455
      %v7457 = vpop.f32.mrf.mxu0
      %v7458 = vpop.f32.mrf.mxu0
      %v7459 = vadd.f32 0.0, %v7458
      %v7460 = vpop.f32.mrf.mxu0
      %7461 = vmatprep.mubr.bf16.mxu0 0
      %7462 = vmatmul.mubr.bf16.gmra.mxu0 %v7299
      %v7463 = vpop.f32.mrf.mxu0
      %v7464 = vadd.f32 0.0, %v7463
      %v7465 = vpop.f32.mrf.mxu0
      %v7466 = vpop.f32.mrf.mxu0
      %v7467 = vadd.f32 0.0, %v7466
      %v7468 = vpop.f32.mrf.mxu0
      %7469 = vmatprep.mubr.bf16.mxu0 0
      %7470 = vmatmul.mubr.bf16.gmra.mxu0 %v7302
      %v7471 = vpop.f32.mrf.mxu0
      %v7472 = vadd.f32 0.0, %v7471
      %v7473 = vpop.f32.mrf.mxu0
      %v7474 = vpop.f32.mrf.mxu0
      %v7475 = vadd.f32 0.0, %v7474
      %v7476 = vpop.f32.mrf.mxu0
      %7477 = vmatprep.mubr.bf16.mxu0 0
      %7478 = vmatmul.mubr.bf16.gmra.mxu0 %v7305
      %v7479 = vpop.f32.mrf.mxu0
      %v7480 = vadd.f32 0.0, %v7479
      %v7481 = vpop.f32.mrf.mxu0
      %v7482 = vpop.f32.mrf.mxu0
      %v7483 = vadd.f32 0.0, %v7482
      %v7484 = vpop.f32.mrf.mxu0
      %7485 = vmatprep.mubr.bf16.mxu0 0
      %7486 = vmatmul.mubr.bf16.gmra.mxu0 %v7308
      %v7487 = vpop.f32.mrf.mxu0
      %v7488 = vadd.f32 0.0, %v7487
      %v7489 = vpop.f32.mrf.mxu0
      %v7490 = vpop.f32.mrf.mxu0
      %v7491 = vadd.f32 0.0, %v7490
      %v7492 = vpop.f32.mrf.mxu0
      %7493 = vmatprep.mubr.bf16.mxu0 0
      %7494 = vmatmul.mubr.bf16.gmra.mxu0 %v7311
      %v7495 = vpop.f32.mrf.mxu0
      %v7496 = vadd.f32 0.0, %v7495
      %v7497 = vpop.f32.mrf.mxu0
      %v7498 = vpop.f32.mrf.mxu0
      %v7499 = vadd.f32 0.0, %v7498
      %v7500 = vpop.f32.mrf.mxu0
      %7501 = vmatprep.mubr.bf16.mxu0 0
      %7502 = vmatmul.mubr.bf16.gmra.mxu0 %v7314
      %v7503 = vpop.f32.mrf.mxu0
      %v7504 = vadd.f32 0.0, %v7503
      %v7505 = vpop.f32.mrf.mxu0
      %v7506 = vpop.f32.mrf.mxu0
      %v7507 = vadd.f32 0.0, %v7506
      %v7508 = vpop.f32.mrf.mxu0
      %7509 = vmatprep.mubr.bf16.mxu0 0
      %7510 = vmatmul.mubr.bf16.gmra.mxu0 %v7317
      %v7511 = vpop.f32.mrf.mxu0
      %v7512 = vadd.f32 0.0, %v7511
      %v7513 = vpop.f32.mrf.mxu0
      %v7514 = vpop.f32.mrf.mxu0
      %v7515 = vadd.f32 0.0, %v7514
      %v7516 = vpop.f32.mrf.mxu0
      %7517 = vmatprep.mubr.bf16.mxu0 0
      %7518 = vmatmul.mubr.bf16.gmra.mxu0 %v7320
      %v7519 = vpop.f32.mrf.mxu0
      %v7520 = vadd.f32 0.0, %v7519
      %v7521 = vpop.f32.mrf.mxu0
      %v7522 = vpop.f32.mrf.mxu0
      %v7523 = vpop.f32.mrf.mxu0
      %7524 = vdwg.mxu0
      %v7525 = vadd.f32 %v7143, %v7360
      %v7526 = vadd.f32 %v7144, %v7363
      %v7527 = vadd.f32 %v7145, %v7368
      %v7528 = vadd.f32 %v7146, %v7371
      %v7529 = vadd.f32 %v7147, %v7376
      %v7530 = vadd.f32 %v7148, %v7379
      %v7531 = vadd.f32 %v7149, %v7384
      %v7532 = vadd.f32 %v7150, %v7387
      %v7533 = vadd.f32 %v7151, %v7392
      %v7534 = vadd.f32 %v7152, %v7395
      %v7535 = vadd.f32 %v7153, %v7400
      %v7536 = vadd.f32 %v7154, %v7403
      %v7537 = vadd.f32 %v7155, %v7408
      %v7538 = vadd.f32 %v7156, %v7411
      %v7539 = vadd.f32 %v7157, %v7416
      %v7540 = vadd.f32 %v7158, %v7419
      %v7541 = vadd.f32 %v7159, %v7424
      %v7542 = vadd.f32 %v7160, %v7427
      %v7543 = vadd.f32 %v7161, %v7432
      %v7544 = vadd.f32 %v7162, %v7435
      %v7545 = vadd.f32 %v7163, %v7440
      %v7546 = vadd.f32 %v7164, %v7443
      %v7547 = vadd.f32 %v7165, %v7448
      %v7548 = vadd.f32 %v7166, %v7451
      %v7549 = vadd.f32 %v7167, %v7456
      %v7550 = vadd.f32 %v7168, %v7459
      %v7551 = vadd.f32 %v7169, %v7464
      %v7552 = vadd.f32 %v7170, %v7467
      %v7553 = vadd.f32 %v7171, %v7472
      %v7554 = vadd.f32 %v7172, %v7475
      %v7555 = vadd.f32 %v7173, %v7480
      %v7556 = vadd.f32 %v7174, %v7483
      %v7557 = vadd.f32 %v7175, %v7488
      %v7558 = vadd.f32 %v7176, %v7491
      %v7559 = vadd.f32 %v7177, %v7496
      %v7560 = vadd.f32 %v7178, %v7499
      %v7561 = vadd.f32 %v7179, %v7504
      %v7562 = vadd.f32 %v7180, %v7507
      %v7563 = vadd.f32 %v7181, %v7512
      %v7564 = vadd.f32 %v7182, %v7515
      %v7565 = vadd.f32 %v7183, %v7520
      %v7566 = vmax.f32 %v7525, 0.0
      %v7567 = vmax.f32 %v7526, 0.0
      %v7568 = vmax.f32 %v7527, 0.0
      %v7569 = vmax.f32 %v7528, 0.0
      %v7570 = vmax.f32 %v7529, 0.0
      %v7571 = vmax.f32 %v7530, 0.0
      %v7572 = vmax.f32 %v7531, 0.0
      %v7573 = vmax.f32 %v7532, 0.0
      %v7574 = vmax.f32 %v7533, 0.0
      %v7575 = vmax.f32 %v7534, 0.0
      %v7576 = vmax.f32 %v7535, 0.0
      %v7577 = vmax.f32 %v7536, 0.0
      %v7578 = vmax.f32 %v7537, 0.0
      %v7579 = vmax.f32 %v7538, 0.0
      %v7580 = vmax.f32 %v7539, 0.0
      %v7581 = vmax.f32 %v7540, 0.0
      %v7582 = vmax.f32 %v7541, 0.0
      %v7583 = vmax.f32 %v7542, 0.0
      %v7584 = vmax.f32 %v7543, 0.0
      %v7585 = vmax.f32 %v7544, 0.0
      %v7586 = vmax.f32 %v7545, 0.0
      %v7587 = vmax.f32 %v7546, 0.0
      %v7588 = vmax.f32 %v7547, 0.0
      %v7589 = vmax.f32 %v7548, 0.0
      %v7590 = vmax.f32 %v7549, 0.0
      %v7591 = vmax.f32 %v7550, 0.0
      %v7592 = vmax.f32 %v7551, 0.0
      %v7593 = vmax.f32 %v7552, 0.0
      %v7594 = vmax.f32 %v7553, 0.0
      %v7595 = vmax.f32 %v7554, 0.0
      %v7596 = vmax.f32 %v7555, 0.0
      %v7597 = vmax.f32 %v7556, 0.0
      %v7598 = vmax.f32 %v7557, 0.0
      %v7599 = vmax.f32 %v7558, 0.0
      %v7600 = vmax.f32 %v7559, 0.0
      %v7601 = vmax.f32 %v7560, 0.0
      %v7602 = vmax.f32 %v7561, 0.0
      %v7603 = vmax.f32 %v7562, 0.0
      %v7604 = vmax.f32 %v7563, 0.0
      %v7605 = vmax.f32 %v7564, 0.0
      %v7606 = vmax.f32 %v7565, 0.0
      %v7607 = vmul.f32 %v7566, %v3760
      %v7608 = vmul.f32 %v7567, %v3765
      %v7609 = vmul.f32 %v7568, %v3770
      %v7610 = vmul.f32 %v7569, %v3775
      %v7611 = vmul.f32 %v7570, %v3780
      %v7612 = vmul.f32 %v7571, %v3785
      %v7613 = vmul.f32 %v7572, %v3790
      %v7614 = vmul.f32 %v7573, %v3795
      %v7615 = vmul.f32 %v7574, %v3800
      %v7616 = vmul.f32 %v7575, %v3805
      %v7617 = vmul.f32 %v7576, %v3810
      %v7618 = vmul.f32 %v7577, %v3815
      %v7619 = vmul.f32 %v7578, %v3820
      %v7620 = vmul.f32 %v7579, %v3825
      %v7621 = vmul.f32 %v7580, %v3830
      %v7622 = vmul.f32 %v7581, %v3835
      %v7623 = vmul.f32 %v7582, %v3840
      %v7624 = vmul.f32 %v7583, %v3845
      %v7625 = vmul.f32 %v7584, %v3850
      %v7626 = vmul.f32 %v7585, %v3855
      %v7627 = vmul.f32 %v7586, %v3860
      %v7628 = vmul.f32 %v7587, %v3865
      %v7629 = vmul.f32 %v7588, %v3870
      %v7630 = vmul.f32 %v7589, %v3875
      %v7631 = vmul.f32 %v7590, %v3880
      %v7632 = vmul.f32 %v7591, %v3885
      %v7633 = vmul.f32 %v7592, %v3890
      %v7634 = vmul.f32 %v7593, %v3895
      %v7635 = vmul.f32 %v7594, %v3900
      %v7636 = vmul.f32 %v7595, %v3905
      %v7637 = vmul.f32 %v7596, %v3910
      %v7638 = vmul.f32 %v7597, %v3915
      %v7639 = vmul.f32 %v7598, %v3920
      %v7640 = vmul.f32 %v7599, %v3925
      %v7641 = vmul.f32 %v7600, %v3930
      %v7642 = vmul.f32 %v7601, %v3935
      %v7643 = vmul.f32 %v7602, %v3940
      %v7644 = vmul.f32 %v7603, %v3945
      %v7645 = vmul.f32 %v7604, %v3950
      %v7646 = vmul.f32 %v7605, %v3955
      %v7647 = vmul.f32 %v7606, %v3960
      %7689 = vrot.lane.b32.xlu0 %v7607, 24
      %v7690 = vpop.permute.xlu0 %7689
      %7691 = vrot.lane.b32.xlu0 %v7608, 24
      %v7692 = vpop.permute.xlu0 %7691
      %7693 = vrot.lane.b32.xlu0 %v7609, 24
      %v7694 = vpop.permute.xlu0 %7693
      %7695 = vrot.lane.b32.xlu0 %v7610, 24
      %v7696 = vpop.permute.xlu0 %7695
      %7697 = vrot.lane.b32.xlu0 %v7611, 24
      %v7698 = vpop.permute.xlu0 %7697
      %7699 = vrot.lane.b32.xlu0 %v7612, 24
      %v7700 = vpop.permute.xlu0 %7699
      %7701 = vrot.lane.b32.xlu0 %v7613, 24
      %v7702 = vpop.permute.xlu0 %7701
      %7703 = vrot.lane.b32.xlu0 %v7614, 24
      %v7704 = vpop.permute.xlu0 %7703
      %7705 = vrot.lane.b32.xlu0 %v7615, 24
      %v7706 = vpop.permute.xlu0 %7705
      %7707 = vrot.lane.b32.xlu0 %v7616, 24
      %v7708 = vpop.permute.xlu0 %7707
      %7709 = vrot.lane.b32.xlu0 %v7617, 24
      %v7710 = vpop.permute.xlu0 %7709
      %7711 = vrot.lane.b32.xlu0 %v7618, 24
      %v7712 = vpop.permute.xlu0 %7711
      %7713 = vrot.lane.b32.xlu0 %v7619, 24
      %v7714 = vpop.permute.xlu0 %7713
      %7715 = vrot.lane.b32.xlu0 %v7620, 24
      %v7716 = vpop.permute.xlu0 %7715
      %7717 = vrot.lane.b32.xlu0 %v7621, 24
      %v7718 = vpop.permute.xlu0 %7717
      %7719 = vrot.lane.b32.xlu0 %v7622, 24
      %v7720 = vpop.permute.xlu0 %7719
      %7721 = vrot.lane.b32.xlu0 %v7623, 24
      %v7722 = vpop.permute.xlu0 %7721
      %7723 = vrot.lane.b32.xlu0 %v7624, 24
      %v7724 = vpop.permute.xlu0 %7723
      %7725 = vrot.lane.b32.xlu0 %v7625, 24
      %v7726 = vpop.permute.xlu0 %7725
      %7727 = vrot.lane.b32.xlu0 %v7626, 24
      %v7728 = vpop.permute.xlu0 %7727
      %7729 = vrot.lane.b32.xlu0 %v7627, 24
      %v7730 = vpop.permute.xlu0 %7729
      %7731 = vrot.lane.b32.xlu0 %v7628, 24
      %v7732 = vpop.permute.xlu0 %7731
      %7733 = vrot.lane.b32.xlu0 %v7629, 24
      %v7734 = vpop.permute.xlu0 %7733
      %7735 = vrot.lane.b32.xlu0 %v7630, 24
      %v7736 = vpop.permute.xlu0 %7735
      %7737 = vrot.lane.b32.xlu0 %v7631, 24
      %v7738 = vpop.permute.xlu0 %7737
      %7739 = vrot.lane.b32.xlu0 %v7632, 24
      %v7740 = vpop.permute.xlu0 %7739
      %7741 = vrot.lane.b32.xlu0 %v7633, 24
      %v7742 = vpop.permute.xlu0 %7741
      %7743 = vrot.lane.b32.xlu0 %v7634, 24
      %v7744 = vpop.permute.xlu0 %7743
      %7745 = vrot.lane.b32.xlu0 %v7635, 24
      %v7746 = vpop.permute.xlu0 %7745
      %7747 = vrot.lane.b32.xlu0 %v7636, 24
      %v7748 = vpop.permute.xlu0 %7747
      %7749 = vrot.lane.b32.xlu0 %v7637, 24
      %v7750 = vpop.permute.xlu0 %7749
      %7751 = vrot.lane.b32.xlu0 %v7638, 24
      %v7752 = vpop.permute.xlu0 %7751
      %7753 = vrot.lane.b32.xlu0 %v7639, 24
      %v7754 = vpop.permute.xlu0 %7753
      %7755 = vrot.lane.b32.xlu0 %v7640, 24
      %v7756 = vpop.permute.xlu0 %7755
      %7757 = vrot.lane.b32.xlu0 %v7641, 24
      %v7758 = vpop.permute.xlu0 %7757
      %7759 = vrot.lane.b32.xlu0 %v7642, 24
      %v7760 = vpop.permute.xlu0 %7759
      %7761 = vrot.lane.b32.xlu0 %v7643, 24
      %v7762 = vpop.permute.xlu0 %7761
      %7763 = vrot.lane.b32.xlu0 %v7644, 24
      %v7764 = vpop.permute.xlu0 %7763
      %7765 = vrot.lane.b32.xlu0 %v7645, 24
      %v7766 = vpop.permute.xlu0 %7765
      %7767 = vrot.lane.b32.xlu0 %v7646, 24
      %v7768 = vpop.permute.xlu0 %7767
      %7769 = vrot.lane.b32.xlu0 %v7647, 24
      %v7770 = vpop.permute.xlu0 %7769
      %vm7812 = vcmask 261312
      %7813 = vst.msk [vmem:[#allocation2 + $0x18] sm:$0xff] %vm7812, %v7690
      %7814 = vst.msk [vmem:[#allocation2 + $0x20] sm:$0xff] %vm7812, %v7692
      %7815 = vst.msk [vmem:[#allocation2 + $0x28] sm:$0xff] %vm7812, %v7694
      %7816 = vst.msk [vmem:[#allocation2 + $0x30] sm:$0xff] %vm7812, %v7696
      %7817 = vst.msk [vmem:[#allocation2 + $0x38] sm:$0xff] %vm7812, %v7698
      %7818 = vst.msk [vmem:[#allocation2 + $0x40] sm:$0xff] %vm7812, %v7700
      %7819 = vst.msk [vmem:[#allocation2 + $0x48] sm:$0xff] %vm7812, %v7702
      %7820 = vst.msk [vmem:[#allocation2 + $0x50] sm:$0xff] %vm7812, %v7704
      %7821 = vst.msk [vmem:[#allocation2 + $0x58] sm:$0xff] %vm7812, %v7706
      %7822 = vst.msk [vmem:[#allocation2 + $0x60] sm:$0xff] %vm7812, %v7708
      %7823 = vst.msk [vmem:[#allocation2 + $0x68] sm:$0xff] %vm7812, %v7710
      %7824 = vst.msk [vmem:[#allocation2 + $0x70] sm:$0xff] %vm7812, %v7712
      %7825 = vst.msk [vmem:[#allocation2 + $0x78] sm:$0xff] %vm7812, %v7714
      %7826 = vst.msk [vmem:[#allocation2 + $0x80] sm:$0xff] %vm7812, %v7716
      %7827 = vst.msk [vmem:[#allocation2 + $0x88] sm:$0xff] %vm7812, %v7718
      %7828 = vst.msk [vmem:[#allocation2 + $0x90] sm:$0xff] %vm7812, %v7720
      %7829 = vst.msk [vmem:[#allocation2 + $0x98] sm:$0xff] %vm7812, %v7722
      %7830 = vst.msk [vmem:[#allocation2 + $0xa0] sm:$0xff] %vm7812, %v7724
      %7831 = vst.msk [vmem:[#allocation2 + $0xa8] sm:$0xff] %vm7812, %v7726
      %7832 = vst.msk [vmem:[#allocation2 + $0xb0] sm:$0xff] %vm7812, %v7728
      %7833 = vst.msk [vmem:[#allocation2 + $0xb8] sm:$0xff] %vm7812, %v7730
      %7834 = vst.msk [vmem:[#allocation2 + $0xc0] sm:$0xff] %vm7812, %v7732
      %7835 = vst.msk [vmem:[#allocation2 + $0xc8] sm:$0xff] %vm7812, %v7734
      %7836 = vst.msk [vmem:[#allocation2 + $0xd0] sm:$0xff] %vm7812, %v7736
      %7837 = vst.msk [vmem:[#allocation2 + $0xd8] sm:$0xff] %vm7812, %v7738
      %7838 = vst.msk [vmem:[#allocation2 + $0xe0] sm:$0xff] %vm7812, %v7740
      %7839 = vst.msk [vmem:[#allocation2 + $0xe8] sm:$0xff] %vm7812, %v7742
      %7840 = vst.msk [vmem:[#allocation2 + $0xf0] sm:$0xff] %vm7812, %v7744
      %7841 = vst.msk [vmem:[#allocation2 + $0xf8] sm:$0xff] %vm7812, %v7746
      %7842 = vst.msk [vmem:[#allocation2 + $0x100] sm:$0xff] %vm7812, %v7748
      %7843 = vst.msk [vmem:[#allocation2 + $0x108] sm:$0xff] %vm7812, %v7750
      %7844 = vst.msk [vmem:[#allocation2 + $0x110] sm:$0xff] %vm7812, %v7752
      %7845 = vst.msk [vmem:[#allocation2 + $0x118] sm:$0xff] %vm7812, %v7754
      %7846 = vst.msk [vmem:[#allocation2 + $0x120] sm:$0xff] %vm7812, %v7756
      %7847 = vst.msk [vmem:[#allocation2 + $0x128] sm:$0xff] %vm7812, %v7758
      %7848 = vst.msk [vmem:[#allocation2 + $0x130] sm:$0xff] %vm7812, %v7760
      %7849 = vst.msk [vmem:[#allocation2 + $0x138] sm:$0xff] %vm7812, %v7762
      %7850 = vst.msk [vmem:[#allocation2 + $0x140] sm:$0xff] %vm7812, %v7764
      %7851 = vst.msk [vmem:[#allocation2 + $0x148] sm:$0xff] %vm7812, %v7766
      %7852 = vst.msk [vmem:[#allocation2 + $0x150] sm:$0xff] %vm7812, %v7768
      %7853 = vst.msk [vmem:[#allocation2 + $0x158] sm:$0xff] %vm7812, %v7770
      %v7854 = vld [vmem:[#allocation2 + $0x5] sm:$0xff]
      %v7855 = vld [vmem:[#allocation2 + $0xd] sm:$0xff]
      %v7856 = vld [vmem:[#allocation2 + $0x15] sm:$0xff]
      %v7857 = vld [vmem:[#allocation2 + $0x1d] sm:$0xff]
      %v7858 = vld [vmem:[#allocation2 + $0x25] sm:$0xff]
      %v7859 = vld [vmem:[#allocation2 + $0x2d] sm:$0xff]
      %v7860 = vld [vmem:[#allocation2 + $0x35] sm:$0xff]
      %v7861 = vld [vmem:[#allocation2 + $0x3d] sm:$0xff]
      %v7862 = vld [vmem:[#allocation2 + $0x45] sm:$0xff]
      %v7863 = vld [vmem:[#allocation2 + $0x4d] sm:$0xff]
      %v7864 = vld [vmem:[#allocation2 + $0x55] sm:$0xff]
      %v7865 = vld [vmem:[#allocation2 + $0x5d] sm:$0xff]
      %v7866 = vld [vmem:[#allocation2 + $0x65] sm:$0xff]
      %v7867 = vld [vmem:[#allocation2 + $0x6d] sm:$0xff]
      %v7868 = vld [vmem:[#allocation2 + $0x75] sm:$0xff]
      %v7869 = vld [vmem:[#allocation2 + $0x7d] sm:$0xff]
      %v7870 = vld [vmem:[#allocation2 + $0x85] sm:$0xff]
      %v7871 = vld [vmem:[#allocation2 + $0x8d] sm:$0xff]
      %v7872 = vld [vmem:[#allocation2 + $0x95] sm:$0xff]
      %v7873 = vld [vmem:[#allocation2 + $0x9d] sm:$0xff]
      %v7874 = vld [vmem:[#allocation2 + $0xa5] sm:$0xff]
      %v7875 = vld [vmem:[#allocation2 + $0xad] sm:$0xff]
      %v7876 = vld [vmem:[#allocation2 + $0xb5] sm:$0xff]
      %v7877 = vld [vmem:[#allocation2 + $0xbd] sm:$0xff]
      %v7878 = vld [vmem:[#allocation2 + $0xc5] sm:$0xff]
      %v7879 = vld [vmem:[#allocation2 + $0xcd] sm:$0xff]
      %v7880 = vld [vmem:[#allocation2 + $0xd5] sm:$0xff]
      %v7881 = vld [vmem:[#allocation2 + $0xdd] sm:$0xff]
      %v7882 = vld [vmem:[#allocation2 + $0xe5] sm:$0xff]
      %v7883 = vld [vmem:[#allocation2 + $0xed] sm:$0xff]
      %v7884 = vld [vmem:[#allocation2 + $0xf5] sm:$0xff]
      %v7885 = vld [vmem:[#allocation2 + $0xfd] sm:$0xff]
      %v7886 = vld [vmem:[#allocation2 + $0x105] sm:$0xff]
      %v7887 = vld [vmem:[#allocation2 + $0x10d] sm:$0xff]
      %v7888 = vld [vmem:[#allocation2 + $0x115] sm:$0xff]
      %v7889 = vld [vmem:[#allocation2 + $0x11d] sm:$0xff]
      %v7890 = vld [vmem:[#allocation2 + $0x125] sm:$0xff]
      %v7891 = vld [vmem:[#allocation2 + $0x12d] sm:$0xff]
      %v7892 = vld [vmem:[#allocation2 + $0x135] sm:$0xff]
      %v7893 = vld [vmem:[#allocation2 + $0x13d] sm:$0xff]
      %v7894 = vld [vmem:[#allocation2 + $0x145] sm:$0xff]
      %v7895 = vpack.c.bf16 %v7855, %v7854
      %v7896 = vpack.c.bf16 %v7857, %v7856
      %v7897 = vpack.c.bf16 %v7859, %v7858
      %v7898 = vpack.c.bf16 %v7861, %v7860
      %v7899 = vpack.c.bf16 %v7863, %v7862
      %v7900 = vpack.c.bf16 %v7865, %v7864
      %v7901 = vpack.c.bf16 %v7867, %v7866
      %v7902 = vpack.c.bf16 %v7869, %v7868
      %v7903 = vpack.c.bf16 %v7871, %v7870
      %v7904 = vpack.c.bf16 %v7873, %v7872
      %v7905 = vpack.c.bf16 %v7875, %v7874
      %v7906 = vpack.c.bf16 %v7877, %v7876
      %v7907 = vpack.c.bf16 %v7879, %v7878
      %v7908 = vpack.c.bf16 %v7881, %v7880
      %v7909 = vpack.c.bf16 %v7883, %v7882
      %v7910 = vpack.c.bf16 %v7885, %v7884
      %v7911 = vpack.c.bf16 %v7887, %v7886
      %v7912 = vpack.c.bf16 %v7889, %v7888
      %v7913 = vpack.c.bf16 %v7891, %v7890
      %v7914 = vpack.c.bf16 %v7893, %v7892
      %v7915 = vpack.c.bf16 %v7894, %v7894
      %v7916 = vld [vmem:[%s4] sm:$0xf]
      %v7917 = vld [vmem:[%s4 + $0x4] sm:$0xf]
      %v7918 = vld [vmem:[%s4 + $0x8] sm:$0xf]
      %v7919 = vld [vmem:[%s4 + $0xc] sm:$0xf]
      %v7920 = vld [vmem:[#allocation2 + $0x6] sm:$0xff]
      %v7921 = vld [vmem:[#allocation2 + $0xe] sm:$0xff]
      %v7922 = vld [vmem:[#allocation2 + $0x16] sm:$0xff]
      %v7923 = vld [vmem:[#allocation2 + $0x1e] sm:$0xff]
      %v7924 = vld [vmem:[#allocation2 + $0x26] sm:$0xff]
      %v7925 = vld [vmem:[#allocation2 + $0x2e] sm:$0xff]
      %v7926 = vld [vmem:[#allocation2 + $0x36] sm:$0xff]
      %v7927 = vld [vmem:[#allocation2 + $0x3e] sm:$0xff]
      %v7928 = vld [vmem:[#allocation2 + $0x46] sm:$0xff]
      %v7929 = vld [vmem:[#allocation2 + $0x4e] sm:$0xff]
      %v7930 = vld [vmem:[#allocation2 + $0x56] sm:$0xff]
      %v7931 = vld [vmem:[#allocation2 + $0x5e] sm:$0xff]
      %v7932 = vld [vmem:[#allocation2 + $0x66] sm:$0xff]
      %v7933 = vld [vmem:[#allocation2 + $0x6e] sm:$0xff]
      %v7934 = vld [vmem:[#allocation2 + $0x76] sm:$0xff]
      %v7935 = vld [vmem:[#allocation2 + $0x7e] sm:$0xff]
      %v7936 = vld [vmem:[#allocation2 + $0x86] sm:$0xff]
      %v7937 = vld [vmem:[#allocation2 + $0x8e] sm:$0xff]
      %v7938 = vld [vmem:[#allocation2 + $0x96] sm:$0xff]
      %v7939 = vld [vmem:[#allocation2 + $0x9e] sm:$0xff]
      %v7940 = vld [vmem:[#allocation2 + $0xa6] sm:$0xff]
      %v7941 = vld [vmem:[#allocation2 + $0xae] sm:$0xff]
      %v7942 = vld [vmem:[#allocation2 + $0xb6] sm:$0xff]
      %v7943 = vld [vmem:[#allocation2 + $0xbe] sm:$0xff]
      %v7944 = vld [vmem:[#allocation2 + $0xc6] sm:$0xff]
      %v7945 = vld [vmem:[#allocation2 + $0xce] sm:$0xff]
      %v7946 = vld [vmem:[#allocation2 + $0xd6] sm:$0xff]
      %v7947 = vld [vmem:[#allocation2 + $0xde] sm:$0xff]
      %v7948 = vld [vmem:[#allocation2 + $0xe6] sm:$0xff]
      %v7949 = vld [vmem:[#allocation2 + $0xee] sm:$0xff]
      %v7950 = vld [vmem:[#allocation2 + $0xf6] sm:$0xff]
      %v7951 = vld [vmem:[#allocation2 + $0xfe] sm:$0xff]
      %v7952 = vld [vmem:[#allocation2 + $0x106] sm:$0xff]
      %v7953 = vld [vmem:[#allocation2 + $0x10e] sm:$0xff]
      %v7954 = vld [vmem:[#allocation2 + $0x116] sm:$0xff]
      %v7955 = vld [vmem:[#allocation2 + $0x11e] sm:$0xff]
      %v7956 = vld [vmem:[#allocation2 + $0x126] sm:$0xff]
      %v7957 = vld [vmem:[#allocation2 + $0x12e] sm:$0xff]
      %v7958 = vld [vmem:[#allocation2 + $0x136] sm:$0xff]
      %v7959 = vld [vmem:[#allocation2 + $0x13e] sm:$0xff]
      %v7960 = vld [vmem:[#allocation2 + $0x146] sm:$0xff]
      %v7961 = vpack.c.bf16 %v7921, %v7920
      %v7962 = vpack.c.bf16 %v7923, %v7922
      %v7963 = vpack.c.bf16 %v7925, %v7924
      %v7964 = vpack.c.bf16 %v7927, %v7926
      %v7965 = vpack.c.bf16 %v7929, %v7928
      %v7966 = vpack.c.bf16 %v7931, %v7930
      %v7967 = vpack.c.bf16 %v7933, %v7932
      %v7968 = vpack.c.bf16 %v7935, %v7934
      %v7969 = vpack.c.bf16 %v7937, %v7936
      %v7970 = vpack.c.bf16 %v7939, %v7938
      %v7971 = vpack.c.bf16 %v7941, %v7940
      %v7972 = vpack.c.bf16 %v7943, %v7942
      %v7973 = vpack.c.bf16 %v7945, %v7944
      %v7974 = vpack.c.bf16 %v7947, %v7946
      %v7975 = vpack.c.bf16 %v7949, %v7948
      %v7976 = vpack.c.bf16 %v7951, %v7950
      %v7977 = vpack.c.bf16 %v7953, %v7952
      %v7978 = vpack.c.bf16 %v7955, %v7954
      %v7979 = vpack.c.bf16 %v7957, %v7956
      %v7980 = vpack.c.bf16 %v7959, %v7958
      %v7981 = vpack.c.bf16 %v7960, %v7960
      %s7982 = scalar_lea.vmem %s4, 16
      %v7983 = vld [vmem:[%s7982] sm:$0xf]
      %v7984 = vld [vmem:[%s7982 + $0x4] sm:$0xf]
      %v7985 = vld [vmem:[%s7982 + $0x8] sm:$0xf]
      %v7986 = vld [vmem:[%s7982 + $0xc] sm:$0xf]
      %v7991 = vunpack.c.l.b16 %v7983
      %v7992 = vunpack.c.l.b16 %v7984
      %v7993 = vunpack.c.l.b16 %v7985
      %v7994 = vunpack.c.l.b16 %v7986
      %v7995 = vpack.c.b16 %v7992, %v7991
      %v7996 = vpack.c.b16 %v7994, %v7993
      %vm7999 = vcmask 261120
      %v8001 = vsel %vm7999, %v7961, 0
      %v8004 = vsel %vm7999, %v7962, 0
      %v8007 = vsel %vm7999, %v7963, 0
      %v8010 = vsel %vm7999, %v7964, 0
      %v8013 = vsel %vm7999, %v7965, 0
      %v8016 = vsel %vm7999, %v7966, 0
      %v8019 = vsel %vm7999, %v7967, 0
      %v8022 = vsel %vm7999, %v7968, 0
      %v8025 = vsel %vm7999, %v7969, 0
      %v8028 = vsel %vm7999, %v7970, 0
      %v8031 = vsel %vm7999, %v7971, 0
      %v8034 = vsel %vm7999, %v7972, 0
      %v8037 = vsel %vm7999, %v7973, 0
      %v8040 = vsel %vm7999, %v7974, 0
      %v8043 = vsel %vm7999, %v7975, 0
      %v8046 = vsel %vm7999, %v7976, 0
      %v8049 = vsel %vm7999, %v7977, 0
      %v8052 = vsel %vm7999, %v7978, 0
      %v8055 = vsel %vm7999, %v7979, 0
      %v8058 = vsel %vm7999, %v7980, 0
      %v8061 = vsel %vm7999, %v7981, 0
      %8063 = vmatprep.subr.bf16.mxu0 0
      %8064 = vmatpush1.bf16.msra.mxu0 0
      %8065 = vmatprep.subr.bf16.mxu0 0
      %8066 = vmatpush1.bf16.msra.mxu0 0
      %8067 = vmatprep.subr.bf16.mxu0 0
      %8068 = vmatpush1.bf16.msra.mxu0 0
      %8069 = vmatprep.subr.bf16.mxu0 0
      %8070 = vmatpush1.bf16.msra.mxu0 0
      %8071 = vmatprep.subr.bf16.mxu0 0
      %8072 = vmatpush1.bf16.msra.mxu0 0
      %8073 = vmatprep.subr.bf16.mxu0 0
      %8074 = vmatpush1.bf16.msra.mxu0 0
      %8075 = vmatprep.subr.bf16.mxu0 0
      %8076 = vmatpush1.bf16.msra.mxu0 %v7996
      %8077 = vmatprep.subr.bf16.mxu0 0
      %8078 = vmatpush1.bf16.msra.mxu0 %v7995
      %8079 = vmatprep.subr.bf16.mxu0 0
      %8080 = vmatpush2.bf16.msra.mxu0 0
      %8081 = vmatprep.subr.bf16.mxu0 0
      %8082 = vmatpush2.bf16.msra.mxu0 0
      %8083 = vmatprep.subr.bf16.mxu0 0
      %8084 = vmatpush2.bf16.msra.mxu0 0
      %8085 = vmatprep.subr.bf16.mxu0 0
      %8086 = vmatpush2.bf16.msra.mxu0 0
      %8087 = vmatprep.subr.bf16.mxu0 0
      %8088 = vmatpush2.bf16.msra.mxu0 0
      %8089 = vmatprep.subr.bf16.mxu0 0
      %8090 = vmatpush2.bf16.msra.mxu0 0
      %8091 = vmatprep.subr.bf16.mxu0 0
      %8092 = vmatpush2.bf16.msra.mxu0 0
      %8093 = vmatprep.subr.bf16.mxu0 0
      %8094 = vmatpush2.bf16.msra.mxu0 0
      %8095 = vmatprep.mubr.bf16.mxu0 0
      %8096 = vmatmul.mubr.bf16.gmra.mxu0 %v8001
      %v8097 = vpop.f32.mrf.mxu0
      %v8098 = vadd.f32 0.0, %v8097
      %v8099 = vpop.f32.mrf.mxu0
      %v8100 = vpop.f32.mrf.mxu0
      %v8101 = vadd.f32 0.0, %v8100
      %v8102 = vpop.f32.mrf.mxu0
      %8103 = vmatprep.mubr.bf16.mxu0 0
      %8104 = vmatmul.mubr.bf16.gmra.mxu0 %v8004
      %v8105 = vpop.f32.mrf.mxu0
      %v8106 = vadd.f32 0.0, %v8105
      %v8107 = vpop.f32.mrf.mxu0
      %v8108 = vpop.f32.mrf.mxu0
      %v8109 = vadd.f32 0.0, %v8108
      %v8110 = vpop.f32.mrf.mxu0
      %8111 = vmatprep.mubr.bf16.mxu0 0
      %8112 = vmatmul.mubr.bf16.gmra.mxu0 %v8007
      %v8113 = vpop.f32.mrf.mxu0
      %v8114 = vadd.f32 0.0, %v8113
      %v8115 = vpop.f32.mrf.mxu0
      %v8116 = vpop.f32.mrf.mxu0
      %v8117 = vadd.f32 0.0, %v8116
      %v8118 = vpop.f32.mrf.mxu0
      %8119 = vmatprep.mubr.bf16.mxu0 0
      %8120 = vmatmul.mubr.bf16.gmra.mxu0 %v8010
      %v8121 = vpop.f32.mrf.mxu0
      %v8122 = vadd.f32 0.0, %v8121
      %v8123 = vpop.f32.mrf.mxu0
      %v8124 = vpop.f32.mrf.mxu0
      %v8125 = vadd.f32 0.0, %v8124
      %v8126 = vpop.f32.mrf.mxu0
      %8127 = vmatprep.mubr.bf16.mxu0 0
      %8128 = vmatmul.mubr.bf16.gmra.mxu0 %v8013
      %v8129 = vpop.f32.mrf.mxu0
      %v8130 = vadd.f32 0.0, %v8129
      %v8131 = vpop.f32.mrf.mxu0
      %v8132 = vpop.f32.mrf.mxu0
      %v8133 = vadd.f32 0.0, %v8132
      %v8134 = vpop.f32.mrf.mxu0
      %8135 = vmatprep.mubr.bf16.mxu0 0
      %8136 = vmatmul.mubr.bf16.gmra.mxu0 %v8016
      %v8137 = vpop.f32.mrf.mxu0
      %v8138 = vadd.f32 0.0, %v8137
      %v8139 = vpop.f32.mrf.mxu0
      %v8140 = vpop.f32.mrf.mxu0
      %v8141 = vadd.f32 0.0, %v8140
      %v8142 = vpop.f32.mrf.mxu0
      %8143 = vmatprep.mubr.bf16.mxu0 0
      %8144 = vmatmul.mubr.bf16.gmra.mxu0 %v8019
      %v8145 = vpop.f32.mrf.mxu0
      %v8146 = vadd.f32 0.0, %v8145
      %v8147 = vpop.f32.mrf.mxu0
      %v8148 = vpop.f32.mrf.mxu0
      %v8149 = vadd.f32 0.0, %v8148
      %v8150 = vpop.f32.mrf.mxu0
      %8151 = vmatprep.mubr.bf16.mxu0 0
      %8152 = vmatmul.mubr.bf16.gmra.mxu0 %v8022
      %v8153 = vpop.f32.mrf.mxu0
      %v8154 = vadd.f32 0.0, %v8153
      %v8155 = vpop.f32.mrf.mxu0
      %v8156 = vpop.f32.mrf.mxu0
      %v8157 = vadd.f32 0.0, %v8156
      %v8158 = vpop.f32.mrf.mxu0
      %8159 = vmatprep.mubr.bf16.mxu0 0
      %8160 = vmatmul.mubr.bf16.gmra.mxu0 %v8025
      %v8161 = vpop.f32.mrf.mxu0
      %v8162 = vadd.f32 0.0, %v8161
      %v8163 = vpop.f32.mrf.mxu0
      %v8164 = vpop.f32.mrf.mxu0
      %v8165 = vadd.f32 0.0, %v8164
      %v8166 = vpop.f32.mrf.mxu0
      %8167 = vmatprep.mubr.bf16.mxu0 0
      %8168 = vmatmul.mubr.bf16.gmra.mxu0 %v8028
      %v8169 = vpop.f32.mrf.mxu0
      %v8170 = vadd.f32 0.0, %v8169
      %v8171 = vpop.f32.mrf.mxu0
      %v8172 = vpop.f32.mrf.mxu0
      %v8173 = vadd.f32 0.0, %v8172
      %v8174 = vpop.f32.mrf.mxu0
      %8175 = vmatprep.mubr.bf16.mxu0 0
      %8176 = vmatmul.mubr.bf16.gmra.mxu0 %v8031
      %v8177 = vpop.f32.mrf.mxu0
      %v8178 = vadd.f32 0.0, %v8177
      %v8179 = vpop.f32.mrf.mxu0
      %v8180 = vpop.f32.mrf.mxu0
      %v8181 = vadd.f32 0.0, %v8180
      %v8182 = vpop.f32.mrf.mxu0
      %8183 = vmatprep.mubr.bf16.mxu0 0
      %8184 = vmatmul.mubr.bf16.gmra.mxu0 %v8034
      %v8185 = vpop.f32.mrf.mxu0
      %v8186 = vadd.f32 0.0, %v8185
      %v8187 = vpop.f32.mrf.mxu0
      %v8188 = vpop.f32.mrf.mxu0
      %v8189 = vadd.f32 0.0, %v8188
      %v8190 = vpop.f32.mrf.mxu0
      %8191 = vmatprep.mubr.bf16.mxu0 0
      %8192 = vmatmul.mubr.bf16.gmra.mxu0 %v8037
      %v8193 = vpop.f32.mrf.mxu0
      %v8194 = vadd.f32 0.0, %v8193
      %v8195 = vpop.f32.mrf.mxu0
      %v8196 = vpop.f32.mrf.mxu0
      %v8197 = vadd.f32 0.0, %v8196
      %v8198 = vpop.f32.mrf.mxu0
      %8199 = vmatprep.mubr.bf16.mxu0 0
      %8200 = vmatmul.mubr.bf16.gmra.mxu0 %v8040
      %v8201 = vpop.f32.mrf.mxu0
      %v8202 = vadd.f32 0.0, %v8201
      %v8203 = vpop.f32.mrf.mxu0
      %v8204 = vpop.f32.mrf.mxu0
      %v8205 = vadd.f32 0.0, %v8204
      %v8206 = vpop.f32.mrf.mxu0
      %8207 = vmatprep.mubr.bf16.mxu0 0
      %8208 = vmatmul.mubr.bf16.gmra.mxu0 %v8043
      %v8209 = vpop.f32.mrf.mxu0
      %v8210 = vadd.f32 0.0, %v8209
      %v8211 = vpop.f32.mrf.mxu0
      %v8212 = vpop.f32.mrf.mxu0
      %v8213 = vadd.f32 0.0, %v8212
      %v8214 = vpop.f32.mrf.mxu0
      %8215 = vmatprep.mubr.bf16.mxu0 0
      %8216 = vmatmul.mubr.bf16.gmra.mxu0 %v8046
      %v8217 = vpop.f32.mrf.mxu0
      %v8218 = vadd.f32 0.0, %v8217
      %v8219 = vpop.f32.mrf.mxu0
      %v8220 = vpop.f32.mrf.mxu0
      %v8221 = vadd.f32 0.0, %v8220
      %v8222 = vpop.f32.mrf.mxu0
      %8223 = vmatprep.mubr.bf16.mxu0 0
      %8224 = vmatmul.mubr.bf16.gmra.mxu0 %v8049
      %v8225 = vpop.f32.mrf.mxu0
      %v8226 = vadd.f32 0.0, %v8225
      %v8227 = vpop.f32.mrf.mxu0
      %v8228 = vpop.f32.mrf.mxu0
      %v8229 = vadd.f32 0.0, %v8228
      %v8230 = vpop.f32.mrf.mxu0
      %8231 = vmatprep.mubr.bf16.mxu0 0
      %8232 = vmatmul.mubr.bf16.gmra.mxu0 %v8052
      %v8233 = vpop.f32.mrf.mxu0
      %v8234 = vadd.f32 0.0, %v8233
      %v8235 = vpop.f32.mrf.mxu0
      %v8236 = vpop.f32.mrf.mxu0
      %v8237 = vadd.f32 0.0, %v8236
      %v8238 = vpop.f32.mrf.mxu0
      %8239 = vmatprep.mubr.bf16.mxu0 0
      %8240 = vmatmul.mubr.bf16.gmra.mxu0 %v8055
      %v8241 = vpop.f32.mrf.mxu0
      %v8242 = vadd.f32 0.0, %v8241
      %v8243 = vpop.f32.mrf.mxu0
      %v8244 = vpop.f32.mrf.mxu0
      %v8245 = vadd.f32 0.0, %v8244
      %v8246 = vpop.f32.mrf.mxu0
      %8247 = vmatprep.mubr.bf16.mxu0 0
      %8248 = vmatmul.mubr.bf16.gmra.mxu0 %v8058
      %v8249 = vpop.f32.mrf.mxu0
      %v8250 = vadd.f32 0.0, %v8249
      %v8251 = vpop.f32.mrf.mxu0
      %v8252 = vpop.f32.mrf.mxu0
      %v8253 = vadd.f32 0.0, %v8252
      %v8254 = vpop.f32.mrf.mxu0
      %8255 = vmatprep.mubr.bf16.mxu0 0
      %8256 = vmatmul.mubr.bf16.gmra.mxu0 %v8061
      %v8257 = vpop.f32.mrf.mxu0
      %v8258 = vadd.f32 0.0, %v8257
      %v8259 = vpop.f32.mrf.mxu0
      %v8260 = vpop.f32.mrf.mxu0
      %v8261 = vpop.f32.mrf.mxu0
      %8262 = vdwg.mxu0
      %v8267 = vunpack.c.l.b16 %v7916
      %v8268 = vunpack.c.l.b16 %v7917
      %v8269 = vunpack.c.l.b16 %v7918
      %v8270 = vunpack.c.l.b16 %v7919
      %v8271 = vpack.c.b16 %v8268, %v8267
      %v8272 = vpack.c.b16 %v8270, %v8269
      %v8276 = vsel %vm7999, %v7895, 0
      %v8279 = vsel %vm7999, %v7896, 0
      %v8282 = vsel %vm7999, %v7897, 0
      %v8285 = vsel %vm7999, %v7898, 0
      %v8288 = vsel %vm7999, %v7899, 0
      %v8291 = vsel %vm7999, %v7900, 0
      %v8294 = vsel %vm7999, %v7901, 0
      %v8297 = vsel %vm7999, %v7902, 0
      %v8300 = vsel %vm7999, %v7903, 0
      %v8303 = vsel %vm7999, %v7904, 0
      %v8306 = vsel %vm7999, %v7905, 0
      %v8309 = vsel %vm7999, %v7906, 0
      %v8312 = vsel %vm7999, %v7907, 0
      %v8315 = vsel %vm7999, %v7908, 0
      %v8318 = vsel %vm7999, %v7909, 0
      %v8321 = vsel %vm7999, %v7910, 0
      %v8324 = vsel %vm7999, %v7911, 0
      %v8327 = vsel %vm7999, %v7912, 0
      %v8330 = vsel %vm7999, %v7913, 0
      %v8333 = vsel %vm7999, %v7914, 0
      %v8336 = vsel %vm7999, %v7915, 0
      %8338 = vmatprep.subr.bf16.mxu0 0
      %8339 = vmatpush1.bf16.msra.mxu0 0
      %8340 = vmatprep.subr.bf16.mxu0 0
      %8341 = vmatpush1.bf16.msra.mxu0 0
      %8342 = vmatprep.subr.bf16.mxu0 0
      %8343 = vmatpush1.bf16.msra.mxu0 0
      %8344 = vmatprep.subr.bf16.mxu0 0
      %8345 = vmatpush1.bf16.msra.mxu0 0
      %8346 = vmatprep.subr.bf16.mxu0 0
      %8347 = vmatpush1.bf16.msra.mxu0 0
      %8348 = vmatprep.subr.bf16.mxu0 0
      %8349 = vmatpush1.bf16.msra.mxu0 0
      %8350 = vmatprep.subr.bf16.mxu0 0
      %8351 = vmatpush1.bf16.msra.mxu0 %v8272
      %8352 = vmatprep.subr.bf16.mxu0 0
      %8353 = vmatpush1.bf16.msra.mxu0 %v8271
      %8354 = vmatprep.subr.bf16.mxu0 0
      %8355 = vmatpush2.bf16.msra.mxu0 0
      %8356 = vmatprep.subr.bf16.mxu0 0
      %8357 = vmatpush2.bf16.msra.mxu0 0
      %8358 = vmatprep.subr.bf16.mxu0 0
      %8359 = vmatpush2.bf16.msra.mxu0 0
      %8360 = vmatprep.subr.bf16.mxu0 0
      %8361 = vmatpush2.bf16.msra.mxu0 0
      %8362 = vmatprep.subr.bf16.mxu0 0
      %8363 = vmatpush2.bf16.msra.mxu0 0
      %8364 = vmatprep.subr.bf16.mxu0 0
      %8365 = vmatpush2.bf16.msra.mxu0 0
      %8366 = vmatprep.subr.bf16.mxu0 0
      %8367 = vmatpush2.bf16.msra.mxu0 0
      %8368 = vmatprep.subr.bf16.mxu0 0
      %8369 = vmatpush2.bf16.msra.mxu0 0
      %8370 = vmatprep.mubr.bf16.mxu0 0
      %8371 = vmatmul.mubr.bf16.gmra.mxu0 %v8276
      %v8372 = vpop.f32.mrf.mxu0
      %v8373 = vadd.f32 %v8098, %v8372
      %v8374 = vpop.f32.mrf.mxu0
      %v8375 = vpop.f32.mrf.mxu0
      %v8376 = vadd.f32 %v8101, %v8375
      %v8377 = vpop.f32.mrf.mxu0
      %8378 = vmatprep.mubr.bf16.mxu0 0
      %8379 = vmatmul.mubr.bf16.gmra.mxu0 %v8279
      %v8380 = vpop.f32.mrf.mxu0
      %v8381 = vadd.f32 %v8106, %v8380
      %v8382 = vpop.f32.mrf.mxu0
      %v8383 = vpop.f32.mrf.mxu0
      %v8384 = vadd.f32 %v8109, %v8383
      %v8385 = vpop.f32.mrf.mxu0
      %8386 = vmatprep.mubr.bf16.mxu0 0
      %8387 = vmatmul.mubr.bf16.gmra.mxu0 %v8282
      %v8388 = vpop.f32.mrf.mxu0
      %v8389 = vadd.f32 %v8114, %v8388
      %v8390 = vpop.f32.mrf.mxu0
      %v8391 = vpop.f32.mrf.mxu0
      %v8392 = vadd.f32 %v8117, %v8391
      %v8393 = vpop.f32.mrf.mxu0
      %8394 = vmatprep.mubr.bf16.mxu0 0
      %8395 = vmatmul.mubr.bf16.gmra.mxu0 %v8285
      %v8396 = vpop.f32.mrf.mxu0
      %v8397 = vadd.f32 %v8122, %v8396
      %v8398 = vpop.f32.mrf.mxu0
      %v8399 = vpop.f32.mrf.mxu0
      %v8400 = vadd.f32 %v8125, %v8399
      %v8401 = vpop.f32.mrf.mxu0
      %8402 = vmatprep.mubr.bf16.mxu0 0
      %8403 = vmatmul.mubr.bf16.gmra.mxu0 %v8288
      %v8404 = vpop.f32.mrf.mxu0
      %v8405 = vadd.f32 %v8130, %v8404
      %v8406 = vpop.f32.mrf.mxu0
      %v8407 = vpop.f32.mrf.mxu0
      %v8408 = vadd.f32 %v8133, %v8407
      %v8409 = vpop.f32.mrf.mxu0
      %8410 = vmatprep.mubr.bf16.mxu0 0
      %8411 = vmatmul.mubr.bf16.gmra.mxu0 %v8291
      %v8412 = vpop.f32.mrf.mxu0
      %v8413 = vadd.f32 %v8138, %v8412
      %v8414 = vpop.f32.mrf.mxu0
      %v8415 = vpop.f32.mrf.mxu0
      %v8416 = vadd.f32 %v8141, %v8415
      %v8417 = vpop.f32.mrf.mxu0
      %8418 = vmatprep.mubr.bf16.mxu0 0
      %8419 = vmatmul.mubr.bf16.gmra.mxu0 %v8294
      %v8420 = vpop.f32.mrf.mxu0
      %v8421 = vadd.f32 %v8146, %v8420
      %v8422 = vpop.f32.mrf.mxu0
      %v8423 = vpop.f32.mrf.mxu0
      %v8424 = vadd.f32 %v8149, %v8423
      %v8425 = vpop.f32.mrf.mxu0
      %8426 = vmatprep.mubr.bf16.mxu0 0
      %8427 = vmatmul.mubr.bf16.gmra.mxu0 %v8297
      %v8428 = vpop.f32.mrf.mxu0
      %v8429 = vadd.f32 %v8154, %v8428
      %v8430 = vpop.f32.mrf.mxu0
      %v8431 = vpop.f32.mrf.mxu0
      %v8432 = vadd.f32 %v8157, %v8431
      %v8433 = vpop.f32.mrf.mxu0
      %8434 = vmatprep.mubr.bf16.mxu0 0
      %8435 = vmatmul.mubr.bf16.gmra.mxu0 %v8300
      %v8436 = vpop.f32.mrf.mxu0
      %v8437 = vadd.f32 %v8162, %v8436
      %v8438 = vpop.f32.mrf.mxu0
      %v8439 = vpop.f32.mrf.mxu0
      %v8440 = vadd.f32 %v8165, %v8439
      %v8441 = vpop.f32.mrf.mxu0
      %8442 = vmatprep.mubr.bf16.mxu0 0
      %8443 = vmatmul.mubr.bf16.gmra.mxu0 %v8303
      %v8444 = vpop.f32.mrf.mxu0
      %v8445 = vadd.f32 %v8170, %v8444
      %v8446 = vpop.f32.mrf.mxu0
      %v8447 = vpop.f32.mrf.mxu0
      %v8448 = vadd.f32 %v8173, %v8447
      %v8449 = vpop.f32.mrf.mxu0
      %8450 = vmatprep.mubr.bf16.mxu0 0
      %8451 = vmatmul.mubr.bf16.gmra.mxu0 %v8306
      %v8452 = vpop.f32.mrf.mxu0
      %v8453 = vadd.f32 %v8178, %v8452
      %v8454 = vpop.f32.mrf.mxu0
      %v8455 = vpop.f32.mrf.mxu0
      %v8456 = vadd.f32 %v8181, %v8455
      %v8457 = vpop.f32.mrf.mxu0
      %8458 = vmatprep.mubr.bf16.mxu0 0
      %8459 = vmatmul.mubr.bf16.gmra.mxu0 %v8309
      %v8460 = vpop.f32.mrf.mxu0
      %v8461 = vadd.f32 %v8186, %v8460
      %v8462 = vpop.f32.mrf.mxu0
      %v8463 = vpop.f32.mrf.mxu0
      %v8464 = vadd.f32 %v8189, %v8463
      %v8465 = vpop.f32.mrf.mxu0
      %8466 = vmatprep.mubr.bf16.mxu0 0
      %8467 = vmatmul.mubr.bf16.gmra.mxu0 %v8312
      %v8468 = vpop.f32.mrf.mxu0
      %v8469 = vadd.f32 %v8194, %v8468
      %v8470 = vpop.f32.mrf.mxu0
      %v8471 = vpop.f32.mrf.mxu0
      %v8472 = vadd.f32 %v8197, %v8471
      %v8473 = vpop.f32.mrf.mxu0
      %8474 = vmatprep.mubr.bf16.mxu0 0
      %8475 = vmatmul.mubr.bf16.gmra.mxu0 %v8315
      %v8476 = vpop.f32.mrf.mxu0
      %v8477 = vadd.f32 %v8202, %v8476
      %v8478 = vpop.f32.mrf.mxu0
      %v8479 = vpop.f32.mrf.mxu0
      %v8480 = vadd.f32 %v8205, %v8479
      %v8481 = vpop.f32.mrf.mxu0
      %8482 = vmatprep.mubr.bf16.mxu0 0
      %8483 = vmatmul.mubr.bf16.gmra.mxu0 %v8318
      %v8484 = vpop.f32.mrf.mxu0
      %v8485 = vadd.f32 %v8210, %v8484
      %v8486 = vpop.f32.mrf.mxu0
      %v8487 = vpop.f32.mrf.mxu0
      %v8488 = vadd.f32 %v8213, %v8487
      %v8489 = vpop.f32.mrf.mxu0
      %8490 = vmatprep.mubr.bf16.mxu0 0
      %8491 = vmatmul.mubr.bf16.gmra.mxu0 %v8321
      %v8492 = vpop.f32.mrf.mxu0
      %v8493 = vadd.f32 %v8218, %v8492
      %v8494 = vpop.f32.mrf.mxu0
      %v8495 = vpop.f32.mrf.mxu0
      %v8496 = vadd.f32 %v8221, %v8495
      %v8497 = vpop.f32.mrf.mxu0
      %8498 = vmatprep.mubr.bf16.mxu0 0
      %8499 = vmatmul.mubr.bf16.gmra.mxu0 %v8324
      %v8500 = vpop.f32.mrf.mxu0
      %v8501 = vadd.f32 %v8226, %v8500
      %v8502 = vpop.f32.mrf.mxu0
      %v8503 = vpop.f32.mrf.mxu0
      %v8504 = vadd.f32 %v8229, %v8503
      %v8505 = vpop.f32.mrf.mxu0
      %8506 = vmatprep.mubr.bf16.mxu0 0
      %8507 = vmatmul.mubr.bf16.gmra.mxu0 %v8327
      %v8508 = vpop.f32.mrf.mxu0
      %v8509 = vadd.f32 %v8234, %v8508
      %v8510 = vpop.f32.mrf.mxu0
      %v8511 = vpop.f32.mrf.mxu0
      %v8512 = vadd.f32 %v8237, %v8511
      %v8513 = vpop.f32.mrf.mxu0
      %8514 = vmatprep.mubr.bf16.mxu0 0
      %8515 = vmatmul.mubr.bf16.gmra.mxu0 %v8330
      %v8516 = vpop.f32.mrf.mxu0
      %v8517 = vadd.f32 %v8242, %v8516
      %v8518 = vpop.f32.mrf.mxu0
      %v8519 = vpop.f32.mrf.mxu0
      %v8520 = vadd.f32 %v8245, %v8519
      %v8521 = vpop.f32.mrf.mxu0
      %8522 = vmatprep.mubr.bf16.mxu0 0
      %8523 = vmatmul.mubr.bf16.gmra.mxu0 %v8333
      %v8524 = vpop.f32.mrf.mxu0
      %v8525 = vadd.f32 %v8250, %v8524
      %v8526 = vpop.f32.mrf.mxu0
      %v8527 = vpop.f32.mrf.mxu0
      %v8528 = vadd.f32 %v8253, %v8527
      %v8529 = vpop.f32.mrf.mxu0
      %8530 = vmatprep.mubr.bf16.mxu0 0
      %8531 = vmatmul.mubr.bf16.gmra.mxu0 %v8336
      %v8532 = vpop.f32.mrf.mxu0
      %v8533 = vadd.f32 %v8258, %v8532
      %v8534 = vpop.f32.mrf.mxu0
      %v8535 = vpop.f32.mrf.mxu0
      %v8536 = vpop.f32.mrf.mxu0
      %8537 = vdwg.mxu0
      %v8538 = vld [vmem:[#allocation2 + $0x7] sm:$0xff]
      %v8539 = vld [vmem:[#allocation2 + $0xf] sm:$0xff]
      %v8540 = vld [vmem:[#allocation2 + $0x17] sm:$0xff]
      %v8541 = vld [vmem:[#allocation2 + $0x1f] sm:$0xff]
      %v8542 = vld [vmem:[#allocation2 + $0x27] sm:$0xff]
      %v8543 = vld [vmem:[#allocation2 + $0x2f] sm:$0xff]
      %v8544 = vld [vmem:[#allocation2 + $0x37] sm:$0xff]
      %v8545 = vld [vmem:[#allocation2 + $0x3f] sm:$0xff]
      %v8546 = vld [vmem:[#allocation2 + $0x47] sm:$0xff]
      %v8547 = vld [vmem:[#allocation2 + $0x4f] sm:$0xff]
      %v8548 = vld [vmem:[#allocation2 + $0x57] sm:$0xff]
      %v8549 = vld [vmem:[#allocation2 + $0x5f] sm:$0xff]
      %v8550 = vld [vmem:[#allocation2 + $0x67] sm:$0xff]
      %v8551 = vld [vmem:[#allocation2 + $0x6f] sm:$0xff]
      %v8552 = vld [vmem:[#allocation2 + $0x77] sm:$0xff]
      %v8553 = vld [vmem:[#allocation2 + $0x7f] sm:$0xff]
      %v8554 = vld [vmem:[#allocation2 + $0x87] sm:$0xff]
      %v8555 = vld [vmem:[#allocation2 + $0x8f] sm:$0xff]
      %v8556 = vld [vmem:[#allocation2 + $0x97] sm:$0xff]
      %v8557 = vld [vmem:[#allocation2 + $0x9f] sm:$0xff]
      %v8558 = vld [vmem:[#allocation2 + $0xa7] sm:$0xff]
      %v8559 = vld [vmem:[#allocation2 + $0xaf] sm:$0xff]
      %v8560 = vld [vmem:[#allocation2 + $0xb7] sm:$0xff]
      %v8561 = vld [vmem:[#allocation2 + $0xbf] sm:$0xff]
      %v8562 = vld [vmem:[#allocation2 + $0xc7] sm:$0xff]
      %v8563 = vld [vmem:[#allocation2 + $0xcf] sm:$0xff]
      %v8564 = vld [vmem:[#allocation2 + $0xd7] sm:$0xff]
      %v8565 = vld [vmem:[#allocation2 + $0xdf] sm:$0xff]
      %v8566 = vld [vmem:[#allocation2 + $0xe7] sm:$0xff]
      %v8567 = vld [vmem:[#allocation2 + $0xef] sm:$0xff]
      %v8568 = vld [vmem:[#allocation2 + $0xf7] sm:$0xff]
      %v8569 = vld [vmem:[#allocation2 + $0xff] sm:$0xff]
      %v8570 = vld [vmem:[#allocation2 + $0x107] sm:$0xff]
      %v8571 = vld [vmem:[#allocation2 + $0x10f] sm:$0xff]
      %v8572 = vld [vmem:[#allocation2 + $0x117] sm:$0xff]
      %v8573 = vld [vmem:[#allocation2 + $0x11f] sm:$0xff]
      %v8574 = vld [vmem:[#allocation2 + $0x127] sm:$0xff]
      %v8575 = vld [vmem:[#allocation2 + $0x12f] sm:$0xff]
      %v8576 = vld [vmem:[#allocation2 + $0x137] sm:$0xff]
      %v8577 = vld [vmem:[#allocation2 + $0x13f] sm:$0xff]
      %v8578 = vld [vmem:[#allocation2 + $0x147] sm:$0xff]
      %v8579 = vpack.c.bf16 %v8539, %v8538
      %v8580 = vpack.c.bf16 %v8541, %v8540
      %v8581 = vpack.c.bf16 %v8543, %v8542
      %v8582 = vpack.c.bf16 %v8545, %v8544
      %v8583 = vpack.c.bf16 %v8547, %v8546
      %v8584 = vpack.c.bf16 %v8549, %v8548
      %v8585 = vpack.c.bf16 %v8551, %v8550
      %v8586 = vpack.c.bf16 %v8553, %v8552
      %v8587 = vpack.c.bf16 %v8555, %v8554
      %v8588 = vpack.c.bf16 %v8557, %v8556
      %v8589 = vpack.c.bf16 %v8559, %v8558
      %v8590 = vpack.c.bf16 %v8561, %v8560
      %v8591 = vpack.c.bf16 %v8563, %v8562
      %v8592 = vpack.c.bf16 %v8565, %v8564
      %v8593 = vpack.c.bf16 %v8567, %v8566
      %v8594 = vpack.c.bf16 %v8569, %v8568
      %v8595 = vpack.c.bf16 %v8571, %v8570
      %v8596 = vpack.c.bf16 %v8573, %v8572
      %v8597 = vpack.c.bf16 %v8575, %v8574
      %v8598 = vpack.c.bf16 %v8577, %v8576
      %v8599 = vpack.c.bf16 %v8578, %v8578
      %s8600 = scalar_lea.vmem %s4, 32
      %v8601 = vld [vmem:[%s8600] sm:$0xf]
      %v8602 = vld [vmem:[%s8600 + $0x4] sm:$0xf]
      %v8603 = vld [vmem:[%s8600 + $0x8] sm:$0xf]
      %v8604 = vld [vmem:[%s8600 + $0xc] sm:$0xf]
      %v8609 = vunpack.c.l.b16 %v8601
      %v8610 = vunpack.c.l.b16 %v8602
      %v8611 = vunpack.c.l.b16 %v8603
      %v8612 = vunpack.c.l.b16 %v8604
      %v8613 = vpack.c.b16 %v8610, %v8609
      %v8614 = vpack.c.b16 %v8612, %v8611
      %v8618 = vsel %vm7999, %v8579, 0
      %v8621 = vsel %vm7999, %v8580, 0
      %v8624 = vsel %vm7999, %v8581, 0
      %v8627 = vsel %vm7999, %v8582, 0
      %v8630 = vsel %vm7999, %v8583, 0
      %v8633 = vsel %vm7999, %v8584, 0
      %v8636 = vsel %vm7999, %v8585, 0
      %v8639 = vsel %vm7999, %v8586, 0
      %v8642 = vsel %vm7999, %v8587, 0
      %v8645 = vsel %vm7999, %v8588, 0
      %v8648 = vsel %vm7999, %v8589, 0
      %v8651 = vsel %vm7999, %v8590, 0
      %v8654 = vsel %vm7999, %v8591, 0
      %v8657 = vsel %vm7999, %v8592, 0
      %v8660 = vsel %vm7999, %v8593, 0
      %v8663 = vsel %vm7999, %v8594, 0
      %v8666 = vsel %vm7999, %v8595, 0
      %v8669 = vsel %vm7999, %v8596, 0
      %v8672 = vsel %vm7999, %v8597, 0
      %v8675 = vsel %vm7999, %v8598, 0
      %v8678 = vsel %vm7999, %v8599, 0
      %8680 = vmatprep.subr.bf16.mxu0 0
      %8681 = vmatpush1.bf16.msra.mxu0 0
      %8682 = vmatprep.subr.bf16.mxu0 0
      %8683 = vmatpush1.bf16.msra.mxu0 0
      %8684 = vmatprep.subr.bf16.mxu0 0
      %8685 = vmatpush1.bf16.msra.mxu0 0
      %8686 = vmatprep.subr.bf16.mxu0 0
      %8687 = vmatpush1.bf16.msra.mxu0 0
      %8688 = vmatprep.subr.bf16.mxu0 0
      %8689 = vmatpush1.bf16.msra.mxu0 0
      %8690 = vmatprep.subr.bf16.mxu0 0
      %8691 = vmatpush1.bf16.msra.mxu0 0
      %8692 = vmatprep.subr.bf16.mxu0 0
      %8693 = vmatpush1.bf16.msra.mxu0 %v8614
      %8694 = vmatprep.subr.bf16.mxu0 0
      %8695 = vmatpush1.bf16.msra.mxu0 %v8613
      %8696 = vmatprep.subr.bf16.mxu0 0
      %8697 = vmatpush2.bf16.msra.mxu0 0
      %8698 = vmatprep.subr.bf16.mxu0 0
      %8699 = vmatpush2.bf16.msra.mxu0 0
      %8700 = vmatprep.subr.bf16.mxu0 0
      %8701 = vmatpush2.bf16.msra.mxu0 0
      %8702 = vmatprep.subr.bf16.mxu0 0
      %8703 = vmatpush2.bf16.msra.mxu0 0
      %8704 = vmatprep.subr.bf16.mxu0 0
      %8705 = vmatpush2.bf16.msra.mxu0 0
      %8706 = vmatprep.subr.bf16.mxu0 0
      %8707 = vmatpush2.bf16.msra.mxu0 0
      %8708 = vmatprep.subr.bf16.mxu0 0
      %8709 = vmatpush2.bf16.msra.mxu0 0
      %8710 = vmatprep.subr.bf16.mxu0 0
      %8711 = vmatpush2.bf16.msra.mxu0 0
      %8712 = vmatprep.mubr.bf16.mxu0 0
      %8713 = vmatmul.mubr.bf16.gmra.mxu0 %v8618
      %v8714 = vpop.f32.mrf.mxu0
      %v8715 = vadd.f32 0.0, %v8714
      %v8716 = vpop.f32.mrf.mxu0
      %v8717 = vpop.f32.mrf.mxu0
      %v8718 = vadd.f32 0.0, %v8717
      %v8719 = vpop.f32.mrf.mxu0
      %8720 = vmatprep.mubr.bf16.mxu0 0
      %8721 = vmatmul.mubr.bf16.gmra.mxu0 %v8621
      %v8722 = vpop.f32.mrf.mxu0
      %v8723 = vadd.f32 0.0, %v8722
      %v8724 = vpop.f32.mrf.mxu0
      %v8725 = vpop.f32.mrf.mxu0
      %v8726 = vadd.f32 0.0, %v8725
      %v8727 = vpop.f32.mrf.mxu0
      %8728 = vmatprep.mubr.bf16.mxu0 0
      %8729 = vmatmul.mubr.bf16.gmra.mxu0 %v8624
      %v8730 = vpop.f32.mrf.mxu0
      %v8731 = vadd.f32 0.0, %v8730
      %v8732 = vpop.f32.mrf.mxu0
      %v8733 = vpop.f32.mrf.mxu0
      %v8734 = vadd.f32 0.0, %v8733
      %v8735 = vpop.f32.mrf.mxu0
      %8736 = vmatprep.mubr.bf16.mxu0 0
      %8737 = vmatmul.mubr.bf16.gmra.mxu0 %v8627
      %v8738 = vpop.f32.mrf.mxu0
      %v8739 = vadd.f32 0.0, %v8738
      %v8740 = vpop.f32.mrf.mxu0
      %v8741 = vpop.f32.mrf.mxu0
      %v8742 = vadd.f32 0.0, %v8741
      %v8743 = vpop.f32.mrf.mxu0
      %8744 = vmatprep.mubr.bf16.mxu0 0
      %8745 = vmatmul.mubr.bf16.gmra.mxu0 %v8630
      %v8746 = vpop.f32.mrf.mxu0
      %v8747 = vadd.f32 0.0, %v8746
      %v8748 = vpop.f32.mrf.mxu0
      %v8749 = vpop.f32.mrf.mxu0
      %v8750 = vadd.f32 0.0, %v8749
      %v8751 = vpop.f32.mrf.mxu0
      %8752 = vmatprep.mubr.bf16.mxu0 0
      %8753 = vmatmul.mubr.bf16.gmra.mxu0 %v8633
      %v8754 = vpop.f32.mrf.mxu0
      %v8755 = vadd.f32 0.0, %v8754
      %v8756 = vpop.f32.mrf.mxu0
      %v8757 = vpop.f32.mrf.mxu0
      %v8758 = vadd.f32 0.0, %v8757
      %v8759 = vpop.f32.mrf.mxu0
      %8760 = vmatprep.mubr.bf16.mxu0 0
      %8761 = vmatmul.mubr.bf16.gmra.mxu0 %v8636
      %v8762 = vpop.f32.mrf.mxu0
      %v8763 = vadd.f32 0.0, %v8762
      %v8764 = vpop.f32.mrf.mxu0
      %v8765 = vpop.f32.mrf.mxu0
      %v8766 = vadd.f32 0.0, %v8765
      %v8767 = vpop.f32.mrf.mxu0
      %8768 = vmatprep.mubr.bf16.mxu0 0
      %8769 = vmatmul.mubr.bf16.gmra.mxu0 %v8639
      %v8770 = vpop.f32.mrf.mxu0
      %v8771 = vadd.f32 0.0, %v8770
      %v8772 = vpop.f32.mrf.mxu0
      %v8773 = vpop.f32.mrf.mxu0
      %v8774 = vadd.f32 0.0, %v8773
      %v8775 = vpop.f32.mrf.mxu0
      %8776 = vmatprep.mubr.bf16.mxu0 0
      %8777 = vmatmul.mubr.bf16.gmra.mxu0 %v8642
      %v8778 = vpop.f32.mrf.mxu0
      %v8779 = vadd.f32 0.0, %v8778
      %v8780 = vpop.f32.mrf.mxu0
      %v8781 = vpop.f32.mrf.mxu0
      %v8782 = vadd.f32 0.0, %v8781
      %v8783 = vpop.f32.mrf.mxu0
      %8784 = vmatprep.mubr.bf16.mxu0 0
      %8785 = vmatmul.mubr.bf16.gmra.mxu0 %v8645
      %v8786 = vpop.f32.mrf.mxu0
      %v8787 = vadd.f32 0.0, %v8786
      %v8788 = vpop.f32.mrf.mxu0
      %v8789 = vpop.f32.mrf.mxu0
      %v8790 = vadd.f32 0.0, %v8789
      %v8791 = vpop.f32.mrf.mxu0
      %8792 = vmatprep.mubr.bf16.mxu0 0
      %8793 = vmatmul.mubr.bf16.gmra.mxu0 %v8648
      %v8794 = vpop.f32.mrf.mxu0
      %v8795 = vadd.f32 0.0, %v8794
      %v8796 = vpop.f32.mrf.mxu0
      %v8797 = vpop.f32.mrf.mxu0
      %v8798 = vadd.f32 0.0, %v8797
      %v8799 = vpop.f32.mrf.mxu0
      %8800 = vmatprep.mubr.bf16.mxu0 0
      %8801 = vmatmul.mubr.bf16.gmra.mxu0 %v8651
      %v8802 = vpop.f32.mrf.mxu0
      %v8803 = vadd.f32 0.0, %v8802
      %v8804 = vpop.f32.mrf.mxu0
      %v8805 = vpop.f32.mrf.mxu0
      %v8806 = vadd.f32 0.0, %v8805
      %v8807 = vpop.f32.mrf.mxu0
      %8808 = vmatprep.mubr.bf16.mxu0 0
      %8809 = vmatmul.mubr.bf16.gmra.mxu0 %v8654
      %v8810 = vpop.f32.mrf.mxu0
      %v8811 = vadd.f32 0.0, %v8810
      %v8812 = vpop.f32.mrf.mxu0
      %v8813 = vpop.f32.mrf.mxu0
      %v8814 = vadd.f32 0.0, %v8813
      %v8815 = vpop.f32.mrf.mxu0
      %8816 = vmatprep.mubr.bf16.mxu0 0
      %8817 = vmatmul.mubr.bf16.gmra.mxu0 %v8657
      %v8818 = vpop.f32.mrf.mxu0
      %v8819 = vadd.f32 0.0, %v8818
      %v8820 = vpop.f32.mrf.mxu0
      %v8821 = vpop.f32.mrf.mxu0
      %v8822 = vadd.f32 0.0, %v8821
      %v8823 = vpop.f32.mrf.mxu0
      %8824 = vmatprep.mubr.bf16.mxu0 0
      %8825 = vmatmul.mubr.bf16.gmra.mxu0 %v8660
      %v8826 = vpop.f32.mrf.mxu0
      %v8827 = vadd.f32 0.0, %v8826
      %v8828 = vpop.f32.mrf.mxu0
      %v8829 = vpop.f32.mrf.mxu0
      %v8830 = vadd.f32 0.0, %v8829
      %v8831 = vpop.f32.mrf.mxu0
      %8832 = vmatprep.mubr.bf16.mxu0 0
      %8833 = vmatmul.mubr.bf16.gmra.mxu0 %v8663
      %v8834 = vpop.f32.mrf.mxu0
      %v8835 = vadd.f32 0.0, %v8834
      %v8836 = vpop.f32.mrf.mxu0
      %v8837 = vpop.f32.mrf.mxu0
      %v8838 = vadd.f32 0.0, %v8837
      %v8839 = vpop.f32.mrf.mxu0
      %8840 = vmatprep.mubr.bf16.mxu0 0
      %8841 = vmatmul.mubr.bf16.gmra.mxu0 %v8666
      %v8842 = vpop.f32.mrf.mxu0
      %v8843 = vadd.f32 0.0, %v8842
      %v8844 = vpop.f32.mrf.mxu0
      %v8845 = vpop.f32.mrf.mxu0
      %v8846 = vadd.f32 0.0, %v8845
      %v8847 = vpop.f32.mrf.mxu0
      %8848 = vmatprep.mubr.bf16.mxu0 0
      %8849 = vmatmul.mubr.bf16.gmra.mxu0 %v8669
      %v8850 = vpop.f32.mrf.mxu0
      %v8851 = vadd.f32 0.0, %v8850
      %v8852 = vpop.f32.mrf.mxu0
      %v8853 = vpop.f32.mrf.mxu0
      %v8854 = vadd.f32 0.0, %v8853
      %v8855 = vpop.f32.mrf.mxu0
      %8856 = vmatprep.mubr.bf16.mxu0 0
      %8857 = vmatmul.mubr.bf16.gmra.mxu0 %v8672
      %v8858 = vpop.f32.mrf.mxu0
      %v8859 = vadd.f32 0.0, %v8858
      %v8860 = vpop.f32.mrf.mxu0
      %v8861 = vpop.f32.mrf.mxu0
      %v8862 = vadd.f32 0.0, %v8861
      %v8863 = vpop.f32.mrf.mxu0
      %8864 = vmatprep.mubr.bf16.mxu0 0
      %8865 = vmatmul.mubr.bf16.gmra.mxu0 %v8675
      %v8866 = vpop.f32.mrf.mxu0
      %v8867 = vadd.f32 0.0, %v8866
      %v8868 = vpop.f32.mrf.mxu0
      %v8869 = vpop.f32.mrf.mxu0
      %v8870 = vadd.f32 0.0, %v8869
      %v8871 = vpop.f32.mrf.mxu0
      %8872 = vmatprep.mubr.bf16.mxu0 0
      %8873 = vmatmul.mubr.bf16.gmra.mxu0 %v8678
      %v8874 = vpop.f32.mrf.mxu0
      %v8875 = vadd.f32 0.0, %v8874
      %v8876 = vpop.f32.mrf.mxu0
      %v8877 = vpop.f32.mrf.mxu0
      %v8878 = vpop.f32.mrf.mxu0
      %8879 = vdwg.mxu0
      %v8880 = vadd.f32 %v8373, %v8715
      %v8881 = vadd.f32 %v8376, %v8718
      %v8882 = vadd.f32 %v8381, %v8723
      %v8883 = vadd.f32 %v8384, %v8726
      %v8884 = vadd.f32 %v8389, %v8731
      %v8885 = vadd.f32 %v8392, %v8734
      %v8886 = vadd.f32 %v8397, %v8739
      %v8887 = vadd.f32 %v8400, %v8742
      %v8888 = vadd.f32 %v8405, %v8747
      %v8889 = vadd.f32 %v8408, %v8750
      %v8890 = vadd.f32 %v8413, %v8755
      %v8891 = vadd.f32 %v8416, %v8758
      %v8892 = vadd.f32 %v8421, %v8763
      %v8893 = vadd.f32 %v8424, %v8766
      %v8894 = vadd.f32 %v8429, %v8771
      %v8895 = vadd.f32 %v8432, %v8774
      %v8896 = vadd.f32 %v8437, %v8779
      %v8897 = vadd.f32 %v8440, %v8782
      %v8898 = vadd.f32 %v8445, %v8787
      %v8899 = vadd.f32 %v8448, %v8790
      %v8900 = vadd.f32 %v8453, %v8795
      %v8901 = vadd.f32 %v8456, %v8798
      %v8902 = vadd.f32 %v8461, %v8803
      %v8903 = vadd.f32 %v8464, %v8806
      %v8904 = vadd.f32 %v8469, %v8811
      %v8905 = vadd.f32 %v8472, %v8814
      %v8906 = vadd.f32 %v8477, %v8819
      %v8907 = vadd.f32 %v8480, %v8822
      %v8908 = vadd.f32 %v8485, %v8827
      %v8909 = vadd.f32 %v8488, %v8830
      %v8910 = vadd.f32 %v8493, %v8835
      %v8911 = vadd.f32 %v8496, %v8838
      %v8912 = vadd.f32 %v8501, %v8843
      %v8913 = vadd.f32 %v8504, %v8846
      %v8914 = vadd.f32 %v8509, %v8851
      %v8915 = vadd.f32 %v8512, %v8854
      %v8916 = vadd.f32 %v8517, %v8859
      %v8917 = vadd.f32 %v8520, %v8862
      %v8918 = vadd.f32 %v8525, %v8867
      %v8919 = vadd.f32 %v8528, %v8870
      %v8920 = vadd.f32 %v8533, %v8875
      %v8921 = vld [vmem:[#allocation2 + $0x17] sm:$0xff]
      %v8922 = vld [vmem:[#allocation2 + $0x1f] sm:$0xff]
      %v8923 = vld [vmem:[#allocation2 + $0x27] sm:$0xff]
      %v8924 = vld [vmem:[#allocation2 + $0x2f] sm:$0xff]
      %v8925 = vld [vmem:[#allocation2 + $0x37] sm:$0xff]
      %v8926 = vld [vmem:[#allocation2 + $0x3f] sm:$0xff]
      %v8927 = vld [vmem:[#allocation2 + $0x47] sm:$0xff]
      %v8928 = vld [vmem:[#allocation2 + $0x4f] sm:$0xff]
      %v8929 = vld [vmem:[#allocation2 + $0x57] sm:$0xff]
      %v8930 = vld [vmem:[#allocation2 + $0x5f] sm:$0xff]
      %v8931 = vld [vmem:[#allocation2 + $0x67] sm:$0xff]
      %v8932 = vld [vmem:[#allocation2 + $0x6f] sm:$0xff]
      %v8933 = vld [vmem:[#allocation2 + $0x77] sm:$0xff]
      %v8934 = vld [vmem:[#allocation2 + $0x7f] sm:$0xff]
      %v8935 = vld [vmem:[#allocation2 + $0x87] sm:$0xff]
      %v8936 = vld [vmem:[#allocation2 + $0x8f] sm:$0xff]
      %v8937 = vld [vmem:[#allocation2 + $0x97] sm:$0xff]
      %v8938 = vld [vmem:[#allocation2 + $0x9f] sm:$0xff]
      %v8939 = vld [vmem:[#allocation2 + $0xa7] sm:$0xff]
      %v8940 = vld [vmem:[#allocation2 + $0xaf] sm:$0xff]
      %v8941 = vld [vmem:[#allocation2 + $0xb7] sm:$0xff]
      %v8942 = vld [vmem:[#allocation2 + $0xbf] sm:$0xff]
      %v8943 = vld [vmem:[#allocation2 + $0xc7] sm:$0xff]
      %v8944 = vld [vmem:[#allocation2 + $0xcf] sm:$0xff]
      %v8945 = vld [vmem:[#allocation2 + $0xd7] sm:$0xff]
      %v8946 = vld [vmem:[#allocation2 + $0xdf] sm:$0xff]
      %v8947 = vld [vmem:[#allocation2 + $0xe7] sm:$0xff]
      %v8948 = vld [vmem:[#allocation2 + $0xef] sm:$0xff]
      %v8949 = vld [vmem:[#allocation2 + $0xf7] sm:$0xff]
      %v8950 = vld [vmem:[#allocation2 + $0xff] sm:$0xff]
      %v8951 = vld [vmem:[#allocation2 + $0x107] sm:$0xff]
      %v8952 = vld [vmem:[#allocation2 + $0x10f] sm:$0xff]
      %v8953 = vld [vmem:[#allocation2 + $0x117] sm:$0xff]
      %v8954 = vld [vmem:[#allocation2 + $0x11f] sm:$0xff]
      %v8955 = vld [vmem:[#allocation2 + $0x127] sm:$0xff]
      %v8956 = vld [vmem:[#allocation2 + $0x12f] sm:$0xff]
      %v8957 = vld [vmem:[#allocation2 + $0x137] sm:$0xff]
      %v8958 = vld [vmem:[#allocation2 + $0x13f] sm:$0xff]
      %v8959 = vld [vmem:[#allocation2 + $0x147] sm:$0xff]
      %v8960 = vld [vmem:[#allocation2 + $0x14f] sm:$0xff]
      %v8961 = vld [vmem:[#allocation2 + $0x157] sm:$0xff]
      %v8962 = vpack.c.bf16 %v8922, %v8921
      %v8963 = vpack.c.bf16 %v8924, %v8923
      %v8964 = vpack.c.bf16 %v8926, %v8925
      %v8965 = vpack.c.bf16 %v8928, %v8927
      %v8966 = vpack.c.bf16 %v8930, %v8929
      %v8967 = vpack.c.bf16 %v8932, %v8931
      %v8968 = vpack.c.bf16 %v8934, %v8933
      %v8969 = vpack.c.bf16 %v8936, %v8935
      %v8970 = vpack.c.bf16 %v8938, %v8937
      %v8971 = vpack.c.bf16 %v8940, %v8939
      %v8972 = vpack.c.bf16 %v8942, %v8941
      %v8973 = vpack.c.bf16 %v8944, %v8943
      %v8974 = vpack.c.bf16 %v8946, %v8945
      %v8975 = vpack.c.bf16 %v8948, %v8947
      %v8976 = vpack.c.bf16 %v8950, %v8949
      %v8977 = vpack.c.bf16 %v8952, %v8951
      %v8978 = vpack.c.bf16 %v8954, %v8953
      %v8979 = vpack.c.bf16 %v8956, %v8955
      %v8980 = vpack.c.bf16 %v8958, %v8957
      %v8981 = vpack.c.bf16 %v8960, %v8959
      %v8982 = vpack.c.bf16 %v8961, %v8961
      %s8983 = scalar_lea.vmem %s4, 48
      %v8984 = vld [vmem:[%s8983] sm:$0xf]
      %v8985 = vld [vmem:[%s8983 + $0x4] sm:$0xf]
      %v8986 = vld [vmem:[%s8983 + $0x8] sm:$0xf]
      %v8987 = vld [vmem:[%s8983 + $0xc] sm:$0xf]
      %v8992 = vunpack.c.l.b16 %v8984
      %v8993 = vunpack.c.l.b16 %v8985
      %v8994 = vunpack.c.l.b16 %v8986
      %v8995 = vunpack.c.l.b16 %v8987
      %v8996 = vpack.c.b16 %v8993, %v8992
      %v8997 = vpack.c.b16 %v8995, %v8994
      %v9001 = vsel %vm7999, %v8962, 0
      %v9004 = vsel %vm7999, %v8963, 0
      %v9007 = vsel %vm7999, %v8964, 0
      %v9010 = vsel %vm7999, %v8965, 0
      %v9013 = vsel %vm7999, %v8966, 0
      %v9016 = vsel %vm7999, %v8967, 0
      %v9019 = vsel %vm7999, %v8968, 0
      %v9022 = vsel %vm7999, %v8969, 0
      %v9025 = vsel %vm7999, %v8970, 0
      %v9028 = vsel %vm7999, %v8971, 0
      %v9031 = vsel %vm7999, %v8972, 0
      %v9034 = vsel %vm7999, %v8973, 0
      %v9037 = vsel %vm7999, %v8974, 0
      %v9040 = vsel %vm7999, %v8975, 0
      %v9043 = vsel %vm7999, %v8976, 0
      %v9046 = vsel %vm7999, %v8977, 0
      %v9049 = vsel %vm7999, %v8978, 0
      %v9052 = vsel %vm7999, %v8979, 0
      %v9055 = vsel %vm7999, %v8980, 0
      %v9058 = vsel %vm7999, %v8981, 0
      %v9061 = vsel %vm7999, %v8982, 0
      %9063 = vmatprep.subr.bf16.mxu0 0
      %9064 = vmatpush1.bf16.msra.mxu0 0
      %9065 = vmatprep.subr.bf16.mxu0 0
      %9066 = vmatpush1.bf16.msra.mxu0 0
      %9067 = vmatprep.subr.bf16.mxu0 0
      %9068 = vmatpush1.bf16.msra.mxu0 0
      %9069 = vmatprep.subr.bf16.mxu0 0
      %9070 = vmatpush1.bf16.msra.mxu0 0
      %9071 = vmatprep.subr.bf16.mxu0 0
      %9072 = vmatpush1.bf16.msra.mxu0 0
      %9073 = vmatprep.subr.bf16.mxu0 0
      %9074 = vmatpush1.bf16.msra.mxu0 0
      %9075 = vmatprep.subr.bf16.mxu0 0
      %9076 = vmatpush1.bf16.msra.mxu0 %v8997
      %9077 = vmatprep.subr.bf16.mxu0 0
      %9078 = vmatpush1.bf16.msra.mxu0 %v8996
      %9079 = vmatprep.subr.bf16.mxu0 0
      %9080 = vmatpush2.bf16.msra.mxu0 0
      %9081 = vmatprep.subr.bf16.mxu0 0
      %9082 = vmatpush2.bf16.msra.mxu0 0
      %9083 = vmatprep.subr.bf16.mxu0 0
      %9084 = vmatpush2.bf16.msra.mxu0 0
      %9085 = vmatprep.subr.bf16.mxu0 0
      %9086 = vmatpush2.bf16.msra.mxu0 0
      %9087 = vmatprep.subr.bf16.mxu0 0
      %9088 = vmatpush2.bf16.msra.mxu0 0
      %9089 = vmatprep.subr.bf16.mxu0 0
      %9090 = vmatpush2.bf16.msra.mxu0 0
      %9091 = vmatprep.subr.bf16.mxu0 0
      %9092 = vmatpush2.bf16.msra.mxu0 0
      %9093 = vmatprep.subr.bf16.mxu0 0
      %9094 = vmatpush2.bf16.msra.mxu0 0
      %9095 = vmatprep.mubr.bf16.mxu0 0
      %9096 = vmatmul.mubr.bf16.gmra.mxu0 %v9001
      %v9097 = vpop.f32.mrf.mxu0
      %v9098 = vadd.f32 0.0, %v9097
      %v9099 = vpop.f32.mrf.mxu0
      %v9100 = vpop.f32.mrf.mxu0
      %v9101 = vadd.f32 0.0, %v9100
      %v9102 = vpop.f32.mrf.mxu0
      %9103 = vmatprep.mubr.bf16.mxu0 0
      %9104 = vmatmul.mubr.bf16.gmra.mxu0 %v9004
      %v9105 = vpop.f32.mrf.mxu0
      %v9106 = vadd.f32 0.0, %v9105
      %v9107 = vpop.f32.mrf.mxu0
      %v9108 = vpop.f32.mrf.mxu0
      %v9109 = vadd.f32 0.0, %v9108
      %v9110 = vpop.f32.mrf.mxu0
      %9111 = vmatprep.mubr.bf16.mxu0 0
      %9112 = vmatmul.mubr.bf16.gmra.mxu0 %v9007
      %v9113 = vpop.f32.mrf.mxu0
      %v9114 = vadd.f32 0.0, %v9113
      %v9115 = vpop.f32.mrf.mxu0
      %v9116 = vpop.f32.mrf.mxu0
      %v9117 = vadd.f32 0.0, %v9116
      %v9118 = vpop.f32.mrf.mxu0
      %9119 = vmatprep.mubr.bf16.mxu0 0
      %9120 = vmatmul.mubr.bf16.gmra.mxu0 %v9010
      %v9121 = vpop.f32.mrf.mxu0
      %v9122 = vadd.f32 0.0, %v9121
      %v9123 = vpop.f32.mrf.mxu0
      %v9124 = vpop.f32.mrf.mxu0
      %v9125 = vadd.f32 0.0, %v9124
      %v9126 = vpop.f32.mrf.mxu0
      %9127 = vmatprep.mubr.bf16.mxu0 0
      %9128 = vmatmul.mubr.bf16.gmra.mxu0 %v9013
      %v9129 = vpop.f32.mrf.mxu0
      %v9130 = vadd.f32 0.0, %v9129
      %v9131 = vpop.f32.mrf.mxu0
      %v9132 = vpop.f32.mrf.mxu0
      %v9133 = vadd.f32 0.0, %v9132
      %v9134 = vpop.f32.mrf.mxu0
      %9135 = vmatprep.mubr.bf16.mxu0 0
      %9136 = vmatmul.mubr.bf16.gmra.mxu0 %v9016
      %v9137 = vpop.f32.mrf.mxu0
      %v9138 = vadd.f32 0.0, %v9137
      %v9139 = vpop.f32.mrf.mxu0
      %v9140 = vpop.f32.mrf.mxu0
      %v9141 = vadd.f32 0.0, %v9140
      %v9142 = vpop.f32.mrf.mxu0
      %9143 = vmatprep.mubr.bf16.mxu0 0
      %9144 = vmatmul.mubr.bf16.gmra.mxu0 %v9019
      %v9145 = vpop.f32.mrf.mxu0
      %v9146 = vadd.f32 0.0, %v9145
      %v9147 = vpop.f32.mrf.mxu0
      %v9148 = vpop.f32.mrf.mxu0
      %v9149 = vadd.f32 0.0, %v9148
      %v9150 = vpop.f32.mrf.mxu0
      %9151 = vmatprep.mubr.bf16.mxu0 0
      %9152 = vmatmul.mubr.bf16.gmra.mxu0 %v9022
      %v9153 = vpop.f32.mrf.mxu0
      %v9154 = vadd.f32 0.0, %v9153
      %v9155 = vpop.f32.mrf.mxu0
      %v9156 = vpop.f32.mrf.mxu0
      %v9157 = vadd.f32 0.0, %v9156
      %v9158 = vpop.f32.mrf.mxu0
      %9159 = vmatprep.mubr.bf16.mxu0 0
      %9160 = vmatmul.mubr.bf16.gmra.mxu0 %v9025
      %v9161 = vpop.f32.mrf.mxu0
      %v9162 = vadd.f32 0.0, %v9161
      %v9163 = vpop.f32.mrf.mxu0
      %v9164 = vpop.f32.mrf.mxu0
      %v9165 = vadd.f32 0.0, %v9164
      %v9166 = vpop.f32.mrf.mxu0
      %9167 = vmatprep.mubr.bf16.mxu0 0
      %9168 = vmatmul.mubr.bf16.gmra.mxu0 %v9028
      %v9169 = vpop.f32.mrf.mxu0
      %v9170 = vadd.f32 0.0, %v9169
      %v9171 = vpop.f32.mrf.mxu0
      %v9172 = vpop.f32.mrf.mxu0
      %v9173 = vadd.f32 0.0, %v9172
      %v9174 = vpop.f32.mrf.mxu0
      %9175 = vmatprep.mubr.bf16.mxu0 0
      %9176 = vmatmul.mubr.bf16.gmra.mxu0 %v9031
      %v9177 = vpop.f32.mrf.mxu0
      %v9178 = vadd.f32 0.0, %v9177
      %v9179 = vpop.f32.mrf.mxu0
      %v9180 = vpop.f32.mrf.mxu0
      %v9181 = vadd.f32 0.0, %v9180
      %v9182 = vpop.f32.mrf.mxu0
      %9183 = vmatprep.mubr.bf16.mxu0 0
      %9184 = vmatmul.mubr.bf16.gmra.mxu0 %v9034
      %v9185 = vpop.f32.mrf.mxu0
      %v9186 = vadd.f32 0.0, %v9185
      %v9187 = vpop.f32.mrf.mxu0
      %v9188 = vpop.f32.mrf.mxu0
      %v9189 = vadd.f32 0.0, %v9188
      %v9190 = vpop.f32.mrf.mxu0
      %9191 = vmatprep.mubr.bf16.mxu0 0
      %9192 = vmatmul.mubr.bf16.gmra.mxu0 %v9037
      %v9193 = vpop.f32.mrf.mxu0
      %v9194 = vadd.f32 0.0, %v9193
      %v9195 = vpop.f32.mrf.mxu0
      %v9196 = vpop.f32.mrf.mxu0
      %v9197 = vadd.f32 0.0, %v9196
      %v9198 = vpop.f32.mrf.mxu0
      %9199 = vmatprep.mubr.bf16.mxu0 0
      %9200 = vmatmul.mubr.bf16.gmra.mxu0 %v9040
      %v9201 = vpop.f32.mrf.mxu0
      %v9202 = vadd.f32 0.0, %v9201
      %v9203 = vpop.f32.mrf.mxu0
      %v9204 = vpop.f32.mrf.mxu0
      %v9205 = vadd.f32 0.0, %v9204
      %v9206 = vpop.f32.mrf.mxu0
      %9207 = vmatprep.mubr.bf16.mxu0 0
      %9208 = vmatmul.mubr.bf16.gmra.mxu0 %v9043
      %v9209 = vpop.f32.mrf.mxu0
      %v9210 = vadd.f32 0.0, %v9209
      %v9211 = vpop.f32.mrf.mxu0
      %v9212 = vpop.f32.mrf.mxu0
      %v9213 = vadd.f32 0.0, %v9212
      %v9214 = vpop.f32.mrf.mxu0
      %9215 = vmatprep.mubr.bf16.mxu0 0
      %9216 = vmatmul.mubr.bf16.gmra.mxu0 %v9046
      %v9217 = vpop.f32.mrf.mxu0
      %v9218 = vadd.f32 0.0, %v9217
      %v9219 = vpop.f32.mrf.mxu0
      %v9220 = vpop.f32.mrf.mxu0
      %v9221 = vadd.f32 0.0, %v9220
      %v9222 = vpop.f32.mrf.mxu0
      %9223 = vmatprep.mubr.bf16.mxu0 0
      %9224 = vmatmul.mubr.bf16.gmra.mxu0 %v9049
      %v9225 = vpop.f32.mrf.mxu0
      %v9226 = vadd.f32 0.0, %v9225
      %v9227 = vpop.f32.mrf.mxu0
      %v9228 = vpop.f32.mrf.mxu0
      %v9229 = vadd.f32 0.0, %v9228
      %v9230 = vpop.f32.mrf.mxu0
      %9231 = vmatprep.mubr.bf16.mxu0 0
      %9232 = vmatmul.mubr.bf16.gmra.mxu0 %v9052
      %v9233 = vpop.f32.mrf.mxu0
      %v9234 = vadd.f32 0.0, %v9233
      %v9235 = vpop.f32.mrf.mxu0
      %v9236 = vpop.f32.mrf.mxu0
      %v9237 = vadd.f32 0.0, %v9236
      %v9238 = vpop.f32.mrf.mxu0
      %9239 = vmatprep.mubr.bf16.mxu0 0
      %9240 = vmatmul.mubr.bf16.gmra.mxu0 %v9055
      %v9241 = vpop.f32.mrf.mxu0
      %v9242 = vadd.f32 0.0, %v9241
      %v9243 = vpop.f32.mrf.mxu0
      %v9244 = vpop.f32.mrf.mxu0
      %v9245 = vadd.f32 0.0, %v9244
      %v9246 = vpop.f32.mrf.mxu0
      %9247 = vmatprep.mubr.bf16.mxu0 0
      %9248 = vmatmul.mubr.bf16.gmra.mxu0 %v9058
      %v9249 = vpop.f32.mrf.mxu0
      %v9250 = vadd.f32 0.0, %v9249
      %v9251 = vpop.f32.mrf.mxu0
      %v9252 = vpop.f32.mrf.mxu0
      %v9253 = vadd.f32 0.0, %v9252
      %v9254 = vpop.f32.mrf.mxu0
      %9255 = vmatprep.mubr.bf16.mxu0 0
      %9256 = vmatmul.mubr.bf16.gmra.mxu0 %v9061
      %v9257 = vpop.f32.mrf.mxu0
      %v9258 = vadd.f32 0.0, %v9257
      %v9259 = vpop.f32.mrf.mxu0
      %v9260 = vpop.f32.mrf.mxu0
      %v9261 = vpop.f32.mrf.mxu0
      %9262 = vdwg.mxu0
      %v9263 = vadd.f32 %v8880, %v9098
      %v9264 = vadd.f32 %v8881, %v9101
      %v9265 = vadd.f32 %v8882, %v9106
      %v9266 = vadd.f32 %v8883, %v9109
      %v9267 = vadd.f32 %v8884, %v9114
      %v9268 = vadd.f32 %v8885, %v9117
      %v9269 = vadd.f32 %v8886, %v9122
      %v9270 = vadd.f32 %v8887, %v9125
      %v9271 = vadd.f32 %v8888, %v9130
      %v9272 = vadd.f32 %v8889, %v9133
      %v9273 = vadd.f32 %v8890, %v9138
      %v9274 = vadd.f32 %v8891, %v9141
      %v9275 = vadd.f32 %v8892, %v9146
      %v9276 = vadd.f32 %v8893, %v9149
      %v9277 = vadd.f32 %v8894, %v9154
      %v9278 = vadd.f32 %v8895, %v9157
      %v9279 = vadd.f32 %v8896, %v9162
      %v9280 = vadd.f32 %v8897, %v9165
      %v9281 = vadd.f32 %v8898, %v9170
      %v9282 = vadd.f32 %v8899, %v9173
      %v9283 = vadd.f32 %v8900, %v9178
      %v9284 = vadd.f32 %v8901, %v9181
      %v9285 = vadd.f32 %v8902, %v9186
      %v9286 = vadd.f32 %v8903, %v9189
      %v9287 = vadd.f32 %v8904, %v9194
      %v9288 = vadd.f32 %v8905, %v9197
      %v9289 = vadd.f32 %v8906, %v9202
      %v9290 = vadd.f32 %v8907, %v9205
      %v9291 = vadd.f32 %v8908, %v9210
      %v9292 = vadd.f32 %v8909, %v9213
      %v9293 = vadd.f32 %v8910, %v9218
      %v9294 = vadd.f32 %v8911, %v9221
      %v9295 = vadd.f32 %v8912, %v9226
      %v9296 = vadd.f32 %v8913, %v9229
      %v9297 = vadd.f32 %v8914, %v9234
      %v9298 = vadd.f32 %v8915, %v9237
      %v9299 = vadd.f32 %v8916, %v9242
      %v9300 = vadd.f32 %v8917, %v9245
      %v9301 = vadd.f32 %v8918, %v9250
      %v9302 = vadd.f32 %v8919, %v9253
      %v9303 = vadd.f32 %v8920, %v9258
      %v9304 = vld [vmem:[#allocation2 + $0x18] sm:$0xff]
      %v9305 = vld [vmem:[#allocation2 + $0x20] sm:$0xff]
      %v9306 = vld [vmem:[#allocation2 + $0x28] sm:$0xff]
      %v9307 = vld [vmem:[#allocation2 + $0x30] sm:$0xff]
      %v9308 = vld [vmem:[#allocation2 + $0x38] sm:$0xff]
      %v9309 = vld [vmem:[#allocation2 + $0x40] sm:$0xff]
      %v9310 = vld [vmem:[#allocation2 + $0x48] sm:$0xff]
      %v9311 = vld [vmem:[#allocation2 + $0x50] sm:$0xff]
      %v9312 = vld [vmem:[#allocation2 + $0x58] sm:$0xff]
      %v9313 = vld [vmem:[#allocation2 + $0x60] sm:$0xff]
      %v9314 = vld [vmem:[#allocation2 + $0x68] sm:$0xff]
      %v9315 = vld [vmem:[#allocation2 + $0x70] sm:$0xff]
      %v9316 = vld [vmem:[#allocation2 + $0x78] sm:$0xff]
      %v9317 = vld [vmem:[#allocation2 + $0x80] sm:$0xff]
      %v9318 = vld [vmem:[#allocation2 + $0x88] sm:$0xff]
      %v9319 = vld [vmem:[#allocation2 + $0x90] sm:$0xff]
      %v9320 = vld [vmem:[#allocation2 + $0x98] sm:$0xff]
      %v9321 = vld [vmem:[#allocation2 + $0xa0] sm:$0xff]
      %v9322 = vld [vmem:[#allocation2 + $0xa8] sm:$0xff]
      %v9323 = vld [vmem:[#allocation2 + $0xb0] sm:$0xff]
      %v9324 = vld [vmem:[#allocation2 + $0xb8] sm:$0xff]
      %v9325 = vld [vmem:[#allocation2 + $0xc0] sm:$0xff]
      %v9326 = vld [vmem:[#allocation2 + $0xc8] sm:$0xff]
      %v9327 = vld [vmem:[#allocation2 + $0xd0] sm:$0xff]
      %v9328 = vld [vmem:[#allocation2 + $0xd8] sm:$0xff]
      %v9329 = vld [vmem:[#allocation2 + $0xe0] sm:$0xff]
      %v9330 = vld [vmem:[#allocation2 + $0xe8] sm:$0xff]
      %v9331 = vld [vmem:[#allocation2 + $0xf0] sm:$0xff]
      %v9332 = vld [vmem:[#allocation2 + $0xf8] sm:$0xff]
      %v9333 = vld [vmem:[#allocation2 + $0x100] sm:$0xff]
      %v9334 = vld [vmem:[#allocation2 + $0x108] sm:$0xff]
      %v9335 = vld [vmem:[#allocation2 + $0x110] sm:$0xff]
      %v9336 = vld [vmem:[#allocation2 + $0x118] sm:$0xff]
      %v9337 = vld [vmem:[#allocation2 + $0x120] sm:$0xff]
      %v9338 = vld [vmem:[#allocation2 + $0x128] sm:$0xff]
      %v9339 = vld [vmem:[#allocation2 + $0x130] sm:$0xff]
      %v9340 = vld [vmem:[#allocation2 + $0x138] sm:$0xff]
      %v9341 = vld [vmem:[#allocation2 + $0x140] sm:$0xff]
      %v9342 = vld [vmem:[#allocation2 + $0x148] sm:$0xff]
      %v9343 = vld [vmem:[#allocation2 + $0x150] sm:$0xff]
      %v9344 = vld [vmem:[#allocation2 + $0x158] sm:$0xff]
      %v9345 = vpack.c.bf16 %v9305, %v9304
      %v9346 = vpack.c.bf16 %v9307, %v9306
      %v9347 = vpack.c.bf16 %v9309, %v9308
      %v9348 = vpack.c.bf16 %v9311, %v9310
      %v9349 = vpack.c.bf16 %v9313, %v9312
      %v9350 = vpack.c.bf16 %v9315, %v9314
      %v9351 = vpack.c.bf16 %v9317, %v9316
      %v9352 = vpack.c.bf16 %v9319, %v9318
      %v9353 = vpack.c.bf16 %v9321, %v9320
      %v9354 = vpack.c.bf16 %v9323, %v9322
      %v9355 = vpack.c.bf16 %v9325, %v9324
      %v9356 = vpack.c.bf16 %v9327, %v9326
      %v9357 = vpack.c.bf16 %v9329, %v9328
      %v9358 = vpack.c.bf16 %v9331, %v9330
      %v9359 = vpack.c.bf16 %v9333, %v9332
      %v9360 = vpack.c.bf16 %v9335, %v9334
      %v9361 = vpack.c.bf16 %v9337, %v9336
      %v9362 = vpack.c.bf16 %v9339, %v9338
      %v9363 = vpack.c.bf16 %v9341, %v9340
      %v9364 = vpack.c.bf16 %v9343, %v9342
      %v9365 = vpack.c.bf16 %v9344, %v9344
      %s9366 = scalar_lea.vmem %s4, 64
      %v9367 = vld [vmem:[%s9366] sm:$0xf]
      %v9368 = vld [vmem:[%s9366 + $0x4] sm:$0xf]
      %v9369 = vld [vmem:[%s9366 + $0x8] sm:$0xf]
      %v9370 = vld [vmem:[%s9366 + $0xc] sm:$0xf]
      %v9375 = vunpack.c.l.b16 %v9367
      %v9376 = vunpack.c.l.b16 %v9368
      %v9377 = vunpack.c.l.b16 %v9369
      %v9378 = vunpack.c.l.b16 %v9370
      %v9379 = vpack.c.b16 %v9376, %v9375
      %v9380 = vpack.c.b16 %v9378, %v9377
      %v9384 = vsel %vm7999, %v9345, 0
      %v9387 = vsel %vm7999, %v9346, 0
      %v9390 = vsel %vm7999, %v9347, 0
      %v9393 = vsel %vm7999, %v9348, 0
      %v9396 = vsel %vm7999, %v9349, 0
      %v9399 = vsel %vm7999, %v9350, 0
      %v9402 = vsel %vm7999, %v9351, 0
      %v9405 = vsel %vm7999, %v9352, 0
      %v9408 = vsel %vm7999, %v9353, 0
      %v9411 = vsel %vm7999, %v9354, 0
      %v9414 = vsel %vm7999, %v9355, 0
      %v9417 = vsel %vm7999, %v9356, 0
      %v9420 = vsel %vm7999, %v9357, 0
      %v9423 = vsel %vm7999, %v9358, 0
      %v9426 = vsel %vm7999, %v9359, 0
      %v9429 = vsel %vm7999, %v9360, 0
      %v9432 = vsel %vm7999, %v9361, 0
      %v9435 = vsel %vm7999, %v9362, 0
      %v9438 = vsel %vm7999, %v9363, 0
      %v9441 = vsel %vm7999, %v9364, 0
      %v9444 = vsel %vm7999, %v9365, 0
      %9446 = vmatprep.subr.bf16.mxu0 0
      %9447 = vmatpush1.bf16.msra.mxu0 0
      %9448 = vmatprep.subr.bf16.mxu0 0
      %9449 = vmatpush1.bf16.msra.mxu0 0
      %9450 = vmatprep.subr.bf16.mxu0 0
      %9451 = vmatpush1.bf16.msra.mxu0 0
      %9452 = vmatprep.subr.bf16.mxu0 0
      %9453 = vmatpush1.bf16.msra.mxu0 0
      %9454 = vmatprep.subr.bf16.mxu0 0
      %9455 = vmatpush1.bf16.msra.mxu0 0
      %9456 = vmatprep.subr.bf16.mxu0 0
      %9457 = vmatpush1.bf16.msra.mxu0 0
      %9458 = vmatprep.subr.bf16.mxu0 0
      %9459 = vmatpush1.bf16.msra.mxu0 %v9380
      %9460 = vmatprep.subr.bf16.mxu0 0
      %9461 = vmatpush1.bf16.msra.mxu0 %v9379
      %9462 = vmatprep.subr.bf16.mxu0 0
      %9463 = vmatpush2.bf16.msra.mxu0 0
      %9464 = vmatprep.subr.bf16.mxu0 0
      %9465 = vmatpush2.bf16.msra.mxu0 0
      %9466 = vmatprep.subr.bf16.mxu0 0
      %9467 = vmatpush2.bf16.msra.mxu0 0
      %9468 = vmatprep.subr.bf16.mxu0 0
      %9469 = vmatpush2.bf16.msra.mxu0 0
      %9470 = vmatprep.subr.bf16.mxu0 0
      %9471 = vmatpush2.bf16.msra.mxu0 0
      %9472 = vmatprep.subr.bf16.mxu0 0
      %9473 = vmatpush2.bf16.msra.mxu0 0
      %9474 = vmatprep.subr.bf16.mxu0 0
      %9475 = vmatpush2.bf16.msra.mxu0 0
      %9476 = vmatprep.subr.bf16.mxu0 0
      %9477 = vmatpush2.bf16.msra.mxu0 0
      %9478 = vmatprep.mubr.bf16.mxu0 0
      %9479 = vmatmul.mubr.bf16.gmra.mxu0 %v9384
      %v9480 = vpop.f32.mrf.mxu0
      %v9481 = vadd.f32 0.0, %v9480
      %v9482 = vpop.f32.mrf.mxu0
      %v9483 = vpop.f32.mrf.mxu0
      %v9484 = vadd.f32 0.0, %v9483
      %v9485 = vpop.f32.mrf.mxu0
      %9486 = vmatprep.mubr.bf16.mxu0 0
      %9487 = vmatmul.mubr.bf16.gmra.mxu0 %v9387
      %v9488 = vpop.f32.mrf.mxu0
      %v9489 = vadd.f32 0.0, %v9488
      %v9490 = vpop.f32.mrf.mxu0
      %v9491 = vpop.f32.mrf.mxu0
      %v9492 = vadd.f32 0.0, %v9491
      %v9493 = vpop.f32.mrf.mxu0
      %9494 = vmatprep.mubr.bf16.mxu0 0
      %9495 = vmatmul.mubr.bf16.gmra.mxu0 %v9390
      %v9496 = vpop.f32.mrf.mxu0
      %v9497 = vadd.f32 0.0, %v9496
      %v9498 = vpop.f32.mrf.mxu0
      %v9499 = vpop.f32.mrf.mxu0
      %v9500 = vadd.f32 0.0, %v9499
      %v9501 = vpop.f32.mrf.mxu0
      %9502 = vmatprep.mubr.bf16.mxu0 0
      %9503 = vmatmul.mubr.bf16.gmra.mxu0 %v9393
      %v9504 = vpop.f32.mrf.mxu0
      %v9505 = vadd.f32 0.0, %v9504
      %v9506 = vpop.f32.mrf.mxu0
      %v9507 = vpop.f32.mrf.mxu0
      %v9508 = vadd.f32 0.0, %v9507
      %v9509 = vpop.f32.mrf.mxu0
      %9510 = vmatprep.mubr.bf16.mxu0 0
      %9511 = vmatmul.mubr.bf16.gmra.mxu0 %v9396
      %v9512 = vpop.f32.mrf.mxu0
      %v9513 = vadd.f32 0.0, %v9512
      %v9514 = vpop.f32.mrf.mxu0
      %v9515 = vpop.f32.mrf.mxu0
      %v9516 = vadd.f32 0.0, %v9515
      %v9517 = vpop.f32.mrf.mxu0
      %9518 = vmatprep.mubr.bf16.mxu0 0
      %9519 = vmatmul.mubr.bf16.gmra.mxu0 %v9399
      %v9520 = vpop.f32.mrf.mxu0
      %v9521 = vadd.f32 0.0, %v9520
      %v9522 = vpop.f32.mrf.mxu0
      %v9523 = vpop.f32.mrf.mxu0
      %v9524 = vadd.f32 0.0, %v9523
      %v9525 = vpop.f32.mrf.mxu0
      %9526 = vmatprep.mubr.bf16.mxu0 0
      %9527 = vmatmul.mubr.bf16.gmra.mxu0 %v9402
      %v9528 = vpop.f32.mrf.mxu0
      %v9529 = vadd.f32 0.0, %v9528
      %v9530 = vpop.f32.mrf.mxu0
      %v9531 = vpop.f32.mrf.mxu0
      %v9532 = vadd.f32 0.0, %v9531
      %v9533 = vpop.f32.mrf.mxu0
      %9534 = vmatprep.mubr.bf16.mxu0 0
      %9535 = vmatmul.mubr.bf16.gmra.mxu0 %v9405
      %v9536 = vpop.f32.mrf.mxu0
      %v9537 = vadd.f32 0.0, %v9536
      %v9538 = vpop.f32.mrf.mxu0
      %v9539 = vpop.f32.mrf.mxu0
      %v9540 = vadd.f32 0.0, %v9539
      %v9541 = vpop.f32.mrf.mxu0
      %9542 = vmatprep.mubr.bf16.mxu0 0
      %9543 = vmatmul.mubr.bf16.gmra.mxu0 %v9408
      %v9544 = vpop.f32.mrf.mxu0
      %v9545 = vadd.f32 0.0, %v9544
      %v9546 = vpop.f32.mrf.mxu0
      %v9547 = vpop.f32.mrf.mxu0
      %v9548 = vadd.f32 0.0, %v9547
      %v9549 = vpop.f32.mrf.mxu0
      %9550 = vmatprep.mubr.bf16.mxu0 0
      %9551 = vmatmul.mubr.bf16.gmra.mxu0 %v9411
      %v9552 = vpop.f32.mrf.mxu0
      %v9553 = vadd.f32 0.0, %v9552
      %v9554 = vpop.f32.mrf.mxu0
      %v9555 = vpop.f32.mrf.mxu0
      %v9556 = vadd.f32 0.0, %v9555
      %v9557 = vpop.f32.mrf.mxu0
      %9558 = vmatprep.mubr.bf16.mxu0 0
      %9559 = vmatmul.mubr.bf16.gmra.mxu0 %v9414
      %v9560 = vpop.f32.mrf.mxu0
      %v9561 = vadd.f32 0.0, %v9560
      %v9562 = vpop.f32.mrf.mxu0
      %v9563 = vpop.f32.mrf.mxu0
      %v9564 = vadd.f32 0.0, %v9563
      %v9565 = vpop.f32.mrf.mxu0
      %9566 = vmatprep.mubr.bf16.mxu0 0
      %9567 = vmatmul.mubr.bf16.gmra.mxu0 %v9417
      %v9568 = vpop.f32.mrf.mxu0
      %v9569 = vadd.f32 0.0, %v9568
      %v9570 = vpop.f32.mrf.mxu0
      %v9571 = vpop.f32.mrf.mxu0
      %v9572 = vadd.f32 0.0, %v9571
      %v9573 = vpop.f32.mrf.mxu0
      %9574 = vmatprep.mubr.bf16.mxu0 0
      %9575 = vmatmul.mubr.bf16.gmra.mxu0 %v9420
      %v9576 = vpop.f32.mrf.mxu0
      %v9577 = vadd.f32 0.0, %v9576
      %v9578 = vpop.f32.mrf.mxu0
      %v9579 = vpop.f32.mrf.mxu0
      %v9580 = vadd.f32 0.0, %v9579
      %v9581 = vpop.f32.mrf.mxu0
      %9582 = vmatprep.mubr.bf16.mxu0 0
      %9583 = vmatmul.mubr.bf16.gmra.mxu0 %v9423
      %v9584 = vpop.f32.mrf.mxu0
      %v9585 = vadd.f32 0.0, %v9584
      %v9586 = vpop.f32.mrf.mxu0
      %v9587 = vpop.f32.mrf.mxu0
      %v9588 = vadd.f32 0.0, %v9587
      %v9589 = vpop.f32.mrf.mxu0
      %9590 = vmatprep.mubr.bf16.mxu0 0
      %9591 = vmatmul.mubr.bf16.gmra.mxu0 %v9426
      %v9592 = vpop.f32.mrf.mxu0
      %v9593 = vadd.f32 0.0, %v9592
      %v9594 = vpop.f32.mrf.mxu0
      %v9595 = vpop.f32.mrf.mxu0
      %v9596 = vadd.f32 0.0, %v9595
      %v9597 = vpop.f32.mrf.mxu0
      %9598 = vmatprep.mubr.bf16.mxu0 0
      %9599 = vmatmul.mubr.bf16.gmra.mxu0 %v9429
      %v9600 = vpop.f32.mrf.mxu0
      %v9601 = vadd.f32 0.0, %v9600
      %v9602 = vpop.f32.mrf.mxu0
      %v9603 = vpop.f32.mrf.mxu0
      %v9604 = vadd.f32 0.0, %v9603
      %v9605 = vpop.f32.mrf.mxu0
      %9606 = vmatprep.mubr.bf16.mxu0 0
      %9607 = vmatmul.mubr.bf16.gmra.mxu0 %v9432
      %v9608 = vpop.f32.mrf.mxu0
      %v9609 = vadd.f32 0.0, %v9608
      %v9610 = vpop.f32.mrf.mxu0
      %v9611 = vpop.f32.mrf.mxu0
      %v9612 = vadd.f32 0.0, %v9611
      %v9613 = vpop.f32.mrf.mxu0
      %9614 = vmatprep.mubr.bf16.mxu0 0
      %9615 = vmatmul.mubr.bf16.gmra.mxu0 %v9435
      %v9616 = vpop.f32.mrf.mxu0
      %v9617 = vadd.f32 0.0, %v9616
      %v9618 = vpop.f32.mrf.mxu0
      %v9619 = vpop.f32.mrf.mxu0
      %v9620 = vadd.f32 0.0, %v9619
      %v9621 = vpop.f32.mrf.mxu0
      %9622 = vmatprep.mubr.bf16.mxu0 0
      %9623 = vmatmul.mubr.bf16.gmra.mxu0 %v9438
      %v9624 = vpop.f32.mrf.mxu0
      %v9625 = vadd.f32 0.0, %v9624
      %v9626 = vpop.f32.mrf.mxu0
      %v9627 = vpop.f32.mrf.mxu0
      %v9628 = vadd.f32 0.0, %v9627
      %v9629 = vpop.f32.mrf.mxu0
      %9630 = vmatprep.mubr.bf16.mxu0 0
      %9631 = vmatmul.mubr.bf16.gmra.mxu0 %v9441
      %v9632 = vpop.f32.mrf.mxu0
      %v9633 = vadd.f32 0.0, %v9632
      %v9634 = vpop.f32.mrf.mxu0
      %v9635 = vpop.f32.mrf.mxu0
      %v9636 = vadd.f32 0.0, %v9635
      %v9637 = vpop.f32.mrf.mxu0
      %9638 = vmatprep.mubr.bf16.mxu0 0
      %9639 = vmatmul.mubr.bf16.gmra.mxu0 %v9444
      %v9640 = vpop.f32.mrf.mxu0
      %v9641 = vadd.f32 0.0, %v9640
      %v9642 = vpop.f32.mrf.mxu0
      %v9643 = vpop.f32.mrf.mxu0
      %v9644 = vpop.f32.mrf.mxu0
      %9645 = vdwg.mxu0
      %v9646 = vadd.f32 %v9263, %v9481
      %v9647 = vadd.f32 %v9264, %v9484
      %v9648 = vadd.f32 %v9265, %v9489
      %v9649 = vadd.f32 %v9266, %v9492
      %v9650 = vadd.f32 %v9267, %v9497
      %v9651 = vadd.f32 %v9268, %v9500
      %v9652 = vadd.f32 %v9269, %v9505
      %v9653 = vadd.f32 %v9270, %v9508
      %v9654 = vadd.f32 %v9271, %v9513
      %v9655 = vadd.f32 %v9272, %v9516
      %v9656 = vadd.f32 %v9273, %v9521
      %v9657 = vadd.f32 %v9274, %v9524
      %v9658 = vadd.f32 %v9275, %v9529
      %v9659 = vadd.f32 %v9276, %v9532
      %v9660 = vadd.f32 %v9277, %v9537
      %v9661 = vadd.f32 %v9278, %v9540
      %v9662 = vadd.f32 %v9279, %v9545
      %v9663 = vadd.f32 %v9280, %v9548
      %v9664 = vadd.f32 %v9281, %v9553
      %v9665 = vadd.f32 %v9282, %v9556
      %v9666 = vadd.f32 %v9283, %v9561
      %v9667 = vadd.f32 %v9284, %v9564
      %v9668 = vadd.f32 %v9285, %v9569
      %v9669 = vadd.f32 %v9286, %v9572
      %v9670 = vadd.f32 %v9287, %v9577
      %v9671 = vadd.f32 %v9288, %v9580
      %v9672 = vadd.f32 %v9289, %v9585
      %v9673 = vadd.f32 %v9290, %v9588
      %v9674 = vadd.f32 %v9291, %v9593
      %v9675 = vadd.f32 %v9292, %v9596
      %v9676 = vadd.f32 %v9293, %v9601
      %v9677 = vadd.f32 %v9294, %v9604
      %v9678 = vadd.f32 %v9295, %v9609
      %v9679 = vadd.f32 %v9296, %v9612
      %v9680 = vadd.f32 %v9297, %v9617
      %v9681 = vadd.f32 %v9298, %v9620
      %v9682 = vadd.f32 %v9299, %v9625
      %v9683 = vadd.f32 %v9300, %v9628
      %v9684 = vadd.f32 %v9301, %v9633
      %v9685 = vadd.f32 %v9302, %v9636
      %v9686 = vadd.f32 %v9303, %v9641
      %v9687 = vld [vmem:[#allocation2 + $0x19] sm:$0xff]
      %v9688 = vld [vmem:[#allocation2 + $0x21] sm:$0xff]
      %v9689 = vld [vmem:[#allocation2 + $0x29] sm:$0xff]
      %v9690 = vld [vmem:[#allocation2 + $0x31] sm:$0xff]
      %v9691 = vld [vmem:[#allocation2 + $0x39] sm:$0xff]
      %v9692 = vld [vmem:[#allocation2 + $0x41] sm:$0xff]
      %v9693 = vld [vmem:[#allocation2 + $0x49] sm:$0xff]
      %v9694 = vld [vmem:[#allocation2 + $0x51] sm:$0xff]
      %v9695 = vld [vmem:[#allocation2 + $0x59] sm:$0xff]
      %v9696 = vld [vmem:[#allocation2 + $0x61] sm:$0xff]
      %v9697 = vld [vmem:[#allocation2 + $0x69] sm:$0xff]
      %v9698 = vld [vmem:[#allocation2 + $0x71] sm:$0xff]
      %v9699 = vld [vmem:[#allocation2 + $0x79] sm:$0xff]
      %v9700 = vld [vmem:[#allocation2 + $0x81] sm:$0xff]
      %v9701 = vld [vmem:[#allocation2 + $0x89] sm:$0xff]
      %v9702 = vld [vmem:[#allocation2 + $0x91] sm:$0xff]
      %v9703 = vld [vmem:[#allocation2 + $0x99] sm:$0xff]
      %v9704 = vld [vmem:[#allocation2 + $0xa1] sm:$0xff]
      %v9705 = vld [vmem:[#allocation2 + $0xa9] sm:$0xff]
      %v9706 = vld [vmem:[#allocation2 + $0xb1] sm:$0xff]
      %v9707 = vld [vmem:[#allocation2 + $0xb9] sm:$0xff]
      %v9708 = vld [vmem:[#allocation2 + $0xc1] sm:$0xff]
      %v9709 = vld [vmem:[#allocation2 + $0xc9] sm:$0xff]
      %v9710 = vld [vmem:[#allocation2 + $0xd1] sm:$0xff]
      %v9711 = vld [vmem:[#allocation2 + $0xd9] sm:$0xff]
      %v9712 = vld [vmem:[#allocation2 + $0xe1] sm:$0xff]
      %v9713 = vld [vmem:[#allocation2 + $0xe9] sm:$0xff]
      %v9714 = vld [vmem:[#allocation2 + $0xf1] sm:$0xff]
      %v9715 = vld [vmem:[#allocation2 + $0xf9] sm:$0xff]
      %v9716 = vld [vmem:[#allocation2 + $0x101] sm:$0xff]
      %v9717 = vld [vmem:[#allocation2 + $0x109] sm:$0xff]
      %v9718 = vld [vmem:[#allocation2 + $0x111] sm:$0xff]
      %v9719 = vld [vmem:[#allocation2 + $0x119] sm:$0xff]
      %v9720 = vld [vmem:[#allocation2 + $0x121] sm:$0xff]
      %v9721 = vld [vmem:[#allocation2 + $0x129] sm:$0xff]
      %v9722 = vld [vmem:[#allocation2 + $0x131] sm:$0xff]
      %v9723 = vld [vmem:[#allocation2 + $0x139] sm:$0xff]
      %v9724 = vld [vmem:[#allocation2 + $0x141] sm:$0xff]
      %v9725 = vld [vmem:[#allocation2 + $0x149] sm:$0xff]
      %v9726 = vld [vmem:[#allocation2 + $0x151] sm:$0xff]
      %v9727 = vld [vmem:[#allocation2 + $0x159] sm:$0xff]
      %v9728 = vpack.c.bf16 %v9688, %v9687
      %v9729 = vpack.c.bf16 %v9690, %v9689
      %v9730 = vpack.c.bf16 %v9692, %v9691
      %v9731 = vpack.c.bf16 %v9694, %v9693
      %v9732 = vpack.c.bf16 %v9696, %v9695
      %v9733 = vpack.c.bf16 %v9698, %v9697
      %v9734 = vpack.c.bf16 %v9700, %v9699
      %v9735 = vpack.c.bf16 %v9702, %v9701
      %v9736 = vpack.c.bf16 %v9704, %v9703
      %v9737 = vpack.c.bf16 %v9706, %v9705
      %v9738 = vpack.c.bf16 %v9708, %v9707
      %v9739 = vpack.c.bf16 %v9710, %v9709
      %v9740 = vpack.c.bf16 %v9712, %v9711
      %v9741 = vpack.c.bf16 %v9714, %v9713
      %v9742 = vpack.c.bf16 %v9716, %v9715
      %v9743 = vpack.c.bf16 %v9718, %v9717
      %v9744 = vpack.c.bf16 %v9720, %v9719
      %v9745 = vpack.c.bf16 %v9722, %v9721
      %v9746 = vpack.c.bf16 %v9724, %v9723
      %v9747 = vpack.c.bf16 %v9726, %v9725
      %v9748 = vpack.c.bf16 %v9727, %v9727
      %s9749 = scalar_lea.vmem %s4, 80
      %v9750 = vld [vmem:[%s9749] sm:$0xf]
      %v9751 = vld [vmem:[%s9749 + $0x4] sm:$0xf]
      %v9752 = vld [vmem:[%s9749 + $0x8] sm:$0xf]
      %v9753 = vld [vmem:[%s9749 + $0xc] sm:$0xf]
      %v9758 = vunpack.c.l.b16 %v9750
      %v9759 = vunpack.c.l.b16 %v9751
      %v9760 = vunpack.c.l.b16 %v9752
      %v9761 = vunpack.c.l.b16 %v9753
      %v9762 = vpack.c.b16 %v9759, %v9758
      %v9763 = vpack.c.b16 %v9761, %v9760
      %v9767 = vsel %vm7999, %v9728, 0
      %v9770 = vsel %vm7999, %v9729, 0
      %v9773 = vsel %vm7999, %v9730, 0
      %v9776 = vsel %vm7999, %v9731, 0
      %v9779 = vsel %vm7999, %v9732, 0
      %v9782 = vsel %vm7999, %v9733, 0
      %v9785 = vsel %vm7999, %v9734, 0
      %v9788 = vsel %vm7999, %v9735, 0
      %v9791 = vsel %vm7999, %v9736, 0
      %v9794 = vsel %vm7999, %v9737, 0
      %v9797 = vsel %vm7999, %v9738, 0
      %v9800 = vsel %vm7999, %v9739, 0
      %v9803 = vsel %vm7999, %v9740, 0
      %v9806 = vsel %vm7999, %v9741, 0
      %v9809 = vsel %vm7999, %v9742, 0
      %v9812 = vsel %vm7999, %v9743, 0
      %v9815 = vsel %vm7999, %v9744, 0
      %v9818 = vsel %vm7999, %v9745, 0
      %v9821 = vsel %vm7999, %v9746, 0
      %v9824 = vsel %vm7999, %v9747, 0
      %v9827 = vsel %vm7999, %v9748, 0
      %9829 = vmatprep.subr.bf16.mxu0 0
      %9830 = vmatpush1.bf16.msra.mxu0 0
      %9831 = vmatprep.subr.bf16.mxu0 0
      %9832 = vmatpush1.bf16.msra.mxu0 0
      %9833 = vmatprep.subr.bf16.mxu0 0
      %9834 = vmatpush1.bf16.msra.mxu0 0
      %9835 = vmatprep.subr.bf16.mxu0 0
      %9836 = vmatpush1.bf16.msra.mxu0 0
      %9837 = vmatprep.subr.bf16.mxu0 0
      %9838 = vmatpush1.bf16.msra.mxu0 0
      %9839 = vmatprep.subr.bf16.mxu0 0
      %9840 = vmatpush1.bf16.msra.mxu0 0
      %9841 = vmatprep.subr.bf16.mxu0 0
      %9842 = vmatpush1.bf16.msra.mxu0 %v9763
      %9843 = vmatprep.subr.bf16.mxu0 0
      %9844 = vmatpush1.bf16.msra.mxu0 %v9762
      %9845 = vmatprep.subr.bf16.mxu0 0
      %9846 = vmatpush2.bf16.msra.mxu0 0
      %9847 = vmatprep.subr.bf16.mxu0 0
      %9848 = vmatpush2.bf16.msra.mxu0 0
      %9849 = vmatprep.subr.bf16.mxu0 0
      %9850 = vmatpush2.bf16.msra.mxu0 0
      %9851 = vmatprep.subr.bf16.mxu0 0
      %9852 = vmatpush2.bf16.msra.mxu0 0
      %9853 = vmatprep.subr.bf16.mxu0 0
      %9854 = vmatpush2.bf16.msra.mxu0 0
      %9855 = vmatprep.subr.bf16.mxu0 0
      %9856 = vmatpush2.bf16.msra.mxu0 0
      %9857 = vmatprep.subr.bf16.mxu0 0
      %9858 = vmatpush2.bf16.msra.mxu0 0
      %9859 = vmatprep.subr.bf16.mxu0 0
      %9860 = vmatpush2.bf16.msra.mxu0 0
      %9861 = vmatprep.mubr.bf16.mxu0 0
      %9862 = vmatmul.mubr.bf16.gmra.mxu0 %v9767
      %v9863 = vpop.f32.mrf.mxu0
      %v9864 = vadd.f32 0.0, %v9863
      %v9865 = vpop.f32.mrf.mxu0
      %v9866 = vpop.f32.mrf.mxu0
      %v9867 = vadd.f32 0.0, %v9866
      %v9868 = vpop.f32.mrf.mxu0
      %9869 = vmatprep.mubr.bf16.mxu0 0
      %9870 = vmatmul.mubr.bf16.gmra.mxu0 %v9770
      %v9871 = vpop.f32.mrf.mxu0
      %v9872 = vadd.f32 0.0, %v9871
      %v9873 = vpop.f32.mrf.mxu0
      %v9874 = vpop.f32.mrf.mxu0
      %v9875 = vadd.f32 0.0, %v9874
      %v9876 = vpop.f32.mrf.mxu0
      %9877 = vmatprep.mubr.bf16.mxu0 0
      %9878 = vmatmul.mubr.bf16.gmra.mxu0 %v9773
      %v9879 = vpop.f32.mrf.mxu0
      %v9880 = vadd.f32 0.0, %v9879
      %v9881 = vpop.f32.mrf.mxu0
      %v9882 = vpop.f32.mrf.mxu0
      %v9883 = vadd.f32 0.0, %v9882
      %v9884 = vpop.f32.mrf.mxu0
      %9885 = vmatprep.mubr.bf16.mxu0 0
      %9886 = vmatmul.mubr.bf16.gmra.mxu0 %v9776
      %v9887 = vpop.f32.mrf.mxu0
      %v9888 = vadd.f32 0.0, %v9887
      %v9889 = vpop.f32.mrf.mxu0
      %v9890 = vpop.f32.mrf.mxu0
      %v9891 = vadd.f32 0.0, %v9890
      %v9892 = vpop.f32.mrf.mxu0
      %9893 = vmatprep.mubr.bf16.mxu0 0
      %9894 = vmatmul.mubr.bf16.gmra.mxu0 %v9779
      %v9895 = vpop.f32.mrf.mxu0
      %v9896 = vadd.f32 0.0, %v9895
      %v9897 = vpop.f32.mrf.mxu0
      %v9898 = vpop.f32.mrf.mxu0
      %v9899 = vadd.f32 0.0, %v9898
      %v9900 = vpop.f32.mrf.mxu0
      %9901 = vmatprep.mubr.bf16.mxu0 0
      %9902 = vmatmul.mubr.bf16.gmra.mxu0 %v9782
      %v9903 = vpop.f32.mrf.mxu0
      %v9904 = vadd.f32 0.0, %v9903
      %v9905 = vpop.f32.mrf.mxu0
      %v9906 = vpop.f32.mrf.mxu0
      %v9907 = vadd.f32 0.0, %v9906
      %v9908 = vpop.f32.mrf.mxu0
      %9909 = vmatprep.mubr.bf16.mxu0 0
      %9910 = vmatmul.mubr.bf16.gmra.mxu0 %v9785
      %v9911 = vpop.f32.mrf.mxu0
      %v9912 = vadd.f32 0.0, %v9911
      %v9913 = vpop.f32.mrf.mxu0
      %v9914 = vpop.f32.mrf.mxu0
      %v9915 = vadd.f32 0.0, %v9914
      %v9916 = vpop.f32.mrf.mxu0
      %9917 = vmatprep.mubr.bf16.mxu0 0
      %9918 = vmatmul.mubr.bf16.gmra.mxu0 %v9788
      %v9919 = vpop.f32.mrf.mxu0
      %v9920 = vadd.f32 0.0, %v9919
      %v9921 = vpop.f32.mrf.mxu0
      %v9922 = vpop.f32.mrf.mxu0
      %v9923 = vadd.f32 0.0, %v9922
      %v9924 = vpop.f32.mrf.mxu0
      %9925 = vmatprep.mubr.bf16.mxu0 0
      %9926 = vmatmul.mubr.bf16.gmra.mxu0 %v9791
      %v9927 = vpop.f32.mrf.mxu0
      %v9928 = vadd.f32 0.0, %v9927
      %v9929 = vpop.f32.mrf.mxu0
      %v9930 = vpop.f32.mrf.mxu0
      %v9931 = vadd.f32 0.0, %v9930
      %v9932 = vpop.f32.mrf.mxu0
      %9933 = vmatprep.mubr.bf16.mxu0 0
      %9934 = vmatmul.mubr.bf16.gmra.mxu0 %v9794
      %v9935 = vpop.f32.mrf.mxu0
      %v9936 = vadd.f32 0.0, %v9935
      %v9937 = vpop.f32.mrf.mxu0
      %v9938 = vpop.f32.mrf.mxu0
      %v9939 = vadd.f32 0.0, %v9938
      %v9940 = vpop.f32.mrf.mxu0
      %9941 = vmatprep.mubr.bf16.mxu0 0
      %9942 = vmatmul.mubr.bf16.gmra.mxu0 %v9797
      %v9943 = vpop.f32.mrf.mxu0
      %v9944 = vadd.f32 0.0, %v9943
      %v9945 = vpop.f32.mrf.mxu0
      %v9946 = vpop.f32.mrf.mxu0
      %v9947 = vadd.f32 0.0, %v9946
      %v9948 = vpop.f32.mrf.mxu0
      %9949 = vmatprep.mubr.bf16.mxu0 0
      %9950 = vmatmul.mubr.bf16.gmra.mxu0 %v9800
      %v9951 = vpop.f32.mrf.mxu0
      %v9952 = vadd.f32 0.0, %v9951
      %v9953 = vpop.f32.mrf.mxu0
      %v9954 = vpop.f32.mrf.mxu0
      %v9955 = vadd.f32 0.0, %v9954
      %v9956 = vpop.f32.mrf.mxu0
      %9957 = vmatprep.mubr.bf16.mxu0 0
      %9958 = vmatmul.mubr.bf16.gmra.mxu0 %v9803
      %v9959 = vpop.f32.mrf.mxu0
      %v9960 = vadd.f32 0.0, %v9959
      %v9961 = vpop.f32.mrf.mxu0
      %v9962 = vpop.f32.mrf.mxu0
      %v9963 = vadd.f32 0.0, %v9962
      %v9964 = vpop.f32.mrf.mxu0
      %9965 = vmatprep.mubr.bf16.mxu0 0
      %9966 = vmatmul.mubr.bf16.gmra.mxu0 %v9806
      %v9967 = vpop.f32.mrf.mxu0
      %v9968 = vadd.f32 0.0, %v9967
      %v9969 = vpop.f32.mrf.mxu0
      %v9970 = vpop.f32.mrf.mxu0
      %v9971 = vadd.f32 0.0, %v9970
      %v9972 = vpop.f32.mrf.mxu0
      %9973 = vmatprep.mubr.bf16.mxu0 0
      %9974 = vmatmul.mubr.bf16.gmra.mxu0 %v9809
      %v9975 = vpop.f32.mrf.mxu0
      %v9976 = vadd.f32 0.0, %v9975
      %v9977 = vpop.f32.mrf.mxu0
      %v9978 = vpop.f32.mrf.mxu0
      %v9979 = vadd.f32 0.0, %v9978
      %v9980 = vpop.f32.mrf.mxu0
      %9981 = vmatprep.mubr.bf16.mxu0 0
      %9982 = vmatmul.mubr.bf16.gmra.mxu0 %v9812
      %v9983 = vpop.f32.mrf.mxu0
      %v9984 = vadd.f32 0.0, %v9983
      %v9985 = vpop.f32.mrf.mxu0
      %v9986 = vpop.f32.mrf.mxu0
      %v9987 = vadd.f32 0.0, %v9986
      %v9988 = vpop.f32.mrf.mxu0
      %9989 = vmatprep.mubr.bf16.mxu0 0
      %9990 = vmatmul.mubr.bf16.gmra.mxu0 %v9815
      %v9991 = vpop.f32.mrf.mxu0
      %v9992 = vadd.f32 0.0, %v9991
      %v9993 = vpop.f32.mrf.mxu0
      %v9994 = vpop.f32.mrf.mxu0
      %v9995 = vadd.f32 0.0, %v9994
      %v9996 = vpop.f32.mrf.mxu0
      %9997 = vmatprep.mubr.bf16.mxu0 0
      %9998 = vmatmul.mubr.bf16.gmra.mxu0 %v9818
      %v9999 = vpop.f32.mrf.mxu0
      %v10000 = vadd.f32 0.0, %v9999
      %v10001 = vpop.f32.mrf.mxu0
      %v10002 = vpop.f32.mrf.mxu0
      %v10003 = vadd.f32 0.0, %v10002
      %v10004 = vpop.f32.mrf.mxu0
      %10005 = vmatprep.mubr.bf16.mxu0 0
      %10006 = vmatmul.mubr.bf16.gmra.mxu0 %v9821
      %v10007 = vpop.f32.mrf.mxu0
      %v10008 = vadd.f32 0.0, %v10007
      %v10009 = vpop.f32.mrf.mxu0
      %v10010 = vpop.f32.mrf.mxu0
      %v10011 = vadd.f32 0.0, %v10010
      %v10012 = vpop.f32.mrf.mxu0
      %10013 = vmatprep.mubr.bf16.mxu0 0
      %10014 = vmatmul.mubr.bf16.gmra.mxu0 %v9824
      %v10015 = vpop.f32.mrf.mxu0
      %v10016 = vadd.f32 0.0, %v10015
      %v10017 = vpop.f32.mrf.mxu0
      %v10018 = vpop.f32.mrf.mxu0
      %v10019 = vadd.f32 0.0, %v10018
      %v10020 = vpop.f32.mrf.mxu0
      %10021 = vmatprep.mubr.bf16.mxu0 0
      %10022 = vmatmul.mubr.bf16.gmra.mxu0 %v9827
      %v10023 = vpop.f32.mrf.mxu0
      %v10024 = vadd.f32 0.0, %v10023
      %v10025 = vpop.f32.mrf.mxu0
      %v10026 = vpop.f32.mrf.mxu0
      %v10027 = vpop.f32.mrf.mxu0
      %10028 = vdwg.mxu0
      %v10029 = vadd.f32 %v9646, %v9864
      %v10030 = vadd.f32 %v9647, %v9867
      %v10031 = vadd.f32 %v9648, %v9872
      %v10032 = vadd.f32 %v9649, %v9875
      %v10033 = vadd.f32 %v9650, %v9880
      %v10034 = vadd.f32 %v9651, %v9883
      %v10035 = vadd.f32 %v9652, %v9888
      %v10036 = vadd.f32 %v9653, %v9891
      %v10037 = vadd.f32 %v9654, %v9896
      %v10038 = vadd.f32 %v9655, %v9899
      %v10039 = vadd.f32 %v9656, %v9904
      %v10040 = vadd.f32 %v9657, %v9907
      %v10041 = vadd.f32 %v9658, %v9912
      %v10042 = vadd.f32 %v9659, %v9915
      %v10043 = vadd.f32 %v9660, %v9920
      %v10044 = vadd.f32 %v9661, %v9923
      %v10045 = vadd.f32 %v9662, %v9928
      %v10046 = vadd.f32 %v9663, %v9931
      %v10047 = vadd.f32 %v9664, %v9936
      %v10048 = vadd.f32 %v9665, %v9939
      %v10049 = vadd.f32 %v9666, %v9944
      %v10050 = vadd.f32 %v9667, %v9947
      %v10051 = vadd.f32 %v9668, %v9952
      %v10052 = vadd.f32 %v9669, %v9955
      %v10053 = vadd.f32 %v9670, %v9960
      %v10054 = vadd.f32 %v9671, %v9963
      %v10055 = vadd.f32 %v9672, %v9968
      %v10056 = vadd.f32 %v9673, %v9971
      %v10057 = vadd.f32 %v9674, %v9976
      %v10058 = vadd.f32 %v9675, %v9979
      %v10059 = vadd.f32 %v9676, %v9984
      %v10060 = vadd.f32 %v9677, %v9987
      %v10061 = vadd.f32 %v9678, %v9992
      %v10062 = vadd.f32 %v9679, %v9995
      %v10063 = vadd.f32 %v9680, %v10000
      %v10064 = vadd.f32 %v9681, %v10003
      %v10065 = vadd.f32 %v9682, %v10008
      %v10066 = vadd.f32 %v9683, %v10011
      %v10067 = vadd.f32 %v9684, %v10016
      %v10068 = vadd.f32 %v9685, %v10019
      %v10069 = vadd.f32 %v9686, %v10024
      %v10070 = vld [vmem:[#allocation2 + $0x29] sm:$0xff]
      %v10071 = vld [vmem:[#allocation2 + $0x31] sm:$0xff]
      %v10072 = vld [vmem:[#allocation2 + $0x39] sm:$0xff]
      %v10073 = vld [vmem:[#allocation2 + $0x41] sm:$0xff]
      %v10074 = vld [vmem:[#allocation2 + $0x49] sm:$0xff]
      %v10075 = vld [vmem:[#allocation2 + $0x51] sm:$0xff]
      %v10076 = vld [vmem:[#allocation2 + $0x59] sm:$0xff]
      %v10077 = vld [vmem:[#allocation2 + $0x61] sm:$0xff]
      %v10078 = vld [vmem:[#allocation2 + $0x69] sm:$0xff]
      %v10079 = vld [vmem:[#allocation2 + $0x71] sm:$0xff]
      %v10080 = vld [vmem:[#allocation2 + $0x79] sm:$0xff]
      %v10081 = vld [vmem:[#allocation2 + $0x81] sm:$0xff]
      %v10082 = vld [vmem:[#allocation2 + $0x89] sm:$0xff]
      %v10083 = vld [vmem:[#allocation2 + $0x91] sm:$0xff]
      %v10084 = vld [vmem:[#allocation2 + $0x99] sm:$0xff]
      %v10085 = vld [vmem:[#allocation2 + $0xa1] sm:$0xff]
      %v10086 = vld [vmem:[#allocation2 + $0xa9] sm:$0xff]
      %v10087 = vld [vmem:[#allocation2 + $0xb1] sm:$0xff]
      %v10088 = vld [vmem:[#allocation2 + $0xb9] sm:$0xff]
      %v10089 = vld [vmem:[#allocation2 + $0xc1] sm:$0xff]
      %v10090 = vld [vmem:[#allocation2 + $0xc9] sm:$0xff]
      %v10091 = vld [vmem:[#allocation2 + $0xd1] sm:$0xff]
      %v10092 = vld [vmem:[#allocation2 + $0xd9] sm:$0xff]
      %v10093 = vld [vmem:[#allocation2 + $0xe1] sm:$0xff]
      %v10094 = vld [vmem:[#allocation2 + $0xe9] sm:$0xff]
      %v10095 = vld [vmem:[#allocation2 + $0xf1] sm:$0xff]
      %v10096 = vld [vmem:[#allocation2 + $0xf9] sm:$0xff]
      %v10097 = vld [vmem:[#allocation2 + $0x101] sm:$0xff]
      %v10098 = vld [vmem:[#allocation2 + $0x109] sm:$0xff]
      %v10099 = vld [vmem:[#allocation2 + $0x111] sm:$0xff]
      %v10100 = vld [vmem:[#allocation2 + $0x119] sm:$0xff]
      %v10101 = vld [vmem:[#allocation2 + $0x121] sm:$0xff]
      %v10102 = vld [vmem:[#allocation2 + $0x129] sm:$0xff]
      %v10103 = vld [vmem:[#allocation2 + $0x131] sm:$0xff]
      %v10104 = vld [vmem:[#allocation2 + $0x139] sm:$0xff]
      %v10105 = vld [vmem:[#allocation2 + $0x141] sm:$0xff]
      %v10106 = vld [vmem:[#allocation2 + $0x149] sm:$0xff]
      %v10107 = vld [vmem:[#allocation2 + $0x151] sm:$0xff]
      %v10108 = vld [vmem:[#allocation2 + $0x159] sm:$0xff]
      %v10109 = vld [vmem:[#allocation2 + $0x161] sm:$0xff]
      %v10110 = vld [vmem:[#allocation2 + $0x169] sm:$0xff]
      %v10111 = vpack.c.bf16 %v10071, %v10070
      %v10112 = vpack.c.bf16 %v10073, %v10072
      %v10113 = vpack.c.bf16 %v10075, %v10074
      %v10114 = vpack.c.bf16 %v10077, %v10076
      %v10115 = vpack.c.bf16 %v10079, %v10078
      %v10116 = vpack.c.bf16 %v10081, %v10080
      %v10117 = vpack.c.bf16 %v10083, %v10082
      %v10118 = vpack.c.bf16 %v10085, %v10084
      %v10119 = vpack.c.bf16 %v10087, %v10086
      %v10120 = vpack.c.bf16 %v10089, %v10088
      %v10121 = vpack.c.bf16 %v10091, %v10090
      %v10122 = vpack.c.bf16 %v10093, %v10092
      %v10123 = vpack.c.bf16 %v10095, %v10094
      %v10124 = vpack.c.bf16 %v10097, %v10096
      %v10125 = vpack.c.bf16 %v10099, %v10098
      %v10126 = vpack.c.bf16 %v10101, %v10100
      %v10127 = vpack.c.bf16 %v10103, %v10102
      %v10128 = vpack.c.bf16 %v10105, %v10104
      %v10129 = vpack.c.bf16 %v10107, %v10106
      %v10130 = vpack.c.bf16 %v10109, %v10108
      %v10131 = vpack.c.bf16 %v10110, %v10110
      %s10132 = scalar_lea.vmem %s4, 96
      %v10133 = vld [vmem:[%s10132] sm:$0xf]
      %v10134 = vld [vmem:[%s10132 + $0x4] sm:$0xf]
      %v10135 = vld [vmem:[%s10132 + $0x8] sm:$0xf]
      %v10136 = vld [vmem:[%s10132 + $0xc] sm:$0xf]
      %v10141 = vunpack.c.l.b16 %v10133
      %v10142 = vunpack.c.l.b16 %v10134
      %v10143 = vunpack.c.l.b16 %v10135
      %v10144 = vunpack.c.l.b16 %v10136
      %v10145 = vpack.c.b16 %v10142, %v10141
      %v10146 = vpack.c.b16 %v10144, %v10143
      %v10150 = vsel %vm7999, %v10111, 0
      %v10153 = vsel %vm7999, %v10112, 0
      %v10156 = vsel %vm7999, %v10113, 0
      %v10159 = vsel %vm7999, %v10114, 0
      %v10162 = vsel %vm7999, %v10115, 0
      %v10165 = vsel %vm7999, %v10116, 0
      %v10168 = vsel %vm7999, %v10117, 0
      %v10171 = vsel %vm7999, %v10118, 0
      %v10174 = vsel %vm7999, %v10119, 0
      %v10177 = vsel %vm7999, %v10120, 0
      %v10180 = vsel %vm7999, %v10121, 0
      %v10183 = vsel %vm7999, %v10122, 0
      %v10186 = vsel %vm7999, %v10123, 0
      %v10189 = vsel %vm7999, %v10124, 0
      %v10192 = vsel %vm7999, %v10125, 0
      %v10195 = vsel %vm7999, %v10126, 0
      %v10198 = vsel %vm7999, %v10127, 0
      %v10201 = vsel %vm7999, %v10128, 0
      %v10204 = vsel %vm7999, %v10129, 0
      %v10207 = vsel %vm7999, %v10130, 0
      %v10210 = vsel %vm7999, %v10131, 0
      %10212 = vmatprep.subr.bf16.mxu0 0
      %10213 = vmatpush1.bf16.msra.mxu0 0
      %10214 = vmatprep.subr.bf16.mxu0 0
      %10215 = vmatpush1.bf16.msra.mxu0 0
      %10216 = vmatprep.subr.bf16.mxu0 0
      %10217 = vmatpush1.bf16.msra.mxu0 0
      %10218 = vmatprep.subr.bf16.mxu0 0
      %10219 = vmatpush1.bf16.msra.mxu0 0
      %10220 = vmatprep.subr.bf16.mxu0 0
      %10221 = vmatpush1.bf16.msra.mxu0 0
      %10222 = vmatprep.subr.bf16.mxu0 0
      %10223 = vmatpush1.bf16.msra.mxu0 0
      %10224 = vmatprep.subr.bf16.mxu0 0
      %10225 = vmatpush1.bf16.msra.mxu0 %v10146
      %10226 = vmatprep.subr.bf16.mxu0 0
      %10227 = vmatpush1.bf16.msra.mxu0 %v10145
      %10228 = vmatprep.subr.bf16.mxu0 0
      %10229 = vmatpush2.bf16.msra.mxu0 0
      %10230 = vmatprep.subr.bf16.mxu0 0
      %10231 = vmatpush2.bf16.msra.mxu0 0
      %10232 = vmatprep.subr.bf16.mxu0 0
      %10233 = vmatpush2.bf16.msra.mxu0 0
      %10234 = vmatprep.subr.bf16.mxu0 0
      %10235 = vmatpush2.bf16.msra.mxu0 0
      %10236 = vmatprep.subr.bf16.mxu0 0
      %10237 = vmatpush2.bf16.msra.mxu0 0
      %10238 = vmatprep.subr.bf16.mxu0 0
      %10239 = vmatpush2.bf16.msra.mxu0 0
      %10240 = vmatprep.subr.bf16.mxu0 0
      %10241 = vmatpush2.bf16.msra.mxu0 0
      %10242 = vmatprep.subr.bf16.mxu0 0
      %10243 = vmatpush2.bf16.msra.mxu0 0
      %10244 = vmatprep.mubr.bf16.mxu0 0
      %10245 = vmatmul.mubr.bf16.gmra.mxu0 %v10150
      %v10246 = vpop.f32.mrf.mxu0
      %v10247 = vadd.f32 0.0, %v10246
      %v10248 = vpop.f32.mrf.mxu0
      %v10249 = vpop.f32.mrf.mxu0
      %v10250 = vadd.f32 0.0, %v10249
      %v10251 = vpop.f32.mrf.mxu0
      %10252 = vmatprep.mubr.bf16.mxu0 0
      %10253 = vmatmul.mubr.bf16.gmra.mxu0 %v10153
      %v10254 = vpop.f32.mrf.mxu0
      %v10255 = vadd.f32 0.0, %v10254
      %v10256 = vpop.f32.mrf.mxu0
      %v10257 = vpop.f32.mrf.mxu0
      %v10258 = vadd.f32 0.0, %v10257
      %v10259 = vpop.f32.mrf.mxu0
      %10260 = vmatprep.mubr.bf16.mxu0 0
      %10261 = vmatmul.mubr.bf16.gmra.mxu0 %v10156
      %v10262 = vpop.f32.mrf.mxu0
      %v10263 = vadd.f32 0.0, %v10262
      %v10264 = vpop.f32.mrf.mxu0
      %v10265 = vpop.f32.mrf.mxu0
      %v10266 = vadd.f32 0.0, %v10265
      %v10267 = vpop.f32.mrf.mxu0
      %10268 = vmatprep.mubr.bf16.mxu0 0
      %10269 = vmatmul.mubr.bf16.gmra.mxu0 %v10159
      %v10270 = vpop.f32.mrf.mxu0
      %v10271 = vadd.f32 0.0, %v10270
      %v10272 = vpop.f32.mrf.mxu0
      %v10273 = vpop.f32.mrf.mxu0
      %v10274 = vadd.f32 0.0, %v10273
      %v10275 = vpop.f32.mrf.mxu0
      %10276 = vmatprep.mubr.bf16.mxu0 0
      %10277 = vmatmul.mubr.bf16.gmra.mxu0 %v10162
      %v10278 = vpop.f32.mrf.mxu0
      %v10279 = vadd.f32 0.0, %v10278
      %v10280 = vpop.f32.mrf.mxu0
      %v10281 = vpop.f32.mrf.mxu0
      %v10282 = vadd.f32 0.0, %v10281
      %v10283 = vpop.f32.mrf.mxu0
      %10284 = vmatprep.mubr.bf16.mxu0 0
      %10285 = vmatmul.mubr.bf16.gmra.mxu0 %v10165
      %v10286 = vpop.f32.mrf.mxu0
      %v10287 = vadd.f32 0.0, %v10286
      %v10288 = vpop.f32.mrf.mxu0
      %v10289 = vpop.f32.mrf.mxu0
      %v10290 = vadd.f32 0.0, %v10289
      %v10291 = vpop.f32.mrf.mxu0
      %10292 = vmatprep.mubr.bf16.mxu0 0
      %10293 = vmatmul.mubr.bf16.gmra.mxu0 %v10168
      %v10294 = vpop.f32.mrf.mxu0
      %v10295 = vadd.f32 0.0, %v10294
      %v10296 = vpop.f32.mrf.mxu0
      %v10297 = vpop.f32.mrf.mxu0
      %v10298 = vadd.f32 0.0, %v10297
      %v10299 = vpop.f32.mrf.mxu0
      %10300 = vmatprep.mubr.bf16.mxu0 0
      %10301 = vmatmul.mubr.bf16.gmra.mxu0 %v10171
      %v10302 = vpop.f32.mrf.mxu0
      %v10303 = vadd.f32 0.0, %v10302
      %v10304 = vpop.f32.mrf.mxu0
      %v10305 = vpop.f32.mrf.mxu0
      %v10306 = vadd.f32 0.0, %v10305
      %v10307 = vpop.f32.mrf.mxu0
      %10308 = vmatprep.mubr.bf16.mxu0 0
      %10309 = vmatmul.mubr.bf16.gmra.mxu0 %v10174
      %v10310 = vpop.f32.mrf.mxu0
      %v10311 = vadd.f32 0.0, %v10310
      %v10312 = vpop.f32.mrf.mxu0
      %v10313 = vpop.f32.mrf.mxu0
      %v10314 = vadd.f32 0.0, %v10313
      %v10315 = vpop.f32.mrf.mxu0
      %10316 = vmatprep.mubr.bf16.mxu0 0
      %10317 = vmatmul.mubr.bf16.gmra.mxu0 %v10177
      %v10318 = vpop.f32.mrf.mxu0
      %v10319 = vadd.f32 0.0, %v10318
      %v10320 = vpop.f32.mrf.mxu0
      %v10321 = vpop.f32.mrf.mxu0
      %v10322 = vadd.f32 0.0, %v10321
      %v10323 = vpop.f32.mrf.mxu0
      %10324 = vmatprep.mubr.bf16.mxu0 0
      %10325 = vmatmul.mubr.bf16.gmra.mxu0 %v10180
      %v10326 = vpop.f32.mrf.mxu0
      %v10327 = vadd.f32 0.0, %v10326
      %v10328 = vpop.f32.mrf.mxu0
      %v10329 = vpop.f32.mrf.mxu0
      %v10330 = vadd.f32 0.0, %v10329
      %v10331 = vpop.f32.mrf.mxu0
      %10332 = vmatprep.mubr.bf16.mxu0 0
      %10333 = vmatmul.mubr.bf16.gmra.mxu0 %v10183
      %v10334 = vpop.f32.mrf.mxu0
      %v10335 = vadd.f32 0.0, %v10334
      %v10336 = vpop.f32.mrf.mxu0
      %v10337 = vpop.f32.mrf.mxu0
      %v10338 = vadd.f32 0.0, %v10337
      %v10339 = vpop.f32.mrf.mxu0
      %10340 = vmatprep.mubr.bf16.mxu0 0
      %10341 = vmatmul.mubr.bf16.gmra.mxu0 %v10186
      %v10342 = vpop.f32.mrf.mxu0
      %v10343 = vadd.f32 0.0, %v10342
      %v10344 = vpop.f32.mrf.mxu0
      %v10345 = vpop.f32.mrf.mxu0
      %v10346 = vadd.f32 0.0, %v10345
      %v10347 = vpop.f32.mrf.mxu0
      %10348 = vmatprep.mubr.bf16.mxu0 0
      %10349 = vmatmul.mubr.bf16.gmra.mxu0 %v10189
      %v10350 = vpop.f32.mrf.mxu0
      %v10351 = vadd.f32 0.0, %v10350
      %v10352 = vpop.f32.mrf.mxu0
      %v10353 = vpop.f32.mrf.mxu0
      %v10354 = vadd.f32 0.0, %v10353
      %v10355 = vpop.f32.mrf.mxu0
      %10356 = vmatprep.mubr.bf16.mxu0 0
      %10357 = vmatmul.mubr.bf16.gmra.mxu0 %v10192
      %v10358 = vpop.f32.mrf.mxu0
      %v10359 = vadd.f32 0.0, %v10358
      %v10360 = vpop.f32.mrf.mxu0
      %v10361 = vpop.f32.mrf.mxu0
      %v10362 = vadd.f32 0.0, %v10361
      %v10363 = vpop.f32.mrf.mxu0
      %10364 = vmatprep.mubr.bf16.mxu0 0
      %10365 = vmatmul.mubr.bf16.gmra.mxu0 %v10195
      %v10366 = vpop.f32.mrf.mxu0
      %v10367 = vadd.f32 0.0, %v10366
      %v10368 = vpop.f32.mrf.mxu0
      %v10369 = vpop.f32.mrf.mxu0
      %v10370 = vadd.f32 0.0, %v10369
      %v10371 = vpop.f32.mrf.mxu0
      %10372 = vmatprep.mubr.bf16.mxu0 0
      %10373 = vmatmul.mubr.bf16.gmra.mxu0 %v10198
      %v10374 = vpop.f32.mrf.mxu0
      %v10375 = vadd.f32 0.0, %v10374
      %v10376 = vpop.f32.mrf.mxu0
      %v10377 = vpop.f32.mrf.mxu0
      %v10378 = vadd.f32 0.0, %v10377
      %v10379 = vpop.f32.mrf.mxu0
      %10380 = vmatprep.mubr.bf16.mxu0 0
      %10381 = vmatmul.mubr.bf16.gmra.mxu0 %v10201
      %v10382 = vpop.f32.mrf.mxu0
      %v10383 = vadd.f32 0.0, %v10382
      %v10384 = vpop.f32.mrf.mxu0
      %v10385 = vpop.f32.mrf.mxu0
      %v10386 = vadd.f32 0.0, %v10385
      %v10387 = vpop.f32.mrf.mxu0
      %10388 = vmatprep.mubr.bf16.mxu0 0
      %10389 = vmatmul.mubr.bf16.gmra.mxu0 %v10204
      %v10390 = vpop.f32.mrf.mxu0
      %v10391 = vadd.f32 0.0, %v10390
      %v10392 = vpop.f32.mrf.mxu0
      %v10393 = vpop.f32.mrf.mxu0
      %v10394 = vadd.f32 0.0, %v10393
      %v10395 = vpop.f32.mrf.mxu0
      %10396 = vmatprep.mubr.bf16.mxu0 0
      %10397 = vmatmul.mubr.bf16.gmra.mxu0 %v10207
      %v10398 = vpop.f32.mrf.mxu0
      %v10399 = vadd.f32 0.0, %v10398
      %v10400 = vpop.f32.mrf.mxu0
      %v10401 = vpop.f32.mrf.mxu0
      %v10402 = vadd.f32 0.0, %v10401
      %v10403 = vpop.f32.mrf.mxu0
      %10404 = vmatprep.mubr.bf16.mxu0 0
      %10405 = vmatmul.mubr.bf16.gmra.mxu0 %v10210
      %v10406 = vpop.f32.mrf.mxu0
      %v10407 = vadd.f32 0.0, %v10406
      %v10408 = vpop.f32.mrf.mxu0
      %v10409 = vpop.f32.mrf.mxu0
      %v10410 = vpop.f32.mrf.mxu0
      %10411 = vdwg.mxu0
      %v10412 = vadd.f32 %v10029, %v10247
      %v10413 = vadd.f32 %v10030, %v10250
      %v10414 = vadd.f32 %v10031, %v10255
      %v10415 = vadd.f32 %v10032, %v10258
      %v10416 = vadd.f32 %v10033, %v10263
      %v10417 = vadd.f32 %v10034, %v10266
      %v10418 = vadd.f32 %v10035, %v10271
      %v10419 = vadd.f32 %v10036, %v10274
      %v10420 = vadd.f32 %v10037, %v10279
      %v10421 = vadd.f32 %v10038, %v10282
      %v10422 = vadd.f32 %v10039, %v10287
      %v10423 = vadd.f32 %v10040, %v10290
      %v10424 = vadd.f32 %v10041, %v10295
      %v10425 = vadd.f32 %v10042, %v10298
      %v10426 = vadd.f32 %v10043, %v10303
      %v10427 = vadd.f32 %v10044, %v10306
      %v10428 = vadd.f32 %v10045, %v10311
      %v10429 = vadd.f32 %v10046, %v10314
      %v10430 = vadd.f32 %v10047, %v10319
      %v10431 = vadd.f32 %v10048, %v10322
      %v10432 = vadd.f32 %v10049, %v10327
      %v10433 = vadd.f32 %v10050, %v10330
      %v10434 = vadd.f32 %v10051, %v10335
      %v10435 = vadd.f32 %v10052, %v10338
      %v10436 = vadd.f32 %v10053, %v10343
      %v10437 = vadd.f32 %v10054, %v10346
      %v10438 = vadd.f32 %v10055, %v10351
      %v10439 = vadd.f32 %v10056, %v10354
      %v10440 = vadd.f32 %v10057, %v10359
      %v10441 = vadd.f32 %v10058, %v10362
      %v10442 = vadd.f32 %v10059, %v10367
      %v10443 = vadd.f32 %v10060, %v10370
      %v10444 = vadd.f32 %v10061, %v10375
      %v10445 = vadd.f32 %v10062, %v10378
      %v10446 = vadd.f32 %v10063, %v10383
      %v10447 = vadd.f32 %v10064, %v10386
      %v10448 = vadd.f32 %v10065, %v10391
      %v10449 = vadd.f32 %v10066, %v10394
      %v10450 = vadd.f32 %v10067, %v10399
      %v10451 = vadd.f32 %v10068, %v10402
      %v10452 = vadd.f32 %v10069, %v10407
      %v10453 = vld [vmem:[#allocation2 + $0x2a] sm:$0xff]
      %v10454 = vld [vmem:[#allocation2 + $0x32] sm:$0xff]
      %v10455 = vld [vmem:[#allocation2 + $0x3a] sm:$0xff]
      %v10456 = vld [vmem:[#allocation2 + $0x42] sm:$0xff]
      %v10457 = vld [vmem:[#allocation2 + $0x4a] sm:$0xff]
      %v10458 = vld [vmem:[#allocation2 + $0x52] sm:$0xff]
      %v10459 = vld [vmem:[#allocation2 + $0x5a] sm:$0xff]
      %v10460 = vld [vmem:[#allocation2 + $0x62] sm:$0xff]
      %v10461 = vld [vmem:[#allocation2 + $0x6a] sm:$0xff]
      %v10462 = vld [vmem:[#allocation2 + $0x72] sm:$0xff]
      %v10463 = vld [vmem:[#allocation2 + $0x7a] sm:$0xff]
      %v10464 = vld [vmem:[#allocation2 + $0x82] sm:$0xff]
      %v10465 = vld [vmem:[#allocation2 + $0x8a] sm:$0xff]
      %v10466 = vld [vmem:[#allocation2 + $0x92] sm:$0xff]
      %v10467 = vld [vmem:[#allocation2 + $0x9a] sm:$0xff]
      %v10468 = vld [vmem:[#allocation2 + $0xa2] sm:$0xff]
      %v10469 = vld [vmem:[#allocation2 + $0xaa] sm:$0xff]
      %v10470 = vld [vmem:[#allocation2 + $0xb2] sm:$0xff]
      %v10471 = vld [vmem:[#allocation2 + $0xba] sm:$0xff]
      %v10472 = vld [vmem:[#allocation2 + $0xc2] sm:$0xff]
      %v10473 = vld [vmem:[#allocation2 + $0xca] sm:$0xff]
      %v10474 = vld [vmem:[#allocation2 + $0xd2] sm:$0xff]
      %v10475 = vld [vmem:[#allocation2 + $0xda] sm:$0xff]
      %v10476 = vld [vmem:[#allocation2 + $0xe2] sm:$0xff]
      %v10477 = vld [vmem:[#allocation2 + $0xea] sm:$0xff]
      %v10478 = vld [vmem:[#allocation2 + $0xf2] sm:$0xff]
      %v10479 = vld [vmem:[#allocation2 + $0xfa] sm:$0xff]
      %v10480 = vld [vmem:[#allocation2 + $0x102] sm:$0xff]
      %v10481 = vld [vmem:[#allocation2 + $0x10a] sm:$0xff]
      %v10482 = vld [vmem:[#allocation2 + $0x112] sm:$0xff]
      %v10483 = vld [vmem:[#allocation2 + $0x11a] sm:$0xff]
      %v10484 = vld [vmem:[#allocation2 + $0x122] sm:$0xff]
      %v10485 = vld [vmem:[#allocation2 + $0x12a] sm:$0xff]
      %v10486 = vld [vmem:[#allocation2 + $0x132] sm:$0xff]
      %v10487 = vld [vmem:[#allocation2 + $0x13a] sm:$0xff]
      %v10488 = vld [vmem:[#allocation2 + $0x142] sm:$0xff]
      %v10489 = vld [vmem:[#allocation2 + $0x14a] sm:$0xff]
      %v10490 = vld [vmem:[#allocation2 + $0x152] sm:$0xff]
      %v10491 = vld [vmem:[#allocation2 + $0x15a] sm:$0xff]
      %v10492 = vld [vmem:[#allocation2 + $0x162] sm:$0xff]
      %v10493 = vld [vmem:[#allocation2 + $0x16a] sm:$0xff]
      %v10494 = vpack.c.bf16 %v10454, %v10453
      %v10495 = vpack.c.bf16 %v10456, %v10455
      %v10496 = vpack.c.bf16 %v10458, %v10457
      %v10497 = vpack.c.bf16 %v10460, %v10459
      %v10498 = vpack.c.bf16 %v10462, %v10461
      %v10499 = vpack.c.bf16 %v10464, %v10463
      %v10500 = vpack.c.bf16 %v10466, %v10465
      %v10501 = vpack.c.bf16 %v10468, %v10467
      %v10502 = vpack.c.bf16 %v10470, %v10469
      %v10503 = vpack.c.bf16 %v10472, %v10471
      %v10504 = vpack.c.bf16 %v10474, %v10473
      %v10505 = vpack.c.bf16 %v10476, %v10475
      %v10506 = vpack.c.bf16 %v10478, %v10477
      %v10507 = vpack.c.bf16 %v10480, %v10479
      %v10508 = vpack.c.bf16 %v10482, %v10481
      %v10509 = vpack.c.bf16 %v10484, %v10483
      %v10510 = vpack.c.bf16 %v10486, %v10485
      %v10511 = vpack.c.bf16 %v10488, %v10487
      %v10512 = vpack.c.bf16 %v10490, %v10489
      %v10513 = vpack.c.bf16 %v10492, %v10491
      %v10514 = vpack.c.bf16 %v10493, %v10493
      %s10515 = scalar_lea.vmem %s4, 112
      %v10516 = vld [vmem:[%s10515] sm:$0xf]
      %v10517 = vld [vmem:[%s10515 + $0x4] sm:$0xf]
      %v10518 = vld [vmem:[%s10515 + $0x8] sm:$0xf]
      %v10519 = vld [vmem:[%s10515 + $0xc] sm:$0xf]
      %v10524 = vunpack.c.l.b16 %v10516
      %v10525 = vunpack.c.l.b16 %v10517
      %v10526 = vunpack.c.l.b16 %v10518
      %v10527 = vunpack.c.l.b16 %v10519
      %v10528 = vpack.c.b16 %v10525, %v10524
      %v10529 = vpack.c.b16 %v10527, %v10526
      %v10533 = vsel %vm7999, %v10494, 0
      %v10536 = vsel %vm7999, %v10495, 0
      %v10539 = vsel %vm7999, %v10496, 0
      %v10542 = vsel %vm7999, %v10497, 0
      %v10545 = vsel %vm7999, %v10498, 0
      %v10548 = vsel %vm7999, %v10499, 0
      %v10551 = vsel %vm7999, %v10500, 0
      %v10554 = vsel %vm7999, %v10501, 0
      %v10557 = vsel %vm7999, %v10502, 0
      %v10560 = vsel %vm7999, %v10503, 0
      %v10563 = vsel %vm7999, %v10504, 0
      %v10566 = vsel %vm7999, %v10505, 0
      %v10569 = vsel %vm7999, %v10506, 0
      %v10572 = vsel %vm7999, %v10507, 0
      %v10575 = vsel %vm7999, %v10508, 0
      %v10578 = vsel %vm7999, %v10509, 0
      %v10581 = vsel %vm7999, %v10510, 0
      %v10584 = vsel %vm7999, %v10511, 0
      %v10587 = vsel %vm7999, %v10512, 0
      %v10590 = vsel %vm7999, %v10513, 0
      %v10593 = vsel %vm7999, %v10514, 0
      %10595 = vmatprep.subr.bf16.mxu0 0
      %10596 = vmatpush1.bf16.msra.mxu0 0
      %10597 = vmatprep.subr.bf16.mxu0 0
      %10598 = vmatpush1.bf16.msra.mxu0 0
      %10599 = vmatprep.subr.bf16.mxu0 0
      %10600 = vmatpush1.bf16.msra.mxu0 0
      %10601 = vmatprep.subr.bf16.mxu0 0
      %10602 = vmatpush1.bf16.msra.mxu0 0
      %10603 = vmatprep.subr.bf16.mxu0 0
      %10604 = vmatpush1.bf16.msra.mxu0 0
      %10605 = vmatprep.subr.bf16.mxu0 0
      %10606 = vmatpush1.bf16.msra.mxu0 0
      %10607 = vmatprep.subr.bf16.mxu0 0
      %10608 = vmatpush1.bf16.msra.mxu0 %v10529
      %10609 = vmatprep.subr.bf16.mxu0 0
      %10610 = vmatpush1.bf16.msra.mxu0 %v10528
      %10611 = vmatprep.subr.bf16.mxu0 0
      %10612 = vmatpush2.bf16.msra.mxu0 0
      %10613 = vmatprep.subr.bf16.mxu0 0
      %10614 = vmatpush2.bf16.msra.mxu0 0
      %10615 = vmatprep.subr.bf16.mxu0 0
      %10616 = vmatpush2.bf16.msra.mxu0 0
      %10617 = vmatprep.subr.bf16.mxu0 0
      %10618 = vmatpush2.bf16.msra.mxu0 0
      %10619 = vmatprep.subr.bf16.mxu0 0
      %10620 = vmatpush2.bf16.msra.mxu0 0
      %10621 = vmatprep.subr.bf16.mxu0 0
      %10622 = vmatpush2.bf16.msra.mxu0 0
      %10623 = vmatprep.subr.bf16.mxu0 0
      %10624 = vmatpush2.bf16.msra.mxu0 0
      %10625 = vmatprep.subr.bf16.mxu0 0
      %10626 = vmatpush2.bf16.msra.mxu0 0
      %10627 = vmatprep.mubr.bf16.mxu0 0
      %10628 = vmatmul.mubr.bf16.gmra.mxu0 %v10533
      %v10629 = vpop.f32.mrf.mxu0
      %v10630 = vadd.f32 0.0, %v10629
      %v10631 = vpop.f32.mrf.mxu0
      %v10632 = vpop.f32.mrf.mxu0
      %v10633 = vadd.f32 0.0, %v10632
      %v10634 = vpop.f32.mrf.mxu0
      %10635 = vmatprep.mubr.bf16.mxu0 0
      %10636 = vmatmul.mubr.bf16.gmra.mxu0 %v10536
      %v10637 = vpop.f32.mrf.mxu0
      %v10638 = vadd.f32 0.0, %v10637
      %v10639 = vpop.f32.mrf.mxu0
      %v10640 = vpop.f32.mrf.mxu0
      %v10641 = vadd.f32 0.0, %v10640
      %v10642 = vpop.f32.mrf.mxu0
      %10643 = vmatprep.mubr.bf16.mxu0 0
      %10644 = vmatmul.mubr.bf16.gmra.mxu0 %v10539
      %v10645 = vpop.f32.mrf.mxu0
      %v10646 = vadd.f32 0.0, %v10645
      %v10647 = vpop.f32.mrf.mxu0
      %v10648 = vpop.f32.mrf.mxu0
      %v10649 = vadd.f32 0.0, %v10648
      %v10650 = vpop.f32.mrf.mxu0
      %10651 = vmatprep.mubr.bf16.mxu0 0
      %10652 = vmatmul.mubr.bf16.gmra.mxu0 %v10542
      %v10653 = vpop.f32.mrf.mxu0
      %v10654 = vadd.f32 0.0, %v10653
      %v10655 = vpop.f32.mrf.mxu0
      %v10656 = vpop.f32.mrf.mxu0
      %v10657 = vadd.f32 0.0, %v10656
      %v10658 = vpop.f32.mrf.mxu0
      %10659 = vmatprep.mubr.bf16.mxu0 0
      %10660 = vmatmul.mubr.bf16.gmra.mxu0 %v10545
      %v10661 = vpop.f32.mrf.mxu0
      %v10662 = vadd.f32 0.0, %v10661
      %v10663 = vpop.f32.mrf.mxu0
      %v10664 = vpop.f32.mrf.mxu0
      %v10665 = vadd.f32 0.0, %v10664
      %v10666 = vpop.f32.mrf.mxu0
      %10667 = vmatprep.mubr.bf16.mxu0 0
      %10668 = vmatmul.mubr.bf16.gmra.mxu0 %v10548
      %v10669 = vpop.f32.mrf.mxu0
      %v10670 = vadd.f32 0.0, %v10669
      %v10671 = vpop.f32.mrf.mxu0
      %v10672 = vpop.f32.mrf.mxu0
      %v10673 = vadd.f32 0.0, %v10672
      %v10674 = vpop.f32.mrf.mxu0
      %10675 = vmatprep.mubr.bf16.mxu0 0
      %10676 = vmatmul.mubr.bf16.gmra.mxu0 %v10551
      %v10677 = vpop.f32.mrf.mxu0
      %v10678 = vadd.f32 0.0, %v10677
      %v10679 = vpop.f32.mrf.mxu0
      %v10680 = vpop.f32.mrf.mxu0
      %v10681 = vadd.f32 0.0, %v10680
      %v10682 = vpop.f32.mrf.mxu0
      %10683 = vmatprep.mubr.bf16.mxu0 0
      %10684 = vmatmul.mubr.bf16.gmra.mxu0 %v10554
      %v10685 = vpop.f32.mrf.mxu0
      %v10686 = vadd.f32 0.0, %v10685
      %v10687 = vpop.f32.mrf.mxu0
      %v10688 = vpop.f32.mrf.mxu0
      %v10689 = vadd.f32 0.0, %v10688
      %v10690 = vpop.f32.mrf.mxu0
      %10691 = vmatprep.mubr.bf16.mxu0 0
      %10692 = vmatmul.mubr.bf16.gmra.mxu0 %v10557
      %v10693 = vpop.f32.mrf.mxu0
      %v10694 = vadd.f32 0.0, %v10693
      %v10695 = vpop.f32.mrf.mxu0
      %v10696 = vpop.f32.mrf.mxu0
      %v10697 = vadd.f32 0.0, %v10696
      %v10698 = vpop.f32.mrf.mxu0
      %10699 = vmatprep.mubr.bf16.mxu0 0
      %10700 = vmatmul.mubr.bf16.gmra.mxu0 %v10560
      %v10701 = vpop.f32.mrf.mxu0
      %v10702 = vadd.f32 0.0, %v10701
      %v10703 = vpop.f32.mrf.mxu0
      %v10704 = vpop.f32.mrf.mxu0
      %v10705 = vadd.f32 0.0, %v10704
      %v10706 = vpop.f32.mrf.mxu0
      %10707 = vmatprep.mubr.bf16.mxu0 0
      %10708 = vmatmul.mubr.bf16.gmra.mxu0 %v10563
      %v10709 = vpop.f32.mrf.mxu0
      %v10710 = vadd.f32 0.0, %v10709
      %v10711 = vpop.f32.mrf.mxu0
      %v10712 = vpop.f32.mrf.mxu0
      %v10713 = vadd.f32 0.0, %v10712
      %v10714 = vpop.f32.mrf.mxu0
      %10715 = vmatprep.mubr.bf16.mxu0 0
      %10716 = vmatmul.mubr.bf16.gmra.mxu0 %v10566
      %v10717 = vpop.f32.mrf.mxu0
      %v10718 = vadd.f32 0.0, %v10717
      %v10719 = vpop.f32.mrf.mxu0
      %v10720 = vpop.f32.mrf.mxu0
      %v10721 = vadd.f32 0.0, %v10720
      %v10722 = vpop.f32.mrf.mxu0
      %10723 = vmatprep.mubr.bf16.mxu0 0
      %10724 = vmatmul.mubr.bf16.gmra.mxu0 %v10569
      %v10725 = vpop.f32.mrf.mxu0
      %v10726 = vadd.f32 0.0, %v10725
      %v10727 = vpop.f32.mrf.mxu0
      %v10728 = vpop.f32.mrf.mxu0
      %v10729 = vadd.f32 0.0, %v10728
      %v10730 = vpop.f32.mrf.mxu0
      %10731 = vmatprep.mubr.bf16.mxu0 0
      %10732 = vmatmul.mubr.bf16.gmra.mxu0 %v10572
      %v10733 = vpop.f32.mrf.mxu0
      %v10734 = vadd.f32 0.0, %v10733
      %v10735 = vpop.f32.mrf.mxu0
      %v10736 = vpop.f32.mrf.mxu0
      %v10737 = vadd.f32 0.0, %v10736
      %v10738 = vpop.f32.mrf.mxu0
      %10739 = vmatprep.mubr.bf16.mxu0 0
      %10740 = vmatmul.mubr.bf16.gmra.mxu0 %v10575
      %v10741 = vpop.f32.mrf.mxu0
      %v10742 = vadd.f32 0.0, %v10741
      %v10743 = vpop.f32.mrf.mxu0
      %v10744 = vpop.f32.mrf.mxu0
      %v10745 = vadd.f32 0.0, %v10744
      %v10746 = vpop.f32.mrf.mxu0
      %10747 = vmatprep.mubr.bf16.mxu0 0
      %10748 = vmatmul.mubr.bf16.gmra.mxu0 %v10578
      %v10749 = vpop.f32.mrf.mxu0
      %v10750 = vadd.f32 0.0, %v10749
      %v10751 = vpop.f32.mrf.mxu0
      %v10752 = vpop.f32.mrf.mxu0
      %v10753 = vadd.f32 0.0, %v10752
      %v10754 = vpop.f32.mrf.mxu0
      %10755 = vmatprep.mubr.bf16.mxu0 0
      %10756 = vmatmul.mubr.bf16.gmra.mxu0 %v10581
      %v10757 = vpop.f32.mrf.mxu0
      %v10758 = vadd.f32 0.0, %v10757
      %v10759 = vpop.f32.mrf.mxu0
      %v10760 = vpop.f32.mrf.mxu0
      %v10761 = vadd.f32 0.0, %v10760
      %v10762 = vpop.f32.mrf.mxu0
      %10763 = vmatprep.mubr.bf16.mxu0 0
      %10764 = vmatmul.mubr.bf16.gmra.mxu0 %v10584
      %v10765 = vpop.f32.mrf.mxu0
      %v10766 = vadd.f32 0.0, %v10765
      %v10767 = vpop.f32.mrf.mxu0
      %v10768 = vpop.f32.mrf.mxu0
      %v10769 = vadd.f32 0.0, %v10768
      %v10770 = vpop.f32.mrf.mxu0
      %10771 = vmatprep.mubr.bf16.mxu0 0
      %10772 = vmatmul.mubr.bf16.gmra.mxu0 %v10587
      %v10773 = vpop.f32.mrf.mxu0
      %v10774 = vadd.f32 0.0, %v10773
      %v10775 = vpop.f32.mrf.mxu0
      %v10776 = vpop.f32.mrf.mxu0
      %v10777 = vadd.f32 0.0, %v10776
      %v10778 = vpop.f32.mrf.mxu0
      %10779 = vmatprep.mubr.bf16.mxu0 0
      %10780 = vmatmul.mubr.bf16.gmra.mxu0 %v10590
      %v10781 = vpop.f32.mrf.mxu0
      %v10782 = vadd.f32 0.0, %v10781
      %v10783 = vpop.f32.mrf.mxu0
      %v10784 = vpop.f32.mrf.mxu0
      %v10785 = vadd.f32 0.0, %v10784
      %v10786 = vpop.f32.mrf.mxu0
      %10787 = vmatprep.mubr.bf16.mxu0 0
      %10788 = vmatmul.mubr.bf16.gmra.mxu0 %v10593
      %v10789 = vpop.f32.mrf.mxu0
      %v10790 = vadd.f32 0.0, %v10789
      %v10791 = vpop.f32.mrf.mxu0
      %v10792 = vpop.f32.mrf.mxu0
      %v10793 = vpop.f32.mrf.mxu0
      %10794 = vdwg.mxu0
      %v10795 = vadd.f32 %v10412, %v10630
      %v10796 = vadd.f32 %v10413, %v10633
      %v10797 = vadd.f32 %v10414, %v10638
      %v10798 = vadd.f32 %v10415, %v10641
      %v10799 = vadd.f32 %v10416, %v10646
      %v10800 = vadd.f32 %v10417, %v10649
      %v10801 = vadd.f32 %v10418, %v10654
      %v10802 = vadd.f32 %v10419, %v10657
      %v10803 = vadd.f32 %v10420, %v10662
      %v10804 = vadd.f32 %v10421, %v10665
      %v10805 = vadd.f32 %v10422, %v10670
      %v10806 = vadd.f32 %v10423, %v10673
      %v10807 = vadd.f32 %v10424, %v10678
      %v10808 = vadd.f32 %v10425, %v10681
      %v10809 = vadd.f32 %v10426, %v10686
      %v10810 = vadd.f32 %v10427, %v10689
      %v10811 = vadd.f32 %v10428, %v10694
      %v10812 = vadd.f32 %v10429, %v10697
      %v10813 = vadd.f32 %v10430, %v10702
      %v10814 = vadd.f32 %v10431, %v10705
      %v10815 = vadd.f32 %v10432, %v10710
      %v10816 = vadd.f32 %v10433, %v10713
      %v10817 = vadd.f32 %v10434, %v10718
      %v10818 = vadd.f32 %v10435, %v10721
      %v10819 = vadd.f32 %v10436, %v10726
      %v10820 = vadd.f32 %v10437, %v10729
      %v10821 = vadd.f32 %v10438, %v10734
      %v10822 = vadd.f32 %v10439, %v10737
      %v10823 = vadd.f32 %v10440, %v10742
      %v10824 = vadd.f32 %v10441, %v10745
      %v10825 = vadd.f32 %v10442, %v10750
      %v10826 = vadd.f32 %v10443, %v10753
      %v10827 = vadd.f32 %v10444, %v10758
      %v10828 = vadd.f32 %v10445, %v10761
      %v10829 = vadd.f32 %v10446, %v10766
      %v10830 = vadd.f32 %v10447, %v10769
      %v10831 = vadd.f32 %v10448, %v10774
      %v10832 = vadd.f32 %v10449, %v10777
      %v10833 = vadd.f32 %v10450, %v10782
      %v10834 = vadd.f32 %v10451, %v10785
      %v10835 = vadd.f32 %v10452, %v10790
      %v10836 = vld [vmem:[#allocation2 + $0x2b] sm:$0xff]
      %v10837 = vld [vmem:[#allocation2 + $0x33] sm:$0xff]
      %v10838 = vld [vmem:[#allocation2 + $0x3b] sm:$0xff]
      %v10839 = vld [vmem:[#allocation2 + $0x43] sm:$0xff]
      %v10840 = vld [vmem:[#allocation2 + $0x4b] sm:$0xff]
      %v10841 = vld [vmem:[#allocation2 + $0x53] sm:$0xff]
      %v10842 = vld [vmem:[#allocation2 + $0x5b] sm:$0xff]
      %v10843 = vld [vmem:[#allocation2 + $0x63] sm:$0xff]
      %v10844 = vld [vmem:[#allocation2 + $0x6b] sm:$0xff]
      %v10845 = vld [vmem:[#allocation2 + $0x73] sm:$0xff]
      %v10846 = vld [vmem:[#allocation2 + $0x7b] sm:$0xff]
      %v10847 = vld [vmem:[#allocation2 + $0x83] sm:$0xff]
      %v10848 = vld [vmem:[#allocation2 + $0x8b] sm:$0xff]
      %v10849 = vld [vmem:[#allocation2 + $0x93] sm:$0xff]
      %v10850 = vld [vmem:[#allocation2 + $0x9b] sm:$0xff]
      %v10851 = vld [vmem:[#allocation2 + $0xa3] sm:$0xff]
      %v10852 = vld [vmem:[#allocation2 + $0xab] sm:$0xff]
      %v10853 = vld [vmem:[#allocation2 + $0xb3] sm:$0xff]
      %v10854 = vld [vmem:[#allocation2 + $0xbb] sm:$0xff]
      %v10855 = vld [vmem:[#allocation2 + $0xc3] sm:$0xff]
      %v10856 = vld [vmem:[#allocation2 + $0xcb] sm:$0xff]
      %v10857 = vld [vmem:[#allocation2 + $0xd3] sm:$0xff]
      %v10858 = vld [vmem:[#allocation2 + $0xdb] sm:$0xff]
      %v10859 = vld [vmem:[#allocation2 + $0xe3] sm:$0xff]
      %v10860 = vld [vmem:[#allocation2 + $0xeb] sm:$0xff]
      %v10861 = vld [vmem:[#allocation2 + $0xf3] sm:$0xff]
      %v10862 = vld [vmem:[#allocation2 + $0xfb] sm:$0xff]
      %v10863 = vld [vmem:[#allocation2 + $0x103] sm:$0xff]
      %v10864 = vld [vmem:[#allocation2 + $0x10b] sm:$0xff]
      %v10865 = vld [vmem:[#allocation2 + $0x113] sm:$0xff]
      %v10866 = vld [vmem:[#allocation2 + $0x11b] sm:$0xff]
      %v10867 = vld [vmem:[#allocation2 + $0x123] sm:$0xff]
      %v10868 = vld [vmem:[#allocation2 + $0x12b] sm:$0xff]
      %v10869 = vld [vmem:[#allocation2 + $0x133] sm:$0xff]
      %v10870 = vld [vmem:[#allocation2 + $0x13b] sm:$0xff]
      %v10871 = vld [vmem:[#allocation2 + $0x143] sm:$0xff]
      %v10872 = vld [vmem:[#allocation2 + $0x14b] sm:$0xff]
      %v10873 = vld [vmem:[#allocation2 + $0x153] sm:$0xff]
      %v10874 = vld [vmem:[#allocation2 + $0x15b] sm:$0xff]
      %v10875 = vld [vmem:[#allocation2 + $0x163] sm:$0xff]
      %v10876 = vld [vmem:[#allocation2 + $0x16b] sm:$0xff]
      %v10877 = vpack.c.bf16 %v10837, %v10836
      %v10878 = vpack.c.bf16 %v10839, %v10838
      %v10879 = vpack.c.bf16 %v10841, %v10840
      %v10880 = vpack.c.bf16 %v10843, %v10842
      %v10881 = vpack.c.bf16 %v10845, %v10844
      %v10882 = vpack.c.bf16 %v10847, %v10846
      %v10883 = vpack.c.bf16 %v10849, %v10848
      %v10884 = vpack.c.bf16 %v10851, %v10850
      %v10885 = vpack.c.bf16 %v10853, %v10852
      %v10886 = vpack.c.bf16 %v10855, %v10854
      %v10887 = vpack.c.bf16 %v10857, %v10856
      %v10888 = vpack.c.bf16 %v10859, %v10858
      %v10889 = vpack.c.bf16 %v10861, %v10860
      %v10890 = vpack.c.bf16 %v10863, %v10862
      %v10891 = vpack.c.bf16 %v10865, %v10864
      %v10892 = vpack.c.bf16 %v10867, %v10866
      %v10893 = vpack.c.bf16 %v10869, %v10868
      %v10894 = vpack.c.bf16 %v10871, %v10870
      %v10895 = vpack.c.bf16 %v10873, %v10872
      %v10896 = vpack.c.bf16 %v10875, %v10874
      %v10897 = vpack.c.bf16 %v10876, %v10876
      %s10898 = scalar_lea.vmem %s4, 128
      %v10899 = vld [vmem:[%s10898] sm:$0xf]
      %v10900 = vld [vmem:[%s10898 + $0x4] sm:$0xf]
      %v10901 = vld [vmem:[%s10898 + $0x8] sm:$0xf]
      %v10902 = vld [vmem:[%s10898 + $0xc] sm:$0xf]
      %v10907 = vunpack.c.l.b16 %v10899
      %v10908 = vunpack.c.l.b16 %v10900
      %v10909 = vunpack.c.l.b16 %v10901
      %v10910 = vunpack.c.l.b16 %v10902
      %v10911 = vpack.c.b16 %v10908, %v10907
      %v10912 = vpack.c.b16 %v10910, %v10909
      %v10916 = vsel %vm7999, %v10877, 0
      %v10919 = vsel %vm7999, %v10878, 0
      %v10922 = vsel %vm7999, %v10879, 0
      %v10925 = vsel %vm7999, %v10880, 0
      %v10928 = vsel %vm7999, %v10881, 0
      %v10931 = vsel %vm7999, %v10882, 0
      %v10934 = vsel %vm7999, %v10883, 0
      %v10937 = vsel %vm7999, %v10884, 0
      %v10940 = vsel %vm7999, %v10885, 0
      %v10943 = vsel %vm7999, %v10886, 0
      %v10946 = vsel %vm7999, %v10887, 0
      %v10949 = vsel %vm7999, %v10888, 0
      %v10952 = vsel %vm7999, %v10889, 0
      %v10955 = vsel %vm7999, %v10890, 0
      %v10958 = vsel %vm7999, %v10891, 0
      %v10961 = vsel %vm7999, %v10892, 0
      %v10964 = vsel %vm7999, %v10893, 0
      %v10967 = vsel %vm7999, %v10894, 0
      %v10970 = vsel %vm7999, %v10895, 0
      %v10973 = vsel %vm7999, %v10896, 0
      %v10976 = vsel %vm7999, %v10897, 0
      %10978 = vmatprep.subr.bf16.mxu0 0
      %10979 = vmatpush1.bf16.msra.mxu0 0
      %10980 = vmatprep.subr.bf16.mxu0 0
      %10981 = vmatpush1.bf16.msra.mxu0 0
      %10982 = vmatprep.subr.bf16.mxu0 0
      %10983 = vmatpush1.bf16.msra.mxu0 0
      %10984 = vmatprep.subr.bf16.mxu0 0
      %10985 = vmatpush1.bf16.msra.mxu0 0
      %10986 = vmatprep.subr.bf16.mxu0 0
      %10987 = vmatpush1.bf16.msra.mxu0 0
      %10988 = vmatprep.subr.bf16.mxu0 0
      %10989 = vmatpush1.bf16.msra.mxu0 0
      %10990 = vmatprep.subr.bf16.mxu0 0
      %10991 = vmatpush1.bf16.msra.mxu0 %v10912
      %10992 = vmatprep.subr.bf16.mxu0 0
      %10993 = vmatpush1.bf16.msra.mxu0 %v10911
      %10994 = vmatprep.subr.bf16.mxu0 0
      %10995 = vmatpush2.bf16.msra.mxu0 0
      %10996 = vmatprep.subr.bf16.mxu0 0
      %10997 = vmatpush2.bf16.msra.mxu0 0
      %10998 = vmatprep.subr.bf16.mxu0 0
      %10999 = vmatpush2.bf16.msra.mxu0 0
      %11000 = vmatprep.subr.bf16.mxu0 0
      %11001 = vmatpush2.bf16.msra.mxu0 0
      %11002 = vmatprep.subr.bf16.mxu0 0
      %11003 = vmatpush2.bf16.msra.mxu0 0
      %11004 = vmatprep.subr.bf16.mxu0 0
      %11005 = vmatpush2.bf16.msra.mxu0 0
      %11006 = vmatprep.subr.bf16.mxu0 0
      %11007 = vmatpush2.bf16.msra.mxu0 0
      %11008 = vmatprep.subr.bf16.mxu0 0
      %11009 = vmatpush2.bf16.msra.mxu0 0
      %11010 = vmatprep.mubr.bf16.mxu0 0
      %11011 = vmatmul.mubr.bf16.gmra.mxu0 %v10916
      %v11012 = vpop.f32.mrf.mxu0
      %v11013 = vadd.f32 0.0, %v11012
      %v11014 = vpop.f32.mrf.mxu0
      %v11015 = vpop.f32.mrf.mxu0
      %v11016 = vadd.f32 0.0, %v11015
      %v11017 = vpop.f32.mrf.mxu0
      %11018 = vmatprep.mubr.bf16.mxu0 0
      %11019 = vmatmul.mubr.bf16.gmra.mxu0 %v10919
      %v11020 = vpop.f32.mrf.mxu0
      %v11021 = vadd.f32 0.0, %v11020
      %v11022 = vpop.f32.mrf.mxu0
      %v11023 = vpop.f32.mrf.mxu0
      %v11024 = vadd.f32 0.0, %v11023
      %v11025 = vpop.f32.mrf.mxu0
      %11026 = vmatprep.mubr.bf16.mxu0 0
      %11027 = vmatmul.mubr.bf16.gmra.mxu0 %v10922
      %v11028 = vpop.f32.mrf.mxu0
      %v11029 = vadd.f32 0.0, %v11028
      %v11030 = vpop.f32.mrf.mxu0
      %v11031 = vpop.f32.mrf.mxu0
      %v11032 = vadd.f32 0.0, %v11031
      %v11033 = vpop.f32.mrf.mxu0
      %11034 = vmatprep.mubr.bf16.mxu0 0
      %11035 = vmatmul.mubr.bf16.gmra.mxu0 %v10925
      %v11036 = vpop.f32.mrf.mxu0
      %v11037 = vadd.f32 0.0, %v11036
      %v11038 = vpop.f32.mrf.mxu0
      %v11039 = vpop.f32.mrf.mxu0
      %v11040 = vadd.f32 0.0, %v11039
      %v11041 = vpop.f32.mrf.mxu0
      %11042 = vmatprep.mubr.bf16.mxu0 0
      %11043 = vmatmul.mubr.bf16.gmra.mxu0 %v10928
      %v11044 = vpop.f32.mrf.mxu0
      %v11045 = vadd.f32 0.0, %v11044
      %v11046 = vpop.f32.mrf.mxu0
      %v11047 = vpop.f32.mrf.mxu0
      %v11048 = vadd.f32 0.0, %v11047
      %v11049 = vpop.f32.mrf.mxu0
      %11050 = vmatprep.mubr.bf16.mxu0 0
      %11051 = vmatmul.mubr.bf16.gmra.mxu0 %v10931
      %v11052 = vpop.f32.mrf.mxu0
      %v11053 = vadd.f32 0.0, %v11052
      %v11054 = vpop.f32.mrf.mxu0
      %v11055 = vpop.f32.mrf.mxu0
      %v11056 = vadd.f32 0.0, %v11055
      %v11057 = vpop.f32.mrf.mxu0
      %11058 = vmatprep.mubr.bf16.mxu0 0
      %11059 = vmatmul.mubr.bf16.gmra.mxu0 %v10934
      %v11060 = vpop.f32.mrf.mxu0
      %v11061 = vadd.f32 0.0, %v11060
      %v11062 = vpop.f32.mrf.mxu0
      %v11063 = vpop.f32.mrf.mxu0
      %v11064 = vadd.f32 0.0, %v11063
      %v11065 = vpop.f32.mrf.mxu0
      %11066 = vmatprep.mubr.bf16.mxu0 0
      %11067 = vmatmul.mubr.bf16.gmra.mxu0 %v10937
      %v11068 = vpop.f32.mrf.mxu0
      %v11069 = vadd.f32 0.0, %v11068
      %v11070 = vpop.f32.mrf.mxu0
      %v11071 = vpop.f32.mrf.mxu0
      %v11072 = vadd.f32 0.0, %v11071
      %v11073 = vpop.f32.mrf.mxu0
      %11074 = vmatprep.mubr.bf16.mxu0 0
      %11075 = vmatmul.mubr.bf16.gmra.mxu0 %v10940
      %v11076 = vpop.f32.mrf.mxu0
      %v11077 = vadd.f32 0.0, %v11076
      %v11078 = vpop.f32.mrf.mxu0
      %v11079 = vpop.f32.mrf.mxu0
      %v11080 = vadd.f32 0.0, %v11079
      %v11081 = vpop.f32.mrf.mxu0
      %11082 = vmatprep.mubr.bf16.mxu0 0
      %11083 = vmatmul.mubr.bf16.gmra.mxu0 %v10943
      %v11084 = vpop.f32.mrf.mxu0
      %v11085 = vadd.f32 0.0, %v11084
      %v11086 = vpop.f32.mrf.mxu0
      %v11087 = vpop.f32.mrf.mxu0
      %v11088 = vadd.f32 0.0, %v11087
      %v11089 = vpop.f32.mrf.mxu0
      %11090 = vmatprep.mubr.bf16.mxu0 0
      %11091 = vmatmul.mubr.bf16.gmra.mxu0 %v10946
      %v11092 = vpop.f32.mrf.mxu0
      %v11093 = vadd.f32 0.0, %v11092
      %v11094 = vpop.f32.mrf.mxu0
      %v11095 = vpop.f32.mrf.mxu0
      %v11096 = vadd.f32 0.0, %v11095
      %v11097 = vpop.f32.mrf.mxu0
      %11098 = vmatprep.mubr.bf16.mxu0 0
      %11099 = vmatmul.mubr.bf16.gmra.mxu0 %v10949
      %v11100 = vpop.f32.mrf.mxu0
      %v11101 = vadd.f32 0.0, %v11100
      %v11102 = vpop.f32.mrf.mxu0
      %v11103 = vpop.f32.mrf.mxu0
      %v11104 = vadd.f32 0.0, %v11103
      %v11105 = vpop.f32.mrf.mxu0
      %11106 = vmatprep.mubr.bf16.mxu0 0
      %11107 = vmatmul.mubr.bf16.gmra.mxu0 %v10952
      %v11108 = vpop.f32.mrf.mxu0
      %v11109 = vadd.f32 0.0, %v11108
      %v11110 = vpop.f32.mrf.mxu0
      %v11111 = vpop.f32.mrf.mxu0
      %v11112 = vadd.f32 0.0, %v11111
      %v11113 = vpop.f32.mrf.mxu0
      %11114 = vmatprep.mubr.bf16.mxu0 0
      %11115 = vmatmul.mubr.bf16.gmra.mxu0 %v10955
      %v11116 = vpop.f32.mrf.mxu0
      %v11117 = vadd.f32 0.0, %v11116
      %v11118 = vpop.f32.mrf.mxu0
      %v11119 = vpop.f32.mrf.mxu0
      %v11120 = vadd.f32 0.0, %v11119
      %v11121 = vpop.f32.mrf.mxu0
      %11122 = vmatprep.mubr.bf16.mxu0 0
      %11123 = vmatmul.mubr.bf16.gmra.mxu0 %v10958
      %v11124 = vpop.f32.mrf.mxu0
      %v11125 = vadd.f32 0.0, %v11124
      %v11126 = vpop.f32.mrf.mxu0
      %v11127 = vpop.f32.mrf.mxu0
      %v11128 = vadd.f32 0.0, %v11127
      %v11129 = vpop.f32.mrf.mxu0
      %11130 = vmatprep.mubr.bf16.mxu0 0
      %11131 = vmatmul.mubr.bf16.gmra.mxu0 %v10961
      %v11132 = vpop.f32.mrf.mxu0
      %v11133 = vadd.f32 0.0, %v11132
      %v11134 = vpop.f32.mrf.mxu0
      %v11135 = vpop.f32.mrf.mxu0
      %v11136 = vadd.f32 0.0, %v11135
      %v11137 = vpop.f32.mrf.mxu0
      %11138 = vmatprep.mubr.bf16.mxu0 0
      %11139 = vmatmul.mubr.bf16.gmra.mxu0 %v10964
      %v11140 = vpop.f32.mrf.mxu0
      %v11141 = vadd.f32 0.0, %v11140
      %v11142 = vpop.f32.mrf.mxu0
      %v11143 = vpop.f32.mrf.mxu0
      %v11144 = vadd.f32 0.0, %v11143
      %v11145 = vpop.f32.mrf.mxu0
      %11146 = vmatprep.mubr.bf16.mxu0 0
      %11147 = vmatmul.mubr.bf16.gmra.mxu0 %v10967
      %v11148 = vpop.f32.mrf.mxu0
      %v11149 = vadd.f32 0.0, %v11148
      %v11150 = vpop.f32.mrf.mxu0
      %v11151 = vpop.f32.mrf.mxu0
      %v11152 = vadd.f32 0.0, %v11151
      %v11153 = vpop.f32.mrf.mxu0
      %11154 = vmatprep.mubr.bf16.mxu0 0
      %11155 = vmatmul.mubr.bf16.gmra.mxu0 %v10970
      %v11156 = vpop.f32.mrf.mxu0
      %v11157 = vadd.f32 0.0, %v11156
      %v11158 = vpop.f32.mrf.mxu0
      %v11159 = vpop.f32.mrf.mxu0
      %v11160 = vadd.f32 0.0, %v11159
      %v11161 = vpop.f32.mrf.mxu0
      %11162 = vmatprep.mubr.bf16.mxu0 0
      %11163 = vmatmul.mubr.bf16.gmra.mxu0 %v10973
      %v11164 = vpop.f32.mrf.mxu0
      %v11165 = vadd.f32 0.0, %v11164
      %v11166 = vpop.f32.mrf.mxu0
      %v11167 = vpop.f32.mrf.mxu0
      %v11168 = vadd.f32 0.0, %v11167
      %v11169 = vpop.f32.mrf.mxu0
      %11170 = vmatprep.mubr.bf16.mxu0 0
      %11171 = vmatmul.mubr.bf16.gmra.mxu0 %v10976
      %v11172 = vpop.f32.mrf.mxu0
      %v11173 = vadd.f32 0.0, %v11172
      %v11174 = vpop.f32.mrf.mxu0
      %v11175 = vpop.f32.mrf.mxu0
      %v11176 = vpop.f32.mrf.mxu0
      %11177 = vdwg.mxu0
      %v11178 = vadd.f32 %v10795, %v11013
      %v11179 = vadd.f32 %v10796, %v11016
      %v11180 = vadd.f32 %v10797, %v11021
      %v11181 = vadd.f32 %v10798, %v11024
      %v11182 = vadd.f32 %v10799, %v11029
      %v11183 = vadd.f32 %v10800, %v11032
      %v11184 = vadd.f32 %v10801, %v11037
      %v11185 = vadd.f32 %v10802, %v11040
      %v11186 = vadd.f32 %v10803, %v11045
      %v11187 = vadd.f32 %v10804, %v11048
      %v11188 = vadd.f32 %v10805, %v11053
      %v11189 = vadd.f32 %v10806, %v11056
      %v11190 = vadd.f32 %v10807, %v11061
      %v11191 = vadd.f32 %v10808, %v11064
      %v11192 = vadd.f32 %v10809, %v11069
      %v11193 = vadd.f32 %v10810, %v11072
      %v11194 = vadd.f32 %v10811, %v11077
      %v11195 = vadd.f32 %v10812, %v11080
      %v11196 = vadd.f32 %v10813, %v11085
      %v11197 = vadd.f32 %v10814, %v11088
      %v11198 = vadd.f32 %v10815, %v11093
      %v11199 = vadd.f32 %v10816, %v11096
      %v11200 = vadd.f32 %v10817, %v11101
      %v11201 = vadd.f32 %v10818, %v11104
      %v11202 = vadd.f32 %v10819, %v11109
      %v11203 = vadd.f32 %v10820, %v11112
      %v11204 = vadd.f32 %v10821, %v11117
      %v11205 = vadd.f32 %v10822, %v11120
      %v11206 = vadd.f32 %v10823, %v11125
      %v11207 = vadd.f32 %v10824, %v11128
      %v11208 = vadd.f32 %v10825, %v11133
      %v11209 = vadd.f32 %v10826, %v11136
      %v11210 = vadd.f32 %v10827, %v11141
      %v11211 = vadd.f32 %v10828, %v11144
      %v11212 = vadd.f32 %v10829, %v11149
      %v11213 = vadd.f32 %v10830, %v11152
      %v11214 = vadd.f32 %v10831, %v11157
      %v11215 = vadd.f32 %v10832, %v11160
      %v11216 = vadd.f32 %v10833, %v11165
      %v11217 = vadd.f32 %v10834, %v11168
      %v11218 = vadd.f32 %v10835, %v11173
      %v11219 = vmax.f32 %v11178, 0.0
      %v11220 = vmax.f32 %v11179, 0.0
      %v11221 = vmax.f32 %v11180, 0.0
      %v11222 = vmax.f32 %v11181, 0.0
      %v11223 = vmax.f32 %v11182, 0.0
      %v11224 = vmax.f32 %v11183, 0.0
      %v11225 = vmax.f32 %v11184, 0.0
      %v11226 = vmax.f32 %v11185, 0.0
      %v11227 = vmax.f32 %v11186, 0.0
      %v11228 = vmax.f32 %v11187, 0.0
      %v11229 = vmax.f32 %v11188, 0.0
      %v11230 = vmax.f32 %v11189, 0.0
      %v11231 = vmax.f32 %v11190, 0.0
      %v11232 = vmax.f32 %v11191, 0.0
      %v11233 = vmax.f32 %v11192, 0.0
      %v11234 = vmax.f32 %v11193, 0.0
      %v11235 = vmax.f32 %v11194, 0.0
      %v11236 = vmax.f32 %v11195, 0.0
      %v11237 = vmax.f32 %v11196, 0.0
      %v11238 = vmax.f32 %v11197, 0.0
      %v11239 = vmax.f32 %v11198, 0.0
      %v11240 = vmax.f32 %v11199, 0.0
      %v11241 = vmax.f32 %v11200, 0.0
      %v11242 = vmax.f32 %v11201, 0.0
      %v11243 = vmax.f32 %v11202, 0.0
      %v11244 = vmax.f32 %v11203, 0.0
      %v11245 = vmax.f32 %v11204, 0.0
      %v11246 = vmax.f32 %v11205, 0.0
      %v11247 = vmax.f32 %v11206, 0.0
      %v11248 = vmax.f32 %v11207, 0.0
      %v11249 = vmax.f32 %v11208, 0.0
      %v11250 = vmax.f32 %v11209, 0.0
      %v11251 = vmax.f32 %v11210, 0.0
      %v11252 = vmax.f32 %v11211, 0.0
      %v11253 = vmax.f32 %v11212, 0.0
      %v11254 = vmax.f32 %v11213, 0.0
      %v11255 = vmax.f32 %v11214, 0.0
      %v11256 = vmax.f32 %v11215, 0.0
      %v11257 = vmax.f32 %v11216, 0.0
      %v11258 = vmax.f32 %v11217, 0.0
      %v11259 = vmax.f32 %v11218, 0.0
      %v11260 = vmul.f32 %v11219, %v3760
      %v11261 = vmul.f32 %v11220, %v3765
      %v11262 = vmul.f32 %v11221, %v3770
      %v11263 = vmul.f32 %v11222, %v3775
      %v11264 = vmul.f32 %v11223, %v3780
      %v11265 = vmul.f32 %v11224, %v3785
      %v11266 = vmul.f32 %v11225, %v3790
      %v11267 = vmul.f32 %v11226, %v3795
      %v11268 = vmul.f32 %v11227, %v3800
      %v11269 = vmul.f32 %v11228, %v3805
      %v11270 = vmul.f32 %v11229, %v3810
      %v11271 = vmul.f32 %v11230, %v3815
      %v11272 = vmul.f32 %v11231, %v3820
      %v11273 = vmul.f32 %v11232, %v3825
      %v11274 = vmul.f32 %v11233, %v3830
      %v11275 = vmul.f32 %v11234, %v3835
      %v11276 = vmul.f32 %v11235, %v3840
      %v11277 = vmul.f32 %v11236, %v3845
      %v11278 = vmul.f32 %v11237, %v3850
      %v11279 = vmul.f32 %v11238, %v3855
      %v11280 = vmul.f32 %v11239, %v3860
      %v11281 = vmul.f32 %v11240, %v3865
      %v11282 = vmul.f32 %v11241, %v3870
      %v11283 = vmul.f32 %v11242, %v3875
      %v11284 = vmul.f32 %v11243, %v3880
      %v11285 = vmul.f32 %v11244, %v3885
      %v11286 = vmul.f32 %v11245, %v3890
      %v11287 = vmul.f32 %v11246, %v3895
      %v11288 = vmul.f32 %v11247, %v3900
      %v11289 = vmul.f32 %v11248, %v3905
      %v11290 = vmul.f32 %v11249, %v3910
      %v11291 = vmul.f32 %v11250, %v3915
      %v11292 = vmul.f32 %v11251, %v3920
      %v11293 = vmul.f32 %v11252, %v3925
      %v11294 = vmul.f32 %v11253, %v3930
      %v11295 = vmul.f32 %v11254, %v3935
      %v11296 = vmul.f32 %v11255, %v3940
      %v11297 = vmul.f32 %v11256, %v3945
      %v11298 = vmul.f32 %v11257, %v3950
      %v11299 = vmul.f32 %v11258, %v3955
      %v11300 = vmul.f32 %v11259, %v3960
      %11342 = vrot.lane.b32.xlu0 %v11260, 32
      %v11343 = vpop.permute.xlu0 %11342
      %11344 = vrot.lane.b32.xlu0 %v11261, 32
      %v11345 = vpop.permute.xlu0 %11344
      %11346 = vrot.lane.b32.xlu0 %v11262, 32
      %v11347 = vpop.permute.xlu0 %11346
      %11348 = vrot.lane.b32.xlu0 %v11263, 32
      %v11349 = vpop.permute.xlu0 %11348
      %11350 = vrot.lane.b32.xlu0 %v11264, 32
      %v11351 = vpop.permute.xlu0 %11350
      %11352 = vrot.lane.b32.xlu0 %v11265, 32
      %v11353 = vpop.permute.xlu0 %11352
      %11354 = vrot.lane.b32.xlu0 %v11266, 32
      %v11355 = vpop.permute.xlu0 %11354
      %11356 = vrot.lane.b32.xlu0 %v11267, 32
      %v11357 = vpop.permute.xlu0 %11356
      %11358 = vrot.lane.b32.xlu0 %v11268, 32
      %v11359 = vpop.permute.xlu0 %11358
      %11360 = vrot.lane.b32.xlu0 %v11269, 32
      %v11361 = vpop.permute.xlu0 %11360
      %11362 = vrot.lane.b32.xlu0 %v11270, 32
      %v11363 = vpop.permute.xlu0 %11362
      %11364 = vrot.lane.b32.xlu0 %v11271, 32
      %v11365 = vpop.permute.xlu0 %11364
      %11366 = vrot.lane.b32.xlu0 %v11272, 32
      %v11367 = vpop.permute.xlu0 %11366
      %11368 = vrot.lane.b32.xlu0 %v11273, 32
      %v11369 = vpop.permute.xlu0 %11368
      %11370 = vrot.lane.b32.xlu0 %v11274, 32
      %v11371 = vpop.permute.xlu0 %11370
      %11372 = vrot.lane.b32.xlu0 %v11275, 32
      %v11373 = vpop.permute.xlu0 %11372
      %11374 = vrot.lane.b32.xlu0 %v11276, 32
      %v11375 = vpop.permute.xlu0 %11374
      %11376 = vrot.lane.b32.xlu0 %v11277, 32
      %v11377 = vpop.permute.xlu0 %11376
      %11378 = vrot.lane.b32.xlu0 %v11278, 32
      %v11379 = vpop.permute.xlu0 %11378
      %11380 = vrot.lane.b32.xlu0 %v11279, 32
      %v11381 = vpop.permute.xlu0 %11380
      %11382 = vrot.lane.b32.xlu0 %v11280, 32
      %v11383 = vpop.permute.xlu0 %11382
      %11384 = vrot.lane.b32.xlu0 %v11281, 32
      %v11385 = vpop.permute.xlu0 %11384
      %11386 = vrot.lane.b32.xlu0 %v11282, 32
      %v11387 = vpop.permute.xlu0 %11386
      %11388 = vrot.lane.b32.xlu0 %v11283, 32
      %v11389 = vpop.permute.xlu0 %11388
      %11390 = vrot.lane.b32.xlu0 %v11284, 32
      %v11391 = vpop.permute.xlu0 %11390
      %11392 = vrot.lane.b32.xlu0 %v11285, 32
      %v11393 = vpop.permute.xlu0 %11392
      %11394 = vrot.lane.b32.xlu0 %v11286, 32
      %v11395 = vpop.permute.xlu0 %11394
      %11396 = vrot.lane.b32.xlu0 %v11287, 32
      %v11397 = vpop.permute.xlu0 %11396
      %11398 = vrot.lane.b32.xlu0 %v11288, 32
      %v11399 = vpop.permute.xlu0 %11398
      %11400 = vrot.lane.b32.xlu0 %v11289, 32
      %v11401 = vpop.permute.xlu0 %11400
      %11402 = vrot.lane.b32.xlu0 %v11290, 32
      %v11403 = vpop.permute.xlu0 %11402
      %11404 = vrot.lane.b32.xlu0 %v11291, 32
      %v11405 = vpop.permute.xlu0 %11404
      %11406 = vrot.lane.b32.xlu0 %v11292, 32
      %v11407 = vpop.permute.xlu0 %11406
      %11408 = vrot.lane.b32.xlu0 %v11293, 32
      %v11409 = vpop.permute.xlu0 %11408
      %11410 = vrot.lane.b32.xlu0 %v11294, 32
      %v11411 = vpop.permute.xlu0 %11410
      %11412 = vrot.lane.b32.xlu0 %v11295, 32
      %v11413 = vpop.permute.xlu0 %11412
      %11414 = vrot.lane.b32.xlu0 %v11296, 32
      %v11415 = vpop.permute.xlu0 %11414
      %11416 = vrot.lane.b32.xlu0 %v11297, 32
      %v11417 = vpop.permute.xlu0 %11416
      %11418 = vrot.lane.b32.xlu0 %v11298, 32
      %v11419 = vpop.permute.xlu0 %11418
      %11420 = vrot.lane.b32.xlu0 %v11299, 32
      %v11421 = vpop.permute.xlu0 %11420
      %11422 = vrot.lane.b32.xlu0 %v11300, 32
      %v11423 = vpop.permute.xlu0 %11422
      %vm11465 = vcmask 326912
      %11466 = vst.msk [vmem:[#allocation2 + $0x18] sm:$0xff] %vm11465, %v11343
      %11467 = vst.msk [vmem:[#allocation2 + $0x20] sm:$0xff] %vm11465, %v11345
      %11468 = vst.msk [vmem:[#allocation2 + $0x28] sm:$0xff] %vm11465, %v11347
      %11469 = vst.msk [vmem:[#allocation2 + $0x30] sm:$0xff] %vm11465, %v11349
      %11470 = vst.msk [vmem:[#allocation2 + $0x38] sm:$0xff] %vm11465, %v11351
      %11471 = vst.msk [vmem:[#allocation2 + $0x40] sm:$0xff] %vm11465, %v11353
      %11472 = vst.msk [vmem:[#allocation2 + $0x48] sm:$0xff] %vm11465, %v11355
      %11473 = vst.msk [vmem:[#allocation2 + $0x50] sm:$0xff] %vm11465, %v11357
      %11474 = vst.msk [vmem:[#allocation2 + $0x58] sm:$0xff] %vm11465, %v11359
      %11475 = vst.msk [vmem:[#allocation2 + $0x60] sm:$0xff] %vm11465, %v11361
      %11476 = vst.msk [vmem:[#allocation2 + $0x68] sm:$0xff] %vm11465, %v11363
      %11477 = vst.msk [vmem:[#allocation2 + $0x70] sm:$0xff] %vm11465, %v11365
      %11478 = vst.msk [vmem:[#allocation2 + $0x78] sm:$0xff] %vm11465, %v11367
      %11479 = vst.msk [vmem:[#allocation2 + $0x80] sm:$0xff] %vm11465, %v11369
      %11480 = vst.msk [vmem:[#allocation2 + $0x88] sm:$0xff] %vm11465, %v11371
      %11481 = vst.msk [vmem:[#allocation2 + $0x90] sm:$0xff] %vm11465, %v11373
      %11482 = vst.msk [vmem:[#allocation2 + $0x98] sm:$0xff] %vm11465, %v11375
      %11483 = vst.msk [vmem:[#allocation2 + $0xa0] sm:$0xff] %vm11465, %v11377
      %11484 = vst.msk [vmem:[#allocation2 + $0xa8] sm:$0xff] %vm11465, %v11379
      %11485 = vst.msk [vmem:[#allocation2 + $0xb0] sm:$0xff] %vm11465, %v11381
      %11486 = vst.msk [vmem:[#allocation2 + $0xb8] sm:$0xff] %vm11465, %v11383
      %11487 = vst.msk [vmem:[#allocation2 + $0xc0] sm:$0xff] %vm11465, %v11385
      %11488 = vst.msk [vmem:[#allocation2 + $0xc8] sm:$0xff] %vm11465, %v11387
      %11489 = vst.msk [vmem:[#allocation2 + $0xd0] sm:$0xff] %vm11465, %v11389
      %11490 = vst.msk [vmem:[#allocation2 + $0xd8] sm:$0xff] %vm11465, %v11391
      %11491 = vst.msk [vmem:[#allocation2 + $0xe0] sm:$0xff] %vm11465, %v11393
      %11492 = vst.msk [vmem:[#allocation2 + $0xe8] sm:$0xff] %vm11465, %v11395
      %11493 = vst.msk [vmem:[#allocation2 + $0xf0] sm:$0xff] %vm11465, %v11397
      %11494 = vst.msk [vmem:[#allocation2 + $0xf8] sm:$0xff] %vm11465, %v11399
      %11495 = vst.msk [vmem:[#allocation2 + $0x100] sm:$0xff] %vm11465, %v11401
      %11496 = vst.msk [vmem:[#allocation2 + $0x108] sm:$0xff] %vm11465, %v11403
      %11497 = vst.msk [vmem:[#allocation2 + $0x110] sm:$0xff] %vm11465, %v11405
      %11498 = vst.msk [vmem:[#allocation2 + $0x118] sm:$0xff] %vm11465, %v11407
      %11499 = vst.msk [vmem:[#allocation2 + $0x120] sm:$0xff] %vm11465, %v11409
      %11500 = vst.msk [vmem:[#allocation2 + $0x128] sm:$0xff] %vm11465, %v11411
      %11501 = vst.msk [vmem:[#allocation2 + $0x130] sm:$0xff] %vm11465, %v11413
      %11502 = vst.msk [vmem:[#allocation2 + $0x138] sm:$0xff] %vm11465, %v11415
      %11503 = vst.msk [vmem:[#allocation2 + $0x140] sm:$0xff] %vm11465, %v11417
      %11504 = vst.msk [vmem:[#allocation2 + $0x148] sm:$0xff] %vm11465, %v11419
      %11505 = vst.msk [vmem:[#allocation2 + $0x150] sm:$0xff] %vm11465, %v11421
      %11506 = vst.msk [vmem:[#allocation2 + $0x158] sm:$0xff] %vm11465, %v11423
      %v11507 = vld [vmem:[#allocation2 + $0x18] sm:$0xff]
      %v11508 = vld [vmem:[#allocation2 + $0x20] sm:$0xff]
      %v11509 = vld [vmem:[#allocation2 + $0x28] sm:$0xff]
      %v11510 = vld [vmem:[#allocation2 + $0x30] sm:$0xff]
      %v11511 = vld [vmem:[#allocation2 + $0x38] sm:$0xff]
      %v11512 = vld [vmem:[#allocation2 + $0x40] sm:$0xff]
      %v11513 = vld [vmem:[#allocation2 + $0x48] sm:$0xff]
      %v11514 = vld [vmem:[#allocation2 + $0x50] sm:$0xff]
      %v11515 = vld [vmem:[#allocation2 + $0x58] sm:$0xff]
      %v11516 = vld [vmem:[#allocation2 + $0x60] sm:$0xff]
      %v11517 = vld [vmem:[#allocation2 + $0x68] sm:$0xff]
      %v11518 = vld [vmem:[#allocation2 + $0x70] sm:$0xff]
      %v11519 = vld [vmem:[#allocation2 + $0x78] sm:$0xff]
      %v11520 = vld [vmem:[#allocation2 + $0x80] sm:$0xff]
      %v11521 = vld [vmem:[#allocation2 + $0x88] sm:$0xff]
      %v11522 = vld [vmem:[#allocation2 + $0x90] sm:$0xff]
      %v11523 = vld [vmem:[#allocation2 + $0x98] sm:$0xff]
      %v11524 = vld [vmem:[#allocation2 + $0xa0] sm:$0xff]
      %v11525 = vld [vmem:[#allocation2 + $0xa8] sm:$0xff]
      %v11526 = vld [vmem:[#allocation2 + $0xb0] sm:$0xff]
      %v11527 = vld [vmem:[#allocation2 + $0xb8] sm:$0xff]
      %v11528 = vld [vmem:[#allocation2 + $0xc0] sm:$0xff]
      %v11529 = vld [vmem:[#allocation2 + $0xc8] sm:$0xff]
      %v11530 = vld [vmem:[#allocation2 + $0xd0] sm:$0xff]
      %v11531 = vld [vmem:[#allocation2 + $0xd8] sm:$0xff]
      %v11532 = vld [vmem:[#allocation2 + $0xe0] sm:$0xff]
      %v11533 = vld [vmem:[#allocation2 + $0xe8] sm:$0xff]
      %v11534 = vld [vmem:[#allocation2 + $0xf0] sm:$0xff]
      %v11535 = vld [vmem:[#allocation2 + $0xf8] sm:$0xff]
      %v11536 = vld [vmem:[#allocation2 + $0x100] sm:$0xff]
      %v11537 = vld [vmem:[#allocation2 + $0x108] sm:$0xff]
      %v11538 = vld [vmem:[#allocation2 + $0x110] sm:$0xff]
      %v11539 = vld [vmem:[#allocation2 + $0x118] sm:$0xff]
      %v11540 = vld [vmem:[#allocation2 + $0x120] sm:$0xff]
      %v11541 = vld [vmem:[#allocation2 + $0x128] sm:$0xff]
      %v11542 = vld [vmem:[#allocation2 + $0x130] sm:$0xff]
      %v11543 = vld [vmem:[#allocation2 + $0x138] sm:$0xff]
      %v11544 = vld [vmem:[#allocation2 + $0x140] sm:$0xff]
      %v11545 = vld [vmem:[#allocation2 + $0x148] sm:$0xff]
      %v11546 = vld [vmem:[#allocation2 + $0x150] sm:$0xff]
      %v11547 = vld [vmem:[#allocation2 + $0x158] sm:$0xff]
      %v11548 = vpack.c.bf16 %v11508, %v11507
      %v11549 = vpack.c.bf16 %v11510, %v11509
      %v11550 = vpack.c.bf16 %v11512, %v11511
      %v11551 = vpack.c.bf16 %v11514, %v11513
      %v11552 = vpack.c.bf16 %v11516, %v11515
      %v11553 = vpack.c.bf16 %v11518, %v11517
      %v11554 = vpack.c.bf16 %v11520, %v11519
      %v11555 = vpack.c.bf16 %v11522, %v11521
      %v11556 = vpack.c.bf16 %v11524, %v11523
      %v11557 = vpack.c.bf16 %v11526, %v11525
      %v11558 = vpack.c.bf16 %v11528, %v11527
      %v11559 = vpack.c.bf16 %v11530, %v11529
      %v11560 = vpack.c.bf16 %v11532, %v11531
      %v11561 = vpack.c.bf16 %v11534, %v11533
      %v11562 = vpack.c.bf16 %v11536, %v11535
      %v11563 = vpack.c.bf16 %v11538, %v11537
      %v11564 = vpack.c.bf16 %v11540, %v11539
      %v11565 = vpack.c.bf16 %v11542, %v11541
      %v11566 = vpack.c.bf16 %v11544, %v11543
      %v11567 = vpack.c.bf16 %v11546, %v11545
      %v11568 = vpack.c.bf16 %v11547, %v11547
      %v11569 = vld [vmem:[%s5] sm:$0xf]
      %v11570 = vld [vmem:[%s5 + $0x4] sm:$0xf]
      %v11571 = vld [vmem:[%s5 + $0x8] sm:$0xf]
      %v11572 = vld [vmem:[%s5 + $0xc] sm:$0xf]
      %v11573 = vld [vmem:[%s5 + $0x10] sm:$0xf]
      %v11579 = vunpack.c.l.b16 %v11569
      %v11580 = vunpack.c.l.b16 %v11570
      %v11581 = vunpack.c.l.b16 %v11571
      %v11582 = vunpack.c.l.b16 %v11572
      %v11583 = vunpack.c.l.b16 %v11573
      %v11584 = vpack.c.b16 %v11580, %v11579
      %v11585 = vpack.c.b16 %v11582, %v11581
      %v11586 = vpack.c.b16 %v11583, %v11583
      %vm11589 = vcmask 326656
      %v11591 = vsel %vm11589, %v11548, 0
      %v11594 = vsel %vm11589, %v11549, 0
      %v11597 = vsel %vm11589, %v11550, 0
      %v11600 = vsel %vm11589, %v11551, 0
      %v11603 = vsel %vm11589, %v11552, 0
      %v11606 = vsel %vm11589, %v11553, 0
      %v11609 = vsel %vm11589, %v11554, 0
      %v11612 = vsel %vm11589, %v11555, 0
      %v11615 = vsel %vm11589, %v11556, 0
      %v11618 = vsel %vm11589, %v11557, 0
      %v11621 = vsel %vm11589, %v11558, 0
      %v11624 = vsel %vm11589, %v11559, 0
      %v11627 = vsel %vm11589, %v11560, 0
      %v11630 = vsel %vm11589, %v11561, 0
      %v11633 = vsel %vm11589, %v11562, 0
      %v11636 = vsel %vm11589, %v11563, 0
      %v11639 = vsel %vm11589, %v11564, 0
      %v11642 = vsel %vm11589, %v11565, 0
      %v11645 = vsel %vm11589, %v11566, 0
      %v11648 = vsel %vm11589, %v11567, 0
      %v11651 = vsel %vm11589, %v11568, 0
      %v11654 = vsel %vm4413, %v11586, 0
      %11656 = vmatprep.subr.bf16.mxu0 0
      %11657 = vmatpush1.bf16.msra.mxu0 0
      %11658 = vmatprep.subr.bf16.mxu0 0
      %11659 = vmatpush1.bf16.msra.mxu0 0
      %11660 = vmatprep.subr.bf16.mxu0 0
      %11661 = vmatpush1.bf16.msra.mxu0 0
      %11662 = vmatprep.subr.bf16.mxu0 0
      %11663 = vmatpush1.bf16.msra.mxu0 0
      %11664 = vmatprep.subr.bf16.mxu0 0
      %11665 = vmatpush1.bf16.msra.mxu0 0
      %11666 = vmatprep.subr.bf16.mxu0 0
      %11667 = vmatpush1.bf16.msra.mxu0 %v11654
      %11668 = vmatprep.subr.bf16.mxu0 0
      %11669 = vmatpush1.bf16.msra.mxu0 %v11585
      %11670 = vmatprep.subr.bf16.mxu0 0
      %11671 = vmatpush1.bf16.msra.mxu0 %v11584
      %11672 = vmatprep.subr.bf16.mxu0 0
      %11673 = vmatpush2.bf16.msra.mxu0 0
      %11674 = vmatprep.subr.bf16.mxu0 0
      %11675 = vmatpush2.bf16.msra.mxu0 0
      %11676 = vmatprep.subr.bf16.mxu0 0
      %11677 = vmatpush2.bf16.msra.mxu0 0
      %11678 = vmatprep.subr.bf16.mxu0 0
      %11679 = vmatpush2.bf16.msra.mxu0 0
      %11680 = vmatprep.subr.bf16.mxu0 0
      %11681 = vmatpush2.bf16.msra.mxu0 0
      %11682 = vmatprep.subr.bf16.mxu0 0
      %11683 = vmatpush2.bf16.msra.mxu0 0
      %11684 = vmatprep.subr.bf16.mxu0 0
      %11685 = vmatpush2.bf16.msra.mxu0 0
      %11686 = vmatprep.subr.bf16.mxu0 0
      %11687 = vmatpush2.bf16.msra.mxu0 0
      %11688 = vmatprep.mubr.bf16.mxu0 0
      %11689 = vmatmul.mubr.bf16.gmra.mxu0 %v11591
      %v11690 = vpop.f32.mrf.mxu0
      %v11691 = vadd.f32 %v253, %v11690
      %v11692 = vpop.f32.mrf.mxu0
      %v11693 = vpop.f32.mrf.mxu0
      %v11694 = vadd.f32 %v254, %v11693
      %v11695 = vpop.f32.mrf.mxu0
      %11696 = vmatprep.mubr.bf16.mxu0 0
      %11697 = vmatmul.mubr.bf16.gmra.mxu0 %v11594
      %v11698 = vpop.f32.mrf.mxu0
      %v11699 = vadd.f32 %v255, %v11698
      %v11700 = vpop.f32.mrf.mxu0
      %v11701 = vpop.f32.mrf.mxu0
      %v11702 = vadd.f32 %v256, %v11701
      %v11703 = vpop.f32.mrf.mxu0
      %11704 = vmatprep.mubr.bf16.mxu0 0
      %11705 = vmatmul.mubr.bf16.gmra.mxu0 %v11597
      %v11706 = vpop.f32.mrf.mxu0
      %v11707 = vadd.f32 %v257, %v11706
      %v11708 = vpop.f32.mrf.mxu0
      %v11709 = vpop.f32.mrf.mxu0
      %v11710 = vadd.f32 %v258, %v11709
      %v11711 = vpop.f32.mrf.mxu0
      %11712 = vmatprep.mubr.bf16.mxu0 0
      %11713 = vmatmul.mubr.bf16.gmra.mxu0 %v11600
      %v11714 = vpop.f32.mrf.mxu0
      %v11715 = vadd.f32 %v259, %v11714
      %v11716 = vpop.f32.mrf.mxu0
      %v11717 = vpop.f32.mrf.mxu0
      %v11718 = vadd.f32 %v260, %v11717
      %v11719 = vpop.f32.mrf.mxu0
      %11720 = vmatprep.mubr.bf16.mxu0 0
      %11721 = vmatmul.mubr.bf16.gmra.mxu0 %v11603
      %v11722 = vpop.f32.mrf.mxu0
      %v11723 = vadd.f32 %v261, %v11722
      %v11724 = vpop.f32.mrf.mxu0
      %v11725 = vpop.f32.mrf.mxu0
      %v11726 = vadd.f32 %v262, %v11725
      %v11727 = vpop.f32.mrf.mxu0
      %11728 = vmatprep.mubr.bf16.mxu0 0
      %11729 = vmatmul.mubr.bf16.gmra.mxu0 %v11606
      %v11730 = vpop.f32.mrf.mxu0
      %v11731 = vadd.f32 %v263, %v11730
      %v11732 = vpop.f32.mrf.mxu0
      %v11733 = vpop.f32.mrf.mxu0
      %v11734 = vadd.f32 %v264, %v11733
      %v11735 = vpop.f32.mrf.mxu0
      %11736 = vmatprep.mubr.bf16.mxu0 0
      %11737 = vmatmul.mubr.bf16.gmra.mxu0 %v11609
      %v11738 = vpop.f32.mrf.mxu0
      %v11739 = vadd.f32 %v265, %v11738
      %v11740 = vpop.f32.mrf.mxu0
      %v11741 = vpop.f32.mrf.mxu0
      %v11742 = vadd.f32 %v266, %v11741
      %v11743 = vpop.f32.mrf.mxu0
      %11744 = vmatprep.mubr.bf16.mxu0 0
      %11745 = vmatmul.mubr.bf16.gmra.mxu0 %v11612
      %v11746 = vpop.f32.mrf.mxu0
      %v11747 = vadd.f32 %v267, %v11746
      %v11748 = vpop.f32.mrf.mxu0
      %v11749 = vpop.f32.mrf.mxu0
      %v11750 = vadd.f32 %v268, %v11749
      %v11751 = vpop.f32.mrf.mxu0
      %11752 = vmatprep.mubr.bf16.mxu0 0
      %11753 = vmatmul.mubr.bf16.gmra.mxu0 %v11615
      %v11754 = vpop.f32.mrf.mxu0
      %v11755 = vadd.f32 %v269, %v11754
      %v11756 = vpop.f32.mrf.mxu0
      %v11757 = vpop.f32.mrf.mxu0
      %v11758 = vadd.f32 %v270, %v11757
      %v11759 = vpop.f32.mrf.mxu0
      %11760 = vmatprep.mubr.bf16.mxu0 0
      %11761 = vmatmul.mubr.bf16.gmra.mxu0 %v11618
      %v11762 = vpop.f32.mrf.mxu0
      %v11763 = vadd.f32 %v271, %v11762
      %v11764 = vpop.f32.mrf.mxu0
      %v11765 = vpop.f32.mrf.mxu0
      %v11766 = vadd.f32 %v272, %v11765
      %v11767 = vpop.f32.mrf.mxu0
      %11768 = vmatprep.mubr.bf16.mxu0 0
      %11769 = vmatmul.mubr.bf16.gmra.mxu0 %v11621
      %v11770 = vpop.f32.mrf.mxu0
      %v11771 = vadd.f32 %v273, %v11770
      %v11772 = vpop.f32.mrf.mxu0
      %v11773 = vpop.f32.mrf.mxu0
      %v11774 = vadd.f32 %v274, %v11773
      %v11775 = vpop.f32.mrf.mxu0
      %11776 = vmatprep.mubr.bf16.mxu0 0
      %11777 = vmatmul.mubr.bf16.gmra.mxu0 %v11624
      %v11778 = vpop.f32.mrf.mxu0
      %v11779 = vadd.f32 %v275, %v11778
      %v11780 = vpop.f32.mrf.mxu0
      %v11781 = vpop.f32.mrf.mxu0
      %v11782 = vadd.f32 %v276, %v11781
      %v11783 = vpop.f32.mrf.mxu0
      %11784 = vmatprep.mubr.bf16.mxu0 0
      %11785 = vmatmul.mubr.bf16.gmra.mxu0 %v11627
      %v11786 = vpop.f32.mrf.mxu0
      %v11787 = vadd.f32 %v277, %v11786
      %v11788 = vpop.f32.mrf.mxu0
      %v11789 = vpop.f32.mrf.mxu0
      %v11790 = vadd.f32 %v278, %v11789
      %v11791 = vpop.f32.mrf.mxu0
      %11792 = vmatprep.mubr.bf16.mxu0 0
      %11793 = vmatmul.mubr.bf16.gmra.mxu0 %v11630
      %v11794 = vpop.f32.mrf.mxu0
      %v11795 = vadd.f32 %v279, %v11794
      %v11796 = vpop.f32.mrf.mxu0
      %v11797 = vpop.f32.mrf.mxu0
      %v11798 = vadd.f32 %v280, %v11797
      %v11799 = vpop.f32.mrf.mxu0
      %11800 = vmatprep.mubr.bf16.mxu0 0
      %11801 = vmatmul.mubr.bf16.gmra.mxu0 %v11633
      %v11802 = vpop.f32.mrf.mxu0
      %v11803 = vadd.f32 %v281, %v11802
      %v11804 = vpop.f32.mrf.mxu0
      %v11805 = vpop.f32.mrf.mxu0
      %v11806 = vadd.f32 %v282, %v11805
      %v11807 = vpop.f32.mrf.mxu0
      %11808 = vmatprep.mubr.bf16.mxu0 0
      %11809 = vmatmul.mubr.bf16.gmra.mxu0 %v11636
      %v11810 = vpop.f32.mrf.mxu0
      %v11811 = vadd.f32 %v283, %v11810
      %v11812 = vpop.f32.mrf.mxu0
      %v11813 = vpop.f32.mrf.mxu0
      %v11814 = vadd.f32 %v284, %v11813
      %v11815 = vpop.f32.mrf.mxu0
      %11816 = vmatprep.mubr.bf16.mxu0 0
      %11817 = vmatmul.mubr.bf16.gmra.mxu0 %v11639
      %v11818 = vpop.f32.mrf.mxu0
      %v11819 = vadd.f32 %v285, %v11818
      %v11820 = vpop.f32.mrf.mxu0
      %v11821 = vpop.f32.mrf.mxu0
      %v11822 = vadd.f32 %v286, %v11821
      %v11823 = vpop.f32.mrf.mxu0
      %11824 = vmatprep.mubr.bf16.mxu0 0
      %11825 = vmatmul.mubr.bf16.gmra.mxu0 %v11642
      %v11826 = vpop.f32.mrf.mxu0
      %v11827 = vadd.f32 %v287, %v11826
      %v11828 = vpop.f32.mrf.mxu0
      %v11829 = vpop.f32.mrf.mxu0
      %v11830 = vadd.f32 %v288, %v11829
      %v11831 = vpop.f32.mrf.mxu0
      %11832 = vmatprep.mubr.bf16.mxu0 0
      %11833 = vmatmul.mubr.bf16.gmra.mxu0 %v11645
      %v11834 = vpop.f32.mrf.mxu0
      %v11835 = vadd.f32 %v289, %v11834
      %v11836 = vpop.f32.mrf.mxu0
      %v11837 = vpop.f32.mrf.mxu0
      %v11838 = vadd.f32 %v290, %v11837
      %v11839 = vpop.f32.mrf.mxu0
      %11840 = vmatprep.mubr.bf16.mxu0 0
      %11841 = vmatmul.mubr.bf16.gmra.mxu0 %v11648
      %v11842 = vpop.f32.mrf.mxu0
      %v11843 = vadd.f32 %v291, %v11842
      %v11844 = vpop.f32.mrf.mxu0
      %v11845 = vpop.f32.mrf.mxu0
      %v11846 = vadd.f32 %v292, %v11845
      %v11847 = vpop.f32.mrf.mxu0
      %11848 = vmatprep.mubr.bf16.mxu0 0
      %11849 = vmatmul.mubr.bf16.gmra.mxu0 %v11651
      %v11850 = vpop.f32.mrf.mxu0
      %v11851 = vadd.f32 %v293, %v11850
      %v11852 = vpop.f32.mrf.mxu0
      %v11853 = vpop.f32.mrf.mxu0
      %v11854 = vpop.f32.mrf.mxu0
      %11855 = vdwg.mxu0
      %11856 = vst [vmem:[%s251] sm:$0xff] %v11691
      %11857 = vst [vmem:[%s251 + $0x8] sm:$0xff] %v11694
      %11858 = vst [vmem:[%s251 + $0x10] sm:$0xff] %v11699
      %11859 = vst [vmem:[%s251 + $0x18] sm:$0xff] %v11702
      %11860 = vst [vmem:[%s251 + $0x20] sm:$0xff] %v11707
      %11861 = vst [vmem:[%s251 + $0x28] sm:$0xff] %v11710
      %11862 = vst [vmem:[%s251 + $0x30] sm:$0xff] %v11715
      %11863 = vst [vmem:[%s251 + $0x38] sm:$0xff] %v11718
      %11864 = vst [vmem:[%s251 + $0x40] sm:$0xff] %v11723
      %11865 = vst [vmem:[%s251 + $0x48] sm:$0xff] %v11726
      %11866 = vst [vmem:[%s251 + $0x50] sm:$0xff] %v11731
      %11867 = vst [vmem:[%s251 + $0x58] sm:$0xff] %v11734
      %11868 = vst [vmem:[%s251 + $0x60] sm:$0xff] %v11739
      %11869 = vst [vmem:[%s251 + $0x68] sm:$0xff] %v11742
      %11870 = vst [vmem:[%s251 + $0x70] sm:$0xff] %v11747
      %11871 = vst [vmem:[%s251 + $0x78] sm:$0xff] %v11750
      %11872 = vst [vmem:[%s251 + $0x80] sm:$0xff] %v11755
      %11873 = vst [vmem:[%s251 + $0x88] sm:$0xff] %v11758
      %11874 = vst [vmem:[%s251 + $0x90] sm:$0xff] %v11763
      %11875 = vst [vmem:[%s251 + $0x98] sm:$0xff] %v11766
      %11876 = vst [vmem:[%s251 + $0xa0] sm:$0xff] %v11771
      %11877 = vst [vmem:[%s251 + $0xa8] sm:$0xff] %v11774
      %11878 = vst [vmem:[%s251 + $0xb0] sm:$0xff] %v11779
      %11879 = vst [vmem:[%s251 + $0xb8] sm:$0xff] %v11782
      %11880 = vst [vmem:[%s251 + $0xc0] sm:$0xff] %v11787
      %11881 = vst [vmem:[%s251 + $0xc8] sm:$0xff] %v11790
      %11882 = vst [vmem:[%s251 + $0xd0] sm:$0xff] %v11795
      %11883 = vst [vmem:[%s251 + $0xd8] sm:$0xff] %v11798
      %11884 = vst [vmem:[%s251 + $0xe0] sm:$0xff] %v11803
      %11885 = vst [vmem:[%s251 + $0xe8] sm:$0xff] %v11806
      %11886 = vst [vmem:[%s251 + $0xf0] sm:$0xff] %v11811
      %11887 = vst [vmem:[%s251 + $0xf8] sm:$0xff] %v11814
      %11888 = vst [vmem:[%s251 + $0x100] sm:$0xff] %v11819
      %11889 = vst [vmem:[%s251 + $0x108] sm:$0xff] %v11822
      %11890 = vst [vmem:[%s251 + $0x110] sm:$0xff] %v11827
      %11891 = vst [vmem:[%s251 + $0x118] sm:$0xff] %v11830
      %11892 = vst [vmem:[%s251 + $0x120] sm:$0xff] %v11835
      %11893 = vst [vmem:[%s251 + $0x128] sm:$0xff] %v11838
      %11894 = vst [vmem:[%s251 + $0x130] sm:$0xff] %v11843
      %11895 = vst [vmem:[%s251 + $0x138] sm:$0xff] %v11846
      %11896 = vst [vmem:[%s251 + $0x140] sm:$0xff] %v11851
      %p11897 = scmp.lt.s32.totalorder %s17, 1
      %s11898 = scalar_select %p11897, %s17, 1
      %s11899 = smul.addr %s11898, 41
      %s11900 = smul.addr %s11899, 8
      %s11901 = scalar_lea.vmem %s6, %s11900
      // Predicated region
      $region45: #{rdb_forward.1} parent=43 // pred_check
        %p11902 = pneg %p166
      $region46: #{rdb_forward.1} parent=43 // pred_check_branch
        %11904 = sbr.rel (%p11902) target = $region48
      $region47: #{rdb_forward.1} parent=43 // pred_region
        _
      $region48: #{rdb_forward.1} parent=43 // pred_fallthru
        _
    $region44: #{rdb_forward.1} parent=5 // pred_fallthru
      _
    %p11905 = scmp.le.s32.totalorder 2, %s12
    // Predicated region
    $region49: #{rdb_forward.1} parent=5 // pred_check
      %p11906 = pneg %p11905
    $region50: #{rdb_forward.1} parent=5 // pred_check_branch
      %11908 = sbr.rel (%p11906) target = $region52
    $region51: #{rdb_forward.1} parent=5 // pred_region
      %s11909 = ssub.s32 %s12, 2
      // Predicated region
      $region53: #{rdb_forward.1} parent=51 // pred_check
        %p11910 = pneg %p172
      $region54: #{rdb_forward.1} parent=51 // pred_check_branch
        %11912 = sbr.rel (%p11910) target = $region56
      $region55: #{rdb_forward.1} parent=51 // pred_region
        %p11913 = scmp.lt.s32.totalorder %s18, 1
        %s11914 = scalar_select %p11913, %s18, 1
        %s11915 = smul.addr %s11914, 41
        %s11916 = smul.addr %s11915, 8
        %s11917 = scalar_lea.vmem %s6, %s11916
      $region56: #{rdb_forward.1} parent=51 // pred_fallthru
        _
    $region52: #{rdb_forward.1} parent=5 // pred_fallthru
      _
  $region6: #{rdb_forward.1} parent=0 // loop_footer
    %s16 = sadd.s32 1, %s12
  $region7: #{rdb_forward.1} parent=0 // loop_footer_branch
    %11 = sbr.rel target = $region3
  $region8: #{rdb_forward.1} parent=0 // loop_exit
    _

</llo_original>
